<compile_context>
chip_gen: v5e
topology: v5e:2x2
jax: 0.10.0
libtpu: 0.0.40
codegen_flags: <defaults>
</compile_context>

<pallas_src>
from functools import partial

import numpy as np
import jax
import jax.numpy as jnp
from jax.experimental import pallas as pl
from jax.experimental.pallas import tpu as pltpu


# ------------------------ constant 0/1 gather matrices ------------------------

def _pool_select_matrix(H, W):
    """(4*H2*W2, H*W) one-hot rows: tap t=2*da+db of each 2x2 window."""
    H2, W2 = H // 2, W // 2
    S = np.zeros((4 * H2 * W2, H * W), np.float32)
    for da in range(2):
        for db in range(2):
            t = 2 * da + db
            for i in range(H2):
                for j in range(W2):
                    S[t * H2 * W2 + i * W2 + j, (2 * i + da) * W + (2 * j + db)] = 1.0
    return S


def _upsample_matrix(H, W):
    """(H*W, H2*W2) one-hot rows: nearest-neighbor 2x replication."""
    H2, W2 = H // 2, W // 2
    E = np.zeros((H * W, H2 * W2), np.float32)
    for r in range(H * W):
        i, j = r // W, r % W
        E[r, (i // 2) * W2 + (j // 2)] = 1.0
    return E


# ------------------------------ fused kernel ----------------------------------

def _cnn_fused_kernel(x_ref, w1, b1, w2, b2, w3, b3, w4, b4, w5, b5,
                      s_ref, e_ref, o_ref, pad_ref, *, H, W):
    H2, W2 = H // 2, W // 2
    HW2 = H2 * W2

    def conv3x3(x3d, w_ref, b_ref, relu):
        # x3d: (hh, ww, cin) f32 value; w_ref: (9, cin, cout); b_ref: (1, cout)
        hh, ww, cin = x3d.shape
        cout = w_ref.shape[-1]
        # In-kernel "same" padding: zero the VMEM halo buffer, write the interior.
        pad_ref[...] = jnp.zeros_like(pad_ref)
        pad_ref[1:hh + 1, 1:ww + 1, :cin] = x3d
        acc = jnp.zeros((hh * ww, cout), dtype=jnp.float32)
        for kh in range(3):                      # 9 whole-image shifted-tap matmuls
            for kw in range(3):
                patch = pad_ref[kh:kh + hh, kw:kw + ww, :cin].reshape(hh * ww, cin)
                w_tap = w_ref[kh * 3 + kw]       # (cin, cout)
                if cin == 1:
                    acc = acc + patch * w_tap    # VPU broadcast MAC (avoid K=1 MXU)
                else:
                    acc = acc + jnp.dot(patch, w_tap,
                                        preferred_element_type=jnp.float32)
        acc = acc + b_ref[...]
        if relu:
            acc = jnp.maximum(acc, 0.0)
        return acc                               # (hh*ww, cout), flat in VMEM/vregs

    # ---- encoder ----
    a1 = conv3x3(x_ref[0], w1, b1, True)                       # (H*W, 32)
    a2 = conv3x3(a1.reshape(H, W, 32), w2, b2, True)           # (H*W, 64)

    # ---- 2x2 max-pool: selection matmul gathers the 4 taps, then 3 maxima ----
    taps = jnp.dot(s_ref[...], a2, preferred_element_type=jnp.float32)  # (4*HW2, 64)
    p = jnp.maximum(jnp.maximum(taps[0 * HW2:1 * HW2], taps[1 * HW2:2 * HW2]),
                    jnp.maximum(taps[2 * HW2:3 * HW2], taps[3 * HW2:4 * HW2]))

    # ---- middle ----
    m = conv3x3(p.reshape(H2, W2, 64), w3, b3, True)           # (HW2, 64)

    # ---- nearest 2x upsample as a replication matmul ----
    u = jnp.dot(e_ref[...], m, preferred_element_type=jnp.float32)      # (H*W, 64)

    # ---- decoder ----
    d1 = conv3x3(u.reshape(H, W, 64), w4, b4, True)            # (H*W, 32)
    d2 = conv3x3(d1.reshape(H, W, 32), w5, b5, False)          # (H*W, 1)
    o_ref[0] = d2.reshape(H, W, 1)


# ------------------------------- wrapper ---------------------------------------

def cnn_forward(x_nchw, params):
    x = jnp.transpose(x_nchw, (0, 2, 3, 1)).astype(jnp.float32)   # NCHW -> NHWC
    N, H, W, cin0 = x.shape
    assert cin0 == 1 and H % 2 == 0 and W % 2 == 0, (N, H, W, cin0)  # pool needs even H,W

    args = [x]
    specs = [pl.BlockSpec((1, H, W, 1), lambda n: (n, 0, 0, 0))]
    for name in ("enc1", "enc2", "mid", "dec1", "dec2"):
        w, b = params[name]                      # w: (3,3,Cin,Cout) HWIO, b: (Cout,)
        cin, cout = w.shape[2], w.shape[3]
        args += [w.reshape(9, cin, cout), b.reshape(1, cout)]
        specs += [pl.BlockSpec((9, cin, cout), lambda n: (0, 0, 0)),
                  pl.BlockSpec((1, cout), lambda n: (0, 0))]
    # constant 0/1 gather matrices for max-pool taps and nearest upsample
    args += [jnp.asarray(_pool_select_matrix(H, W)),
             jnp.asarray(_upsample_matrix(H, W))]
    specs += [pl.BlockSpec((4 * (H // 2) * (W // 2), H * W), lambda n: (0, 0)),
              pl.BlockSpec((H * W, (H // 2) * (W // 2)), lambda n: (0, 0))]

    out = pl.pallas_call(
        partial(_cnn_fused_kernel, H=H, W=W),
        out_shape=jax.ShapeDtypeStruct((N, H, W, 1), jnp.float32),
        grid_spec=pltpu.PrefetchScalarGridSpec(
            num_scalar_prefetch=0,
            grid=(N,),
            in_specs=specs,
            out_specs=pl.BlockSpec((1, H, W, 1), lambda n: (n, 0, 0, 0)),
            scratch_shapes=[pltpu.VMEM((H + 2, W + 2, 64), jnp.float32)],
        ),
        compiler_params=pltpu.CompilerParams(dimension_semantics=("parallel",)),
    )(*args)
    return jnp.transpose(out, (0, 3, 1, 2))                        # NHWC -> NCHW


# ------------------------------ parameters --------------------------------------

def init_params(key):
    """Deterministic PyTorch-Conv2d-style uniform init; weights stored HWIO (3,3,Cin,Cout)."""
    shapes = [("enc1", 1, 32), ("enc2", 32, 64), ("mid", 64, 64),
              ("dec1", 64, 32), ("dec2", 32, 1)]
    params = {}
    for name, cin, cout in shapes:
        key, kw, kb = jax.random.split(key, 3)
        bound = 1.0 / jnp.sqrt(cin * 9.0)
        w = jax.random.uniform(kw, (3, 3, cin, cout), jnp.float32, -bound, bound)
        b = jax.random.uniform(kb, (cout,), jnp.float32, -bound, bound)
        params[name] = (w, b)
    return params


# --------------------------- pure-JAX reference ----------------------------------

def _conv_ref(x, w, b, relu):
    y = jax.lax.conv_general_dilated(
        x, w, window_strides=(1, 1), padding="SAME",
        dimension_numbers=("NHWC", "HWIO", "NHWC"),
        precision=jax.lax.Precision.HIGHEST)
    y = y + b
    return jnp.maximum(y, 0.0) if relu else y


def cnn_forward_ref(x_nchw, params):
    x = jnp.transpose(x_nchw, (0, 2, 3, 1)).astype(jnp.float32)
    x = _conv_ref(x, *params["enc1"], relu=True)
    x = _conv_ref(x, *params["enc2"], relu=True)
    x = jax.lax.reduce_window(x, -jnp.inf, jax.lax.max,
                              (1, 2, 2, 1), (1, 2, 2, 1), "VALID")
    x = _conv_ref(x, *params["mid"], relu=True)
    x = jnp.repeat(jnp.repeat(x, 2, axis=1), 2, axis=2)            # nearest 2x
    x = _conv_ref(x, *params["dec1"], relu=True)
    x = _conv_ref(x, *params["dec2"], relu=False)
    return jnp.transpose(x, (0, 3, 1, 2))


# ----------------------------------- main ----------------------------------------

if __name__ == "__main__":
    key = jax.random.PRNGKey(0)
    k_param, k_x = jax.random.split(key)
    params = init_params(k_param)

    # Input consistent with Conv2d(1, 32, ...): (N=2, C=1, H=16, W=16), NCHW.
    x = jax.random.normal(k_x, (2, 1, 16, 16), dtype=jnp.float32)

    out = jax.block_until_ready(cnn_forward(x, params))
    assert out.shape == (2, 1, 16, 16), out.shape

    ref = jax.block_until_ready(cnn_forward_ref(x, params))
    assert jnp.allclose(out, ref, atol=1e-3, rtol=1e-3), "mismatch vs reference"

    print("KERNEL_OK")
</pallas_src>

<mosaic_0001>
module attributes {stable_mosaic.version = 11 : i64} {
  func.func @_cnn_fused_kernel(%arg0: i32, %arg1: memref<1x16x16x1xf32, #tpu.memory_space<vmem>>, %arg2: memref<9x1x32xf32, #tpu.memory_space<vmem>>, %arg3: memref<1x32xf32, #tpu.memory_space<vmem>>, %arg4: memref<9x32x64xf32, #tpu.memory_space<vmem>>, %arg5: memref<1x64xf32, #tpu.memory_space<vmem>>, %arg6: memref<9x64x64xf32, #tpu.memory_space<vmem>>, %arg7: memref<1x64xf32, #tpu.memory_space<vmem>>, %arg8: memref<9x64x32xf32, #tpu.memory_space<vmem>>, %arg9: memref<1x32xf32, #tpu.memory_space<vmem>>, %arg10: memref<9x32x1xf32, #tpu.memory_space<vmem>>, %arg11: memref<1x1xf32, #tpu.memory_space<vmem>>, %arg12: memref<256x256xf32, #tpu.memory_space<vmem>>, %arg13: memref<256x64xf32, #tpu.memory_space<vmem>>, %arg14: memref<1x16x16x1xf32, #tpu.memory_space<vmem>>, %arg15: memref<18x18x64xf32, #tpu.memory_space<vmem>>) attributes {dimension_semantics = [#tpu.dimension_semantics<parallel>], iteration_bounds = array<i64: 2>, scalar_prefetch = 0 : i64, scratch_operands = 1 : i64, tpu.core_type = #tpu.core_type<tc>, window_params = [{transform_indices = @transform_0, window_bounds = array<i64: 1, 16, 16, 1>}, {pipeline_mode = #tpu.pipeline_mode<synchronous>, transform_indices = @transform_1, window_bounds = array<i64: 9, 1, 32>}, {pipeline_mode = #tpu.pipeline_mode<synchronous>, transform_indices = @transform_2, window_bounds = array<i64: 1, 32>}, {pipeline_mode = #tpu.pipeline_mode<synchronous>, transform_indices = @transform_3, window_bounds = array<i64: 9, 32, 64>}, {pipeline_mode = #tpu.pipeline_mode<synchronous>, transform_indices = @transform_4, window_bounds = array<i64: 1, 64>}, {pipeline_mode = #tpu.pipeline_mode<synchronous>, transform_indices = @transform_5, window_bounds = array<i64: 9, 64, 64>}, {pipeline_mode = #tpu.pipeline_mode<synchronous>, transform_indices = @transform_6, window_bounds = array<i64: 1, 64>}, {pipeline_mode = #tpu.pipeline_mode<synchronous>, transform_indices = @transform_7, window_bounds = array<i64: 9, 64, 32>}, {pipeline_mode = #tpu.pipeline_mode<synchronous>, transform_indices = @transform_8, window_bounds = array<i64: 1, 32>}, {pipeline_mode = #tpu.pipeline_mode<synchronous>, transform_indices = @transform_9, window_bounds = array<i64: 9, 32, 1>}, {pipeline_mode = #tpu.pipeline_mode<synchronous>, transform_indices = @transform_10, window_bounds = array<i64: 1, 1>}, {pipeline_mode = #tpu.pipeline_mode<synchronous>, transform_indices = @transform_11, window_bounds = array<i64: 256, 256>}, {pipeline_mode = #tpu.pipeline_mode<synchronous>, transform_indices = @transform_12, window_bounds = array<i64: 256, 64>}, {transform_indices = @transform_13, window_bounds = array<i64: 1, 16, 16, 1>}]} {
    %c0 = arith.constant 0 : index
    %c0_0 = arith.constant 0 : index
    %c0_1 = arith.constant 0 : index
    %c0_2 = arith.constant 0 : index
    %0 = vector.load %arg1[%c0, %c0_0, %c0_1, %c0_2] : memref<1x16x16x1xf32, #tpu.memory_space<vmem>>, vector<1x16x16x1xf32>
    %1 = vector.shape_cast %0 : vector<1x16x16x1xf32> to vector<16x16x1xf32>
    %cst = arith.constant 0.000000e+00 : f32
    %2 = vector.broadcast %cst : f32 to vector<18x18x64xf32>
    %c0_3 = arith.constant 0 : index
    %c0_4 = arith.constant 0 : index
    %c0_5 = arith.constant 0 : index
    %3 = vector.load %arg15[%c0_3, %c0_4, %c0_5] : memref<18x18x64xf32, #tpu.memory_space<vmem>>, vector<18x18x64xf32>
    tpu.vector_store %arg15[%c0_3, %c0_4, %c0_5], %2 {strides = array<i32>} : memref<18x18x64xf32, #tpu.memory_space<vmem>>, vector<18x18x64xf32>,
    %c1 = arith.constant 1 : index
    %c1_6 = arith.constant 1 : index
    %c0_7 = arith.constant 0 : index
    %4 = vector.load %arg15[%c1, %c1_6, %c0_7] : memref<18x18x64xf32, #tpu.memory_space<vmem>>, vector<16x16x1xf32>
    tpu.vector_store %arg15[%c1, %c1_6, %c0_7], %1 {strides = array<i32>} : memref<18x18x64xf32, #tpu.memory_space<vmem>>, vector<16x16x1xf32>,
    %cst_8 = arith.constant 0.000000e+00 : f32
    %5 = vector.broadcast %cst_8 : f32 to vector<256x32xf32>
    %c0_9 = arith.constant 0 : index
    %c0_10 = arith.constant 0 : index
    %c0_11 = arith.constant 0 : index
    %6 = vector.load %arg15[%c0_9, %c0_10, %c0_11] : memref<18x18x64xf32, #tpu.memory_space<vmem>>, vector<16x16x1xf32>
    %7 = vector.shape_cast %6 : vector<16x16x1xf32> to vector<256x1xf32>
    %c0_12 = arith.constant 0 : index
    %c0_13 = arith.constant 0 : index
    %c0_14 = arith.constant 0 : index
    %8 = vector.load %arg2[%c0_12, %c0_13, %c0_14] : memref<9x1x32xf32, #tpu.memory_space<vmem>>, vector<1x1x32xf32>
    %9 = vector.shape_cast %8 : vector<1x1x32xf32> to vector<1x32xf32>
    %10 = vector.broadcast %7 : vector<256x1xf32> to vector<256x32xf32>
    %11 = vector.broadcast %9 : vector<1x32xf32> to vector<256x32xf32>
    %12 = arith.mulf %10, %11 : vector<256x32xf32>
    %13 = arith.addf %5, %12 : vector<256x32xf32>
    %c0_15 = arith.constant 0 : index
    %c1_16 = arith.constant 1 : index
    %c0_17 = arith.constant 0 : index
    %14 = vector.load %arg15[%c0_15, %c1_16, %c0_17] : memref<18x18x64xf32, #tpu.memory_space<vmem>>, vector<16x16x1xf32>
    %15 = vector.shape_cast %14 : vector<16x16x1xf32> to vector<256x1xf32>
    %c1_18 = arith.constant 1 : index
    %c0_19 = arith.constant 0 : index
    %c0_20 = arith.constant 0 : index
    %16 = vector.load %arg2[%c1_18, %c0_19, %c0_20] : memref<9x1x32xf32, #tpu.memory_space<vmem>>, vector<1x1x32xf32>
    %17 = vector.shape_cast %16 : vector<1x1x32xf32> to vector<1x32xf32>
    %18 = vector.broadcast %15 : vector<256x1xf32> to vector<256x32xf32>
    %19 = vector.broadcast %17 : vector<1x32xf32> to vector<256x32xf32>
    %20 = arith.mulf %18, %19 : vector<256x32xf32>
    %21 = arith.addf %13, %20 : vector<256x32xf32>
    %c0_21 = arith.constant 0 : index
    %c2 = arith.constant 2 : index
    %c0_22 = arith.constant 0 : index
    %22 = vector.load %arg15[%c0_21, %c2, %c0_22] : memref<18x18x64xf32, #tpu.memory_space<vmem>>, vector<16x16x1xf32>
    %23 = vector.shape_cast %22 : vector<16x16x1xf32> to vector<256x1xf32>
    %c2_23 = arith.constant 2 : index
    %c0_24 = arith.constant 0 : index
    %c0_25 = arith.constant 0 : index
    %24 = vector.load %arg2[%c2_23, %c0_24, %c0_25] : memref<9x1x32xf32, #tpu.memory_space<vmem>>, vector<1x1x32xf32>
    %25 = vector.shape_cast %24 : vector<1x1x32xf32> to vector<1x32xf32>
    %26 = vector.broadcast %23 : vector<256x1xf32> to vector<256x32xf32>
    %27 = vector.broadcast %25 : vector<1x32xf32> to vector<256x32xf32>
    %28 = arith.mulf %26, %27 : vector<256x32xf32>
    %29 = arith.addf %21, %28 : vector<256x32xf32>
    %c1_26 = arith.constant 1 : index
    %c0_27 = arith.constant 0 : index
    %c0_28 = arith.constant 0 : index
    %30 = vector.load %arg15[%c1_26, %c0_27, %c0_28] : memref<18x18x64xf32, #tpu.memory_space<vmem>>, vector<16x16x1xf32>
    %31 = vector.shape_cast %30 : vector<16x16x1xf32> to vector<256x1xf32>
    %c3 = arith.constant 3 : index
    %c0_29 = arith.constant 0 : index
    %c0_30 = arith.constant 0 : index
    %32 = vector.load %arg2[%c3, %c0_29, %c0_30] : memref<9x1x32xf32, #tpu.memory_space<vmem>>, vector<1x1x32xf32>
    %33 = vector.shape_cast %32 : vector<1x1x32xf32> to vector<1x32xf32>
    %34 = vector.broadcast %31 : vector<256x1xf32> to vector<256x32xf32>
    %35 = vector.broadcast %33 : vector<1x32xf32> to vector<256x32xf32>
    %36 = arith.mulf %34, %35 : vector<256x32xf32>
    %37 = arith.addf %29, %36 : vector<256x32xf32>
    %c1_31 = arith.constant 1 : index
    %c1_32 = arith.constant 1 : index
    %c0_33 = arith.constant 0 : index
    %38 = vector.load %arg15[%c1_31, %c1_32, %c0_33] : memref<18x18x64xf32, #tpu.memory_space<vmem>>, vector<16x16x1xf32>
    %39 = vector.shape_cast %38 : vector<16x16x1xf32> to vector<256x1xf32>
    %c4 = arith.constant 4 : index
    %c0_34 = arith.constant 0 : index
    %c0_35 = arith.constant 0 : index
    %40 = vector.load %arg2[%c4, %c0_34, %c0_35] : memref<9x1x32xf32, #tpu.memory_space<vmem>>, vector<1x1x32xf32>
    %41 = vector.shape_cast %40 : vector<1x1x32xf32> to vector<1x32xf32>
    %42 = vector.broadcast %39 : vector<256x1xf32> to vector<256x32xf32>
    %43 = vector.broadcast %41 : vector<1x32xf32> to vector<256x32xf32>
    %44 = arith.mulf %42, %43 : vector<256x32xf32>
    %45 = arith.addf %37, %44 : vector<256x32xf32>
    %c1_36 = arith.constant 1 : index
    %c2_37 = arith.constant 2 : index
    %c0_38 = arith.constant 0 : index
    %46 = vector.load %arg15[%c1_36, %c2_37, %c0_38] : memref<18x18x64xf32, #tpu.memory_space<vmem>>, vector<16x16x1xf32>
    %47 = vector.shape_cast %46 : vector<16x16x1xf32> to vector<256x1xf32>
    %c5 = arith.constant 5 : index
    %c0_39 = arith.constant 0 : index
    %c0_40 = arith.constant 0 : index
    %48 = vector.load %arg2[%c5, %c0_39, %c0_40] : memref<9x1x32xf32, #tpu.memory_space<vmem>>, vector<1x1x32xf32>
    %49 = vector.shape_cast %48 : vector<1x1x32xf32> to vector<1x32xf32>
    %50 = vector.broadcast %47 : vector<256x1xf32> to vector<256x32xf32>
    %51 = vector.broadcast %49 : vector<1x32xf32> to vector<256x32xf32>
    %52 = arith.mulf %50, %51 : vector<256x32xf32>
    %53 = arith.addf %45, %52 : vector<256x32xf32>
    %c2_41 = arith.constant 2 : index
    %c0_42 = arith.constant 0 : index
    %c0_43 = arith.constant 0 : index
    %54 = vector.load %arg15[%c2_41, %c0_42, %c0_43] : memref<18x18x64xf32, #tpu.memory_space<vmem>>, vector<16x16x1xf32>
    %55 = vector.shape_cast %54 : vector<16x16x1xf32> to vector<256x1xf32>
    %c6 = arith.constant 6 : index
    %c0_44 = arith.constant 0 : index
    %c0_45 = arith.constant 0 : index
    %56 = vector.load %arg2[%c6, %c0_44, %c0_45] : memref<9x1x32xf32, #tpu.memory_space<vmem>>, vector<1x1x32xf32>
    %57 = vector.shape_cast %56 : vector<1x1x32xf32> to vector<1x32xf32>
    %58 = vector.broadcast %55 : vector<256x1xf32> to vector<256x32xf32>
    %59 = vector.broadcast %57 : vector<1x32xf32> to vector<256x32xf32>
    %60 = arith.mulf %58, %59 : vector<256x32xf32>
    %61 = arith.addf %53, %60 : vector<256x32xf32>
    %c2_46 = arith.constant 2 : index
    %c1_47 = arith.constant 1 : index
    %c0_48 = arith.constant 0 : index
    %62 = vector.load %arg15[%c2_46, %c1_47, %c0_48] : memref<18x18x64xf32, #tpu.memory_space<vmem>>, vector<16x16x1xf32>
    %63 = vector.shape_cast %62 : vector<16x16x1xf32> to vector<256x1xf32>
    %c7 = arith.constant 7 : index
    %c0_49 = arith.constant 0 : index
    %c0_50 = arith.constant 0 : index
    %64 = vector.load %arg2[%c7, %c0_49, %c0_50] : memref<9x1x32xf32, #tpu.memory_space<vmem>>, vector<1x1x32xf32>
    %65 = vector.shape_cast %64 : vector<1x1x32xf32> to vector<1x32xf32>
    %66 = vector.broadcast %63 : vector<256x1xf32> to vector<256x32xf32>
    %67 = vector.broadcast %65 : vector<1x32xf32> to vector<256x32xf32>
    %68 = arith.mulf %66, %67 : vector<256x32xf32>
    %69 = arith.addf %61, %68 : vector<256x32xf32>
    %c2_51 = arith.constant 2 : index
    %c2_52 = arith.constant 2 : index
    %c0_53 = arith.constant 0 : index
    %70 = vector.load %arg15[%c2_51, %c2_52, %c0_53] : memref<18x18x64xf32, #tpu.memory_space<vmem>>, vector<16x16x1xf32>
    %71 = vector.shape_cast %70 : vector<16x16x1xf32> to vector<256x1xf32>
    %c8 = arith.constant 8 : index
    %c0_54 = arith.constant 0 : index
    %c0_55 = arith.constant 0 : index
    %72 = vector.load %arg2[%c8, %c0_54, %c0_55] : memref<9x1x32xf32, #tpu.memory_space<vmem>>, vector<1x1x32xf32>
    %73 = vector.shape_cast %72 : vector<1x1x32xf32> to vector<1x32xf32>
    %74 = vector.broadcast %71 : vector<256x1xf32> to vector<256x32xf32>
    %75 = vector.broadcast %73 : vector<1x32xf32> to vector<256x32xf32>
    %76 = arith.mulf %74, %75 : vector<256x32xf32>
    %77 = arith.addf %69, %76 : vector<256x32xf32>
    %c0_56 = arith.constant 0 : index
    %c0_57 = arith.constant 0 : index
    %78 = vector.load %arg3[%c0_56, %c0_57] : memref<1x32xf32, #tpu.memory_space<vmem>>, vector<1x32xf32>
    %79 = vector.broadcast %78 : vector<1x32xf32> to vector<256x32xf32>
    %80 = arith.addf %77, %79 : vector<256x32xf32>
    %cst_58 = arith.constant 0.000000e+00 : f32
    %81 = vector.broadcast %cst_58 : f32 to vector<256x32xf32>
    %82 = arith.maximumf %80, %81 : vector<256x32xf32>
    %83 = vector.shape_cast %82 : vector<256x32xf32> to vector<16x16x32xf32>
    %cst_59 = arith.constant 0.000000e+00 : f32
    %84 = vector.broadcast %cst_59 : f32 to vector<18x18x64xf32>
    %c0_60 = arith.constant 0 : index
    %c0_61 = arith.constant 0 : index
    %c0_62 = arith.constant 0 : index
    %85 = vector.load %arg15[%c0_60, %c0_61, %c0_62] : memref<18x18x64xf32, #tpu.memory_space<vmem>>, vector<18x18x64xf32>
    tpu.vector_store %arg15[%c0_60, %c0_61, %c0_62], %84 {strides = array<i32>} : memref<18x18x64xf32, #tpu.memory_space<vmem>>, vector<18x18x64xf32>,
    %c1_63 = arith.constant 1 : index
    %c1_64 = arith.constant 1 : index
    %c0_65 = arith.constant 0 : index
    %86 = vector.load %arg15[%c1_63, %c1_64, %c0_65] : memref<18x18x64xf32, #tpu.memory_space<vmem>>, vector<16x16x32xf32>
    tpu.vector_store %arg15[%c1_63, %c1_64, %c0_65], %83 {strides = array<i32>} : memref<18x18x64xf32, #tpu.memory_space<vmem>>, vector<16x16x32xf32>,
    %cst_66 = arith.constant 0.000000e+00 : f32
    %87 = vector.broadcast %cst_66 : f32 to vector<256x64xf32>
    %c0_67 = arith.constant 0 : index
    %c0_68 = arith.constant 0 : index
    %c0_69 = arith.constant 0 : index
    %88 = vector.load %arg15[%c0_67, %c0_68, %c0_69] : memref<18x18x64xf32, #tpu.memory_space<vmem>>, vector<16x16x32xf32>
    %89 = vector.shape_cast %88 : vector<16x16x32xf32> to vector<256x32xf32>
    %c0_70 = arith.constant 0 : index
    %c0_71 = arith.constant 0 : index
    %c0_72 = arith.constant 0 : index
    %90 = vector.load %arg4[%c0_70, %c0_71, %c0_72] : memref<9x32x64xf32, #tpu.memory_space<vmem>>, vector<1x32x64xf32>
    %91 = vector.shape_cast %90 : vector<1x32x64xf32> to vector<32x64xf32>
    %cst_73 = arith.constant dense<0.000000e+00> : vector<256x64xf32>
    %92 = tpu.matmul %89, %91, %cst_73 {dimension_numbers = #tpu.dot_dimension_numbers<[1], [0], [0], [1], [0, 0, 1, 1], [], []>} : vector<256x32xf32>, vector<32x64xf32>, vector<256x64xf32> -> vector<256x64xf32>
    %93 = arith.addf %87, %92 : vector<256x64xf32>
    %c0_74 = arith.constant 0 : index
    %c1_75 = arith.constant 1 : index
    %c0_76 = arith.constant 0 : index
    %94 = vector.load %arg15[%c0_74, %c1_75, %c0_76] : memref<18x18x64xf32, #tpu.memory_space<vmem>>, vector<16x16x32xf32>
    %95 = vector.shape_cast %94 : vector<16x16x32xf32> to vector<256x32xf32>
    %c1_77 = arith.constant 1 : index
    %c0_78 = arith.constant 0 : index
    %c0_79 = arith.constant 0 : index
    %96 = vector.load %arg4[%c1_77, %c0_78, %c0_79] : memref<9x32x64xf32, #tpu.memory_space<vmem>>, vector<1x32x64xf32>
    %97 = vector.shape_cast %96 : vector<1x32x64xf32> to vector<32x64xf32>
    %cst_80 = arith.constant dense<0.000000e+00> : vector<256x64xf32>
    %98 = tpu.matmul %95, %97, %cst_80 {dimension_numbers = #tpu.dot_dimension_numbers<[1], [0], [0], [1], [0, 0, 1, 1], [], []>} : vector<256x32xf32>, vector<32x64xf32>, vector<256x64xf32> -> vector<256x64xf32>
    %99 = arith.addf %93, %98 : vector<256x64xf32>
    %c0_81 = arith.constant 0 : index
    %c2_82 = arith.constant 2 : index
    %c0_83 = arith.constant 0 : index
    %100 = vector.load %arg15[%c0_81, %c2_82, %c0_83] : memref<18x18x64xf32, #tpu.memory_space<vmem>>, vector<16x16x32xf32>
    %101 = vector.shape_cast %100 : vector<16x16x32xf32> to vector<256x32xf32>
    %c2_84 = arith.constant 2 : index
    %c0_85 = arith.constant 0 : index
    %c0_86 = arith.constant 0 : index
    %102 = vector.load %arg4[%c2_84, %c0_85, %c0_86] : memref<9x32x64xf32, #tpu.memory_space<vmem>>, vector<1x32x64xf32>
    %103 = vector.shape_cast %102 : vector<1x32x64xf32> to vector<32x64xf32>
    %cst_87 = arith.constant dense<0.000000e+00> : vector<256x64xf32>
    %104 = tpu.matmul %101, %103, %cst_87 {dimension_numbers = #tpu.dot_dimension_numbers<[1], [0], [0], [1], [0, 0, 1, 1], [], []>} : vector<256x32xf32>, vector<32x64xf32>, vector<256x64xf32> -> vector<256x64xf32>
    %105 = arith.addf %99, %104 : vector<256x64xf32>
    %c1_88 = arith.constant 1 : index
    %c0_89 = arith.constant 0 : index
    %c0_90 = arith.constant 0 : index
    %106 = vector.load %arg15[%c1_88, %c0_89, %c0_90] : memref<18x18x64xf32, #tpu.memory_space<vmem>>, vector<16x16x32xf32>
    %107 = vector.shape_cast %106 : vector<16x16x32xf32> to vector<256x32xf32>
    %c3_91 = arith.constant 3 : index
    %c0_92 = arith.constant 0 : index
    %c0_93 = arith.constant 0 : index
    %108 = vector.load %arg4[%c3_91, %c0_92, %c0_93] : memref<9x32x64xf32, #tpu.memory_space<vmem>>, vector<1x32x64xf32>
    %109 = vector.shape_cast %108 : vector<1x32x64xf32> to vector<32x64xf32>
    %cst_94 = arith.constant dense<0.000000e+00> : vector<256x64xf32>
    %110 = tpu.matmul %107, %109, %cst_94 {dimension_numbers = #tpu.dot_dimension_numbers<[1], [0], [0], [1], [0, 0, 1, 1], [], []>} : vector<256x32xf32>, vector<32x64xf32>, vector<256x64xf32> -> vector<256x64xf32>
    %111 = arith.addf %105, %110 : vector<256x64xf32>
    %c1_95 = arith.constant 1 : index
    %c1_96 = arith.constant 1 : index
    %c0_97 = arith.constant 0 : index
    %112 = vector.load %arg15[%c1_95, %c1_96, %c0_97] : memref<18x18x64xf32, #tpu.memory_space<vmem>>, vector<16x16x32xf32>
    %113 = vector.shape_cast %112 : vector<16x16x32xf32> to vector<256x32xf32>
    %c4_98 = arith.constant 4 : index
    %c0_99 = arith.constant 0 : index
    %c0_100 = arith.constant 0 : index
    %114 = vector.load %arg4[%c4_98, %c0_99, %c0_100] : memref<9x32x64xf32, #tpu.memory_space<vmem>>, vector<1x32x64xf32>
    %115 = vector.shape_cast %114 : vector<1x32x64xf32> to vector<32x64xf32>
    %cst_101 = arith.constant dense<0.000000e+00> : vector<256x64xf32>
    %116 = tpu.matmul %113, %115, %cst_101 {dimension_numbers = #tpu.dot_dimension_numbers<[1], [0], [0], [1], [0, 0, 1, 1], [], []>} : vector<256x32xf32>, vector<32x64xf32>, vector<256x64xf32> -> vector<256x64xf32>
    %117 = arith.addf %111, %116 : vector<256x64xf32>
    %c1_102 = arith.constant 1 : index
    %c2_103 = arith.constant 2 : index
    %c0_104 = arith.constant 0 : index
    %118 = vector.load %arg15[%c1_102, %c2_103, %c0_104] : memref<18x18x64xf32, #tpu.memory_space<vmem>>, vector<16x16x32xf32>
    %119 = vector.shape_cast %118 : vector<16x16x32xf32> to vector<256x32xf32>
    %c5_105 = arith.constant 5 : index
    %c0_106 = arith.constant 0 : index
    %c0_107 = arith.constant 0 : index
    %120 = vector.load %arg4[%c5_105, %c0_106, %c0_107] : memref<9x32x64xf32, #tpu.memory_space<vmem>>, vector<1x32x64xf32>
    %121 = vector.shape_cast %120 : vector<1x32x64xf32> to vector<32x64xf32>
    %cst_108 = arith.constant dense<0.000000e+00> : vector<256x64xf32>
    %122 = tpu.matmul %119, %121, %cst_108 {dimension_numbers = #tpu.dot_dimension_numbers<[1], [0], [0], [1], [0, 0, 1, 1], [], []>} : vector<256x32xf32>, vector<32x64xf32>, vector<256x64xf32> -> vector<256x64xf32>
    %123 = arith.addf %117, %122 : vector<256x64xf32>
    %c2_109 = arith.constant 2 : index
    %c0_110 = arith.constant 0 : index
    %c0_111 = arith.constant 0 : index
    %124 = vector.load %arg15[%c2_109, %c0_110, %c0_111] : memref<18x18x64xf32, #tpu.memory_space<vmem>>, vector<16x16x32xf32>
    %125 = vector.shape_cast %124 : vector<16x16x32xf32> to vector<256x32xf32>
    %c6_112 = arith.constant 6 : index
    %c0_113 = arith.constant 0 : index
    %c0_114 = arith.constant 0 : index
    %126 = vector.load %arg4[%c6_112, %c0_113, %c0_114] : memref<9x32x64xf32, #tpu.memory_space<vmem>>, vector<1x32x64xf32>
    %127 = vector.shape_cast %126 : vector<1x32x64xf32> to vector<32x64xf32>
    %cst_115 = arith.constant dense<0.000000e+00> : vector<256x64xf32>
    %128 = tpu.matmul %125, %127, %cst_115 {dimension_numbers = #tpu.dot_dimension_numbers<[1], [0], [0], [1], [0, 0, 1, 1], [], []>} : vector<256x32xf32>, vector<32x64xf32>, vector<256x64xf32> -> vector<256x64xf32>
    %129 = arith.addf %123, %128 : vector<256x64xf32>
    %c2_116 = arith.constant 2 : index
    %c1_117 = arith.constant 1 : index
    %c0_118 = arith.constant 0 : index
    %130 = vector.load %arg15[%c2_116, %c1_117, %c0_118] : memref<18x18x64xf32, #tpu.memory_space<vmem>>, vector<16x16x32xf32>
    %131 = vector.shape_cast %130 : vector<16x16x32xf32> to vector<256x32xf32>
    %c7_119 = arith.constant 7 : index
    %c0_120 = arith.constant 0 : index
    %c0_121 = arith.constant 0 : index
    %132 = vector.load %arg4[%c7_119, %c0_120, %c0_121] : memref<9x32x64xf32, #tpu.memory_space<vmem>>, vector<1x32x64xf32>
    %133 = vector.shape_cast %132 : vector<1x32x64xf32> to vector<32x64xf32>
    %cst_122 = arith.constant dense<0.000000e+00> : vector<256x64xf32>
    %134 = tpu.matmul %131, %133, %cst_122 {dimension_numbers = #tpu.dot_dimension_numbers<[1], [0], [0], [1], [0, 0, 1, 1], [], []>} : vector<256x32xf32>, vector<32x64xf32>, vector<256x64xf32> -> vector<256x64xf32>
    %135 = arith.addf %129, %134 : vector<256x64xf32>
    %c2_123 = arith.constant 2 : index
    %c2_124 = arith.constant 2 : index
    %c0_125 = arith.constant 0 : index
    %136 = vector.load %arg15[%c2_123, %c2_124, %c0_125] : memref<18x18x64xf32, #tpu.memory_space<vmem>>, vector<16x16x32xf32>
    %137 = vector.shape_cast %136 : vector<16x16x32xf32> to vector<256x32xf32>
    %c8_126 = arith.constant 8 : index
    %c0_127 = arith.constant 0 : index
    %c0_128 = arith.constant 0 : index
    %138 = vector.load %arg4[%c8_126, %c0_127, %c0_128] : memref<9x32x64xf32, #tpu.memory_space<vmem>>, vector<1x32x64xf32>
    %139 = vector.shape_cast %138 : vector<1x32x64xf32> to vector<32x64xf32>
    %cst_129 = arith.constant dense<0.000000e+00> : vector<256x64xf32>
    %140 = tpu.matmul %137, %139, %cst_129 {dimension_numbers = #tpu.dot_dimension_numbers<[1], [0], [0], [1], [0, 0, 1, 1], [], []>} : vector<256x32xf32>, vector<32x64xf32>, vector<256x64xf32> -> vector<256x64xf32>
    %141 = arith.addf %135, %140 : vector<256x64xf32>
    %c0_130 = arith.constant 0 : index
    %c0_131 = arith.constant 0 : index
    %142 = vector.load %arg5[%c0_130, %c0_131] : memref<1x64xf32, #tpu.memory_space<vmem>>, vector<1x64xf32>
    %143 = vector.broadcast %142 : vector<1x64xf32> to vector<256x64xf32>
    %144 = arith.addf %141, %143 : vector<256x64xf32>
    %cst_132 = arith.constant 0.000000e+00 : f32
    %145 = vector.broadcast %cst_132 : f32 to vector<256x64xf32>
    %146 = arith.maximumf %144, %145 : vector<256x64xf32>
    %c0_133 = arith.constant 0 : index
    %c0_134 = arith.constant 0 : index
    %147 = vector.load %arg12[%c0_133, %c0_134] : memref<256x256xf32, #tpu.memory_space<vmem>>, vector<256x256xf32>
    %cst_135 = arith.constant dense<0.000000e+00> : vector<256x64xf32>
    %148 = tpu.matmul %147, %146, %cst_135 {dimension_numbers = #tpu.dot_dimension_numbers<[1], [0], [0], [1], [0, 0, 1, 1], [], []>} : vector<256x256xf32>, vector<256x64xf32>, vector<256x64xf32> -> vector<256x64xf32>
    %149 = vector.extract_strided_slice %148 {offsets = [0, 0], sizes = [64, 64], strides = [1, 1]} : vector<256x64xf32> to vector<64x64xf32>
    %150 = vector.extract_strided_slice %148 {offsets = [64, 0], sizes = [64, 64], strides = [1, 1]} : vector<256x64xf32> to vector<64x64xf32>
    %151 = arith.maximumf %149, %150 : vector<64x64xf32>
    %152 = vector.extract_strided_slice %148 {offsets = [128, 0], sizes = [64, 64], strides = [1, 1]} : vector<256x64xf32> to vector<64x64xf32>
    %153 = vector.extract_strided_slice %148 {offsets = [192, 0], sizes = [64, 64], strides = [1, 1]} : vector<256x64xf32> to vector<64x64xf32>
    %154 = arith.maximumf %152, %153 : vector<64x64xf32>
    %155 = arith.maximumf %151, %154 : vector<64x64xf32>
    %156 = vector.shape_cast %155 : vector<64x64xf32> to vector<8x8x64xf32>
    %cst_136 = arith.constant 0.000000e+00 : f32
    %157 = vector.broadcast %cst_136 : f32 to vector<18x18x64xf32>
    %c0_137 = arith.constant 0 : index
    %c0_138 = arith.constant 0 : index
    %c0_139 = arith.constant 0 : index
    %158 = vector.load %arg15[%c0_137, %c0_138, %c0_139] : memref<18x18x64xf32, #tpu.memory_space<vmem>>, vector<18x18x64xf32>
    tpu.vector_store %arg15[%c0_137, %c0_138, %c0_139], %157 {strides = array<i32>} : memref<18x18x64xf32, #tpu.memory_space<vmem>>, vector<18x18x64xf32>,
    %c1_140 = arith.constant 1 : index
    %c1_141 = arith.constant 1 : index
    %c0_142 = arith.constant 0 : index
    %159 = vector.load %arg15[%c1_140, %c1_141, %c0_142] : memref<18x18x64xf32, #tpu.memory_space<vmem>>, vector<8x8x64xf32>
    tpu.vector_store %arg15[%c1_140, %c1_141, %c0_142], %156 {strides = array<i32>} : memref<18x18x64xf32, #tpu.memory_space<vmem>>, vector<8x8x64xf32>,
    %cst_143 = arith.constant 0.000000e+00 : f32
    %160 = vector.broadcast %cst_143 : f32 to vector<64x64xf32>
    %c0_144 = arith.constant 0 : index
    %c0_145 = arith.constant 0 : index
    %c0_146 = arith.constant 0 : index
    %161 = vector.load %arg15[%c0_144, %c0_145, %c0_146] : memref<18x18x64xf32, #tpu.memory_space<vmem>>, vector<8x8x64xf32>
    %162 = vector.shape_cast %161 : vector<8x8x64xf32> to vector<64x64xf32>
    %c0_147 = arith.constant 0 : index
    %c0_148 = arith.constant 0 : index
    %c0_149 = arith.constant 0 : index
    %163 = vector.load %arg6[%c0_147, %c0_148, %c0_149] : memref<9x64x64xf32, #tpu.memory_space<vmem>>, vector<1x64x64xf32>
    %164 = vector.shape_cast %163 : vector<1x64x64xf32> to vector<64x64xf32>
    %cst_150 = arith.constant dense<0.000000e+00> : vector<64x64xf32>
    %165 = tpu.matmul %162, %164, %cst_150 {dimension_numbers = #tpu.dot_dimension_numbers<[1], [0], [0], [1], [0, 0, 1, 1], [], []>} : vector<64x64xf32>, vector<64x64xf32>, vector<64x64xf32> -> vector<64x64xf32>
    %166 = arith.addf %160, %165 : vector<64x64xf32>
    %c0_151 = arith.constant 0 : index
    %c1_152 = arith.constant 1 : index
    %c0_153 = arith.constant 0 : index
    %167 = vector.load %arg15[%c0_151, %c1_152, %c0_153] : memref<18x18x64xf32, #tpu.memory_space<vmem>>, vector<8x8x64xf32>
    %168 = vector.shape_cast %167 : vector<8x8x64xf32> to vector<64x64xf32>
    %c1_154 = arith.constant 1 : index
    %c0_155 = arith.constant 0 : index
    %c0_156 = arith.constant 0 : index
    %169 = vector.load %arg6[%c1_154, %c0_155, %c0_156] : memref<9x64x64xf32, #tpu.memory_space<vmem>>, vector<1x64x64xf32>
    %170 = vector.shape_cast %169 : vector<1x64x64xf32> to vector<64x64xf32>
    %cst_157 = arith.constant dense<0.000000e+00> : vector<64x64xf32>
    %171 = tpu.matmul %168, %170, %cst_157 {dimension_numbers = #tpu.dot_dimension_numbers<[1], [0], [0], [1], [0, 0, 1, 1], [], []>} : vector<64x64xf32>, vector<64x64xf32>, vector<64x64xf32> -> vector<64x64xf32>
    %172 = arith.addf %166, %171 : vector<64x64xf32>
    %c0_158 = arith.constant 0 : index
    %c2_159 = arith.constant 2 : index
    %c0_160 = arith.constant 0 : index
    %173 = vector.load %arg15[%c0_158, %c2_159, %c0_160] : memref<18x18x64xf32, #tpu.memory_space<vmem>>, vector<8x8x64xf32>
    %174 = vector.shape_cast %173 : vector<8x8x64xf32> to vector<64x64xf32>
    %c2_161 = arith.constant 2 : index
    %c0_162 = arith.constant 0 : index
    %c0_163 = arith.constant 0 : index
    %175 = vector.load %arg6[%c2_161, %c0_162, %c0_163] : memref<9x64x64xf32, #tpu.memory_space<vmem>>, vector<1x64x64xf32>
    %176 = vector.shape_cast %175 : vector<1x64x64xf32> to vector<64x64xf32>
    %cst_164 = arith.constant dense<0.000000e+00> : vector<64x64xf32>
    %177 = tpu.matmul %174, %176, %cst_164 {dimension_numbers = #tpu.dot_dimension_numbers<[1], [0], [0], [1], [0, 0, 1, 1], [], []>} : vector<64x64xf32>, vector<64x64xf32>, vector<64x64xf32> -> vector<64x64xf32>
    %178 = arith.addf %172, %177 : vector<64x64xf32>
    %c1_165 = arith.constant 1 : index
    %c0_166 = arith.constant 0 : index
    %c0_167 = arith.constant 0 : index
    %179 = vector.load %arg15[%c1_165, %c0_166, %c0_167] : memref<18x18x64xf32, #tpu.memory_space<vmem>>, vector<8x8x64xf32>
    %180 = vector.shape_cast %179 : vector<8x8x64xf32> to vector<64x64xf32>
    %c3_168 = arith.constant 3 : index
    %c0_169 = arith.constant 0 : index
    %c0_170 = arith.constant 0 : index
    %181 = vector.load %arg6[%c3_168, %c0_169, %c0_170] : memref<9x64x64xf32, #tpu.memory_space<vmem>>, vector<1x64x64xf32>
    %182 = vector.shape_cast %181 : vector<1x64x64xf32> to vector<64x64xf32>
    %cst_171 = arith.constant dense<0.000000e+00> : vector<64x64xf32>
    %183 = tpu.matmul %180, %182, %cst_171 {dimension_numbers = #tpu.dot_dimension_numbers<[1], [0], [0], [1], [0, 0, 1, 1], [], []>} : vector<64x64xf32>, vector<64x64xf32>, vector<64x64xf32> -> vector<64x64xf32>
    %184 = arith.addf %178, %183 : vector<64x64xf32>
    %c1_172 = arith.constant 1 : index
    %c1_173 = arith.constant 1 : index
    %c0_174 = arith.constant 0 : index
    %185 = vector.load %arg15[%c1_172, %c1_173, %c0_174] : memref<18x18x64xf32, #tpu.memory_space<vmem>>, vector<8x8x64xf32>
    %186 = vector.shape_cast %185 : vector<8x8x64xf32> to vector<64x64xf32>
    %c4_175 = arith.constant 4 : index
    %c0_176 = arith.constant 0 : index
    %c0_177 = arith.constant 0 : index
    %187 = vector.load %arg6[%c4_175, %c0_176, %c0_177] : memref<9x64x64xf32, #tpu.memory_space<vmem>>, vector<1x64x64xf32>
    %188 = vector.shape_cast %187 : vector<1x64x64xf32> to vector<64x64xf32>
    %cst_178 = arith.constant dense<0.000000e+00> : vector<64x64xf32>
    %189 = tpu.matmul %186, %188, %cst_178 {dimension_numbers = #tpu.dot_dimension_numbers<[1], [0], [0], [1], [0, 0, 1, 1], [], []>} : vector<64x64xf32>, vector<64x64xf32>, vector<64x64xf32> -> vector<64x64xf32>
    %190 = arith.addf %184, %189 : vector<64x64xf32>
    %c1_179 = arith.constant 1 : index
    %c2_180 = arith.constant 2 : index
    %c0_181 = arith.constant 0 : index
    %191 = vector.load %arg15[%c1_179, %c2_180, %c0_181] : memref<18x18x64xf32, #tpu.memory_space<vmem>>, vector<8x8x64xf32>
    %192 = vector.shape_cast %191 : vector<8x8x64xf32> to vector<64x64xf32>
    %c5_182 = arith.constant 5 : index
    %c0_183 = arith.constant 0 : index
    %c0_184 = arith.constant 0 : index
    %193 = vector.load %arg6[%c5_182, %c0_183, %c0_184] : memref<9x64x64xf32, #tpu.memory_space<vmem>>, vector<1x64x64xf32>
    %194 = vector.shape_cast %193 : vector<1x64x64xf32> to vector<64x64xf32>
    %cst_185 = arith.constant dense<0.000000e+00> : vector<64x64xf32>
    %195 = tpu.matmul %192, %194, %cst_185 {dimension_numbers = #tpu.dot_dimension_numbers<[1], [0], [0], [1], [0, 0, 1, 1], [], []>} : vector<64x64xf32>, vector<64x64xf32>, vector<64x64xf32> -> vector<64x64xf32>
    %196 = arith.addf %190, %195 : vector<64x64xf32>
    %c2_186 = arith.constant 2 : index
    %c0_187 = arith.constant 0 : index
    %c0_188 = arith.constant 0 : index
    %197 = vector.load %arg15[%c2_186, %c0_187, %c0_188] : memref<18x18x64xf32, #tpu.memory_space<vmem>>, vector<8x8x64xf32>
    %198 = vector.shape_cast %197 : vector<8x8x64xf32> to vector<64x64xf32>
    %c6_189 = arith.constant 6 : index
    %c0_190 = arith.constant 0 : index
    %c0_191 = arith.constant 0 : index
    %199 = vector.load %arg6[%c6_189, %c0_190, %c0_191] : memref<9x64x64xf32, #tpu.memory_space<vmem>>, vector<1x64x64xf32>
    %200 = vector.shape_cast %199 : vector<1x64x64xf32> to vector<64x64xf32>
    %cst_192 = arith.constant dense<0.000000e+00> : vector<64x64xf32>
    %201 = tpu.matmul %198, %200, %cst_192 {dimension_numbers = #tpu.dot_dimension_numbers<[1], [0], [0], [1], [0, 0, 1, 1], [], []>} : vector<64x64xf32>, vector<64x64xf32>, vector<64x64xf32> -> vector<64x64xf32>
    %202 = arith.addf %196, %201 : vector<64x64xf32>
    %c2_193 = arith.constant 2 : index
    %c1_194 = arith.constant 1 : index
    %c0_195 = arith.constant 0 : index
    %203 = vector.load %arg15[%c2_193, %c1_194, %c0_195] : memref<18x18x64xf32, #tpu.memory_space<vmem>>, vector<8x8x64xf32>
    %204 = vector.shape_cast %203 : vector<8x8x64xf32> to vector<64x64xf32>
    %c7_196 = arith.constant 7 : index
    %c0_197 = arith.constant 0 : index
    %c0_198 = arith.constant 0 : index
    %205 = vector.load %arg6[%c7_196, %c0_197, %c0_198] : memref<9x64x64xf32, #tpu.memory_space<vmem>>, vector<1x64x64xf32>
    %206 = vector.shape_cast %205 : vector<1x64x64xf32> to vector<64x64xf32>
    %cst_199 = arith.constant dense<0.000000e+00> : vector<64x64xf32>
    %207 = tpu.matmul %204, %206, %cst_199 {dimension_numbers = #tpu.dot_dimension_numbers<[1], [0], [0], [1], [0, 0, 1, 1], [], []>} : vector<64x64xf32>, vector<64x64xf32>, vector<64x64xf32> -> vector<64x64xf32>
    %208 = arith.addf %202, %207 : vector<64x64xf32>
    %c2_200 = arith.constant 2 : index
    %c2_201 = arith.constant 2 : index
    %c0_202 = arith.constant 0 : index
    %209 = vector.load %arg15[%c2_200, %c2_201, %c0_202] : memref<18x18x64xf32, #tpu.memory_space<vmem>>, vector<8x8x64xf32>
    %210 = vector.shape_cast %209 : vector<8x8x64xf32> to vector<64x64xf32>
    %c8_203 = arith.constant 8 : index
    %c0_204 = arith.constant 0 : index
    %c0_205 = arith.constant 0 : index
    %211 = vector.load %arg6[%c8_203, %c0_204, %c0_205] : memref<9x64x64xf32, #tpu.memory_space<vmem>>, vector<1x64x64xf32>
    %212 = vector.shape_cast %211 : vector<1x64x64xf32> to vector<64x64xf32>
    %cst_206 = arith.constant dense<0.000000e+00> : vector<64x64xf32>
    %213 = tpu.matmul %210, %212, %cst_206 {dimension_numbers = #tpu.dot_dimension_numbers<[1], [0], [0], [1], [0, 0, 1, 1], [], []>} : vector<64x64xf32>, vector<64x64xf32>, vector<64x64xf32> -> vector<64x64xf32>
    %214 = arith.addf %208, %213 : vector<64x64xf32>
    %c0_207 = arith.constant 0 : index
    %c0_208 = arith.constant 0 : index
    %215 = vector.load %arg7[%c0_207, %c0_208] : memref<1x64xf32, #tpu.memory_space<vmem>>, vector<1x64xf32>
    %216 = vector.broadcast %215 : vector<1x64xf32> to vector<64x64xf32>
    %217 = arith.addf %214, %216 : vector<64x64xf32>
    %cst_209 = arith.constant 0.000000e+00 : f32
    %218 = vector.broadcast %cst_209 : f32 to vector<64x64xf32>
    %219 = arith.maximumf %217, %218 : vector<64x64xf32>
    %c0_210 = arith.constant 0 : index
    %c0_211 = arith.constant 0 : index
    %220 = vector.load %arg13[%c0_210, %c0_211] : memref<256x64xf32, #tpu.memory_space<vmem>>, vector<256x64xf32>
    %cst_212 = arith.constant dense<0.000000e+00> : vector<256x64xf32>
    %221 = tpu.matmul %220, %219, %cst_212 {dimension_numbers = #tpu.dot_dimension_numbers<[1], [0], [0], [1], [0, 0, 1, 1], [], []>} : vector<256x64xf32>, vector<64x64xf32>, vector<256x64xf32> -> vector<256x64xf32>
    %222 = vector.shape_cast %221 : vector<256x64xf32> to vector<16x16x64xf32>
    %cst_213 = arith.constant 0.000000e+00 : f32
    %223 = vector.broadcast %cst_213 : f32 to vector<18x18x64xf32>
    %c0_214 = arith.constant 0 : index
    %c0_215 = arith.constant 0 : index
    %c0_216 = arith.constant 0 : index
    %224 = vector.load %arg15[%c0_214, %c0_215, %c0_216] : memref<18x18x64xf32, #tpu.memory_space<vmem>>, vector<18x18x64xf32>
    tpu.vector_store %arg15[%c0_214, %c0_215, %c0_216], %223 {strides = array<i32>} : memref<18x18x64xf32, #tpu.memory_space<vmem>>, vector<18x18x64xf32>,
    %c1_217 = arith.constant 1 : index
    %c1_218 = arith.constant 1 : index
    %c0_219 = arith.constant 0 : index
    %225 = vector.load %arg15[%c1_217, %c1_218, %c0_219] : memref<18x18x64xf32, #tpu.memory_space<vmem>>, vector<16x16x64xf32>
    tpu.vector_store %arg15[%c1_217, %c1_218, %c0_219], %222 {strides = array<i32>} : memref<18x18x64xf32, #tpu.memory_space<vmem>>, vector<16x16x64xf32>,
    %cst_220 = arith.constant 0.000000e+00 : f32
    %226 = vector.broadcast %cst_220 : f32 to vector<256x32xf32>
    %c0_221 = arith.constant 0 : index
    %c0_222 = arith.constant 0 : index
    %c0_223 = arith.constant 0 : index
    %227 = vector.load %arg15[%c0_221, %c0_222, %c0_223] : memref<18x18x64xf32, #tpu.memory_space<vmem>>, vector<16x16x64xf32>
    %228 = vector.shape_cast %227 : vector<16x16x64xf32> to vector<256x64xf32>
    %c0_224 = arith.constant 0 : index
    %c0_225 = arith.constant 0 : index
    %c0_226 = arith.constant 0 : index
    %229 = vector.load %arg8[%c0_224, %c0_225, %c0_226] : memref<9x64x32xf32, #tpu.memory_space<vmem>>, vector<1x64x32xf32>
    %230 = vector.shape_cast %229 : vector<1x64x32xf32> to vector<64x32xf32>
    %cst_227 = arith.constant dense<0.000000e+00> : vector<256x32xf32>
    %231 = tpu.matmul %228, %230, %cst_227 {dimension_numbers = #tpu.dot_dimension_numbers<[1], [0], [0], [1], [0, 0, 1, 1], [], []>} : vector<256x64xf32>, vector<64x32xf32>, vector<256x32xf32> -> vector<256x32xf32>
    %232 = arith.addf %226, %231 : vector<256x32xf32>
    %c0_228 = arith.constant 0 : index
    %c1_229 = arith.constant 1 : index
    %c0_230 = arith.constant 0 : index
    %233 = vector.load %arg15[%c0_228, %c1_229, %c0_230] : memref<18x18x64xf32, #tpu.memory_space<vmem>>, vector<16x16x64xf32>
    %234 = vector.shape_cast %233 : vector<16x16x64xf32> to vector<256x64xf32>
    %c1_231 = arith.constant 1 : index
    %c0_232 = arith.constant 0 : index
    %c0_233 = arith.constant 0 : index
    %235 = vector.load %arg8[%c1_231, %c0_232, %c0_233] : memref<9x64x32xf32, #tpu.memory_space<vmem>>, vector<1x64x32xf32>
    %236 = vector.shape_cast %235 : vector<1x64x32xf32> to vector<64x32xf32>
    %cst_234 = arith.constant dense<0.000000e+00> : vector<256x32xf32>
    %237 = tpu.matmul %234, %236, %cst_234 {dimension_numbers = #tpu.dot_dimension_numbers<[1], [0], [0], [1], [0, 0, 1, 1], [], []>} : vector<256x64xf32>, vector<64x32xf32>, vector<256x32xf32> -> vector<256x32xf32>
    %238 = arith.addf %232, %237 : vector<256x32xf32>
    %c0_235 = arith.constant 0 : index
    %c2_236 = arith.constant 2 : index
    %c0_237 = arith.constant 0 : index
    %239 = vector.load %arg15[%c0_235, %c2_236, %c0_237] : memref<18x18x64xf32, #tpu.memory_space<vmem>>, vector<16x16x64xf32>
    %240 = vector.shape_cast %239 : vector<16x16x64xf32> to vector<256x64xf32>
    %c2_238 = arith.constant 2 : index
    %c0_239 = arith.constant 0 : index
    %c0_240 = arith.constant 0 : index
    %241 = vector.load %arg8[%c2_238, %c0_239, %c0_240] : memref<9x64x32xf32, #tpu.memory_space<vmem>>, vector<1x64x32xf32>
    %242 = vector.shape_cast %241 : vector<1x64x32xf32> to vector<64x32xf32>
    %cst_241 = arith.constant dense<0.000000e+00> : vector<256x32xf32>
    %243 = tpu.matmul %240, %242, %cst_241 {dimension_numbers = #tpu.dot_dimension_numbers<[1], [0], [0], [1], [0, 0, 1, 1], [], []>} : vector<256x64xf32>, vector<64x32xf32>, vector<256x32xf32> -> vector<256x32xf32>
    %244 = arith.addf %238, %243 : vector<256x32xf32>
    %c1_242 = arith.constant 1 : index
    %c0_243 = arith.constant 0 : index
    %c0_244 = arith.constant 0 : index
    %245 = vector.load %arg15[%c1_242, %c0_243, %c0_244] : memref<18x18x64xf32, #tpu.memory_space<vmem>>, vector<16x16x64xf32>
    %246 = vector.shape_cast %245 : vector<16x16x64xf32> to vector<256x64xf32>
    %c3_245 = arith.constant 3 : index
    %c0_246 = arith.constant 0 : index
    %c0_247 = arith.constant 0 : index
    %247 = vector.load %arg8[%c3_245, %c0_246, %c0_247] : memref<9x64x32xf32, #tpu.memory_space<vmem>>, vector<1x64x32xf32>
    %248 = vector.shape_cast %247 : vector<1x64x32xf32> to vector<64x32xf32>
    %cst_248 = arith.constant dense<0.000000e+00> : vector<256x32xf32>
    %249 = tpu.matmul %246, %248, %cst_248 {dimension_numbers = #tpu.dot_dimension_numbers<[1], [0], [0], [1], [0, 0, 1, 1], [], []>} : vector<256x64xf32>, vector<64x32xf32>, vector<256x32xf32> -> vector<256x32xf32>
    %250 = arith.addf %244, %249 : vector<256x32xf32>
    %c1_249 = arith.constant 1 : index
    %c1_250 = arith.constant 1 : index
    %c0_251 = arith.constant 0 : index
    %251 = vector.load %arg15[%c1_249, %c1_250, %c0_251] : memref<18x18x64xf32, #tpu.memory_space<vmem>>, vector<16x16x64xf32>
    %252 = vector.shape_cast %251 : vector<16x16x64xf32> to vector<256x64xf32>
    %c4_252 = arith.constant 4 : index
    %c0_253 = arith.constant 0 : index
    %c0_254 = arith.constant 0 : index
    %253 = vector.load %arg8[%c4_252, %c0_253, %c0_254] : memref<9x64x32xf32, #tpu.memory_space<vmem>>, vector<1x64x32xf32>
    %254 = vector.shape_cast %253 : vector<1x64x32xf32> to vector<64x32xf32>
    %cst_255 = arith.constant dense<0.000000e+00> : vector<256x32xf32>
    %255 = tpu.matmul %252, %254, %cst_255 {dimension_numbers = #tpu.dot_dimension_numbers<[1], [0], [0], [1], [0, 0, 1, 1], [], []>} : vector<256x64xf32>, vector<64x32xf32>, vector<256x32xf32> -> vector<256x32xf32>
    %256 = arith.addf %250, %255 : vector<256x32xf32>
    %c1_256 = arith.constant 1 : index
    %c2_257 = arith.constant 2 : index
    %c0_258 = arith.constant 0 : index
    %257 = vector.load %arg15[%c1_256, %c2_257, %c0_258] : memref<18x18x64xf32, #tpu.memory_space<vmem>>, vector<16x16x64xf32>
    %258 = vector.shape_cast %257 : vector<16x16x64xf32> to vector<256x64xf32>
    %c5_259 = arith.constant 5 : index
    %c0_260 = arith.constant 0 : index
    %c0_261 = arith.constant 0 : index
    %259 = vector.load %arg8[%c5_259, %c0_260, %c0_261] : memref<9x64x32xf32, #tpu.memory_space<vmem>>, vector<1x64x32xf32>
    %260 = vector.shape_cast %259 : vector<1x64x32xf32> to vector<64x32xf32>
    %cst_262 = arith.constant dense<0.000000e+00> : vector<256x32xf32>
    %261 = tpu.matmul %258, %260, %cst_262 {dimension_numbers = #tpu.dot_dimension_numbers<[1], [0], [0], [1], [0, 0, 1, 1], [], []>} : vector<256x64xf32>, vector<64x32xf32>, vector<256x32xf32> -> vector<256x32xf32>
    %262 = arith.addf %256, %261 : vector<256x32xf32>
    %c2_263 = arith.constant 2 : index
    %c0_264 = arith.constant 0 : index
    %c0_265 = arith.constant 0 : index
    %263 = vector.load %arg15[%c2_263, %c0_264, %c0_265] : memref<18x18x64xf32, #tpu.memory_space<vmem>>, vector<16x16x64xf32>
    %264 = vector.shape_cast %263 : vector<16x16x64xf32> to vector<256x64xf32>
    %c6_266 = arith.constant 6 : index
    %c0_267 = arith.constant 0 : index
    %c0_268 = arith.constant 0 : index
    %265 = vector.load %arg8[%c6_266, %c0_267, %c0_268] : memref<9x64x32xf32, #tpu.memory_space<vmem>>, vector<1x64x32xf32>
    %266 = vector.shape_cast %265 : vector<1x64x32xf32> to vector<64x32xf32>
    %cst_269 = arith.constant dense<0.000000e+00> : vector<256x32xf32>
    %267 = tpu.matmul %264, %266, %cst_269 {dimension_numbers = #tpu.dot_dimension_numbers<[1], [0], [0], [1], [0, 0, 1, 1], [], []>} : vector<256x64xf32>, vector<64x32xf32>, vector<256x32xf32> -> vector<256x32xf32>
    %268 = arith.addf %262, %267 : vector<256x32xf32>
    %c2_270 = arith.constant 2 : index
    %c1_271 = arith.constant 1 : index
    %c0_272 = arith.constant 0 : index
    %269 = vector.load %arg15[%c2_270, %c1_271, %c0_272] : memref<18x18x64xf32, #tpu.memory_space<vmem>>, vector<16x16x64xf32>
    %270 = vector.shape_cast %269 : vector<16x16x64xf32> to vector<256x64xf32>
    %c7_273 = arith.constant 7 : index
    %c0_274 = arith.constant 0 : index
    %c0_275 = arith.constant 0 : index
    %271 = vector.load %arg8[%c7_273, %c0_274, %c0_275] : memref<9x64x32xf32, #tpu.memory_space<vmem>>, vector<1x64x32xf32>
    %272 = vector.shape_cast %271 : vector<1x64x32xf32> to vector<64x32xf32>
    %cst_276 = arith.constant dense<0.000000e+00> : vector<256x32xf32>
    %273 = tpu.matmul %270, %272, %cst_276 {dimension_numbers = #tpu.dot_dimension_numbers<[1], [0], [0], [1], [0, 0, 1, 1], [], []>} : vector<256x64xf32>, vector<64x32xf32>, vector<256x32xf32> -> vector<256x32xf32>
    %274 = arith.addf %268, %273 : vector<256x32xf32>
    %c2_277 = arith.constant 2 : index
    %c2_278 = arith.constant 2 : index
    %c0_279 = arith.constant 0 : index
    %275 = vector.load %arg15[%c2_277, %c2_278, %c0_279] : memref<18x18x64xf32, #tpu.memory_space<vmem>>, vector<16x16x64xf32>
    %276 = vector.shape_cast %275 : vector<16x16x64xf32> to vector<256x64xf32>
    %c8_280 = arith.constant 8 : index
    %c0_281 = arith.constant 0 : index
    %c0_282 = arith.constant 0 : index
    %277 = vector.load %arg8[%c8_280, %c0_281, %c0_282] : memref<9x64x32xf32, #tpu.memory_space<vmem>>, vector<1x64x32xf32>
    %278 = vector.shape_cast %277 : vector<1x64x32xf32> to vector<64x32xf32>
    %cst_283 = arith.constant dense<0.000000e+00> : vector<256x32xf32>
    %279 = tpu.matmul %276, %278, %cst_283 {dimension_numbers = #tpu.dot_dimension_numbers<[1], [0], [0], [1], [0, 0, 1, 1], [], []>} : vector<256x64xf32>, vector<64x32xf32>, vector<256x32xf32> -> vector<256x32xf32>
    %280 = arith.addf %274, %279 : vector<256x32xf32>
    %c0_284 = arith.constant 0 : index
    %c0_285 = arith.constant 0 : index
    %281 = vector.load %arg9[%c0_284, %c0_285] : memref<1x32xf32, #tpu.memory_space<vmem>>, vector<1x32xf32>
    %282 = vector.broadcast %281 : vector<1x32xf32> to vector<256x32xf32>
    %283 = arith.addf %280, %282 : vector<256x32xf32>
    %cst_286 = arith.constant 0.000000e+00 : f32
    %284 = vector.broadcast %cst_286 : f32 to vector<256x32xf32>
    %285 = arith.maximumf %283, %284 : vector<256x32xf32>
    %286 = vector.shape_cast %285 : vector<256x32xf32> to vector<16x16x32xf32>
    %cst_287 = arith.constant 0.000000e+00 : f32
    %287 = vector.broadcast %cst_287 : f32 to vector<18x18x64xf32>
    %c0_288 = arith.constant 0 : index
    %c0_289 = arith.constant 0 : index
    %c0_290 = arith.constant 0 : index
    %288 = vector.load %arg15[%c0_288, %c0_289, %c0_290] : memref<18x18x64xf32, #tpu.memory_space<vmem>>, vector<18x18x64xf32>
    tpu.vector_store %arg15[%c0_288, %c0_289, %c0_290], %287 {strides = array<i32>} : memref<18x18x64xf32, #tpu.memory_space<vmem>>, vector<18x18x64xf32>,
    %c1_291 = arith.constant 1 : index
    %c1_292 = arith.constant 1 : index
    %c0_293 = arith.constant 0 : index
    %289 = vector.load %arg15[%c1_291, %c1_292, %c0_293] : memref<18x18x64xf32, #tpu.memory_space<vmem>>, vector<16x16x32xf32>
    tpu.vector_store %arg15[%c1_291, %c1_292, %c0_293], %286 {strides = array<i32>} : memref<18x18x64xf32, #tpu.memory_space<vmem>>, vector<16x16x32xf32>,
    %cst_294 = arith.constant 0.000000e+00 : f32
    %290 = vector.broadcast %cst_294 : f32 to vector<256x1xf32>
    %c0_295 = arith.constant 0 : index
    %c0_296 = arith.constant 0 : index
    %c0_297 = arith.constant 0 : index
    %291 = vector.load %arg15[%c0_295, %c0_296, %c0_297] : memref<18x18x64xf32, #tpu.memory_space<vmem>>, vector<16x16x32xf32>
    %292 = vector.shape_cast %291 : vector<16x16x32xf32> to vector<256x32xf32>
    %c0_298 = arith.constant 0 : index
    %c0_299 = arith.constant 0 : index
    %c0_300 = arith.constant 0 : index
    %293 = vector.load %arg10[%c0_298, %c0_299, %c0_300] : memref<9x32x1xf32, #tpu.memory_space<vmem>>, vector<1x32x1xf32>
    %294 = vector.shape_cast %293 : vector<1x32x1xf32> to vector<32x1xf32>
    %cst_301 = arith.constant dense<0.000000e+00> : vector<256x1xf32>
    %295 = tpu.matmul %292, %294, %cst_301 {dimension_numbers = #tpu.dot_dimension_numbers<[1], [0], [0], [1], [0, 0, 1, 1], [], []>} : vector<256x32xf32>, vector<32x1xf32>, vector<256x1xf32> -> vector<256x1xf32>
    %296 = arith.addf %290, %295 : vector<256x1xf32>
    %c0_302 = arith.constant 0 : index
    %c1_303 = arith.constant 1 : index
    %c0_304 = arith.constant 0 : index
    %297 = vector.load %arg15[%c0_302, %c1_303, %c0_304] : memref<18x18x64xf32, #tpu.memory_space<vmem>>, vector<16x16x32xf32>
    %298 = vector.shape_cast %297 : vector<16x16x32xf32> to vector<256x32xf32>
    %c1_305 = arith.constant 1 : index
    %c0_306 = arith.constant 0 : index
    %c0_307 = arith.constant 0 : index
    %299 = vector.load %arg10[%c1_305, %c0_306, %c0_307] : memref<9x32x1xf32, #tpu.memory_space<vmem>>, vector<1x32x1xf32>
    %300 = vector.shape_cast %299 : vector<1x32x1xf32> to vector<32x1xf32>
    %cst_308 = arith.constant dense<0.000000e+00> : vector<256x1xf32>
    %301 = tpu.matmul %298, %300, %cst_308 {dimension_numbers = #tpu.dot_dimension_numbers<[1], [0], [0], [1], [0, 0, 1, 1], [], []>} : vector<256x32xf32>, vector<32x1xf32>, vector<256x1xf32> -> vector<256x1xf32>
    %302 = arith.addf %296, %301 : vector<256x1xf32>
    %c0_309 = arith.constant 0 : index
    %c2_310 = arith.constant 2 : index
    %c0_311 = arith.constant 0 : index
    %303 = vector.load %arg15[%c0_309, %c2_310, %c0_311] : memref<18x18x64xf32, #tpu.memory_space<vmem>>, vector<16x16x32xf32>
    %304 = vector.shape_cast %303 : vector<16x16x32xf32> to vector<256x32xf32>
    %c2_312 = arith.constant 2 : index
    %c0_313 = arith.constant 0 : index
    %c0_314 = arith.constant 0 : index
    %305 = vector.load %arg10[%c2_312, %c0_313, %c0_314] : memref<9x32x1xf32, #tpu.memory_space<vmem>>, vector<1x32x1xf32>
    %306 = vector.shape_cast %305 : vector<1x32x1xf32> to vector<32x1xf32>
    %cst_315 = arith.constant dense<0.000000e+00> : vector<256x1xf32>
    %307 = tpu.matmul %304, %306, %cst_315 {dimension_numbers = #tpu.dot_dimension_numbers<[1], [0], [0], [1], [0, 0, 1, 1], [], []>} : vector<256x32xf32>, vector<32x1xf32>, vector<256x1xf32> -> vector<256x1xf32>
    %308 = arith.addf %302, %307 : vector<256x1xf32>
    %c1_316 = arith.constant 1 : index
    %c0_317 = arith.constant 0 : index
    %c0_318 = arith.constant 0 : index
    %309 = vector.load %arg15[%c1_316, %c0_317, %c0_318] : memref<18x18x64xf32, #tpu.memory_space<vmem>>, vector<16x16x32xf32>
    %310 = vector.shape_cast %309 : vector<16x16x32xf32> to vector<256x32xf32>
    %c3_319 = arith.constant 3 : index
    %c0_320 = arith.constant 0 : index
    %c0_321 = arith.constant 0 : index
    %311 = vector.load %arg10[%c3_319, %c0_320, %c0_321] : memref<9x32x1xf32, #tpu.memory_space<vmem>>, vector<1x32x1xf32>
    %312 = vector.shape_cast %311 : vector<1x32x1xf32> to vector<32x1xf32>
    %cst_322 = arith.constant dense<0.000000e+00> : vector<256x1xf32>
    %313 = tpu.matmul %310, %312, %cst_322 {dimension_numbers = #tpu.dot_dimension_numbers<[1], [0], [0], [1], [0, 0, 1, 1], [], []>} : vector<256x32xf32>, vector<32x1xf32>, vector<256x1xf32> -> vector<256x1xf32>
    %314 = arith.addf %308, %313 : vector<256x1xf32>
    %c1_323 = arith.constant 1 : index
    %c1_324 = arith.constant 1 : index
    %c0_325 = arith.constant 0 : index
    %315 = vector.load %arg15[%c1_323, %c1_324, %c0_325] : memref<18x18x64xf32, #tpu.memory_space<vmem>>, vector<16x16x32xf32>
    %316 = vector.shape_cast %315 : vector<16x16x32xf32> to vector<256x32xf32>
    %c4_326 = arith.constant 4 : index
    %c0_327 = arith.constant 0 : index
    %c0_328 = arith.constant 0 : index
    %317 = vector.load %arg10[%c4_326, %c0_327, %c0_328] : memref<9x32x1xf32, #tpu.memory_space<vmem>>, vector<1x32x1xf32>
    %318 = vector.shape_cast %317 : vector<1x32x1xf32> to vector<32x1xf32>
    %cst_329 = arith.constant dense<0.000000e+00> : vector<256x1xf32>
    %319 = tpu.matmul %316, %318, %cst_329 {dimension_numbers = #tpu.dot_dimension_numbers<[1], [0], [0], [1], [0, 0, 1, 1], [], []>} : vector<256x32xf32>, vector<32x1xf32>, vector<256x1xf32> -> vector<256x1xf32>
    %320 = arith.addf %314, %319 : vector<256x1xf32>
    %c1_330 = arith.constant 1 : index
    %c2_331 = arith.constant 2 : index
    %c0_332 = arith.constant 0 : index
    %321 = vector.load %arg15[%c1_330, %c2_331, %c0_332] : memref<18x18x64xf32, #tpu.memory_space<vmem>>, vector<16x16x32xf32>
    %322 = vector.shape_cast %321 : vector<16x16x32xf32> to vector<256x32xf32>
    %c5_333 = arith.constant 5 : index
    %c0_334 = arith.constant 0 : index
    %c0_335 = arith.constant 0 : index
    %323 = vector.load %arg10[%c5_333, %c0_334, %c0_335] : memref<9x32x1xf32, #tpu.memory_space<vmem>>, vector<1x32x1xf32>
    %324 = vector.shape_cast %323 : vector<1x32x1xf32> to vector<32x1xf32>
    %cst_336 = arith.constant dense<0.000000e+00> : vector<256x1xf32>
    %325 = tpu.matmul %322, %324, %cst_336 {dimension_numbers = #tpu.dot_dimension_numbers<[1], [0], [0], [1], [0, 0, 1, 1], [], []>} : vector<256x32xf32>, vector<32x1xf32>, vector<256x1xf32> -> vector<256x1xf32>
    %326 = arith.addf %320, %325 : vector<256x1xf32>
    %c2_337 = arith.constant 2 : index
    %c0_338 = arith.constant 0 : index
    %c0_339 = arith.constant 0 : index
    %327 = vector.load %arg15[%c2_337, %c0_338, %c0_339] : memref<18x18x64xf32, #tpu.memory_space<vmem>>, vector<16x16x32xf32>
    %328 = vector.shape_cast %327 : vector<16x16x32xf32> to vector<256x32xf32>
    %c6_340 = arith.constant 6 : index
    %c0_341 = arith.constant 0 : index
    %c0_342 = arith.constant 0 : index
    %329 = vector.load %arg10[%c6_340, %c0_341, %c0_342] : memref<9x32x1xf32, #tpu.memory_space<vmem>>, vector<1x32x1xf32>
    %330 = vector.shape_cast %329 : vector<1x32x1xf32> to vector<32x1xf32>
    %cst_343 = arith.constant dense<0.000000e+00> : vector<256x1xf32>
    %331 = tpu.matmul %328, %330, %cst_343 {dimension_numbers = #tpu.dot_dimension_numbers<[1], [0], [0], [1], [0, 0, 1, 1], [], []>} : vector<256x32xf32>, vector<32x1xf32>, vector<256x1xf32> -> vector<256x1xf32>
    %332 = arith.addf %326, %331 : vector<256x1xf32>
    %c2_344 = arith.constant 2 : index
    %c1_345 = arith.constant 1 : index
    %c0_346 = arith.constant 0 : index
    %333 = vector.load %arg15[%c2_344, %c1_345, %c0_346] : memref<18x18x64xf32, #tpu.memory_space<vmem>>, vector<16x16x32xf32>
    %334 = vector.shape_cast %333 : vector<16x16x32xf32> to vector<256x32xf32>
    %c7_347 = arith.constant 7 : index
    %c0_348 = arith.constant 0 : index
    %c0_349 = arith.constant 0 : index
    %335 = vector.load %arg10[%c7_347, %c0_348, %c0_349] : memref<9x32x1xf32, #tpu.memory_space<vmem>>, vector<1x32x1xf32>
    %336 = vector.shape_cast %335 : vector<1x32x1xf32> to vector<32x1xf32>
    %cst_350 = arith.constant dense<0.000000e+00> : vector<256x1xf32>
    %337 = tpu.matmul %334, %336, %cst_350 {dimension_numbers = #tpu.dot_dimension_numbers<[1], [0], [0], [1], [0, 0, 1, 1], [], []>} : vector<256x32xf32>, vector<32x1xf32>, vector<256x1xf32> -> vector<256x1xf32>
    %338 = arith.addf %332, %337 : vector<256x1xf32>
    %c2_351 = arith.constant 2 : index
    %c2_352 = arith.constant 2 : index
    %c0_353 = arith.constant 0 : index
    %339 = vector.load %arg15[%c2_351, %c2_352, %c0_353] : memref<18x18x64xf32, #tpu.memory_space<vmem>>, vector<16x16x32xf32>
    %340 = vector.shape_cast %339 : vector<16x16x32xf32> to vector<256x32xf32>
    %c8_354 = arith.constant 8 : index
    %c0_355 = arith.constant 0 : index
    %c0_356 = arith.constant 0 : index
    %341 = vector.load %arg10[%c8_354, %c0_355, %c0_356] : memref<9x32x1xf32, #tpu.memory_space<vmem>>, vector<1x32x1xf32>
    %342 = vector.shape_cast %341 : vector<1x32x1xf32> to vector<32x1xf32>
    %cst_357 = arith.constant dense<0.000000e+00> : vector<256x1xf32>
    %343 = tpu.matmul %340, %342, %cst_357 {dimension_numbers = #tpu.dot_dimension_numbers<[1], [0], [0], [1], [0, 0, 1, 1], [], []>} : vector<256x32xf32>, vector<32x1xf32>, vector<256x1xf32> -> vector<256x1xf32>
    %344 = arith.addf %338, %343 : vector<256x1xf32>
    %c0_358 = arith.constant 0 : index
    %c0_359 = arith.constant 0 : index
    %345 = vector.load %arg11[%c0_358, %c0_359] : memref<1x1xf32, #tpu.memory_space<vmem>>, vector<1x1xf32>
    %346 = vector.broadcast %345 : vector<1x1xf32> to vector<256x1xf32>
    %347 = arith.addf %344, %346 : vector<256x1xf32>
    %348 = vector.shape_cast %347 : vector<256x1xf32> to vector<16x16x1xf32>
    %c0_360 = arith.constant 0 : index
    %c0_361 = arith.constant 0 : index
    %c0_362 = arith.constant 0 : index
    %c0_363 = arith.constant 0 : index
    %349 = vector.load %arg14[%c0_360, %c0_361, %c0_362, %c0_363] : memref<1x16x16x1xf32, #tpu.memory_space<vmem>>, vector<1x16x16x1xf32>
    %350 = vector.shape_cast %349 : vector<1x16x16x1xf32> to vector<16x16x1xf32>
    %351 = vector.shape_cast %348 : vector<16x16x1xf32> to vector<1x16x16x1xf32>
    tpu.vector_store %arg14[%c0_360, %c0_361, %c0_362, %c0_363], %351 {strides = array<i32>} : memref<1x16x16x1xf32, #tpu.memory_space<vmem>>, vector<1x16x16x1xf32>,
    return
  }
  func.func @transform_0(%arg0: i32) -> (i32, i32, i32, i32) {
    %c0_i32 = arith.constant 0 : i32
    %c0_i32_0 = arith.constant 0 : i32
    %c0_i32_1 = arith.constant 0 : i32
    %c0_i32_2 = arith.constant 0 : i32
    return %arg0, %c0_i32, %c0_i32_0, %c0_i32_1 : i32, i32, i32, i32
  }
  func.func @transform_1(%arg0: i32) -> (i32, i32, i32) {
    %c0_i32 = arith.constant 0 : i32
    %c0_i32_0 = arith.constant 0 : i32
    %c0_i32_1 = arith.constant 0 : i32
    %c0_i32_2 = arith.constant 0 : i32
    return %c0_i32, %c0_i32_0, %c0_i32_1 : i32, i32, i32
  }
  func.func @transform_2(%arg0: i32) -> (i32, i32) {
    %c0_i32 = arith.constant 0 : i32
    %c0_i32_0 = arith.constant 0 : i32
    %c0_i32_1 = arith.constant 0 : i32
    return %c0_i32, %c0_i32_0 : i32, i32
  }
  func.func @transform_3(%arg0: i32) -> (i32, i32, i32) {
    %c0_i32 = arith.constant 0 : i32
    %c0_i32_0 = arith.constant 0 : i32
    %c0_i32_1 = arith.constant 0 : i32
    %c0_i32_2 = arith.constant 0 : i32
    return %c0_i32, %c0_i32_0, %c0_i32_1 : i32, i32, i32
  }
  func.func @transform_4(%arg0: i32) -> (i32, i32) {
    %c0_i32 = arith.constant 0 : i32
    %c0_i32_0 = arith.constant 0 : i32
    %c0_i32_1 = arith.constant 0 : i32
    return %c0_i32, %c0_i32_0 : i32, i32
  }
  func.func @transform_5(%arg0: i32) -> (i32, i32, i32) {
    %c0_i32 = arith.constant 0 : i32
    %c0_i32_0 = arith.constant 0 : i32
    %c0_i32_1 = arith.constant 0 : i32
    %c0_i32_2 = arith.constant 0 : i32
    return %c0_i32, %c0_i32_0, %c0_i32_1 : i32, i32, i32
  }
  func.func @transform_6(%arg0: i32) -> (i32, i32) {
    %c0_i32 = arith.constant 0 : i32
    %c0_i32_0 = arith.constant 0 : i32
    %c0_i32_1 = arith.constant 0 : i32
    return %c0_i32, %c0_i32_0 : i32, i32
  }
  func.func @transform_7(%arg0: i32) -> (i32, i32, i32) {
    %c0_i32 = arith.constant 0 : i32
    %c0_i32_0 = arith.constant 0 : i32
    %c0_i32_1 = arith.constant 0 : i32
    %c0_i32_2 = arith.constant 0 : i32
    return %c0_i32, %c0_i32_0, %c0_i32_1 : i32, i32, i32
  }
  func.func @transform_8(%arg0: i32) -> (i32, i32) {
    %c0_i32 = arith.constant 0 : i32
    %c0_i32_0 = arith.constant 0 : i32
    %c0_i32_1 = arith.constant 0 : i32
    return %c0_i32, %c0_i32_0 : i32, i32
  }
  func.func @transform_9(%arg0: i32) -> (i32, i32, i32) {
    %c0_i32 = arith.constant 0 : i32
    %c0_i32_0 = arith.constant 0 : i32
    %c0_i32_1 = arith.constant 0 : i32
    %c0_i32_2 = arith.constant 0 : i32
    return %c0_i32, %c0_i32_0, %c0_i32_1 : i32, i32, i32
  }
  func.func @transform_10(%arg0: i32) -> (i32, i32) {
    %c0_i32 = arith.constant 0 : i32
    %c0_i32_0 = arith.constant 0 : i32
    %c0_i32_1 = arith.constant 0 : i32
    return %c0_i32, %c0_i32_0 : i32, i32
  }
  func.func @transform_11(%arg0: i32) -> (i32, i32) {
    %c0_i32 = arith.constant 0 : i32
    %c0_i32_0 = arith.constant 0 : i32
    %c0_i32_1 = arith.constant 0 : i32
    return %c0_i32, %c0_i32_0 : i32, i32
  }
  func.func @transform_12(%arg0: i32) -> (i32, i32) {
    %c0_i32 = arith.constant 0 : i32
    %c0_i32_0 = arith.constant 0 : i32
    %c0_i32_1 = arith.constant 0 : i32
    return %c0_i32, %c0_i32_0 : i32, i32
  }
  func.func @transform_13(%arg0: i32) -> (i32, i32, i32, i32) {
    %c0_i32 = arith.constant 0 : i32
    %c0_i32_0 = arith.constant 0 : i32
    %c0_i32_1 = arith.constant 0 : i32
    %c0_i32_2 = arith.constant 0 : i32
    return %arg0, %c0_i32, %c0_i32_0, %c0_i32_1 : i32, i32, i32, i32
  }
}

</mosaic_0001>

<llo_original>
// kernel: tpu_custom_call.1
$region0: #{tpu_custom_call.1}
  #allocation0 [shape = 'u32[]', space=smem, size = 0x4, offset = 0x4, fixed_abs, tag = 'smem constant byte address 0x4 - core index']
  #allocation1 [shape = 'u32[72,128]{1,0:T(1,128)}', space=vmem, size = 0x9000, scoped, tag = 'internal scratch']
  #allocation2 [shape = 'f32[18,18,64]{2,1,0:T(8,128)}', space=vmem, size = 0x36000, scoped, tag = 'scratch operand']
  #allocation3 [shape = 'f32[1,1]{1,0:T(1,128)S(1)}', space=vmem, size = 0x200, scoped, tag = 'scoped memory for tpu_custom_call.1']
  %s0 = inlined_call_operand.vmem [shape: f32[2,16,16,1], index: 0, kind: input, shape index: {}]
  %s1 = inlined_call_operand.vmem [shape: f32[9,1,32], index: 1, kind: input, shape index: {}]
  %s2 = inlined_call_operand.vmem [shape: f32[1,32], index: 2, kind: input, shape index: {}]
  %s3 = inlined_call_operand.vmem [shape: f32[9,32,64], index: 3, kind: input, shape index: {}]
  %s4 = inlined_call_operand.vmem [shape: f32[1,64], index: 4, kind: input, shape index: {}]
  %s5 = inlined_call_operand.vmem [shape: f32[9,64,64], index: 5, kind: input, shape index: {}]
  %s6 = inlined_call_operand.vmem [shape: f32[1,64], index: 6, kind: input, shape index: {}]
  %s7 = inlined_call_operand.vmem [shape: f32[9,64,32], index: 7, kind: input, shape index: {}]
  %s8 = inlined_call_operand.vmem [shape: f32[1,32], index: 8, kind: input, shape index: {}]
  %s9 = inlined_call_operand.vmem [shape: f32[9,32,1], index: 9, kind: input, shape index: {}]
  %s10 = inlined_call_operand.<no memory space> [shape: f32[1,1], index: 10, kind: input, shape index: {}]
  %s11 = inlined_call_operand.vmem [shape: f32[256,256], index: 11, kind: input, shape index: {}]
  %s12 = inlined_call_operand.vmem [shape: f32[256,64], index: 12, kind: input, shape index: {}]
  %s13 = inlined_call_operand.vmem [shape: f32[2,16,16,1], index: 13, kind: output, shape index: {}]
  %s14 = sld [smem:[#allocation0]]
  $region85: #{tpu_custom_call.1} parent=0
    _
  %s16 = ssub.s32 1, %s14
  %s17 = scalar_select 0, %s16, %s14
  %v18 = vstv %s10
  %19 = vst [vmem:[#allocation3] sm:$0x1] %v18
  loop: start=0, step=1, limit=4
  $region2: #{tpu_custom_call.1} parent=0 // loop_pre_header
    _
  $region3: #{tpu_custom_call.1} parent=0 // loop_header
    %s21 = sphi 0, %s25
    %p22 = scmp.ge.s32.totalorder %s21, 4
    %s31 = sphi 0, %s33
    %s34 = sphi 0, %s31
    %s35 = sphi 0, %s34
    %s51 = sphi 0, %s35
    %s55 = sphi 0, %s55
    %s57 = sphi 0, %s55
    %s58 = sphi 0, %s57
    %s72 = sphi 0, %s58
    %s76 = sphi 0, %s76
    %s78 = sphi 0, %s76
    %s79 = sphi 0, %s78
    %s93 = sphi 0, %s79
    %s97 = sphi 0, %s97
    %s99 = sphi 0, %s97
    %s100 = sphi 0, %s99
    %s114 = sphi 0, %s100
    %s118 = sphi 0, %s118
    %s120 = sphi 0, %s118
    %s121 = sphi 0, %s120
    %s135 = sphi 0, %s121
    %s139 = sphi 0, %s139
    %s141 = sphi 0, %s139
    %s142 = sphi 0, %s141
    %s156 = sphi 0, %s142
    %s160 = sphi 0, %s160
    %s162 = sphi 0, %s160
    %s163 = sphi 0, %s162
    %s177 = sphi 0, %s163
    %s181 = sphi 0, %s181
    %s183 = sphi 0, %s181
    %s184 = sphi 0, %s183
    %s198 = sphi 0, %s184
    %s202 = sphi 0, %s202
    %s204 = sphi 0, %s202
    %s205 = sphi 0, %s204
    %s219 = sphi 0, %s205
    %s223 = sphi 0, %s223
    %s225 = sphi 0, %s223
    %s226 = sphi 0, %s225
    %s240 = sphi 0, %s226
    %s244 = sphi 0, %s244
    %s246 = sphi 0, %s244
    %s247 = sphi 0, %s246
    %s261 = sphi 0, %s247
    %s265 = sphi 0, %s265
    %s267 = sphi 0, %s265
    %s268 = sphi 0, %s267
    %s282 = sphi 0, %s268
    %s286 = sphi 0, %s286
    %s288 = sphi 0, %s286
    %s289 = sphi 0, %s288
    %s303 = sphi 0, %s289
    %s309 = sphi 0, %s311
    %s312 = sphi 0, %s309
    %s313 = sphi 0, %s312
    %s329 = sphi 0, %s313
  $region4: #{tpu_custom_call.1} parent=0 // loop_header_branch
    %24 = sbr.rel (%p22) target = $region8
  $region5: #{tpu_custom_call.1} parent=0 // loop_body
    %s26 = ssub.s32 %s21, 1
    %s27 = ssub.s32 %s21, 2
    %s28 = sadd.s32 %s21, 1
    %s29 = ssub.s32 %s21, %s28
    %p30 = scmp.eq.s32.totalorder %s29, 0
    %s32 = sadd.s32 %s31, 1
    %s33 = scalar_select %p30, %s31, %s32
    %p36 = pneg %p30
    %p37 = scmp.eq.s32.totalorder %s21, 1
    %p38 = por %p36, %p37
    %p39 = scmp.ne.s32.totalorder %s31, %s34
    %p40 = scmp.eq.s32.totalorder %s21, 0
    %p41 = por %p39, %p40
    %p42 = scmp.ne.s32.totalorder %s31, %s34
    %p43 = scmp.eq.s32.totalorder %s26, 1
    %p44 = por %p42, %p43
    %p45 = scmp.ne.s32.totalorder %s34, %s35
    %p46 = scmp.eq.s32.totalorder %s26, 0
    %p47 = por %p45, %p46
    %p48 = scmp.ne.s32.totalorder %s34, %s35
    %p49 = scmp.eq.s32.totalorder %s27, 1
    %p50 = por %p48, %p49
    %p52 = scmp.ne.s32.totalorder %s35, %s51
    %p53 = scmp.eq.s32.totalorder %s27, 0
    %p54 = por %p52, %p53
    %s56 = sadd.s32 %s55, 1
    %p59 = scmp.eq.s32.totalorder %s21, 1
    %p60 = scmp.ne.s32.totalorder %s55, %s57
    %p61 = scmp.eq.s32.totalorder %s21, 0
    %p62 = por %p60, %p61
    %p63 = scmp.ne.s32.totalorder %s55, %s57
    %p64 = scmp.eq.s32.totalorder %s26, 1
    %p65 = por %p63, %p64
    %p66 = scmp.ne.s32.totalorder %s57, %s58
    %p67 = scmp.eq.s32.totalorder %s26, 0
    %p68 = por %p66, %p67
    %p69 = scmp.ne.s32.totalorder %s57, %s58
    %p70 = scmp.eq.s32.totalorder %s27, 1
    %p71 = por %p69, %p70
    %p73 = scmp.ne.s32.totalorder %s58, %s72
    %p74 = scmp.eq.s32.totalorder %s27, 0
    %p75 = por %p73, %p74
    %s77 = sadd.s32 %s76, 1
    %p80 = scmp.eq.s32.totalorder %s21, 1
    %p81 = scmp.ne.s32.totalorder %s76, %s78
    %p82 = scmp.eq.s32.totalorder %s21, 0
    %p83 = por %p81, %p82
    %p84 = scmp.ne.s32.totalorder %s76, %s78
    %p85 = scmp.eq.s32.totalorder %s26, 1
    %p86 = por %p84, %p85
    %p87 = scmp.ne.s32.totalorder %s78, %s79
    %p88 = scmp.eq.s32.totalorder %s26, 0
    %p89 = por %p87, %p88
    %p90 = scmp.ne.s32.totalorder %s78, %s79
    %p91 = scmp.eq.s32.totalorder %s27, 1
    %p92 = por %p90, %p91
    %p94 = scmp.ne.s32.totalorder %s79, %s93
    %p95 = scmp.eq.s32.totalorder %s27, 0
    %p96 = por %p94, %p95
    %s98 = sadd.s32 %s97, 1
    %p101 = scmp.eq.s32.totalorder %s21, 1
    %p102 = scmp.ne.s32.totalorder %s97, %s99
    %p103 = scmp.eq.s32.totalorder %s21, 0
    %p104 = por %p102, %p103
    %p105 = scmp.ne.s32.totalorder %s97, %s99
    %p106 = scmp.eq.s32.totalorder %s26, 1
    %p107 = por %p105, %p106
    %p108 = scmp.ne.s32.totalorder %s99, %s100
    %p109 = scmp.eq.s32.totalorder %s26, 0
    %p110 = por %p108, %p109
    %p111 = scmp.ne.s32.totalorder %s99, %s100
    %p112 = scmp.eq.s32.totalorder %s27, 1
    %p113 = por %p111, %p112
    %p115 = scmp.ne.s32.totalorder %s100, %s114
    %p116 = scmp.eq.s32.totalorder %s27, 0
    %p117 = por %p115, %p116
    %s119 = sadd.s32 %s118, 1
    %p122 = scmp.eq.s32.totalorder %s21, 1
    %p123 = scmp.ne.s32.totalorder %s118, %s120
    %p124 = scmp.eq.s32.totalorder %s21, 0
    %p125 = por %p123, %p124
    %p126 = scmp.ne.s32.totalorder %s118, %s120
    %p127 = scmp.eq.s32.totalorder %s26, 1
    %p128 = por %p126, %p127
    %p129 = scmp.ne.s32.totalorder %s120, %s121
    %p130 = scmp.eq.s32.totalorder %s26, 0
    %p131 = por %p129, %p130
    %p132 = scmp.ne.s32.totalorder %s120, %s121
    %p133 = scmp.eq.s32.totalorder %s27, 1
    %p134 = por %p132, %p133
    %p136 = scmp.ne.s32.totalorder %s121, %s135
    %p137 = scmp.eq.s32.totalorder %s27, 0
    %p138 = por %p136, %p137
    %s140 = sadd.s32 %s139, 1
    %p143 = scmp.eq.s32.totalorder %s21, 1
    %p144 = scmp.ne.s32.totalorder %s139, %s141
    %p145 = scmp.eq.s32.totalorder %s21, 0
    %p146 = por %p144, %p145
    %p147 = scmp.ne.s32.totalorder %s139, %s141
    %p148 = scmp.eq.s32.totalorder %s26, 1
    %p149 = por %p147, %p148
    %p150 = scmp.ne.s32.totalorder %s141, %s142
    %p151 = scmp.eq.s32.totalorder %s26, 0
    %p152 = por %p150, %p151
    %p153 = scmp.ne.s32.totalorder %s141, %s142
    %p154 = scmp.eq.s32.totalorder %s27, 1
    %p155 = por %p153, %p154
    %p157 = scmp.ne.s32.totalorder %s142, %s156
    %p158 = scmp.eq.s32.totalorder %s27, 0
    %p159 = por %p157, %p158
    %s161 = sadd.s32 %s160, 1
    %p164 = scmp.eq.s32.totalorder %s21, 1
    %p165 = scmp.ne.s32.totalorder %s160, %s162
    %p166 = scmp.eq.s32.totalorder %s21, 0
    %p167 = por %p165, %p166
    %p168 = scmp.ne.s32.totalorder %s160, %s162
    %p169 = scmp.eq.s32.totalorder %s26, 1
    %p170 = por %p168, %p169
    %p171 = scmp.ne.s32.totalorder %s162, %s163
    %p172 = scmp.eq.s32.totalorder %s26, 0
    %p173 = por %p171, %p172
    %p174 = scmp.ne.s32.totalorder %s162, %s163
    %p175 = scmp.eq.s32.totalorder %s27, 1
    %p176 = por %p174, %p175
    %p178 = scmp.ne.s32.totalorder %s163, %s177
    %p179 = scmp.eq.s32.totalorder %s27, 0
    %p180 = por %p178, %p179
    %s182 = sadd.s32 %s181, 1
    %p185 = scmp.eq.s32.totalorder %s21, 1
    %p186 = scmp.ne.s32.totalorder %s181, %s183
    %p187 = scmp.eq.s32.totalorder %s21, 0
    %p188 = por %p186, %p187
    %p189 = scmp.ne.s32.totalorder %s181, %s183
    %p190 = scmp.eq.s32.totalorder %s26, 1
    %p191 = por %p189, %p190
    %p192 = scmp.ne.s32.totalorder %s183, %s184
    %p193 = scmp.eq.s32.totalorder %s26, 0
    %p194 = por %p192, %p193
    %p195 = scmp.ne.s32.totalorder %s183, %s184
    %p196 = scmp.eq.s32.totalorder %s27, 1
    %p197 = por %p195, %p196
    %p199 = scmp.ne.s32.totalorder %s184, %s198
    %p200 = scmp.eq.s32.totalorder %s27, 0
    %p201 = por %p199, %p200
    %s203 = sadd.s32 %s202, 1
    %p206 = scmp.eq.s32.totalorder %s21, 1
    %p207 = scmp.ne.s32.totalorder %s202, %s204
    %p208 = scmp.eq.s32.totalorder %s21, 0
    %p209 = por %p207, %p208
    %p210 = scmp.ne.s32.totalorder %s202, %s204
    %p211 = scmp.eq.s32.totalorder %s26, 1
    %p212 = por %p210, %p211
    %p213 = scmp.ne.s32.totalorder %s204, %s205
    %p214 = scmp.eq.s32.totalorder %s26, 0
    %p215 = por %p213, %p214
    %p216 = scmp.ne.s32.totalorder %s204, %s205
    %p217 = scmp.eq.s32.totalorder %s27, 1
    %p218 = por %p216, %p217
    %p220 = scmp.ne.s32.totalorder %s205, %s219
    %p221 = scmp.eq.s32.totalorder %s27, 0
    %p222 = por %p220, %p221
    %s224 = sadd.s32 %s223, 1
    %p227 = scmp.eq.s32.totalorder %s21, 1
    %p228 = scmp.ne.s32.totalorder %s223, %s225
    %p229 = scmp.eq.s32.totalorder %s21, 0
    %p230 = por %p228, %p229
    %p231 = scmp.ne.s32.totalorder %s223, %s225
    %p232 = scmp.eq.s32.totalorder %s26, 1
    %p233 = por %p231, %p232
    %p234 = scmp.ne.s32.totalorder %s225, %s226
    %p235 = scmp.eq.s32.totalorder %s26, 0
    %p236 = por %p234, %p235
    %p237 = scmp.ne.s32.totalorder %s225, %s226
    %p238 = scmp.eq.s32.totalorder %s27, 1
    %p239 = por %p237, %p238
    %p241 = scmp.ne.s32.totalorder %s226, %s240
    %p242 = scmp.eq.s32.totalorder %s27, 0
    %p243 = por %p241, %p242
    %s245 = sadd.s32 %s244, 1
    %p248 = scmp.eq.s32.totalorder %s21, 1
    %p249 = scmp.ne.s32.totalorder %s244, %s246
    %p250 = scmp.eq.s32.totalorder %s21, 0
    %p251 = por %p249, %p250
    %p252 = scmp.ne.s32.totalorder %s244, %s246
    %p253 = scmp.eq.s32.totalorder %s26, 1
    %p254 = por %p252, %p253
    %p255 = scmp.ne.s32.totalorder %s246, %s247
    %p256 = scmp.eq.s32.totalorder %s26, 0
    %p257 = por %p255, %p256
    %p258 = scmp.ne.s32.totalorder %s246, %s247
    %p259 = scmp.eq.s32.totalorder %s27, 1
    %p260 = por %p258, %p259
    %p262 = scmp.ne.s32.totalorder %s247, %s261
    %p263 = scmp.eq.s32.totalorder %s27, 0
    %p264 = por %p262, %p263
    %s266 = sadd.s32 %s265, 1
    %p269 = scmp.eq.s32.totalorder %s21, 1
    %p270 = scmp.ne.s32.totalorder %s265, %s267
    %p271 = scmp.eq.s32.totalorder %s21, 0
    %p272 = por %p270, %p271
    %p273 = scmp.ne.s32.totalorder %s265, %s267
    %p274 = scmp.eq.s32.totalorder %s26, 1
    %p275 = por %p273, %p274
    %p276 = scmp.ne.s32.totalorder %s267, %s268
    %p277 = scmp.eq.s32.totalorder %s26, 0
    %p278 = por %p276, %p277
    %p279 = scmp.ne.s32.totalorder %s267, %s268
    %p280 = scmp.eq.s32.totalorder %s27, 1
    %p281 = por %p279, %p280
    %p283 = scmp.ne.s32.totalorder %s268, %s282
    %p284 = scmp.eq.s32.totalorder %s27, 0
    %p285 = por %p283, %p284
    %s287 = sadd.s32 %s286, 1
    %p290 = scmp.eq.s32.totalorder %s21, 1
    %p291 = scmp.ne.s32.totalorder %s286, %s288
    %p292 = scmp.eq.s32.totalorder %s21, 0
    %p293 = por %p291, %p292
    %p294 = scmp.ne.s32.totalorder %s286, %s288
    %p295 = scmp.eq.s32.totalorder %s26, 1
    %p296 = por %p294, %p295
    %p297 = scmp.ne.s32.totalorder %s288, %s289
    %p298 = scmp.eq.s32.totalorder %s26, 0
    %p299 = por %p297, %p298
    %p300 = scmp.ne.s32.totalorder %s288, %s289
    %p301 = scmp.eq.s32.totalorder %s27, 1
    %p302 = por %p300, %p301
    %p304 = scmp.ne.s32.totalorder %s289, %s303
    %p305 = scmp.eq.s32.totalorder %s27, 0
    %p306 = por %p304, %p305
    %s307 = ssub.s32 %s21, %s28
    %p308 = scmp.eq.s32.totalorder %s307, 0
    %s310 = sadd.s32 %s309, 1
    %s311 = scalar_select %p308, %s309, %s310
    %p314 = pneg %p308
    %p315 = scmp.eq.s32.totalorder %s21, 1
    %p316 = por %p314, %p315
    %p317 = scmp.ne.s32.totalorder %s309, %s312
    %p318 = scmp.eq.s32.totalorder %s21, 0
    %p319 = por %p317, %p318
    %p320 = scmp.ne.s32.totalorder %s309, %s312
    %p321 = scmp.eq.s32.totalorder %s26, 1
    %p322 = por %p320, %p321
    %p323 = scmp.ne.s32.totalorder %s312, %s313
    %p324 = scmp.eq.s32.totalorder %s26, 0
    %p325 = por %p323, %p324
    %p326 = scmp.ne.s32.totalorder %s312, %s313
    %p327 = scmp.eq.s32.totalorder %s27, 1
    %p328 = por %p326, %p327
    %p330 = scmp.ne.s32.totalorder %s313, %s329
    %p331 = scmp.eq.s32.totalorder %s27, 0
    %p332 = por %p330, %p331
    %p333 = scmp.le.s32.totalorder 1, %s21
    %p334 = scmp.lt.s32.totalorder %s21, 3
    %p335 = pnand %p333, %p334
    %p336 = pneg %p335
    // Predicated region
    $region9: #{tpu_custom_call.1} parent=5 // pred_check
      _
    $region10: #{tpu_custom_call.1} parent=5 // pred_check_branch
      %338 = sbr.rel (%p335) target = $region12
    $region11: #{tpu_custom_call.1} parent=5 // pred_region
      %s339 = ssub.s32 %s21, 1
      // Predicated region
      $region13: #{tpu_custom_call.1} parent=11 // pred_check
        %p340 = pneg %p68
      $region14: #{tpu_custom_call.1} parent=11 // pred_check_branch
        %342 = sbr.rel (%p340) target = $region16
      $region15: #{tpu_custom_call.1} parent=11 // pred_region
        _
      $region16: #{tpu_custom_call.1} parent=11 // pred_fallthru
        _
      // Predicated region
      $region17: #{tpu_custom_call.1} parent=11 // pred_check
        %p343 = pneg %p89
      $region18: #{tpu_custom_call.1} parent=11 // pred_check_branch
        %345 = sbr.rel (%p343) target = $region20
      $region19: #{tpu_custom_call.1} parent=11 // pred_region
        _
      $region20: #{tpu_custom_call.1} parent=11 // pred_fallthru
        _
      // Predicated region
      $region21: #{tpu_custom_call.1} parent=11 // pred_check
        %p346 = pneg %p110
      $region22: #{tpu_custom_call.1} parent=11 // pred_check_branch
        %348 = sbr.rel (%p346) target = $region24
      $region23: #{tpu_custom_call.1} parent=11 // pred_region
        _
      $region24: #{tpu_custom_call.1} parent=11 // pred_fallthru
        _
      // Predicated region
      $region25: #{tpu_custom_call.1} parent=11 // pred_check
        %p349 = pneg %p131
      $region26: #{tpu_custom_call.1} parent=11 // pred_check_branch
        %351 = sbr.rel (%p349) target = $region28
      $region27: #{tpu_custom_call.1} parent=11 // pred_region
        _
      $region28: #{tpu_custom_call.1} parent=11 // pred_fallthru
        _
      // Predicated region
      $region29: #{tpu_custom_call.1} parent=11 // pred_check
        %p352 = pneg %p152
      $region30: #{tpu_custom_call.1} parent=11 // pred_check_branch
        %354 = sbr.rel (%p352) target = $region32
      $region31: #{tpu_custom_call.1} parent=11 // pred_region
        _
      $region32: #{tpu_custom_call.1} parent=11 // pred_fallthru
        _
      // Predicated region
      $region33: #{tpu_custom_call.1} parent=11 // pred_check
        %p355 = pneg %p173
      $region34: #{tpu_custom_call.1} parent=11 // pred_check_branch
        %357 = sbr.rel (%p355) target = $region36
      $region35: #{tpu_custom_call.1} parent=11 // pred_region
        _
      $region36: #{tpu_custom_call.1} parent=11 // pred_fallthru
        _
      // Predicated region
      $region37: #{tpu_custom_call.1} parent=11 // pred_check
        %p358 = pneg %p194
      $region38: #{tpu_custom_call.1} parent=11 // pred_check_branch
        %360 = sbr.rel (%p358) target = $region40
      $region39: #{tpu_custom_call.1} parent=11 // pred_region
        _
      $region40: #{tpu_custom_call.1} parent=11 // pred_fallthru
        _
      // Predicated region
      $region41: #{tpu_custom_call.1} parent=11 // pred_check
        %p361 = pneg %p215
      $region42: #{tpu_custom_call.1} parent=11 // pred_check_branch
        %363 = sbr.rel (%p361) target = $region44
      $region43: #{tpu_custom_call.1} parent=11 // pred_region
        _
      $region44: #{tpu_custom_call.1} parent=11 // pred_fallthru
        _
      // Predicated region
      $region45: #{tpu_custom_call.1} parent=11 // pred_check
        %p364 = pneg %p236
      $region46: #{tpu_custom_call.1} parent=11 // pred_check_branch
        %366 = sbr.rel (%p364) target = $region48
      $region47: #{tpu_custom_call.1} parent=11 // pred_region
        _
      $region48: #{tpu_custom_call.1} parent=11 // pred_fallthru
        _
      // Predicated region
      $region49: #{tpu_custom_call.1} parent=11 // pred_check
        %p367 = pneg %p257
      $region50: #{tpu_custom_call.1} parent=11 // pred_check_branch
        %369 = sbr.rel (%p367) target = $region52
      $region51: #{tpu_custom_call.1} parent=11 // pred_region
        _
      $region52: #{tpu_custom_call.1} parent=11 // pred_fallthru
        _
      // Predicated region
      $region53: #{tpu_custom_call.1} parent=11 // pred_check
        %p370 = pneg %p278
      $region54: #{tpu_custom_call.1} parent=11 // pred_check_branch
        %372 = sbr.rel (%p370) target = $region56
      $region55: #{tpu_custom_call.1} parent=11 // pred_region
        _
      $region56: #{tpu_custom_call.1} parent=11 // pred_fallthru
        _
      // Predicated region
      $region57: #{tpu_custom_call.1} parent=11 // pred_check
        %p373 = pneg %p299
      $region58: #{tpu_custom_call.1} parent=11 // pred_check_branch
        %375 = sbr.rel (%p373) target = $region60
      $region59: #{tpu_custom_call.1} parent=11 // pred_region
        _
      $region60: #{tpu_custom_call.1} parent=11 // pred_fallthru
        _
    $region12: #{tpu_custom_call.1} parent=5 // pred_fallthru
      _
    %p376 = scmp.lt.s32.totalorder %s21, 2
    // Predicated region
    $region61: #{tpu_custom_call.1} parent=5 // pred_check
      %p377 = pneg %p376
    $region62: #{tpu_custom_call.1} parent=5 // pred_check_branch
      %379 = sbr.rel (%p377) target = $region64
    $region63: #{tpu_custom_call.1} parent=5 // pred_region
      // Predicated region
      $region65: #{tpu_custom_call.1} parent=63 // pred_check
        %p380 = pneg %p41
      $region66: #{tpu_custom_call.1} parent=63 // pred_check_branch
        %382 = sbr.rel (%p380) target = $region68
      $region67: #{tpu_custom_call.1} parent=63 // pred_region
        %p383 = scmp.lt.s32.totalorder %s21, 1
        %s384 = scalar_select %p383, %s21, 1
        %s385 = smul.addr %s384, 32
        %s386 = smul.addr %s385, 8
        %s387 = scalar_lea.vmem %s0, %s386
      $region68: #{tpu_custom_call.1} parent=63 // pred_fallthru
        _
    $region64: #{tpu_custom_call.1} parent=5 // pred_fallthru
      _
    %p388 = scmp.le.s32.totalorder 1, %s21
    %p389 = scmp.lt.s32.totalorder %s21, 3
    %p390 = pnand %p388, %p389
    %p391 = pneg %p390
    // Predicated region
    $region69: #{tpu_custom_call.1} parent=5 // pred_check
      _
    $region70: #{tpu_custom_call.1} parent=5 // pred_check_branch
      %393 = sbr.rel (%p390) target = $region72
    $region71: #{tpu_custom_call.1} parent=5 // pred_region
      %s394 = ssub.s32 %s21, 1
      %p395 = scmp.lt.s32.totalorder %s26, 1
      %s396 = scalar_select %p395, %s26, 1
      %s397 = smul.addr %s396, 32
      %s398 = smul.addr %s397, 8
      %s399 = scalar_lea.vmem %s0, %s398
      %p400 = pneg %p47
      %p401 = pneg %p44
      %p402 = pneg %p68
      %p403 = pneg %p65
      %p404 = pneg %p89
      %p405 = pneg %p86
      %p406 = pneg %p110
      %p407 = pneg %p107
      %p408 = pneg %p131
      %p409 = pneg %p128
      %p410 = pneg %p152
      %p411 = pneg %p149
      %p412 = pneg %p173
      %p413 = pneg %p170
      %p414 = pneg %p194
      %p415 = pneg %p191
      %p416 = pneg %p215
      %p417 = pneg %p212
      %p418 = pneg %p236
      %p419 = pneg %p233
      %p420 = pneg %p257
      %p421 = pneg %p254
      %p422 = pneg %p278
      %p423 = pneg %p275
      %p424 = pneg %p299
      %p425 = pneg %p296
      %p426 = pneg %p325
      %p427 = pneg %p322
      %p428 = scmp.lt.s32.totalorder %s26, 1
      %s429 = scalar_select %p428, %s26, 1
      %s430 = smul.addr %s429, 32
      %s431 = smul.addr %s430, 8
      %s432 = scalar_lea.vmem %s13, %s431
      %p433 = scmp.lt.s32.totalorder %s26, 1
      %s434 = scalar_select %p433, %s26, 1
      %s435 = smul.addr %s434, 32
      %s436 = smul.addr %s435, 8
      %s437 = scalar_lea.vmem %s0, %s436
      %p438 = scmp.lt.s32.totalorder %s26, 1
      %s439 = scalar_select %p438, %s26, 1
      %s440 = smul.addr %s439, 32
      %s441 = smul.addr %s440, 8
      %s442 = scalar_lea.vmem %s13, %s441
      %v443 = vld [vmem:[%s437] sm:$0xff]
      %v444 = vld [vmem:[%s437 + $0x8] sm:$0xff]
      %v445 = vld [vmem:[%s437 + $0x10] sm:$0xff]
      %v446 = vld [vmem:[%s437 + $0x18] sm:$0xff]
      %v447 = vld [vmem:[%s437 + $0x20] sm:$0xff]
      %v448 = vld [vmem:[%s437 + $0x28] sm:$0xff]
      %v449 = vld [vmem:[%s437 + $0x30] sm:$0xff]
      %v450 = vld [vmem:[%s437 + $0x38] sm:$0xff]
      %v451 = vld [vmem:[%s437 + $0x40] sm:$0xff]
      %v452 = vld [vmem:[%s437 + $0x48] sm:$0xff]
      %v453 = vld [vmem:[%s437 + $0x50] sm:$0xff]
      %v454 = vld [vmem:[%s437 + $0x58] sm:$0xff]
      %v455 = vld [vmem:[%s437 + $0x60] sm:$0xff]
      %v456 = vld [vmem:[%s437 + $0x68] sm:$0xff]
      %v457 = vld [vmem:[%s437 + $0x70] sm:$0xff]
      %v458 = vld [vmem:[%s437 + $0x78] sm:$0xff]
      %v459 = vld [vmem:[%s437 + $0x80] sm:$0xff]
      %v460 = vld [vmem:[%s437 + $0x88] sm:$0xff]
      %v461 = vld [vmem:[%s437 + $0x90] sm:$0xff]
      %v462 = vld [vmem:[%s437 + $0x98] sm:$0xff]
      %v463 = vld [vmem:[%s437 + $0xa0] sm:$0xff]
      %v464 = vld [vmem:[%s437 + $0xa8] sm:$0xff]
      %v465 = vld [vmem:[%s437 + $0xb0] sm:$0xff]
      %v466 = vld [vmem:[%s437 + $0xb8] sm:$0xff]
      %v467 = vld [vmem:[%s437 + $0xc0] sm:$0xff]
      %v468 = vld [vmem:[%s437 + $0xc8] sm:$0xff]
      %v469 = vld [vmem:[%s437 + $0xd0] sm:$0xff]
      %v470 = vld [vmem:[%s437 + $0xd8] sm:$0xff]
      %v471 = vld [vmem:[%s437 + $0xe0] sm:$0xff]
      %v472 = vld [vmem:[%s437 + $0xe8] sm:$0xff]
      %v473 = vld [vmem:[%s437 + $0xf0] sm:$0xff]
      %v474 = vld [vmem:[%s437 + $0xf8] sm:$0xff]
      %vm475 = vcmask 523264
      %476 = vst.msk [vmem:[#allocation2] sm:$0xff] %vm475, 0.0
      %477 = vst.msk [vmem:[#allocation2 + $0x8] sm:$0xff] %vm475, 0.0
      %vm478 = vcmask 517120
      %479 = vst.msk [vmem:[#allocation2 + $0x10] sm:$0x3] %vm478, 0.0
      %480 = vst.msk [vmem:[#allocation2 + $0x18] sm:$0xff] %vm475, 0.0
      %481 = vst.msk [vmem:[#allocation2 + $0x20] sm:$0xff] %vm475, 0.0
      %482 = vst.msk [vmem:[#allocation2 + $0x28] sm:$0x3] %vm478, 0.0
      %483 = vst.msk [vmem:[#allocation2 + $0x30] sm:$0xff] %vm475, 0.0
      %484 = vst.msk [vmem:[#allocation2 + $0x38] sm:$0xff] %vm475, 0.0
      %485 = vst.msk [vmem:[#allocation2 + $0x40] sm:$0x3] %vm478, 0.0
      %486 = vst.msk [vmem:[#allocation2 + $0x48] sm:$0xff] %vm475, 0.0
      %487 = vst.msk [vmem:[#allocation2 + $0x50] sm:$0xff] %vm475, 0.0
      %488 = vst.msk [vmem:[#allocation2 + $0x58] sm:$0x3] %vm478, 0.0
      %489 = vst.msk [vmem:[#allocation2 + $0x60] sm:$0xff] %vm475, 0.0
      %490 = vst.msk [vmem:[#allocation2 + $0x68] sm:$0xff] %vm475, 0.0
      %491 = vst.msk [vmem:[#allocation2 + $0x70] sm:$0x3] %vm478, 0.0
      %492 = vst.msk [vmem:[#allocation2 + $0x78] sm:$0xff] %vm475, 0.0
      %493 = vst.msk [vmem:[#allocation2 + $0x80] sm:$0xff] %vm475, 0.0
      %494 = vst.msk [vmem:[#allocation2 + $0x88] sm:$0x3] %vm478, 0.0
      %495 = vst.msk [vmem:[#allocation2 + $0x90] sm:$0xff] %vm475, 0.0
      %496 = vst.msk [vmem:[#allocation2 + $0x98] sm:$0xff] %vm475, 0.0
      %497 = vst.msk [vmem:[#allocation2 + $0xa0] sm:$0x3] %vm478, 0.0
      %498 = vst.msk [vmem:[#allocation2 + $0xa8] sm:$0xff] %vm475, 0.0
      %499 = vst.msk [vmem:[#allocation2 + $0xb0] sm:$0xff] %vm475, 0.0
      %500 = vst.msk [vmem:[#allocation2 + $0xb8] sm:$0x3] %vm478, 0.0
      %501 = vst.msk [vmem:[#allocation2 + $0xc0] sm:$0xff] %vm475, 0.0
      %502 = vst.msk [vmem:[#allocation2 + $0xc8] sm:$0xff] %vm475, 0.0
      %503 = vst.msk [vmem:[#allocation2 + $0xd0] sm:$0x3] %vm478, 0.0
      %504 = vst.msk [vmem:[#allocation2 + $0xd8] sm:$0xff] %vm475, 0.0
      %505 = vst.msk [vmem:[#allocation2 + $0xe0] sm:$0xff] %vm475, 0.0
      %506 = vst.msk [vmem:[#allocation2 + $0xe8] sm:$0x3] %vm478, 0.0
      %507 = vst.msk [vmem:[#allocation2 + $0xf0] sm:$0xff] %vm475, 0.0
      %508 = vst.msk [vmem:[#allocation2 + $0xf8] sm:$0xff] %vm475, 0.0
      %509 = vst.msk [vmem:[#allocation2 + $0x100] sm:$0x3] %vm478, 0.0
      %510 = vst.msk [vmem:[#allocation2 + $0x108] sm:$0xff] %vm475, 0.0
      %511 = vst.msk [vmem:[#allocation2 + $0x110] sm:$0xff] %vm475, 0.0
      %512 = vst.msk [vmem:[#allocation2 + $0x118] sm:$0x3] %vm478, 0.0
      %513 = vst.msk [vmem:[#allocation2 + $0x120] sm:$0xff] %vm475, 0.0
      %514 = vst.msk [vmem:[#allocation2 + $0x128] sm:$0xff] %vm475, 0.0
      %515 = vst.msk [vmem:[#allocation2 + $0x130] sm:$0x3] %vm478, 0.0
      %516 = vst.msk [vmem:[#allocation2 + $0x138] sm:$0xff] %vm475, 0.0
      %517 = vst.msk [vmem:[#allocation2 + $0x140] sm:$0xff] %vm475, 0.0
      %518 = vst.msk [vmem:[#allocation2 + $0x148] sm:$0x3] %vm478, 0.0
      %519 = vst.msk [vmem:[#allocation2 + $0x150] sm:$0xff] %vm475, 0.0
      %520 = vst.msk [vmem:[#allocation2 + $0x158] sm:$0xff] %vm475, 0.0
      %521 = vst.msk [vmem:[#allocation2 + $0x160] sm:$0x3] %vm478, 0.0
      %522 = vst.msk [vmem:[#allocation2 + $0x168] sm:$0xff] %vm475, 0.0
      %523 = vst.msk [vmem:[#allocation2 + $0x170] sm:$0xff] %vm475, 0.0
      %524 = vst.msk [vmem:[#allocation2 + $0x178] sm:$0x3] %vm478, 0.0
      %525 = vst.msk [vmem:[#allocation2 + $0x180] sm:$0xff] %vm475, 0.0
      %526 = vst.msk [vmem:[#allocation2 + $0x188] sm:$0xff] %vm475, 0.0
      %527 = vst.msk [vmem:[#allocation2 + $0x190] sm:$0x3] %vm478, 0.0
      %528 = vst.msk [vmem:[#allocation2 + $0x198] sm:$0xff] %vm475, 0.0
      %529 = vst.msk [vmem:[#allocation2 + $0x1a0] sm:$0xff] %vm475, 0.0
      %530 = vst.msk [vmem:[#allocation2 + $0x1a8] sm:$0x3] %vm478, 0.0
      %s531 = scalar_lea.vmem [#allocation2], 24
      %vm532 = vcmask 7168
      %533 = vst.msk [vmem:[%s531 + $0x1] sm:$0xff] %vm532, %v443
      %534 = vst.msk [vmem:[%s531 + $0x9] sm:$0xff] %vm532, %v444
      %535 = vst.msk [vmem:[%s531 + $0x19] sm:$0xff] %vm532, %v445
      %536 = vst.msk [vmem:[%s531 + $0x21] sm:$0xff] %vm532, %v446
      %537 = vst.msk [vmem:[%s531 + $0x31] sm:$0xff] %vm532, %v447
      %538 = vst.msk [vmem:[%s531 + $0x39] sm:$0xff] %vm532, %v448
      %539 = vst.msk [vmem:[%s531 + $0x49] sm:$0xff] %vm532, %v449
      %540 = vst.msk [vmem:[%s531 + $0x51] sm:$0xff] %vm532, %v450
      %541 = vst.msk [vmem:[%s531 + $0x61] sm:$0xff] %vm532, %v451
      %542 = vst.msk [vmem:[%s531 + $0x69] sm:$0xff] %vm532, %v452
      %543 = vst.msk [vmem:[%s531 + $0x79] sm:$0xff] %vm532, %v453
      %544 = vst.msk [vmem:[%s531 + $0x81] sm:$0xff] %vm532, %v454
      %545 = vst.msk [vmem:[%s531 + $0x91] sm:$0xff] %vm532, %v455
      %546 = vst.msk [vmem:[%s531 + $0x99] sm:$0xff] %vm532, %v456
      %547 = vst.msk [vmem:[%s531 + $0xa9] sm:$0xff] %vm532, %v457
      %548 = vst.msk [vmem:[%s531 + $0xb1] sm:$0xff] %vm532, %v458
      %549 = vst.msk [vmem:[%s531 + $0xc1] sm:$0xff] %vm532, %v459
      %550 = vst.msk [vmem:[%s531 + $0xc9] sm:$0xff] %vm532, %v460
      %551 = vst.msk [vmem:[%s531 + $0xd9] sm:$0xff] %vm532, %v461
      %552 = vst.msk [vmem:[%s531 + $0xe1] sm:$0xff] %vm532, %v462
      %553 = vst.msk [vmem:[%s531 + $0xf1] sm:$0xff] %vm532, %v463
      %554 = vst.msk [vmem:[%s531 + $0xf9] sm:$0xff] %vm532, %v464
      %555 = vst.msk [vmem:[%s531 + $0x109] sm:$0xff] %vm532, %v465
      %556 = vst.msk [vmem:[%s531 + $0x111] sm:$0xff] %vm532, %v466
      %557 = vst.msk [vmem:[%s531 + $0x121] sm:$0xff] %vm532, %v467
      %558 = vst.msk [vmem:[%s531 + $0x129] sm:$0xff] %vm532, %v468
      %559 = vst.msk [vmem:[%s531 + $0x139] sm:$0xff] %vm532, %v469
      %560 = vst.msk [vmem:[%s531 + $0x141] sm:$0xff] %vm532, %v470
      %561 = vst.msk [vmem:[%s531 + $0x151] sm:$0xff] %vm532, %v471
      %562 = vst.msk [vmem:[%s531 + $0x159] sm:$0xff] %vm532, %v472
      %563 = vst.msk [vmem:[%s531 + $0x169] sm:$0xff] %vm532, %v473
      %564 = vst.msk [vmem:[%s531 + $0x171] sm:$0xff] %vm532, %v474
      %v565 = vld [vmem:[#allocation2] sm:$0xff]
      %v566 = vld [vmem:[#allocation2 + $0x8] sm:$0xff]
      %v567 = vld [vmem:[#allocation2 + $0x18] sm:$0xff]
      %v568 = vld [vmem:[#allocation2 + $0x20] sm:$0xff]
      %v569 = vld [vmem:[#allocation2 + $0x30] sm:$0xff]
      %v570 = vld [vmem:[#allocation2 + $0x38] sm:$0xff]
      %v571 = vld [vmem:[#allocation2 + $0x48] sm:$0xff]
      %v572 = vld [vmem:[#allocation2 + $0x50] sm:$0xff]
      %v573 = vld [vmem:[#allocation2 + $0x60] sm:$0xff]
      %v574 = vld [vmem:[#allocation2 + $0x68] sm:$0xff]
      %v575 = vld [vmem:[#allocation2 + $0x78] sm:$0xff]
      %v576 = vld [vmem:[#allocation2 + $0x80] sm:$0xff]
      %v577 = vld [vmem:[#allocation2 + $0x90] sm:$0xff]
      %v578 = vld [vmem:[#allocation2 + $0x98] sm:$0xff]
      %v579 = vld [vmem:[#allocation2 + $0xa8] sm:$0xff]
      %v580 = vld [vmem:[#allocation2 + $0xb0] sm:$0xff]
      %v581 = vld [vmem:[#allocation2 + $0xc0] sm:$0xff]
      %v582 = vld [vmem:[#allocation2 + $0xc8] sm:$0xff]
      %v583 = vld [vmem:[#allocation2 + $0xd8] sm:$0xff]
      %v584 = vld [vmem:[#allocation2 + $0xe0] sm:$0xff]
      %v585 = vld [vmem:[#allocation2 + $0xf0] sm:$0xff]
      %v586 = vld [vmem:[#allocation2 + $0xf8] sm:$0xff]
      %v587 = vld [vmem:[#allocation2 + $0x108] sm:$0xff]
      %v588 = vld [vmem:[#allocation2 + $0x110] sm:$0xff]
      %v589 = vld [vmem:[#allocation2 + $0x120] sm:$0xff]
      %v590 = vld [vmem:[#allocation2 + $0x128] sm:$0xff]
      %v591 = vld [vmem:[#allocation2 + $0x138] sm:$0xff]
      %v592 = vld [vmem:[#allocation2 + $0x140] sm:$0xff]
      %v593 = vld [vmem:[#allocation2 + $0x150] sm:$0xff]
      %v594 = vld [vmem:[#allocation2 + $0x158] sm:$0xff]
      %v595 = vld [vmem:[#allocation2 + $0x168] sm:$0xff]
      %v596 = vld [vmem:[#allocation2 + $0x170] sm:$0xff]
      %v597 = vld [vmem:[%s1] sm:$0x1]
      %599 = vset.pattern.permute.xlu0 0
      %600 = vperm.xlu0 %599, %v565
      %v601 = vpop.permute.xlu0 %600
      %604 = vset.pattern.permute.xlu0 0
      %605 = vperm.xlu0 %604, %v566
      %v606 = vpop.permute.xlu0 %605
      %609 = vset.pattern.permute.xlu0 0
      %610 = vperm.xlu0 %609, %v567
      %v611 = vpop.permute.xlu0 %610
      %614 = vset.pattern.permute.xlu0 0
      %615 = vperm.xlu0 %614, %v568
      %v616 = vpop.permute.xlu0 %615
      %619 = vset.pattern.permute.xlu0 0
      %620 = vperm.xlu0 %619, %v569
      %v621 = vpop.permute.xlu0 %620
      %624 = vset.pattern.permute.xlu0 0
      %625 = vperm.xlu0 %624, %v570
      %v626 = vpop.permute.xlu0 %625
      %629 = vset.pattern.permute.xlu0 0
      %630 = vperm.xlu0 %629, %v571
      %v631 = vpop.permute.xlu0 %630
      %634 = vset.pattern.permute.xlu0 0
      %635 = vperm.xlu0 %634, %v572
      %v636 = vpop.permute.xlu0 %635
      %639 = vset.pattern.permute.xlu0 0
      %640 = vperm.xlu0 %639, %v573
      %v641 = vpop.permute.xlu0 %640
      %644 = vset.pattern.permute.xlu0 0
      %645 = vperm.xlu0 %644, %v574
      %v646 = vpop.permute.xlu0 %645
      %649 = vset.pattern.permute.xlu0 0
      %650 = vperm.xlu0 %649, %v575
      %v651 = vpop.permute.xlu0 %650
      %654 = vset.pattern.permute.xlu0 0
      %655 = vperm.xlu0 %654, %v576
      %v656 = vpop.permute.xlu0 %655
      %659 = vset.pattern.permute.xlu0 0
      %660 = vperm.xlu0 %659, %v577
      %v661 = vpop.permute.xlu0 %660
      %664 = vset.pattern.permute.xlu0 0
      %665 = vperm.xlu0 %664, %v578
      %v666 = vpop.permute.xlu0 %665
      %669 = vset.pattern.permute.xlu0 0
      %670 = vperm.xlu0 %669, %v579
      %v671 = vpop.permute.xlu0 %670
      %674 = vset.pattern.permute.xlu0 0
      %675 = vperm.xlu0 %674, %v580
      %v676 = vpop.permute.xlu0 %675
      %679 = vset.pattern.permute.xlu0 0
      %680 = vperm.xlu0 %679, %v581
      %v681 = vpop.permute.xlu0 %680
      %684 = vset.pattern.permute.xlu0 0
      %685 = vperm.xlu0 %684, %v582
      %v686 = vpop.permute.xlu0 %685
      %689 = vset.pattern.permute.xlu0 0
      %690 = vperm.xlu0 %689, %v583
      %v691 = vpop.permute.xlu0 %690
      %694 = vset.pattern.permute.xlu0 0
      %695 = vperm.xlu0 %694, %v584
      %v696 = vpop.permute.xlu0 %695
      %699 = vset.pattern.permute.xlu0 0
      %700 = vperm.xlu0 %699, %v585
      %v701 = vpop.permute.xlu0 %700
      %704 = vset.pattern.permute.xlu0 0
      %705 = vperm.xlu0 %704, %v586
      %v706 = vpop.permute.xlu0 %705
      %709 = vset.pattern.permute.xlu0 0
      %710 = vperm.xlu0 %709, %v587
      %v711 = vpop.permute.xlu0 %710
      %714 = vset.pattern.permute.xlu0 0
      %715 = vperm.xlu0 %714, %v588
      %v716 = vpop.permute.xlu0 %715
      %719 = vset.pattern.permute.xlu0 0
      %720 = vperm.xlu0 %719, %v589
      %v721 = vpop.permute.xlu0 %720
      %724 = vset.pattern.permute.xlu0 0
      %725 = vperm.xlu0 %724, %v590
      %v726 = vpop.permute.xlu0 %725
      %729 = vset.pattern.permute.xlu0 0
      %730 = vperm.xlu0 %729, %v591
      %v731 = vpop.permute.xlu0 %730
      %734 = vset.pattern.permute.xlu0 0
      %735 = vperm.xlu0 %734, %v592
      %v736 = vpop.permute.xlu0 %735
      %739 = vset.pattern.permute.xlu0 0
      %740 = vperm.xlu0 %739, %v593
      %v741 = vpop.permute.xlu0 %740
      %744 = vset.pattern.permute.xlu0 0
      %745 = vperm.xlu0 %744, %v594
      %v746 = vpop.permute.xlu0 %745
      %749 = vset.pattern.permute.xlu0 0
      %750 = vperm.xlu0 %749, %v595
      %v751 = vpop.permute.xlu0 %750
      %754 = vset.pattern.permute.xlu0 0
      %755 = vperm.xlu0 %754, %v596
      %v756 = vpop.permute.xlu0 %755
      %v759 = vperm.slane %v597, 0
      %v761 = vmul.f32 %v601, %v759
      %v762 = vmul.f32 %v606, %v759
      %v763 = vmul.f32 %v611, %v759
      %v764 = vmul.f32 %v616, %v759
      %v765 = vmul.f32 %v621, %v759
      %v766 = vmul.f32 %v626, %v759
      %v767 = vmul.f32 %v631, %v759
      %v768 = vmul.f32 %v636, %v759
      %v769 = vmul.f32 %v641, %v759
      %v770 = vmul.f32 %v646, %v759
      %v771 = vmul.f32 %v651, %v759
      %v772 = vmul.f32 %v656, %v759
      %v773 = vmul.f32 %v661, %v759
      %v774 = vmul.f32 %v666, %v759
      %v775 = vmul.f32 %v671, %v759
      %v776 = vmul.f32 %v676, %v759
      %v777 = vmul.f32 %v681, %v759
      %v778 = vmul.f32 %v686, %v759
      %v779 = vmul.f32 %v691, %v759
      %v780 = vmul.f32 %v696, %v759
      %v781 = vmul.f32 %v701, %v759
      %v782 = vmul.f32 %v706, %v759
      %v783 = vmul.f32 %v711, %v759
      %v784 = vmul.f32 %v716, %v759
      %v785 = vmul.f32 %v721, %v759
      %v786 = vmul.f32 %v726, %v759
      %v787 = vmul.f32 %v731, %v759
      %v788 = vmul.f32 %v736, %v759
      %v789 = vmul.f32 %v741, %v759
      %v790 = vmul.f32 %v746, %v759
      %v791 = vmul.f32 %v751, %v759
      %v792 = vmul.f32 %v756, %v759
      %v793 = vadd.f32 %v761, 0.0
      %v794 = vadd.f32 %v762, 0.0
      %v795 = vadd.f32 %v763, 0.0
      %v796 = vadd.f32 %v764, 0.0
      %v797 = vadd.f32 %v765, 0.0
      %v798 = vadd.f32 %v766, 0.0
      %v799 = vadd.f32 %v767, 0.0
      %v800 = vadd.f32 %v768, 0.0
      %v801 = vadd.f32 %v769, 0.0
      %v802 = vadd.f32 %v770, 0.0
      %v803 = vadd.f32 %v771, 0.0
      %v804 = vadd.f32 %v772, 0.0
      %v805 = vadd.f32 %v773, 0.0
      %v806 = vadd.f32 %v774, 0.0
      %v807 = vadd.f32 %v775, 0.0
      %v808 = vadd.f32 %v776, 0.0
      %v809 = vadd.f32 %v777, 0.0
      %v810 = vadd.f32 %v778, 0.0
      %v811 = vadd.f32 %v779, 0.0
      %v812 = vadd.f32 %v780, 0.0
      %v813 = vadd.f32 %v781, 0.0
      %v814 = vadd.f32 %v782, 0.0
      %v815 = vadd.f32 %v783, 0.0
      %v816 = vadd.f32 %v784, 0.0
      %v817 = vadd.f32 %v785, 0.0
      %v818 = vadd.f32 %v786, 0.0
      %v819 = vadd.f32 %v787, 0.0
      %v820 = vadd.f32 %v788, 0.0
      %v821 = vadd.f32 %v789, 0.0
      %v822 = vadd.f32 %v790, 0.0
      %v823 = vadd.f32 %v791, 0.0
      %v824 = vadd.f32 %v792, 0.0
      %v825 = vld [vmem:[#allocation2 + $0x1] sm:$0xff]
      %v826 = vld [vmem:[#allocation2 + $0x9] sm:$0xff]
      %v827 = vld [vmem:[#allocation2 + $0x19] sm:$0xff]
      %v828 = vld [vmem:[#allocation2 + $0x21] sm:$0xff]
      %v829 = vld [vmem:[#allocation2 + $0x31] sm:$0xff]
      %v830 = vld [vmem:[#allocation2 + $0x39] sm:$0xff]
      %v831 = vld [vmem:[#allocation2 + $0x49] sm:$0xff]
      %v832 = vld [vmem:[#allocation2 + $0x51] sm:$0xff]
      %v833 = vld [vmem:[#allocation2 + $0x61] sm:$0xff]
      %v834 = vld [vmem:[#allocation2 + $0x69] sm:$0xff]
      %v835 = vld [vmem:[#allocation2 + $0x79] sm:$0xff]
      %v836 = vld [vmem:[#allocation2 + $0x81] sm:$0xff]
      %v837 = vld [vmem:[#allocation2 + $0x91] sm:$0xff]
      %v838 = vld [vmem:[#allocation2 + $0x99] sm:$0xff]
      %v839 = vld [vmem:[#allocation2 + $0xa9] sm:$0xff]
      %v840 = vld [vmem:[#allocation2 + $0xb1] sm:$0xff]
      %v841 = vld [vmem:[#allocation2 + $0xc1] sm:$0xff]
      %v842 = vld [vmem:[#allocation2 + $0xc9] sm:$0xff]
      %v843 = vld [vmem:[#allocation2 + $0xd9] sm:$0xff]
      %v844 = vld [vmem:[#allocation2 + $0xe1] sm:$0xff]
      %v845 = vld [vmem:[#allocation2 + $0xf1] sm:$0xff]
      %v846 = vld [vmem:[#allocation2 + $0xf9] sm:$0xff]
      %v847 = vld [vmem:[#allocation2 + $0x109] sm:$0xff]
      %v848 = vld [vmem:[#allocation2 + $0x111] sm:$0xff]
      %v849 = vld [vmem:[#allocation2 + $0x121] sm:$0xff]
      %v850 = vld [vmem:[#allocation2 + $0x129] sm:$0xff]
      %v851 = vld [vmem:[#allocation2 + $0x139] sm:$0xff]
      %v852 = vld [vmem:[#allocation2 + $0x141] sm:$0xff]
      %v853 = vld [vmem:[#allocation2 + $0x151] sm:$0xff]
      %v854 = vld [vmem:[#allocation2 + $0x159] sm:$0xff]
      %v855 = vld [vmem:[#allocation2 + $0x169] sm:$0xff]
      %v856 = vld [vmem:[#allocation2 + $0x171] sm:$0xff]
      %s857 = scalar_lea.vmem %s1, 1
      %v858 = vld [vmem:[%s857] sm:$0x1]
      %860 = vset.pattern.permute.xlu0 0
      %861 = vperm.xlu0 %860, %v825
      %v862 = vpop.permute.xlu0 %861
      %865 = vset.pattern.permute.xlu0 0
      %866 = vperm.xlu0 %865, %v826
      %v867 = vpop.permute.xlu0 %866
      %870 = vset.pattern.permute.xlu0 0
      %871 = vperm.xlu0 %870, %v827
      %v872 = vpop.permute.xlu0 %871
      %875 = vset.pattern.permute.xlu0 0
      %876 = vperm.xlu0 %875, %v828
      %v877 = vpop.permute.xlu0 %876
      %880 = vset.pattern.permute.xlu0 0
      %881 = vperm.xlu0 %880, %v829
      %v882 = vpop.permute.xlu0 %881
      %885 = vset.pattern.permute.xlu0 0
      %886 = vperm.xlu0 %885, %v830
      %v887 = vpop.permute.xlu0 %886
      %890 = vset.pattern.permute.xlu0 0
      %891 = vperm.xlu0 %890, %v831
      %v892 = vpop.permute.xlu0 %891
      %895 = vset.pattern.permute.xlu0 0
      %896 = vperm.xlu0 %895, %v832
      %v897 = vpop.permute.xlu0 %896
      %900 = vset.pattern.permute.xlu0 0
      %901 = vperm.xlu0 %900, %v833
      %v902 = vpop.permute.xlu0 %901
      %905 = vset.pattern.permute.xlu0 0
      %906 = vperm.xlu0 %905, %v834
      %v907 = vpop.permute.xlu0 %906
      %910 = vset.pattern.permute.xlu0 0
      %911 = vperm.xlu0 %910, %v835
      %v912 = vpop.permute.xlu0 %911
      %915 = vset.pattern.permute.xlu0 0
      %916 = vperm.xlu0 %915, %v836
      %v917 = vpop.permute.xlu0 %916
      %920 = vset.pattern.permute.xlu0 0
      %921 = vperm.xlu0 %920, %v837
      %v922 = vpop.permute.xlu0 %921
      %925 = vset.pattern.permute.xlu0 0
      %926 = vperm.xlu0 %925, %v838
      %v927 = vpop.permute.xlu0 %926
      %930 = vset.pattern.permute.xlu0 0
      %931 = vperm.xlu0 %930, %v839
      %v932 = vpop.permute.xlu0 %931
      %935 = vset.pattern.permute.xlu0 0
      %936 = vperm.xlu0 %935, %v840
      %v937 = vpop.permute.xlu0 %936
      %940 = vset.pattern.permute.xlu0 0
      %941 = vperm.xlu0 %940, %v841
      %v942 = vpop.permute.xlu0 %941
      %945 = vset.pattern.permute.xlu0 0
      %946 = vperm.xlu0 %945, %v842
      %v947 = vpop.permute.xlu0 %946
      %950 = vset.pattern.permute.xlu0 0
      %951 = vperm.xlu0 %950, %v843
      %v952 = vpop.permute.xlu0 %951
      %955 = vset.pattern.permute.xlu0 0
      %956 = vperm.xlu0 %955, %v844
      %v957 = vpop.permute.xlu0 %956
      %960 = vset.pattern.permute.xlu0 0
      %961 = vperm.xlu0 %960, %v845
      %v962 = vpop.permute.xlu0 %961
      %965 = vset.pattern.permute.xlu0 0
      %966 = vperm.xlu0 %965, %v846
      %v967 = vpop.permute.xlu0 %966
      %970 = vset.pattern.permute.xlu0 0
      %971 = vperm.xlu0 %970, %v847
      %v972 = vpop.permute.xlu0 %971
      %975 = vset.pattern.permute.xlu0 0
      %976 = vperm.xlu0 %975, %v848
      %v977 = vpop.permute.xlu0 %976
      %980 = vset.pattern.permute.xlu0 0
      %981 = vperm.xlu0 %980, %v849
      %v982 = vpop.permute.xlu0 %981
      %985 = vset.pattern.permute.xlu0 0
      %986 = vperm.xlu0 %985, %v850
      %v987 = vpop.permute.xlu0 %986
      %990 = vset.pattern.permute.xlu0 0
      %991 = vperm.xlu0 %990, %v851
      %v992 = vpop.permute.xlu0 %991
      %995 = vset.pattern.permute.xlu0 0
      %996 = vperm.xlu0 %995, %v852
      %v997 = vpop.permute.xlu0 %996
      %1000 = vset.pattern.permute.xlu0 0
      %1001 = vperm.xlu0 %1000, %v853
      %v1002 = vpop.permute.xlu0 %1001
      %1005 = vset.pattern.permute.xlu0 0
      %1006 = vperm.xlu0 %1005, %v854
      %v1007 = vpop.permute.xlu0 %1006
      %1010 = vset.pattern.permute.xlu0 0
      %1011 = vperm.xlu0 %1010, %v855
      %v1012 = vpop.permute.xlu0 %1011
      %1015 = vset.pattern.permute.xlu0 0
      %1016 = vperm.xlu0 %1015, %v856
      %v1017 = vpop.permute.xlu0 %1016
      %v1020 = vperm.slane %v858, 0
      %v1022 = vmul.f32 %v862, %v1020
      %v1023 = vmul.f32 %v867, %v1020
      %v1024 = vmul.f32 %v872, %v1020
      %v1025 = vmul.f32 %v877, %v1020
      %v1026 = vmul.f32 %v882, %v1020
      %v1027 = vmul.f32 %v887, %v1020
      %v1028 = vmul.f32 %v892, %v1020
      %v1029 = vmul.f32 %v897, %v1020
      %v1030 = vmul.f32 %v902, %v1020
      %v1031 = vmul.f32 %v907, %v1020
      %v1032 = vmul.f32 %v912, %v1020
      %v1033 = vmul.f32 %v917, %v1020
      %v1034 = vmul.f32 %v922, %v1020
      %v1035 = vmul.f32 %v927, %v1020
      %v1036 = vmul.f32 %v932, %v1020
      %v1037 = vmul.f32 %v937, %v1020
      %v1038 = vmul.f32 %v942, %v1020
      %v1039 = vmul.f32 %v947, %v1020
      %v1040 = vmul.f32 %v952, %v1020
      %v1041 = vmul.f32 %v957, %v1020
      %v1042 = vmul.f32 %v962, %v1020
      %v1043 = vmul.f32 %v967, %v1020
      %v1044 = vmul.f32 %v972, %v1020
      %v1045 = vmul.f32 %v977, %v1020
      %v1046 = vmul.f32 %v982, %v1020
      %v1047 = vmul.f32 %v987, %v1020
      %v1048 = vmul.f32 %v992, %v1020
      %v1049 = vmul.f32 %v997, %v1020
      %v1050 = vmul.f32 %v1002, %v1020
      %v1051 = vmul.f32 %v1007, %v1020
      %v1052 = vmul.f32 %v1012, %v1020
      %v1053 = vmul.f32 %v1017, %v1020
      %v1054 = vadd.f32 %v793, %v1022
      %v1055 = vadd.f32 %v794, %v1023
      %v1056 = vadd.f32 %v795, %v1024
      %v1057 = vadd.f32 %v796, %v1025
      %v1058 = vadd.f32 %v797, %v1026
      %v1059 = vadd.f32 %v798, %v1027
      %v1060 = vadd.f32 %v799, %v1028
      %v1061 = vadd.f32 %v800, %v1029
      %v1062 = vadd.f32 %v801, %v1030
      %v1063 = vadd.f32 %v802, %v1031
      %v1064 = vadd.f32 %v803, %v1032
      %v1065 = vadd.f32 %v804, %v1033
      %v1066 = vadd.f32 %v805, %v1034
      %v1067 = vadd.f32 %v806, %v1035
      %v1068 = vadd.f32 %v807, %v1036
      %v1069 = vadd.f32 %v808, %v1037
      %v1070 = vadd.f32 %v809, %v1038
      %v1071 = vadd.f32 %v810, %v1039
      %v1072 = vadd.f32 %v811, %v1040
      %v1073 = vadd.f32 %v812, %v1041
      %v1074 = vadd.f32 %v813, %v1042
      %v1075 = vadd.f32 %v814, %v1043
      %v1076 = vadd.f32 %v815, %v1044
      %v1077 = vadd.f32 %v816, %v1045
      %v1078 = vadd.f32 %v817, %v1046
      %v1079 = vadd.f32 %v818, %v1047
      %v1080 = vadd.f32 %v819, %v1048
      %v1081 = vadd.f32 %v820, %v1049
      %v1082 = vadd.f32 %v821, %v1050
      %v1083 = vadd.f32 %v822, %v1051
      %v1084 = vadd.f32 %v823, %v1052
      %v1085 = vadd.f32 %v824, %v1053
      %v1086 = vld [vmem:[#allocation2 + $0x2] sm:$0xff]
      %v1087 = vld [vmem:[#allocation2 + $0xa] sm:$0xff]
      %v1088 = vld [vmem:[#allocation2 + $0x1a] sm:$0xff]
      %v1089 = vld [vmem:[#allocation2 + $0x22] sm:$0xff]
      %v1090 = vld [vmem:[#allocation2 + $0x32] sm:$0xff]
      %v1091 = vld [vmem:[#allocation2 + $0x3a] sm:$0xff]
      %v1092 = vld [vmem:[#allocation2 + $0x4a] sm:$0xff]
      %v1093 = vld [vmem:[#allocation2 + $0x52] sm:$0xff]
      %v1094 = vld [vmem:[#allocation2 + $0x62] sm:$0xff]
      %v1095 = vld [vmem:[#allocation2 + $0x6a] sm:$0xff]
      %v1096 = vld [vmem:[#allocation2 + $0x7a] sm:$0xff]
      %v1097 = vld [vmem:[#allocation2 + $0x82] sm:$0xff]
      %v1098 = vld [vmem:[#allocation2 + $0x92] sm:$0xff]
      %v1099 = vld [vmem:[#allocation2 + $0x9a] sm:$0xff]
      %v1100 = vld [vmem:[#allocation2 + $0xaa] sm:$0xff]
      %v1101 = vld [vmem:[#allocation2 + $0xb2] sm:$0xff]
      %v1102 = vld [vmem:[#allocation2 + $0xc2] sm:$0xff]
      %v1103 = vld [vmem:[#allocation2 + $0xca] sm:$0xff]
      %v1104 = vld [vmem:[#allocation2 + $0xda] sm:$0xff]
      %v1105 = vld [vmem:[#allocation2 + $0xe2] sm:$0xff]
      %v1106 = vld [vmem:[#allocation2 + $0xf2] sm:$0xff]
      %v1107 = vld [vmem:[#allocation2 + $0xfa] sm:$0xff]
      %v1108 = vld [vmem:[#allocation2 + $0x10a] sm:$0xff]
      %v1109 = vld [vmem:[#allocation2 + $0x112] sm:$0xff]
      %v1110 = vld [vmem:[#allocation2 + $0x122] sm:$0xff]
      %v1111 = vld [vmem:[#allocation2 + $0x12a] sm:$0xff]
      %v1112 = vld [vmem:[#allocation2 + $0x13a] sm:$0xff]
      %v1113 = vld [vmem:[#allocation2 + $0x142] sm:$0xff]
      %v1114 = vld [vmem:[#allocation2 + $0x152] sm:$0xff]
      %v1115 = vld [vmem:[#allocation2 + $0x15a] sm:$0xff]
      %v1116 = vld [vmem:[#allocation2 + $0x16a] sm:$0xff]
      %v1117 = vld [vmem:[#allocation2 + $0x172] sm:$0xff]
      %s1118 = scalar_lea.vmem %s1, 2
      %v1119 = vld [vmem:[%s1118] sm:$0x1]
      %1121 = vset.pattern.permute.xlu0 0
      %1122 = vperm.xlu0 %1121, %v1086
      %v1123 = vpop.permute.xlu0 %1122
      %1126 = vset.pattern.permute.xlu0 0
      %1127 = vperm.xlu0 %1126, %v1087
      %v1128 = vpop.permute.xlu0 %1127
      %1131 = vset.pattern.permute.xlu0 0
      %1132 = vperm.xlu0 %1131, %v1088
      %v1133 = vpop.permute.xlu0 %1132
      %1136 = vset.pattern.permute.xlu0 0
      %1137 = vperm.xlu0 %1136, %v1089
      %v1138 = vpop.permute.xlu0 %1137
      %1141 = vset.pattern.permute.xlu0 0
      %1142 = vperm.xlu0 %1141, %v1090
      %v1143 = vpop.permute.xlu0 %1142
      %1146 = vset.pattern.permute.xlu0 0
      %1147 = vperm.xlu0 %1146, %v1091
      %v1148 = vpop.permute.xlu0 %1147
      %1151 = vset.pattern.permute.xlu0 0
      %1152 = vperm.xlu0 %1151, %v1092
      %v1153 = vpop.permute.xlu0 %1152
      %1156 = vset.pattern.permute.xlu0 0
      %1157 = vperm.xlu0 %1156, %v1093
      %v1158 = vpop.permute.xlu0 %1157
      %1161 = vset.pattern.permute.xlu0 0
      %1162 = vperm.xlu0 %1161, %v1094
      %v1163 = vpop.permute.xlu0 %1162
      %1166 = vset.pattern.permute.xlu0 0
      %1167 = vperm.xlu0 %1166, %v1095
      %v1168 = vpop.permute.xlu0 %1167
      %1171 = vset.pattern.permute.xlu0 0
      %1172 = vperm.xlu0 %1171, %v1096
      %v1173 = vpop.permute.xlu0 %1172
      %1176 = vset.pattern.permute.xlu0 0
      %1177 = vperm.xlu0 %1176, %v1097
      %v1178 = vpop.permute.xlu0 %1177
      %1181 = vset.pattern.permute.xlu0 0
      %1182 = vperm.xlu0 %1181, %v1098
      %v1183 = vpop.permute.xlu0 %1182
      %1186 = vset.pattern.permute.xlu0 0
      %1187 = vperm.xlu0 %1186, %v1099
      %v1188 = vpop.permute.xlu0 %1187
      %1191 = vset.pattern.permute.xlu0 0
      %1192 = vperm.xlu0 %1191, %v1100
      %v1193 = vpop.permute.xlu0 %1192
      %1196 = vset.pattern.permute.xlu0 0
      %1197 = vperm.xlu0 %1196, %v1101
      %v1198 = vpop.permute.xlu0 %1197
      %1201 = vset.pattern.permute.xlu0 0
      %1202 = vperm.xlu0 %1201, %v1102
      %v1203 = vpop.permute.xlu0 %1202
      %1206 = vset.pattern.permute.xlu0 0
      %1207 = vperm.xlu0 %1206, %v1103
      %v1208 = vpop.permute.xlu0 %1207
      %1211 = vset.pattern.permute.xlu0 0
      %1212 = vperm.xlu0 %1211, %v1104
      %v1213 = vpop.permute.xlu0 %1212
      %1216 = vset.pattern.permute.xlu0 0
      %1217 = vperm.xlu0 %1216, %v1105
      %v1218 = vpop.permute.xlu0 %1217
      %1221 = vset.pattern.permute.xlu0 0
      %1222 = vperm.xlu0 %1221, %v1106
      %v1223 = vpop.permute.xlu0 %1222
      %1226 = vset.pattern.permute.xlu0 0
      %1227 = vperm.xlu0 %1226, %v1107
      %v1228 = vpop.permute.xlu0 %1227
      %1231 = vset.pattern.permute.xlu0 0
      %1232 = vperm.xlu0 %1231, %v1108
      %v1233 = vpop.permute.xlu0 %1232
      %1236 = vset.pattern.permute.xlu0 0
      %1237 = vperm.xlu0 %1236, %v1109
      %v1238 = vpop.permute.xlu0 %1237
      %1241 = vset.pattern.permute.xlu0 0
      %1242 = vperm.xlu0 %1241, %v1110
      %v1243 = vpop.permute.xlu0 %1242
      %1246 = vset.pattern.permute.xlu0 0
      %1247 = vperm.xlu0 %1246, %v1111
      %v1248 = vpop.permute.xlu0 %1247
      %1251 = vset.pattern.permute.xlu0 0
      %1252 = vperm.xlu0 %1251, %v1112
      %v1253 = vpop.permute.xlu0 %1252
      %1256 = vset.pattern.permute.xlu0 0
      %1257 = vperm.xlu0 %1256, %v1113
      %v1258 = vpop.permute.xlu0 %1257
      %1261 = vset.pattern.permute.xlu0 0
      %1262 = vperm.xlu0 %1261, %v1114
      %v1263 = vpop.permute.xlu0 %1262
      %1266 = vset.pattern.permute.xlu0 0
      %1267 = vperm.xlu0 %1266, %v1115
      %v1268 = vpop.permute.xlu0 %1267
      %1271 = vset.pattern.permute.xlu0 0
      %1272 = vperm.xlu0 %1271, %v1116
      %v1273 = vpop.permute.xlu0 %1272
      %1276 = vset.pattern.permute.xlu0 0
      %1277 = vperm.xlu0 %1276, %v1117
      %v1278 = vpop.permute.xlu0 %1277
      %v1281 = vperm.slane %v1119, 0
      %v1283 = vmul.f32 %v1123, %v1281
      %v1284 = vmul.f32 %v1128, %v1281
      %v1285 = vmul.f32 %v1133, %v1281
      %v1286 = vmul.f32 %v1138, %v1281
      %v1287 = vmul.f32 %v1143, %v1281
      %v1288 = vmul.f32 %v1148, %v1281
      %v1289 = vmul.f32 %v1153, %v1281
      %v1290 = vmul.f32 %v1158, %v1281
      %v1291 = vmul.f32 %v1163, %v1281
      %v1292 = vmul.f32 %v1168, %v1281
      %v1293 = vmul.f32 %v1173, %v1281
      %v1294 = vmul.f32 %v1178, %v1281
      %v1295 = vmul.f32 %v1183, %v1281
      %v1296 = vmul.f32 %v1188, %v1281
      %v1297 = vmul.f32 %v1193, %v1281
      %v1298 = vmul.f32 %v1198, %v1281
      %v1299 = vmul.f32 %v1203, %v1281
      %v1300 = vmul.f32 %v1208, %v1281
      %v1301 = vmul.f32 %v1213, %v1281
      %v1302 = vmul.f32 %v1218, %v1281
      %v1303 = vmul.f32 %v1223, %v1281
      %v1304 = vmul.f32 %v1228, %v1281
      %v1305 = vmul.f32 %v1233, %v1281
      %v1306 = vmul.f32 %v1238, %v1281
      %v1307 = vmul.f32 %v1243, %v1281
      %v1308 = vmul.f32 %v1248, %v1281
      %v1309 = vmul.f32 %v1253, %v1281
      %v1310 = vmul.f32 %v1258, %v1281
      %v1311 = vmul.f32 %v1263, %v1281
      %v1312 = vmul.f32 %v1268, %v1281
      %v1313 = vmul.f32 %v1273, %v1281
      %v1314 = vmul.f32 %v1278, %v1281
      %v1315 = vadd.f32 %v1054, %v1283
      %v1316 = vadd.f32 %v1055, %v1284
      %v1317 = vadd.f32 %v1056, %v1285
      %v1318 = vadd.f32 %v1057, %v1286
      %v1319 = vadd.f32 %v1058, %v1287
      %v1320 = vadd.f32 %v1059, %v1288
      %v1321 = vadd.f32 %v1060, %v1289
      %v1322 = vadd.f32 %v1061, %v1290
      %v1323 = vadd.f32 %v1062, %v1291
      %v1324 = vadd.f32 %v1063, %v1292
      %v1325 = vadd.f32 %v1064, %v1293
      %v1326 = vadd.f32 %v1065, %v1294
      %v1327 = vadd.f32 %v1066, %v1295
      %v1328 = vadd.f32 %v1067, %v1296
      %v1329 = vadd.f32 %v1068, %v1297
      %v1330 = vadd.f32 %v1069, %v1298
      %v1331 = vadd.f32 %v1070, %v1299
      %v1332 = vadd.f32 %v1071, %v1300
      %v1333 = vadd.f32 %v1072, %v1301
      %v1334 = vadd.f32 %v1073, %v1302
      %v1335 = vadd.f32 %v1074, %v1303
      %v1336 = vadd.f32 %v1075, %v1304
      %v1337 = vadd.f32 %v1076, %v1305
      %v1338 = vadd.f32 %v1077, %v1306
      %v1339 = vadd.f32 %v1078, %v1307
      %v1340 = vadd.f32 %v1079, %v1308
      %v1341 = vadd.f32 %v1080, %v1309
      %v1342 = vadd.f32 %v1081, %v1310
      %v1343 = vadd.f32 %v1082, %v1311
      %v1344 = vadd.f32 %v1083, %v1312
      %v1345 = vadd.f32 %v1084, %v1313
      %v1346 = vadd.f32 %v1085, %v1314
      %v1347 = vld [vmem:[%s531] sm:$0xff]
      %v1348 = vld [vmem:[%s531 + $0x8] sm:$0xff]
      %v1349 = vld [vmem:[%s531 + $0x18] sm:$0xff]
      %v1350 = vld [vmem:[%s531 + $0x20] sm:$0xff]
      %v1351 = vld [vmem:[%s531 + $0x30] sm:$0xff]
      %v1352 = vld [vmem:[%s531 + $0x38] sm:$0xff]
      %v1353 = vld [vmem:[%s531 + $0x48] sm:$0xff]
      %v1354 = vld [vmem:[%s531 + $0x50] sm:$0xff]
      %v1355 = vld [vmem:[%s531 + $0x60] sm:$0xff]
      %v1356 = vld [vmem:[%s531 + $0x68] sm:$0xff]
      %v1357 = vld [vmem:[%s531 + $0x78] sm:$0xff]
      %v1358 = vld [vmem:[%s531 + $0x80] sm:$0xff]
      %v1359 = vld [vmem:[%s531 + $0x90] sm:$0xff]
      %v1360 = vld [vmem:[%s531 + $0x98] sm:$0xff]
      %v1361 = vld [vmem:[%s531 + $0xa8] sm:$0xff]
      %v1362 = vld [vmem:[%s531 + $0xb0] sm:$0xff]
      %v1363 = vld [vmem:[%s531 + $0xc0] sm:$0xff]
      %v1364 = vld [vmem:[%s531 + $0xc8] sm:$0xff]
      %v1365 = vld [vmem:[%s531 + $0xd8] sm:$0xff]
      %v1366 = vld [vmem:[%s531 + $0xe0] sm:$0xff]
      %v1367 = vld [vmem:[%s531 + $0xf0] sm:$0xff]
      %v1368 = vld [vmem:[%s531 + $0xf8] sm:$0xff]
      %v1369 = vld [vmem:[%s531 + $0x108] sm:$0xff]
      %v1370 = vld [vmem:[%s531 + $0x110] sm:$0xff]
      %v1371 = vld [vmem:[%s531 + $0x120] sm:$0xff]
      %v1372 = vld [vmem:[%s531 + $0x128] sm:$0xff]
      %v1373 = vld [vmem:[%s531 + $0x138] sm:$0xff]
      %v1374 = vld [vmem:[%s531 + $0x140] sm:$0xff]
      %v1375 = vld [vmem:[%s531 + $0x150] sm:$0xff]
      %v1376 = vld [vmem:[%s531 + $0x158] sm:$0xff]
      %v1377 = vld [vmem:[%s531 + $0x168] sm:$0xff]
      %v1378 = vld [vmem:[%s531 + $0x170] sm:$0xff]
      %s1379 = scalar_lea.vmem %s1, 3
      %v1380 = vld [vmem:[%s1379] sm:$0x1]
      %1382 = vset.pattern.permute.xlu0 0
      %1383 = vperm.xlu0 %1382, %v1347
      %v1384 = vpop.permute.xlu0 %1383
      %1387 = vset.pattern.permute.xlu0 0
      %1388 = vperm.xlu0 %1387, %v1348
      %v1389 = vpop.permute.xlu0 %1388
      %1392 = vset.pattern.permute.xlu0 0
      %1393 = vperm.xlu0 %1392, %v1349
      %v1394 = vpop.permute.xlu0 %1393
      %1397 = vset.pattern.permute.xlu0 0
      %1398 = vperm.xlu0 %1397, %v1350
      %v1399 = vpop.permute.xlu0 %1398
      %1402 = vset.pattern.permute.xlu0 0
      %1403 = vperm.xlu0 %1402, %v1351
      %v1404 = vpop.permute.xlu0 %1403
      %1407 = vset.pattern.permute.xlu0 0
      %1408 = vperm.xlu0 %1407, %v1352
      %v1409 = vpop.permute.xlu0 %1408
      %1412 = vset.pattern.permute.xlu0 0
      %1413 = vperm.xlu0 %1412, %v1353
      %v1414 = vpop.permute.xlu0 %1413
      %1417 = vset.pattern.permute.xlu0 0
      %1418 = vperm.xlu0 %1417, %v1354
      %v1419 = vpop.permute.xlu0 %1418
      %1422 = vset.pattern.permute.xlu0 0
      %1423 = vperm.xlu0 %1422, %v1355
      %v1424 = vpop.permute.xlu0 %1423
      %1427 = vset.pattern.permute.xlu0 0
      %1428 = vperm.xlu0 %1427, %v1356
      %v1429 = vpop.permute.xlu0 %1428
      %1432 = vset.pattern.permute.xlu0 0
      %1433 = vperm.xlu0 %1432, %v1357
      %v1434 = vpop.permute.xlu0 %1433
      %1437 = vset.pattern.permute.xlu0 0
      %1438 = vperm.xlu0 %1437, %v1358
      %v1439 = vpop.permute.xlu0 %1438
      %1442 = vset.pattern.permute.xlu0 0
      %1443 = vperm.xlu0 %1442, %v1359
      %v1444 = vpop.permute.xlu0 %1443
      %1447 = vset.pattern.permute.xlu0 0
      %1448 = vperm.xlu0 %1447, %v1360
      %v1449 = vpop.permute.xlu0 %1448
      %1452 = vset.pattern.permute.xlu0 0
      %1453 = vperm.xlu0 %1452, %v1361
      %v1454 = vpop.permute.xlu0 %1453
      %1457 = vset.pattern.permute.xlu0 0
      %1458 = vperm.xlu0 %1457, %v1362
      %v1459 = vpop.permute.xlu0 %1458
      %1462 = vset.pattern.permute.xlu0 0
      %1463 = vperm.xlu0 %1462, %v1363
      %v1464 = vpop.permute.xlu0 %1463
      %1467 = vset.pattern.permute.xlu0 0
      %1468 = vperm.xlu0 %1467, %v1364
      %v1469 = vpop.permute.xlu0 %1468
      %1472 = vset.pattern.permute.xlu0 0
      %1473 = vperm.xlu0 %1472, %v1365
      %v1474 = vpop.permute.xlu0 %1473
      %1477 = vset.pattern.permute.xlu0 0
      %1478 = vperm.xlu0 %1477, %v1366
      %v1479 = vpop.permute.xlu0 %1478
      %1482 = vset.pattern.permute.xlu0 0
      %1483 = vperm.xlu0 %1482, %v1367
      %v1484 = vpop.permute.xlu0 %1483
      %1487 = vset.pattern.permute.xlu0 0
      %1488 = vperm.xlu0 %1487, %v1368
      %v1489 = vpop.permute.xlu0 %1488
      %1492 = vset.pattern.permute.xlu0 0
      %1493 = vperm.xlu0 %1492, %v1369
      %v1494 = vpop.permute.xlu0 %1493
      %1497 = vset.pattern.permute.xlu0 0
      %1498 = vperm.xlu0 %1497, %v1370
      %v1499 = vpop.permute.xlu0 %1498
      %1502 = vset.pattern.permute.xlu0 0
      %1503 = vperm.xlu0 %1502, %v1371
      %v1504 = vpop.permute.xlu0 %1503
      %1507 = vset.pattern.permute.xlu0 0
      %1508 = vperm.xlu0 %1507, %v1372
      %v1509 = vpop.permute.xlu0 %1508
      %1512 = vset.pattern.permute.xlu0 0
      %1513 = vperm.xlu0 %1512, %v1373
      %v1514 = vpop.permute.xlu0 %1513
      %1517 = vset.pattern.permute.xlu0 0
      %1518 = vperm.xlu0 %1517, %v1374
      %v1519 = vpop.permute.xlu0 %1518
      %1522 = vset.pattern.permute.xlu0 0
      %1523 = vperm.xlu0 %1522, %v1375
      %v1524 = vpop.permute.xlu0 %1523
      %1527 = vset.pattern.permute.xlu0 0
      %1528 = vperm.xlu0 %1527, %v1376
      %v1529 = vpop.permute.xlu0 %1528
      %1532 = vset.pattern.permute.xlu0 0
      %1533 = vperm.xlu0 %1532, %v1377
      %v1534 = vpop.permute.xlu0 %1533
      %1537 = vset.pattern.permute.xlu0 0
      %1538 = vperm.xlu0 %1537, %v1378
      %v1539 = vpop.permute.xlu0 %1538
      %v1542 = vperm.slane %v1380, 0
      %v1544 = vmul.f32 %v1384, %v1542
      %v1545 = vmul.f32 %v1389, %v1542
      %v1546 = vmul.f32 %v1394, %v1542
      %v1547 = vmul.f32 %v1399, %v1542
      %v1548 = vmul.f32 %v1404, %v1542
      %v1549 = vmul.f32 %v1409, %v1542
      %v1550 = vmul.f32 %v1414, %v1542
      %v1551 = vmul.f32 %v1419, %v1542
      %v1552 = vmul.f32 %v1424, %v1542
      %v1553 = vmul.f32 %v1429, %v1542
      %v1554 = vmul.f32 %v1434, %v1542
      %v1555 = vmul.f32 %v1439, %v1542
      %v1556 = vmul.f32 %v1444, %v1542
      %v1557 = vmul.f32 %v1449, %v1542
      %v1558 = vmul.f32 %v1454, %v1542
      %v1559 = vmul.f32 %v1459, %v1542
      %v1560 = vmul.f32 %v1464, %v1542
      %v1561 = vmul.f32 %v1469, %v1542
      %v1562 = vmul.f32 %v1474, %v1542
      %v1563 = vmul.f32 %v1479, %v1542
      %v1564 = vmul.f32 %v1484, %v1542
      %v1565 = vmul.f32 %v1489, %v1542
      %v1566 = vmul.f32 %v1494, %v1542
      %v1567 = vmul.f32 %v1499, %v1542
      %v1568 = vmul.f32 %v1504, %v1542
      %v1569 = vmul.f32 %v1509, %v1542
      %v1570 = vmul.f32 %v1514, %v1542
      %v1571 = vmul.f32 %v1519, %v1542
      %v1572 = vmul.f32 %v1524, %v1542
      %v1573 = vmul.f32 %v1529, %v1542
      %v1574 = vmul.f32 %v1534, %v1542
      %v1575 = vmul.f32 %v1539, %v1542
      %v1576 = vadd.f32 %v1315, %v1544
      %v1577 = vadd.f32 %v1316, %v1545
      %v1578 = vadd.f32 %v1317, %v1546
      %v1579 = vadd.f32 %v1318, %v1547
      %v1580 = vadd.f32 %v1319, %v1548
      %v1581 = vadd.f32 %v1320, %v1549
      %v1582 = vadd.f32 %v1321, %v1550
      %v1583 = vadd.f32 %v1322, %v1551
      %v1584 = vadd.f32 %v1323, %v1552
      %v1585 = vadd.f32 %v1324, %v1553
      %v1586 = vadd.f32 %v1325, %v1554
      %v1587 = vadd.f32 %v1326, %v1555
      %v1588 = vadd.f32 %v1327, %v1556
      %v1589 = vadd.f32 %v1328, %v1557
      %v1590 = vadd.f32 %v1329, %v1558
      %v1591 = vadd.f32 %v1330, %v1559
      %v1592 = vadd.f32 %v1331, %v1560
      %v1593 = vadd.f32 %v1332, %v1561
      %v1594 = vadd.f32 %v1333, %v1562
      %v1595 = vadd.f32 %v1334, %v1563
      %v1596 = vadd.f32 %v1335, %v1564
      %v1597 = vadd.f32 %v1336, %v1565
      %v1598 = vadd.f32 %v1337, %v1566
      %v1599 = vadd.f32 %v1338, %v1567
      %v1600 = vadd.f32 %v1339, %v1568
      %v1601 = vadd.f32 %v1340, %v1569
      %v1602 = vadd.f32 %v1341, %v1570
      %v1603 = vadd.f32 %v1342, %v1571
      %v1604 = vadd.f32 %v1343, %v1572
      %v1605 = vadd.f32 %v1344, %v1573
      %v1606 = vadd.f32 %v1345, %v1574
      %v1607 = vadd.f32 %v1346, %v1575
      %v1608 = vld [vmem:[%s531 + $0x1] sm:$0xff]
      %v1609 = vld [vmem:[%s531 + $0x9] sm:$0xff]
      %v1610 = vld [vmem:[%s531 + $0x19] sm:$0xff]
      %v1611 = vld [vmem:[%s531 + $0x21] sm:$0xff]
      %v1612 = vld [vmem:[%s531 + $0x31] sm:$0xff]
      %v1613 = vld [vmem:[%s531 + $0x39] sm:$0xff]
      %v1614 = vld [vmem:[%s531 + $0x49] sm:$0xff]
      %v1615 = vld [vmem:[%s531 + $0x51] sm:$0xff]
      %v1616 = vld [vmem:[%s531 + $0x61] sm:$0xff]
      %v1617 = vld [vmem:[%s531 + $0x69] sm:$0xff]
      %v1618 = vld [vmem:[%s531 + $0x79] sm:$0xff]
      %v1619 = vld [vmem:[%s531 + $0x81] sm:$0xff]
      %v1620 = vld [vmem:[%s531 + $0x91] sm:$0xff]
      %v1621 = vld [vmem:[%s531 + $0x99] sm:$0xff]
      %v1622 = vld [vmem:[%s531 + $0xa9] sm:$0xff]
      %v1623 = vld [vmem:[%s531 + $0xb1] sm:$0xff]
      %v1624 = vld [vmem:[%s531 + $0xc1] sm:$0xff]
      %v1625 = vld [vmem:[%s531 + $0xc9] sm:$0xff]
      %v1626 = vld [vmem:[%s531 + $0xd9] sm:$0xff]
      %v1627 = vld [vmem:[%s531 + $0xe1] sm:$0xff]
      %v1628 = vld [vmem:[%s531 + $0xf1] sm:$0xff]
      %v1629 = vld [vmem:[%s531 + $0xf9] sm:$0xff]
      %v1630 = vld [vmem:[%s531 + $0x109] sm:$0xff]
      %v1631 = vld [vmem:[%s531 + $0x111] sm:$0xff]
      %v1632 = vld [vmem:[%s531 + $0x121] sm:$0xff]
      %v1633 = vld [vmem:[%s531 + $0x129] sm:$0xff]
      %v1634 = vld [vmem:[%s531 + $0x139] sm:$0xff]
      %v1635 = vld [vmem:[%s531 + $0x141] sm:$0xff]
      %v1636 = vld [vmem:[%s531 + $0x151] sm:$0xff]
      %v1637 = vld [vmem:[%s531 + $0x159] sm:$0xff]
      %v1638 = vld [vmem:[%s531 + $0x169] sm:$0xff]
      %v1639 = vld [vmem:[%s531 + $0x171] sm:$0xff]
      %s1640 = scalar_lea.vmem %s1, 4
      %v1641 = vld [vmem:[%s1640] sm:$0x1]
      %1643 = vset.pattern.permute.xlu0 0
      %1644 = vperm.xlu0 %1643, %v1608
      %v1645 = vpop.permute.xlu0 %1644
      %1648 = vset.pattern.permute.xlu0 0
      %1649 = vperm.xlu0 %1648, %v1609
      %v1650 = vpop.permute.xlu0 %1649
      %1653 = vset.pattern.permute.xlu0 0
      %1654 = vperm.xlu0 %1653, %v1610
      %v1655 = vpop.permute.xlu0 %1654
      %1658 = vset.pattern.permute.xlu0 0
      %1659 = vperm.xlu0 %1658, %v1611
      %v1660 = vpop.permute.xlu0 %1659
      %1663 = vset.pattern.permute.xlu0 0
      %1664 = vperm.xlu0 %1663, %v1612
      %v1665 = vpop.permute.xlu0 %1664
      %1668 = vset.pattern.permute.xlu0 0
      %1669 = vperm.xlu0 %1668, %v1613
      %v1670 = vpop.permute.xlu0 %1669
      %1673 = vset.pattern.permute.xlu0 0
      %1674 = vperm.xlu0 %1673, %v1614
      %v1675 = vpop.permute.xlu0 %1674
      %1678 = vset.pattern.permute.xlu0 0
      %1679 = vperm.xlu0 %1678, %v1615
      %v1680 = vpop.permute.xlu0 %1679
      %1683 = vset.pattern.permute.xlu0 0
      %1684 = vperm.xlu0 %1683, %v1616
      %v1685 = vpop.permute.xlu0 %1684
      %1688 = vset.pattern.permute.xlu0 0
      %1689 = vperm.xlu0 %1688, %v1617
      %v1690 = vpop.permute.xlu0 %1689
      %1693 = vset.pattern.permute.xlu0 0
      %1694 = vperm.xlu0 %1693, %v1618
      %v1695 = vpop.permute.xlu0 %1694
      %1698 = vset.pattern.permute.xlu0 0
      %1699 = vperm.xlu0 %1698, %v1619
      %v1700 = vpop.permute.xlu0 %1699
      %1703 = vset.pattern.permute.xlu0 0
      %1704 = vperm.xlu0 %1703, %v1620
      %v1705 = vpop.permute.xlu0 %1704
      %1708 = vset.pattern.permute.xlu0 0
      %1709 = vperm.xlu0 %1708, %v1621
      %v1710 = vpop.permute.xlu0 %1709
      %1713 = vset.pattern.permute.xlu0 0
      %1714 = vperm.xlu0 %1713, %v1622
      %v1715 = vpop.permute.xlu0 %1714
      %1718 = vset.pattern.permute.xlu0 0
      %1719 = vperm.xlu0 %1718, %v1623
      %v1720 = vpop.permute.xlu0 %1719
      %1723 = vset.pattern.permute.xlu0 0
      %1724 = vperm.xlu0 %1723, %v1624
      %v1725 = vpop.permute.xlu0 %1724
      %1728 = vset.pattern.permute.xlu0 0
      %1729 = vperm.xlu0 %1728, %v1625
      %v1730 = vpop.permute.xlu0 %1729
      %1733 = vset.pattern.permute.xlu0 0
      %1734 = vperm.xlu0 %1733, %v1626
      %v1735 = vpop.permute.xlu0 %1734
      %1738 = vset.pattern.permute.xlu0 0
      %1739 = vperm.xlu0 %1738, %v1627
      %v1740 = vpop.permute.xlu0 %1739
      %1743 = vset.pattern.permute.xlu0 0
      %1744 = vperm.xlu0 %1743, %v1628
      %v1745 = vpop.permute.xlu0 %1744
      %1748 = vset.pattern.permute.xlu0 0
      %1749 = vperm.xlu0 %1748, %v1629
      %v1750 = vpop.permute.xlu0 %1749
      %1753 = vset.pattern.permute.xlu0 0
      %1754 = vperm.xlu0 %1753, %v1630
      %v1755 = vpop.permute.xlu0 %1754
      %1758 = vset.pattern.permute.xlu0 0
      %1759 = vperm.xlu0 %1758, %v1631
      %v1760 = vpop.permute.xlu0 %1759
      %1763 = vset.pattern.permute.xlu0 0
      %1764 = vperm.xlu0 %1763, %v1632
      %v1765 = vpop.permute.xlu0 %1764
      %1768 = vset.pattern.permute.xlu0 0
      %1769 = vperm.xlu0 %1768, %v1633
      %v1770 = vpop.permute.xlu0 %1769
      %1773 = vset.pattern.permute.xlu0 0
      %1774 = vperm.xlu0 %1773, %v1634
      %v1775 = vpop.permute.xlu0 %1774
      %1778 = vset.pattern.permute.xlu0 0
      %1779 = vperm.xlu0 %1778, %v1635
      %v1780 = vpop.permute.xlu0 %1779
      %1783 = vset.pattern.permute.xlu0 0
      %1784 = vperm.xlu0 %1783, %v1636
      %v1785 = vpop.permute.xlu0 %1784
      %1788 = vset.pattern.permute.xlu0 0
      %1789 = vperm.xlu0 %1788, %v1637
      %v1790 = vpop.permute.xlu0 %1789
      %1793 = vset.pattern.permute.xlu0 0
      %1794 = vperm.xlu0 %1793, %v1638
      %v1795 = vpop.permute.xlu0 %1794
      %1798 = vset.pattern.permute.xlu0 0
      %1799 = vperm.xlu0 %1798, %v1639
      %v1800 = vpop.permute.xlu0 %1799
      %v1803 = vperm.slane %v1641, 0
      %v1805 = vmul.f32 %v1645, %v1803
      %v1806 = vmul.f32 %v1650, %v1803
      %v1807 = vmul.f32 %v1655, %v1803
      %v1808 = vmul.f32 %v1660, %v1803
      %v1809 = vmul.f32 %v1665, %v1803
      %v1810 = vmul.f32 %v1670, %v1803
      %v1811 = vmul.f32 %v1675, %v1803
      %v1812 = vmul.f32 %v1680, %v1803
      %v1813 = vmul.f32 %v1685, %v1803
      %v1814 = vmul.f32 %v1690, %v1803
      %v1815 = vmul.f32 %v1695, %v1803
      %v1816 = vmul.f32 %v1700, %v1803
      %v1817 = vmul.f32 %v1705, %v1803
      %v1818 = vmul.f32 %v1710, %v1803
      %v1819 = vmul.f32 %v1715, %v1803
      %v1820 = vmul.f32 %v1720, %v1803
      %v1821 = vmul.f32 %v1725, %v1803
      %v1822 = vmul.f32 %v1730, %v1803
      %v1823 = vmul.f32 %v1735, %v1803
      %v1824 = vmul.f32 %v1740, %v1803
      %v1825 = vmul.f32 %v1745, %v1803
      %v1826 = vmul.f32 %v1750, %v1803
      %v1827 = vmul.f32 %v1755, %v1803
      %v1828 = vmul.f32 %v1760, %v1803
      %v1829 = vmul.f32 %v1765, %v1803
      %v1830 = vmul.f32 %v1770, %v1803
      %v1831 = vmul.f32 %v1775, %v1803
      %v1832 = vmul.f32 %v1780, %v1803
      %v1833 = vmul.f32 %v1785, %v1803
      %v1834 = vmul.f32 %v1790, %v1803
      %v1835 = vmul.f32 %v1795, %v1803
      %v1836 = vmul.f32 %v1800, %v1803
      %v1837 = vadd.f32 %v1576, %v1805
      %v1838 = vadd.f32 %v1577, %v1806
      %v1839 = vadd.f32 %v1578, %v1807
      %v1840 = vadd.f32 %v1579, %v1808
      %v1841 = vadd.f32 %v1580, %v1809
      %v1842 = vadd.f32 %v1581, %v1810
      %v1843 = vadd.f32 %v1582, %v1811
      %v1844 = vadd.f32 %v1583, %v1812
      %v1845 = vadd.f32 %v1584, %v1813
      %v1846 = vadd.f32 %v1585, %v1814
      %v1847 = vadd.f32 %v1586, %v1815
      %v1848 = vadd.f32 %v1587, %v1816
      %v1849 = vadd.f32 %v1588, %v1817
      %v1850 = vadd.f32 %v1589, %v1818
      %v1851 = vadd.f32 %v1590, %v1819
      %v1852 = vadd.f32 %v1591, %v1820
      %v1853 = vadd.f32 %v1592, %v1821
      %v1854 = vadd.f32 %v1593, %v1822
      %v1855 = vadd.f32 %v1594, %v1823
      %v1856 = vadd.f32 %v1595, %v1824
      %v1857 = vadd.f32 %v1596, %v1825
      %v1858 = vadd.f32 %v1597, %v1826
      %v1859 = vadd.f32 %v1598, %v1827
      %v1860 = vadd.f32 %v1599, %v1828
      %v1861 = vadd.f32 %v1600, %v1829
      %v1862 = vadd.f32 %v1601, %v1830
      %v1863 = vadd.f32 %v1602, %v1831
      %v1864 = vadd.f32 %v1603, %v1832
      %v1865 = vadd.f32 %v1604, %v1833
      %v1866 = vadd.f32 %v1605, %v1834
      %v1867 = vadd.f32 %v1606, %v1835
      %v1868 = vadd.f32 %v1607, %v1836
      %v1869 = vld [vmem:[%s531 + $0x2] sm:$0xff]
      %v1870 = vld [vmem:[%s531 + $0xa] sm:$0xff]
      %v1871 = vld [vmem:[%s531 + $0x1a] sm:$0xff]
      %v1872 = vld [vmem:[%s531 + $0x22] sm:$0xff]
      %v1873 = vld [vmem:[%s531 + $0x32] sm:$0xff]
      %v1874 = vld [vmem:[%s531 + $0x3a] sm:$0xff]
      %v1875 = vld [vmem:[%s531 + $0x4a] sm:$0xff]
      %v1876 = vld [vmem:[%s531 + $0x52] sm:$0xff]
      %v1877 = vld [vmem:[%s531 + $0x62] sm:$0xff]
      %v1878 = vld [vmem:[%s531 + $0x6a] sm:$0xff]
      %v1879 = vld [vmem:[%s531 + $0x7a] sm:$0xff]
      %v1880 = vld [vmem:[%s531 + $0x82] sm:$0xff]
      %v1881 = vld [vmem:[%s531 + $0x92] sm:$0xff]
      %v1882 = vld [vmem:[%s531 + $0x9a] sm:$0xff]
      %v1883 = vld [vmem:[%s531 + $0xaa] sm:$0xff]
      %v1884 = vld [vmem:[%s531 + $0xb2] sm:$0xff]
      %v1885 = vld [vmem:[%s531 + $0xc2] sm:$0xff]
      %v1886 = vld [vmem:[%s531 + $0xca] sm:$0xff]
      %v1887 = vld [vmem:[%s531 + $0xda] sm:$0xff]
      %v1888 = vld [vmem:[%s531 + $0xe2] sm:$0xff]
      %v1889 = vld [vmem:[%s531 + $0xf2] sm:$0xff]
      %v1890 = vld [vmem:[%s531 + $0xfa] sm:$0xff]
      %v1891 = vld [vmem:[%s531 + $0x10a] sm:$0xff]
      %v1892 = vld [vmem:[%s531 + $0x112] sm:$0xff]
      %v1893 = vld [vmem:[%s531 + $0x122] sm:$0xff]
      %v1894 = vld [vmem:[%s531 + $0x12a] sm:$0xff]
      %v1895 = vld [vmem:[%s531 + $0x13a] sm:$0xff]
      %v1896 = vld [vmem:[%s531 + $0x142] sm:$0xff]
      %v1897 = vld [vmem:[%s531 + $0x152] sm:$0xff]
      %v1898 = vld [vmem:[%s531 + $0x15a] sm:$0xff]
      %v1899 = vld [vmem:[%s531 + $0x16a] sm:$0xff]
      %v1900 = vld [vmem:[%s531 + $0x172] sm:$0xff]
      %s1901 = scalar_lea.vmem %s1, 5
      %v1902 = vld [vmem:[%s1901] sm:$0x1]
      %1904 = vset.pattern.permute.xlu0 0
      %1905 = vperm.xlu0 %1904, %v1869
      %v1906 = vpop.permute.xlu0 %1905
      %1909 = vset.pattern.permute.xlu0 0
      %1910 = vperm.xlu0 %1909, %v1870
      %v1911 = vpop.permute.xlu0 %1910
      %1914 = vset.pattern.permute.xlu0 0
      %1915 = vperm.xlu0 %1914, %v1871
      %v1916 = vpop.permute.xlu0 %1915
      %1919 = vset.pattern.permute.xlu0 0
      %1920 = vperm.xlu0 %1919, %v1872
      %v1921 = vpop.permute.xlu0 %1920
      %1924 = vset.pattern.permute.xlu0 0
      %1925 = vperm.xlu0 %1924, %v1873
      %v1926 = vpop.permute.xlu0 %1925
      %1929 = vset.pattern.permute.xlu0 0
      %1930 = vperm.xlu0 %1929, %v1874
      %v1931 = vpop.permute.xlu0 %1930
      %1934 = vset.pattern.permute.xlu0 0
      %1935 = vperm.xlu0 %1934, %v1875
      %v1936 = vpop.permute.xlu0 %1935
      %1939 = vset.pattern.permute.xlu0 0
      %1940 = vperm.xlu0 %1939, %v1876
      %v1941 = vpop.permute.xlu0 %1940
      %1944 = vset.pattern.permute.xlu0 0
      %1945 = vperm.xlu0 %1944, %v1877
      %v1946 = vpop.permute.xlu0 %1945
      %1949 = vset.pattern.permute.xlu0 0
      %1950 = vperm.xlu0 %1949, %v1878
      %v1951 = vpop.permute.xlu0 %1950
      %1954 = vset.pattern.permute.xlu0 0
      %1955 = vperm.xlu0 %1954, %v1879
      %v1956 = vpop.permute.xlu0 %1955
      %1959 = vset.pattern.permute.xlu0 0
      %1960 = vperm.xlu0 %1959, %v1880
      %v1961 = vpop.permute.xlu0 %1960
      %1964 = vset.pattern.permute.xlu0 0
      %1965 = vperm.xlu0 %1964, %v1881
      %v1966 = vpop.permute.xlu0 %1965
      %1969 = vset.pattern.permute.xlu0 0
      %1970 = vperm.xlu0 %1969, %v1882
      %v1971 = vpop.permute.xlu0 %1970
      %1974 = vset.pattern.permute.xlu0 0
      %1975 = vperm.xlu0 %1974, %v1883
      %v1976 = vpop.permute.xlu0 %1975
      %1979 = vset.pattern.permute.xlu0 0
      %1980 = vperm.xlu0 %1979, %v1884
      %v1981 = vpop.permute.xlu0 %1980
      %1984 = vset.pattern.permute.xlu0 0
      %1985 = vperm.xlu0 %1984, %v1885
      %v1986 = vpop.permute.xlu0 %1985
      %1989 = vset.pattern.permute.xlu0 0
      %1990 = vperm.xlu0 %1989, %v1886
      %v1991 = vpop.permute.xlu0 %1990
      %1994 = vset.pattern.permute.xlu0 0
      %1995 = vperm.xlu0 %1994, %v1887
      %v1996 = vpop.permute.xlu0 %1995
      %1999 = vset.pattern.permute.xlu0 0
      %2000 = vperm.xlu0 %1999, %v1888
      %v2001 = vpop.permute.xlu0 %2000
      %2004 = vset.pattern.permute.xlu0 0
      %2005 = vperm.xlu0 %2004, %v1889
      %v2006 = vpop.permute.xlu0 %2005
      %2009 = vset.pattern.permute.xlu0 0
      %2010 = vperm.xlu0 %2009, %v1890
      %v2011 = vpop.permute.xlu0 %2010
      %2014 = vset.pattern.permute.xlu0 0
      %2015 = vperm.xlu0 %2014, %v1891
      %v2016 = vpop.permute.xlu0 %2015
      %2019 = vset.pattern.permute.xlu0 0
      %2020 = vperm.xlu0 %2019, %v1892
      %v2021 = vpop.permute.xlu0 %2020
      %2024 = vset.pattern.permute.xlu0 0
      %2025 = vperm.xlu0 %2024, %v1893
      %v2026 = vpop.permute.xlu0 %2025
      %2029 = vset.pattern.permute.xlu0 0
      %2030 = vperm.xlu0 %2029, %v1894
      %v2031 = vpop.permute.xlu0 %2030
      %2034 = vset.pattern.permute.xlu0 0
      %2035 = vperm.xlu0 %2034, %v1895
      %v2036 = vpop.permute.xlu0 %2035
      %2039 = vset.pattern.permute.xlu0 0
      %2040 = vperm.xlu0 %2039, %v1896
      %v2041 = vpop.permute.xlu0 %2040
      %2044 = vset.pattern.permute.xlu0 0
      %2045 = vperm.xlu0 %2044, %v1897
      %v2046 = vpop.permute.xlu0 %2045
      %2049 = vset.pattern.permute.xlu0 0
      %2050 = vperm.xlu0 %2049, %v1898
      %v2051 = vpop.permute.xlu0 %2050
      %2054 = vset.pattern.permute.xlu0 0
      %2055 = vperm.xlu0 %2054, %v1899
      %v2056 = vpop.permute.xlu0 %2055
      %2059 = vset.pattern.permute.xlu0 0
      %2060 = vperm.xlu0 %2059, %v1900
      %v2061 = vpop.permute.xlu0 %2060
      %v2064 = vperm.slane %v1902, 0
      %v2066 = vmul.f32 %v1906, %v2064
      %v2067 = vmul.f32 %v1911, %v2064
      %v2068 = vmul.f32 %v1916, %v2064
      %v2069 = vmul.f32 %v1921, %v2064
      %v2070 = vmul.f32 %v1926, %v2064
      %v2071 = vmul.f32 %v1931, %v2064
      %v2072 = vmul.f32 %v1936, %v2064
      %v2073 = vmul.f32 %v1941, %v2064
      %v2074 = vmul.f32 %v1946, %v2064
      %v2075 = vmul.f32 %v1951, %v2064
      %v2076 = vmul.f32 %v1956, %v2064
      %v2077 = vmul.f32 %v1961, %v2064
      %v2078 = vmul.f32 %v1966, %v2064
      %v2079 = vmul.f32 %v1971, %v2064
      %v2080 = vmul.f32 %v1976, %v2064
      %v2081 = vmul.f32 %v1981, %v2064
      %v2082 = vmul.f32 %v1986, %v2064
      %v2083 = vmul.f32 %v1991, %v2064
      %v2084 = vmul.f32 %v1996, %v2064
      %v2085 = vmul.f32 %v2001, %v2064
      %v2086 = vmul.f32 %v2006, %v2064
      %v2087 = vmul.f32 %v2011, %v2064
      %v2088 = vmul.f32 %v2016, %v2064
      %v2089 = vmul.f32 %v2021, %v2064
      %v2090 = vmul.f32 %v2026, %v2064
      %v2091 = vmul.f32 %v2031, %v2064
      %v2092 = vmul.f32 %v2036, %v2064
      %v2093 = vmul.f32 %v2041, %v2064
      %v2094 = vmul.f32 %v2046, %v2064
      %v2095 = vmul.f32 %v2051, %v2064
      %v2096 = vmul.f32 %v2056, %v2064
      %v2097 = vmul.f32 %v2061, %v2064
      %v2098 = vadd.f32 %v1837, %v2066
      %v2099 = vadd.f32 %v1838, %v2067
      %v2100 = vadd.f32 %v1839, %v2068
      %v2101 = vadd.f32 %v1840, %v2069
      %v2102 = vadd.f32 %v1841, %v2070
      %v2103 = vadd.f32 %v1842, %v2071
      %v2104 = vadd.f32 %v1843, %v2072
      %v2105 = vadd.f32 %v1844, %v2073
      %v2106 = vadd.f32 %v1845, %v2074
      %v2107 = vadd.f32 %v1846, %v2075
      %v2108 = vadd.f32 %v1847, %v2076
      %v2109 = vadd.f32 %v1848, %v2077
      %v2110 = vadd.f32 %v1849, %v2078
      %v2111 = vadd.f32 %v1850, %v2079
      %v2112 = vadd.f32 %v1851, %v2080
      %v2113 = vadd.f32 %v1852, %v2081
      %v2114 = vadd.f32 %v1853, %v2082
      %v2115 = vadd.f32 %v1854, %v2083
      %v2116 = vadd.f32 %v1855, %v2084
      %v2117 = vadd.f32 %v1856, %v2085
      %v2118 = vadd.f32 %v1857, %v2086
      %v2119 = vadd.f32 %v1858, %v2087
      %v2120 = vadd.f32 %v1859, %v2088
      %v2121 = vadd.f32 %v1860, %v2089
      %v2122 = vadd.f32 %v1861, %v2090
      %v2123 = vadd.f32 %v1862, %v2091
      %v2124 = vadd.f32 %v1863, %v2092
      %v2125 = vadd.f32 %v1864, %v2093
      %v2126 = vadd.f32 %v1865, %v2094
      %v2127 = vadd.f32 %v1866, %v2095
      %v2128 = vadd.f32 %v1867, %v2096
      %v2129 = vadd.f32 %v1868, %v2097
      %s2130 = scalar_lea.vmem [#allocation2], 48
      %v2131 = vld [vmem:[%s2130] sm:$0xff]
      %v2132 = vld [vmem:[%s2130 + $0x8] sm:$0xff]
      %v2133 = vld [vmem:[%s2130 + $0x18] sm:$0xff]
      %v2134 = vld [vmem:[%s2130 + $0x20] sm:$0xff]
      %v2135 = vld [vmem:[%s2130 + $0x30] sm:$0xff]
      %v2136 = vld [vmem:[%s2130 + $0x38] sm:$0xff]
      %v2137 = vld [vmem:[%s2130 + $0x48] sm:$0xff]
      %v2138 = vld [vmem:[%s2130 + $0x50] sm:$0xff]
      %v2139 = vld [vmem:[%s2130 + $0x60] sm:$0xff]
      %v2140 = vld [vmem:[%s2130 + $0x68] sm:$0xff]
      %v2141 = vld [vmem:[%s2130 + $0x78] sm:$0xff]
      %v2142 = vld [vmem:[%s2130 + $0x80] sm:$0xff]
      %v2143 = vld [vmem:[%s2130 + $0x90] sm:$0xff]
      %v2144 = vld [vmem:[%s2130 + $0x98] sm:$0xff]
      %v2145 = vld [vmem:[%s2130 + $0xa8] sm:$0xff]
      %v2146 = vld [vmem:[%s2130 + $0xb0] sm:$0xff]
      %v2147 = vld [vmem:[%s2130 + $0xc0] sm:$0xff]
      %v2148 = vld [vmem:[%s2130 + $0xc8] sm:$0xff]
      %v2149 = vld [vmem:[%s2130 + $0xd8] sm:$0xff]
      %v2150 = vld [vmem:[%s2130 + $0xe0] sm:$0xff]
      %v2151 = vld [vmem:[%s2130 + $0xf0] sm:$0xff]
      %v2152 = vld [vmem:[%s2130 + $0xf8] sm:$0xff]
      %v2153 = vld [vmem:[%s2130 + $0x108] sm:$0xff]
      %v2154 = vld [vmem:[%s2130 + $0x110] sm:$0xff]
      %v2155 = vld [vmem:[%s2130 + $0x120] sm:$0xff]
      %v2156 = vld [vmem:[%s2130 + $0x128] sm:$0xff]
      %v2157 = vld [vmem:[%s2130 + $0x138] sm:$0xff]
      %v2158 = vld [vmem:[%s2130 + $0x140] sm:$0xff]
      %v2159 = vld [vmem:[%s2130 + $0x150] sm:$0xff]
      %v2160 = vld [vmem:[%s2130 + $0x158] sm:$0xff]
      %v2161 = vld [vmem:[%s2130 + $0x168] sm:$0xff]
      %v2162 = vld [vmem:[%s2130 + $0x170] sm:$0xff]
      %s2163 = scalar_lea.vmem %s1, 6
      %v2164 = vld [vmem:[%s2163] sm:$0x1]
      %2166 = vset.pattern.permute.xlu0 0
      %2167 = vperm.xlu0 %2166, %v2131
      %v2168 = vpop.permute.xlu0 %2167
      %2171 = vset.pattern.permute.xlu0 0
      %2172 = vperm.xlu0 %2171, %v2132
      %v2173 = vpop.permute.xlu0 %2172
      %2176 = vset.pattern.permute.xlu0 0
      %2177 = vperm.xlu0 %2176, %v2133
      %v2178 = vpop.permute.xlu0 %2177
      %2181 = vset.pattern.permute.xlu0 0
      %2182 = vperm.xlu0 %2181, %v2134
      %v2183 = vpop.permute.xlu0 %2182
      %2186 = vset.pattern.permute.xlu0 0
      %2187 = vperm.xlu0 %2186, %v2135
      %v2188 = vpop.permute.xlu0 %2187
      %2191 = vset.pattern.permute.xlu0 0
      %2192 = vperm.xlu0 %2191, %v2136
      %v2193 = vpop.permute.xlu0 %2192
      %2196 = vset.pattern.permute.xlu0 0
      %2197 = vperm.xlu0 %2196, %v2137
      %v2198 = vpop.permute.xlu0 %2197
      %2201 = vset.pattern.permute.xlu0 0
      %2202 = vperm.xlu0 %2201, %v2138
      %v2203 = vpop.permute.xlu0 %2202
      %2206 = vset.pattern.permute.xlu0 0
      %2207 = vperm.xlu0 %2206, %v2139
      %v2208 = vpop.permute.xlu0 %2207
      %2211 = vset.pattern.permute.xlu0 0
      %2212 = vperm.xlu0 %2211, %v2140
      %v2213 = vpop.permute.xlu0 %2212
      %2216 = vset.pattern.permute.xlu0 0
      %2217 = vperm.xlu0 %2216, %v2141
      %v2218 = vpop.permute.xlu0 %2217
      %2221 = vset.pattern.permute.xlu0 0
      %2222 = vperm.xlu0 %2221, %v2142
      %v2223 = vpop.permute.xlu0 %2222
      %2226 = vset.pattern.permute.xlu0 0
      %2227 = vperm.xlu0 %2226, %v2143
      %v2228 = vpop.permute.xlu0 %2227
      %2231 = vset.pattern.permute.xlu0 0
      %2232 = vperm.xlu0 %2231, %v2144
      %v2233 = vpop.permute.xlu0 %2232
      %2236 = vset.pattern.permute.xlu0 0
      %2237 = vperm.xlu0 %2236, %v2145
      %v2238 = vpop.permute.xlu0 %2237
      %2241 = vset.pattern.permute.xlu0 0
      %2242 = vperm.xlu0 %2241, %v2146
      %v2243 = vpop.permute.xlu0 %2242
      %2246 = vset.pattern.permute.xlu0 0
      %2247 = vperm.xlu0 %2246, %v2147
      %v2248 = vpop.permute.xlu0 %2247
      %2251 = vset.pattern.permute.xlu0 0
      %2252 = vperm.xlu0 %2251, %v2148
      %v2253 = vpop.permute.xlu0 %2252
      %2256 = vset.pattern.permute.xlu0 0
      %2257 = vperm.xlu0 %2256, %v2149
      %v2258 = vpop.permute.xlu0 %2257
      %2261 = vset.pattern.permute.xlu0 0
      %2262 = vperm.xlu0 %2261, %v2150
      %v2263 = vpop.permute.xlu0 %2262
      %2266 = vset.pattern.permute.xlu0 0
      %2267 = vperm.xlu0 %2266, %v2151
      %v2268 = vpop.permute.xlu0 %2267
      %2271 = vset.pattern.permute.xlu0 0
      %2272 = vperm.xlu0 %2271, %v2152
      %v2273 = vpop.permute.xlu0 %2272
      %2276 = vset.pattern.permute.xlu0 0
      %2277 = vperm.xlu0 %2276, %v2153
      %v2278 = vpop.permute.xlu0 %2277
      %2281 = vset.pattern.permute.xlu0 0
      %2282 = vperm.xlu0 %2281, %v2154
      %v2283 = vpop.permute.xlu0 %2282
      %2286 = vset.pattern.permute.xlu0 0
      %2287 = vperm.xlu0 %2286, %v2155
      %v2288 = vpop.permute.xlu0 %2287
      %2291 = vset.pattern.permute.xlu0 0
      %2292 = vperm.xlu0 %2291, %v2156
      %v2293 = vpop.permute.xlu0 %2292
      %2296 = vset.pattern.permute.xlu0 0
      %2297 = vperm.xlu0 %2296, %v2157
      %v2298 = vpop.permute.xlu0 %2297
      %2301 = vset.pattern.permute.xlu0 0
      %2302 = vperm.xlu0 %2301, %v2158
      %v2303 = vpop.permute.xlu0 %2302
      %2306 = vset.pattern.permute.xlu0 0
      %2307 = vperm.xlu0 %2306, %v2159
      %v2308 = vpop.permute.xlu0 %2307
      %2311 = vset.pattern.permute.xlu0 0
      %2312 = vperm.xlu0 %2311, %v2160
      %v2313 = vpop.permute.xlu0 %2312
      %2316 = vset.pattern.permute.xlu0 0
      %2317 = vperm.xlu0 %2316, %v2161
      %v2318 = vpop.permute.xlu0 %2317
      %2321 = vset.pattern.permute.xlu0 0
      %2322 = vperm.xlu0 %2321, %v2162
      %v2323 = vpop.permute.xlu0 %2322
      %v2326 = vperm.slane %v2164, 0
      %v2328 = vmul.f32 %v2168, %v2326
      %v2329 = vmul.f32 %v2173, %v2326
      %v2330 = vmul.f32 %v2178, %v2326
      %v2331 = vmul.f32 %v2183, %v2326
      %v2332 = vmul.f32 %v2188, %v2326
      %v2333 = vmul.f32 %v2193, %v2326
      %v2334 = vmul.f32 %v2198, %v2326
      %v2335 = vmul.f32 %v2203, %v2326
      %v2336 = vmul.f32 %v2208, %v2326
      %v2337 = vmul.f32 %v2213, %v2326
      %v2338 = vmul.f32 %v2218, %v2326
      %v2339 = vmul.f32 %v2223, %v2326
      %v2340 = vmul.f32 %v2228, %v2326
      %v2341 = vmul.f32 %v2233, %v2326
      %v2342 = vmul.f32 %v2238, %v2326
      %v2343 = vmul.f32 %v2243, %v2326
      %v2344 = vmul.f32 %v2248, %v2326
      %v2345 = vmul.f32 %v2253, %v2326
      %v2346 = vmul.f32 %v2258, %v2326
      %v2347 = vmul.f32 %v2263, %v2326
      %v2348 = vmul.f32 %v2268, %v2326
      %v2349 = vmul.f32 %v2273, %v2326
      %v2350 = vmul.f32 %v2278, %v2326
      %v2351 = vmul.f32 %v2283, %v2326
      %v2352 = vmul.f32 %v2288, %v2326
      %v2353 = vmul.f32 %v2293, %v2326
      %v2354 = vmul.f32 %v2298, %v2326
      %v2355 = vmul.f32 %v2303, %v2326
      %v2356 = vmul.f32 %v2308, %v2326
      %v2357 = vmul.f32 %v2313, %v2326
      %v2358 = vmul.f32 %v2318, %v2326
      %v2359 = vmul.f32 %v2323, %v2326
      %v2360 = vadd.f32 %v2098, %v2328
      %v2361 = vadd.f32 %v2099, %v2329
      %v2362 = vadd.f32 %v2100, %v2330
      %v2363 = vadd.f32 %v2101, %v2331
      %v2364 = vadd.f32 %v2102, %v2332
      %v2365 = vadd.f32 %v2103, %v2333
      %v2366 = vadd.f32 %v2104, %v2334
      %v2367 = vadd.f32 %v2105, %v2335
      %v2368 = vadd.f32 %v2106, %v2336
      %v2369 = vadd.f32 %v2107, %v2337
      %v2370 = vadd.f32 %v2108, %v2338
      %v2371 = vadd.f32 %v2109, %v2339
      %v2372 = vadd.f32 %v2110, %v2340
      %v2373 = vadd.f32 %v2111, %v2341
      %v2374 = vadd.f32 %v2112, %v2342
      %v2375 = vadd.f32 %v2113, %v2343
      %v2376 = vadd.f32 %v2114, %v2344
      %v2377 = vadd.f32 %v2115, %v2345
      %v2378 = vadd.f32 %v2116, %v2346
      %v2379 = vadd.f32 %v2117, %v2347
      %v2380 = vadd.f32 %v2118, %v2348
      %v2381 = vadd.f32 %v2119, %v2349
      %v2382 = vadd.f32 %v2120, %v2350
      %v2383 = vadd.f32 %v2121, %v2351
      %v2384 = vadd.f32 %v2122, %v2352
      %v2385 = vadd.f32 %v2123, %v2353
      %v2386 = vadd.f32 %v2124, %v2354
      %v2387 = vadd.f32 %v2125, %v2355
      %v2388 = vadd.f32 %v2126, %v2356
      %v2389 = vadd.f32 %v2127, %v2357
      %v2390 = vadd.f32 %v2128, %v2358
      %v2391 = vadd.f32 %v2129, %v2359
      %v2392 = vld [vmem:[%s2130 + $0x1] sm:$0xff]
      %v2393 = vld [vmem:[%s2130 + $0x9] sm:$0xff]
      %v2394 = vld [vmem:[%s2130 + $0x19] sm:$0xff]
      %v2395 = vld [vmem:[%s2130 + $0x21] sm:$0xff]
      %v2396 = vld [vmem:[%s2130 + $0x31] sm:$0xff]
      %v2397 = vld [vmem:[%s2130 + $0x39] sm:$0xff]
      %v2398 = vld [vmem:[%s2130 + $0x49] sm:$0xff]
      %v2399 = vld [vmem:[%s2130 + $0x51] sm:$0xff]
      %v2400 = vld [vmem:[%s2130 + $0x61] sm:$0xff]
      %v2401 = vld [vmem:[%s2130 + $0x69] sm:$0xff]
      %v2402 = vld [vmem:[%s2130 + $0x79] sm:$0xff]
      %v2403 = vld [vmem:[%s2130 + $0x81] sm:$0xff]
      %v2404 = vld [vmem:[%s2130 + $0x91] sm:$0xff]
      %v2405 = vld [vmem:[%s2130 + $0x99] sm:$0xff]
      %v2406 = vld [vmem:[%s2130 + $0xa9] sm:$0xff]
      %v2407 = vld [vmem:[%s2130 + $0xb1] sm:$0xff]
      %v2408 = vld [vmem:[%s2130 + $0xc1] sm:$0xff]
      %v2409 = vld [vmem:[%s2130 + $0xc9] sm:$0xff]
      %v2410 = vld [vmem:[%s2130 + $0xd9] sm:$0xff]
      %v2411 = vld [vmem:[%s2130 + $0xe1] sm:$0xff]
      %v2412 = vld [vmem:[%s2130 + $0xf1] sm:$0xff]
      %v2413 = vld [vmem:[%s2130 + $0xf9] sm:$0xff]
      %v2414 = vld [vmem:[%s2130 + $0x109] sm:$0xff]
      %v2415 = vld [vmem:[%s2130 + $0x111] sm:$0xff]
      %v2416 = vld [vmem:[%s2130 + $0x121] sm:$0xff]
      %v2417 = vld [vmem:[%s2130 + $0x129] sm:$0xff]
      %v2418 = vld [vmem:[%s2130 + $0x139] sm:$0xff]
      %v2419 = vld [vmem:[%s2130 + $0x141] sm:$0xff]
      %v2420 = vld [vmem:[%s2130 + $0x151] sm:$0xff]
      %v2421 = vld [vmem:[%s2130 + $0x159] sm:$0xff]
      %v2422 = vld [vmem:[%s2130 + $0x169] sm:$0xff]
      %v2423 = vld [vmem:[%s2130 + $0x171] sm:$0xff]
      %s2424 = scalar_lea.vmem %s1, 7
      %v2425 = vld [vmem:[%s2424] sm:$0x1]
      %2427 = vset.pattern.permute.xlu0 0
      %2428 = vperm.xlu0 %2427, %v2392
      %v2429 = vpop.permute.xlu0 %2428
      %2432 = vset.pattern.permute.xlu0 0
      %2433 = vperm.xlu0 %2432, %v2393
      %v2434 = vpop.permute.xlu0 %2433
      %2437 = vset.pattern.permute.xlu0 0
      %2438 = vperm.xlu0 %2437, %v2394
      %v2439 = vpop.permute.xlu0 %2438
      %2442 = vset.pattern.permute.xlu0 0
      %2443 = vperm.xlu0 %2442, %v2395
      %v2444 = vpop.permute.xlu0 %2443
      %2447 = vset.pattern.permute.xlu0 0
      %2448 = vperm.xlu0 %2447, %v2396
      %v2449 = vpop.permute.xlu0 %2448
      %2452 = vset.pattern.permute.xlu0 0
      %2453 = vperm.xlu0 %2452, %v2397
      %v2454 = vpop.permute.xlu0 %2453
      %2457 = vset.pattern.permute.xlu0 0
      %2458 = vperm.xlu0 %2457, %v2398
      %v2459 = vpop.permute.xlu0 %2458
      %2462 = vset.pattern.permute.xlu0 0
      %2463 = vperm.xlu0 %2462, %v2399
      %v2464 = vpop.permute.xlu0 %2463
      %2467 = vset.pattern.permute.xlu0 0
      %2468 = vperm.xlu0 %2467, %v2400
      %v2469 = vpop.permute.xlu0 %2468
      %2472 = vset.pattern.permute.xlu0 0
      %2473 = vperm.xlu0 %2472, %v2401
      %v2474 = vpop.permute.xlu0 %2473
      %2477 = vset.pattern.permute.xlu0 0
      %2478 = vperm.xlu0 %2477, %v2402
      %v2479 = vpop.permute.xlu0 %2478
      %2482 = vset.pattern.permute.xlu0 0
      %2483 = vperm.xlu0 %2482, %v2403
      %v2484 = vpop.permute.xlu0 %2483
      %2487 = vset.pattern.permute.xlu0 0
      %2488 = vperm.xlu0 %2487, %v2404
      %v2489 = vpop.permute.xlu0 %2488
      %2492 = vset.pattern.permute.xlu0 0
      %2493 = vperm.xlu0 %2492, %v2405
      %v2494 = vpop.permute.xlu0 %2493
      %2497 = vset.pattern.permute.xlu0 0
      %2498 = vperm.xlu0 %2497, %v2406
      %v2499 = vpop.permute.xlu0 %2498
      %2502 = vset.pattern.permute.xlu0 0
      %2503 = vperm.xlu0 %2502, %v2407
      %v2504 = vpop.permute.xlu0 %2503
      %2507 = vset.pattern.permute.xlu0 0
      %2508 = vperm.xlu0 %2507, %v2408
      %v2509 = vpop.permute.xlu0 %2508
      %2512 = vset.pattern.permute.xlu0 0
      %2513 = vperm.xlu0 %2512, %v2409
      %v2514 = vpop.permute.xlu0 %2513
      %2517 = vset.pattern.permute.xlu0 0
      %2518 = vperm.xlu0 %2517, %v2410
      %v2519 = vpop.permute.xlu0 %2518
      %2522 = vset.pattern.permute.xlu0 0
      %2523 = vperm.xlu0 %2522, %v2411
      %v2524 = vpop.permute.xlu0 %2523
      %2527 = vset.pattern.permute.xlu0 0
      %2528 = vperm.xlu0 %2527, %v2412
      %v2529 = vpop.permute.xlu0 %2528
      %2532 = vset.pattern.permute.xlu0 0
      %2533 = vperm.xlu0 %2532, %v2413
      %v2534 = vpop.permute.xlu0 %2533
      %2537 = vset.pattern.permute.xlu0 0
      %2538 = vperm.xlu0 %2537, %v2414
      %v2539 = vpop.permute.xlu0 %2538
      %2542 = vset.pattern.permute.xlu0 0
      %2543 = vperm.xlu0 %2542, %v2415
      %v2544 = vpop.permute.xlu0 %2543
      %2547 = vset.pattern.permute.xlu0 0
      %2548 = vperm.xlu0 %2547, %v2416
      %v2549 = vpop.permute.xlu0 %2548
      %2552 = vset.pattern.permute.xlu0 0
      %2553 = vperm.xlu0 %2552, %v2417
      %v2554 = vpop.permute.xlu0 %2553
      %2557 = vset.pattern.permute.xlu0 0
      %2558 = vperm.xlu0 %2557, %v2418
      %v2559 = vpop.permute.xlu0 %2558
      %2562 = vset.pattern.permute.xlu0 0
      %2563 = vperm.xlu0 %2562, %v2419
      %v2564 = vpop.permute.xlu0 %2563
      %2567 = vset.pattern.permute.xlu0 0
      %2568 = vperm.xlu0 %2567, %v2420
      %v2569 = vpop.permute.xlu0 %2568
      %2572 = vset.pattern.permute.xlu0 0
      %2573 = vperm.xlu0 %2572, %v2421
      %v2574 = vpop.permute.xlu0 %2573
      %2577 = vset.pattern.permute.xlu0 0
      %2578 = vperm.xlu0 %2577, %v2422
      %v2579 = vpop.permute.xlu0 %2578
      %2582 = vset.pattern.permute.xlu0 0
      %2583 = vperm.xlu0 %2582, %v2423
      %v2584 = vpop.permute.xlu0 %2583
      %v2587 = vperm.slane %v2425, 0
      %v2589 = vmul.f32 %v2429, %v2587
      %v2590 = vmul.f32 %v2434, %v2587
      %v2591 = vmul.f32 %v2439, %v2587
      %v2592 = vmul.f32 %v2444, %v2587
      %v2593 = vmul.f32 %v2449, %v2587
      %v2594 = vmul.f32 %v2454, %v2587
      %v2595 = vmul.f32 %v2459, %v2587
      %v2596 = vmul.f32 %v2464, %v2587
      %v2597 = vmul.f32 %v2469, %v2587
      %v2598 = vmul.f32 %v2474, %v2587
      %v2599 = vmul.f32 %v2479, %v2587
      %v2600 = vmul.f32 %v2484, %v2587
      %v2601 = vmul.f32 %v2489, %v2587
      %v2602 = vmul.f32 %v2494, %v2587
      %v2603 = vmul.f32 %v2499, %v2587
      %v2604 = vmul.f32 %v2504, %v2587
      %v2605 = vmul.f32 %v2509, %v2587
      %v2606 = vmul.f32 %v2514, %v2587
      %v2607 = vmul.f32 %v2519, %v2587
      %v2608 = vmul.f32 %v2524, %v2587
      %v2609 = vmul.f32 %v2529, %v2587
      %v2610 = vmul.f32 %v2534, %v2587
      %v2611 = vmul.f32 %v2539, %v2587
      %v2612 = vmul.f32 %v2544, %v2587
      %v2613 = vmul.f32 %v2549, %v2587
      %v2614 = vmul.f32 %v2554, %v2587
      %v2615 = vmul.f32 %v2559, %v2587
      %v2616 = vmul.f32 %v2564, %v2587
      %v2617 = vmul.f32 %v2569, %v2587
      %v2618 = vmul.f32 %v2574, %v2587
      %v2619 = vmul.f32 %v2579, %v2587
      %v2620 = vmul.f32 %v2584, %v2587
      %v2621 = vadd.f32 %v2360, %v2589
      %v2622 = vadd.f32 %v2361, %v2590
      %v2623 = vadd.f32 %v2362, %v2591
      %v2624 = vadd.f32 %v2363, %v2592
      %v2625 = vadd.f32 %v2364, %v2593
      %v2626 = vadd.f32 %v2365, %v2594
      %v2627 = vadd.f32 %v2366, %v2595
      %v2628 = vadd.f32 %v2367, %v2596
      %v2629 = vadd.f32 %v2368, %v2597
      %v2630 = vadd.f32 %v2369, %v2598
      %v2631 = vadd.f32 %v2370, %v2599
      %v2632 = vadd.f32 %v2371, %v2600
      %v2633 = vadd.f32 %v2372, %v2601
      %v2634 = vadd.f32 %v2373, %v2602
      %v2635 = vadd.f32 %v2374, %v2603
      %v2636 = vadd.f32 %v2375, %v2604
      %v2637 = vadd.f32 %v2376, %v2605
      %v2638 = vadd.f32 %v2377, %v2606
      %v2639 = vadd.f32 %v2378, %v2607
      %v2640 = vadd.f32 %v2379, %v2608
      %v2641 = vadd.f32 %v2380, %v2609
      %v2642 = vadd.f32 %v2381, %v2610
      %v2643 = vadd.f32 %v2382, %v2611
      %v2644 = vadd.f32 %v2383, %v2612
      %v2645 = vadd.f32 %v2384, %v2613
      %v2646 = vadd.f32 %v2385, %v2614
      %v2647 = vadd.f32 %v2386, %v2615
      %v2648 = vadd.f32 %v2387, %v2616
      %v2649 = vadd.f32 %v2388, %v2617
      %v2650 = vadd.f32 %v2389, %v2618
      %v2651 = vadd.f32 %v2390, %v2619
      %v2652 = vadd.f32 %v2391, %v2620
      %v2653 = vld [vmem:[%s2130 + $0x2] sm:$0xff]
      %v2654 = vld [vmem:[%s2130 + $0xa] sm:$0xff]
      %v2655 = vld [vmem:[%s2130 + $0x1a] sm:$0xff]
      %v2656 = vld [vmem:[%s2130 + $0x22] sm:$0xff]
      %v2657 = vld [vmem:[%s2130 + $0x32] sm:$0xff]
      %v2658 = vld [vmem:[%s2130 + $0x3a] sm:$0xff]
      %v2659 = vld [vmem:[%s2130 + $0x4a] sm:$0xff]
      %v2660 = vld [vmem:[%s2130 + $0x52] sm:$0xff]
      %v2661 = vld [vmem:[%s2130 + $0x62] sm:$0xff]
      %v2662 = vld [vmem:[%s2130 + $0x6a] sm:$0xff]
      %v2663 = vld [vmem:[%s2130 + $0x7a] sm:$0xff]
      %v2664 = vld [vmem:[%s2130 + $0x82] sm:$0xff]
      %v2665 = vld [vmem:[%s2130 + $0x92] sm:$0xff]
      %v2666 = vld [vmem:[%s2130 + $0x9a] sm:$0xff]
      %v2667 = vld [vmem:[%s2130 + $0xaa] sm:$0xff]
      %v2668 = vld [vmem:[%s2130 + $0xb2] sm:$0xff]
      %v2669 = vld [vmem:[%s2130 + $0xc2] sm:$0xff]
      %v2670 = vld [vmem:[%s2130 + $0xca] sm:$0xff]
      %v2671 = vld [vmem:[%s2130 + $0xda] sm:$0xff]
      %v2672 = vld [vmem:[%s2130 + $0xe2] sm:$0xff]
      %v2673 = vld [vmem:[%s2130 + $0xf2] sm:$0xff]
      %v2674 = vld [vmem:[%s2130 + $0xfa] sm:$0xff]
      %v2675 = vld [vmem:[%s2130 + $0x10a] sm:$0xff]
      %v2676 = vld [vmem:[%s2130 + $0x112] sm:$0xff]
      %v2677 = vld [vmem:[%s2130 + $0x122] sm:$0xff]
      %v2678 = vld [vmem:[%s2130 + $0x12a] sm:$0xff]
      %v2679 = vld [vmem:[%s2130 + $0x13a] sm:$0xff]
      %v2680 = vld [vmem:[%s2130 + $0x142] sm:$0xff]
      %v2681 = vld [vmem:[%s2130 + $0x152] sm:$0xff]
      %v2682 = vld [vmem:[%s2130 + $0x15a] sm:$0xff]
      %v2683 = vld [vmem:[%s2130 + $0x16a] sm:$0xff]
      %v2684 = vld [vmem:[%s2130 + $0x172] sm:$0xff]
      %s2685 = scalar_lea.vmem %s1, 8
      %v2686 = vld [vmem:[%s2685] sm:$0x1]
      %2688 = vset.pattern.permute.xlu0 0
      %2689 = vperm.xlu0 %2688, %v2653
      %v2690 = vpop.permute.xlu0 %2689
      %2693 = vset.pattern.permute.xlu0 0
      %2694 = vperm.xlu0 %2693, %v2654
      %v2695 = vpop.permute.xlu0 %2694
      %2698 = vset.pattern.permute.xlu0 0
      %2699 = vperm.xlu0 %2698, %v2655
      %v2700 = vpop.permute.xlu0 %2699
      %2703 = vset.pattern.permute.xlu0 0
      %2704 = vperm.xlu0 %2703, %v2656
      %v2705 = vpop.permute.xlu0 %2704
      %2708 = vset.pattern.permute.xlu0 0
      %2709 = vperm.xlu0 %2708, %v2657
      %v2710 = vpop.permute.xlu0 %2709
      %2713 = vset.pattern.permute.xlu0 0
      %2714 = vperm.xlu0 %2713, %v2658
      %v2715 = vpop.permute.xlu0 %2714
      %2718 = vset.pattern.permute.xlu0 0
      %2719 = vperm.xlu0 %2718, %v2659
      %v2720 = vpop.permute.xlu0 %2719
      %2723 = vset.pattern.permute.xlu0 0
      %2724 = vperm.xlu0 %2723, %v2660
      %v2725 = vpop.permute.xlu0 %2724
      %2728 = vset.pattern.permute.xlu0 0
      %2729 = vperm.xlu0 %2728, %v2661
      %v2730 = vpop.permute.xlu0 %2729
      %2733 = vset.pattern.permute.xlu0 0
      %2734 = vperm.xlu0 %2733, %v2662
      %v2735 = vpop.permute.xlu0 %2734
      %2738 = vset.pattern.permute.xlu0 0
      %2739 = vperm.xlu0 %2738, %v2663
      %v2740 = vpop.permute.xlu0 %2739
      %2743 = vset.pattern.permute.xlu0 0
      %2744 = vperm.xlu0 %2743, %v2664
      %v2745 = vpop.permute.xlu0 %2744
      %2748 = vset.pattern.permute.xlu0 0
      %2749 = vperm.xlu0 %2748, %v2665
      %v2750 = vpop.permute.xlu0 %2749
      %2753 = vset.pattern.permute.xlu0 0
      %2754 = vperm.xlu0 %2753, %v2666
      %v2755 = vpop.permute.xlu0 %2754
      %2758 = vset.pattern.permute.xlu0 0
      %2759 = vperm.xlu0 %2758, %v2667
      %v2760 = vpop.permute.xlu0 %2759
      %2763 = vset.pattern.permute.xlu0 0
      %2764 = vperm.xlu0 %2763, %v2668
      %v2765 = vpop.permute.xlu0 %2764
      %2768 = vset.pattern.permute.xlu0 0
      %2769 = vperm.xlu0 %2768, %v2669
      %v2770 = vpop.permute.xlu0 %2769
      %2773 = vset.pattern.permute.xlu0 0
      %2774 = vperm.xlu0 %2773, %v2670
      %v2775 = vpop.permute.xlu0 %2774
      %2778 = vset.pattern.permute.xlu0 0
      %2779 = vperm.xlu0 %2778, %v2671
      %v2780 = vpop.permute.xlu0 %2779
      %2783 = vset.pattern.permute.xlu0 0
      %2784 = vperm.xlu0 %2783, %v2672
      %v2785 = vpop.permute.xlu0 %2784
      %2788 = vset.pattern.permute.xlu0 0
      %2789 = vperm.xlu0 %2788, %v2673
      %v2790 = vpop.permute.xlu0 %2789
      %2793 = vset.pattern.permute.xlu0 0
      %2794 = vperm.xlu0 %2793, %v2674
      %v2795 = vpop.permute.xlu0 %2794
      %2798 = vset.pattern.permute.xlu0 0
      %2799 = vperm.xlu0 %2798, %v2675
      %v2800 = vpop.permute.xlu0 %2799
      %2803 = vset.pattern.permute.xlu0 0
      %2804 = vperm.xlu0 %2803, %v2676
      %v2805 = vpop.permute.xlu0 %2804
      %2808 = vset.pattern.permute.xlu0 0
      %2809 = vperm.xlu0 %2808, %v2677
      %v2810 = vpop.permute.xlu0 %2809
      %2813 = vset.pattern.permute.xlu0 0
      %2814 = vperm.xlu0 %2813, %v2678
      %v2815 = vpop.permute.xlu0 %2814
      %2818 = vset.pattern.permute.xlu0 0
      %2819 = vperm.xlu0 %2818, %v2679
      %v2820 = vpop.permute.xlu0 %2819
      %2823 = vset.pattern.permute.xlu0 0
      %2824 = vperm.xlu0 %2823, %v2680
      %v2825 = vpop.permute.xlu0 %2824
      %2828 = vset.pattern.permute.xlu0 0
      %2829 = vperm.xlu0 %2828, %v2681
      %v2830 = vpop.permute.xlu0 %2829
      %2833 = vset.pattern.permute.xlu0 0
      %2834 = vperm.xlu0 %2833, %v2682
      %v2835 = vpop.permute.xlu0 %2834
      %2838 = vset.pattern.permute.xlu0 0
      %2839 = vperm.xlu0 %2838, %v2683
      %v2840 = vpop.permute.xlu0 %2839
      %2843 = vset.pattern.permute.xlu0 0
      %2844 = vperm.xlu0 %2843, %v2684
      %v2845 = vpop.permute.xlu0 %2844
      %v2848 = vperm.slane %v2686, 0
      %v2850 = vmul.f32 %v2690, %v2848
      %v2851 = vmul.f32 %v2695, %v2848
      %v2852 = vmul.f32 %v2700, %v2848
      %v2853 = vmul.f32 %v2705, %v2848
      %v2854 = vmul.f32 %v2710, %v2848
      %v2855 = vmul.f32 %v2715, %v2848
      %v2856 = vmul.f32 %v2720, %v2848
      %v2857 = vmul.f32 %v2725, %v2848
      %v2858 = vmul.f32 %v2730, %v2848
      %v2859 = vmul.f32 %v2735, %v2848
      %v2860 = vmul.f32 %v2740, %v2848
      %v2861 = vmul.f32 %v2745, %v2848
      %v2862 = vmul.f32 %v2750, %v2848
      %v2863 = vmul.f32 %v2755, %v2848
      %v2864 = vmul.f32 %v2760, %v2848
      %v2865 = vmul.f32 %v2765, %v2848
      %v2866 = vmul.f32 %v2770, %v2848
      %v2867 = vmul.f32 %v2775, %v2848
      %v2868 = vmul.f32 %v2780, %v2848
      %v2869 = vmul.f32 %v2785, %v2848
      %v2870 = vmul.f32 %v2790, %v2848
      %v2871 = vmul.f32 %v2795, %v2848
      %v2872 = vmul.f32 %v2800, %v2848
      %v2873 = vmul.f32 %v2805, %v2848
      %v2874 = vmul.f32 %v2810, %v2848
      %v2875 = vmul.f32 %v2815, %v2848
      %v2876 = vmul.f32 %v2820, %v2848
      %v2877 = vmul.f32 %v2825, %v2848
      %v2878 = vmul.f32 %v2830, %v2848
      %v2879 = vmul.f32 %v2835, %v2848
      %v2880 = vmul.f32 %v2840, %v2848
      %v2881 = vmul.f32 %v2845, %v2848
      %v2882 = vadd.f32 %v2621, %v2850
      %v2883 = vadd.f32 %v2622, %v2851
      %v2884 = vadd.f32 %v2623, %v2852
      %v2885 = vadd.f32 %v2624, %v2853
      %v2886 = vadd.f32 %v2625, %v2854
      %v2887 = vadd.f32 %v2626, %v2855
      %v2888 = vadd.f32 %v2627, %v2856
      %v2889 = vadd.f32 %v2628, %v2857
      %v2890 = vadd.f32 %v2629, %v2858
      %v2891 = vadd.f32 %v2630, %v2859
      %v2892 = vadd.f32 %v2631, %v2860
      %v2893 = vadd.f32 %v2632, %v2861
      %v2894 = vadd.f32 %v2633, %v2862
      %v2895 = vadd.f32 %v2634, %v2863
      %v2896 = vadd.f32 %v2635, %v2864
      %v2897 = vadd.f32 %v2636, %v2865
      %v2898 = vadd.f32 %v2637, %v2866
      %v2899 = vadd.f32 %v2638, %v2867
      %v2900 = vadd.f32 %v2639, %v2868
      %v2901 = vadd.f32 %v2640, %v2869
      %v2902 = vadd.f32 %v2641, %v2870
      %v2903 = vadd.f32 %v2642, %v2871
      %v2904 = vadd.f32 %v2643, %v2872
      %v2905 = vadd.f32 %v2644, %v2873
      %v2906 = vadd.f32 %v2645, %v2874
      %v2907 = vadd.f32 %v2646, %v2875
      %v2908 = vadd.f32 %v2647, %v2876
      %v2909 = vadd.f32 %v2648, %v2877
      %v2910 = vadd.f32 %v2649, %v2878
      %v2911 = vadd.f32 %v2650, %v2879
      %v2912 = vadd.f32 %v2651, %v2880
      %v2913 = vadd.f32 %v2652, %v2881
      %v2914 = vld [vmem:[%s2] sm:$0x1]
      %v2916 = vperm.slane %v2914, 0
      %v2918 = vadd.f32 %v2882, %v2916
      %v2919 = vadd.f32 %v2883, %v2916
      %v2920 = vadd.f32 %v2884, %v2916
      %v2921 = vadd.f32 %v2885, %v2916
      %v2922 = vadd.f32 %v2886, %v2916
      %v2923 = vadd.f32 %v2887, %v2916
      %v2924 = vadd.f32 %v2888, %v2916
      %v2925 = vadd.f32 %v2889, %v2916
      %v2926 = vadd.f32 %v2890, %v2916
      %v2927 = vadd.f32 %v2891, %v2916
      %v2928 = vadd.f32 %v2892, %v2916
      %v2929 = vadd.f32 %v2893, %v2916
      %v2930 = vadd.f32 %v2894, %v2916
      %v2931 = vadd.f32 %v2895, %v2916
      %v2932 = vadd.f32 %v2896, %v2916
      %v2933 = vadd.f32 %v2897, %v2916
      %v2934 = vadd.f32 %v2898, %v2916
      %v2935 = vadd.f32 %v2899, %v2916
      %v2936 = vadd.f32 %v2900, %v2916
      %v2937 = vadd.f32 %v2901, %v2916
      %v2938 = vadd.f32 %v2902, %v2916
      %v2939 = vadd.f32 %v2903, %v2916
      %v2940 = vadd.f32 %v2904, %v2916
      %v2941 = vadd.f32 %v2905, %v2916
      %v2942 = vadd.f32 %v2906, %v2916
      %v2943 = vadd.f32 %v2907, %v2916
      %v2944 = vadd.f32 %v2908, %v2916
      %v2945 = vadd.f32 %v2909, %v2916
      %v2946 = vadd.f32 %v2910, %v2916
      %v2947 = vadd.f32 %v2911, %v2916
      %v2948 = vadd.f32 %v2912, %v2916
      %v2949 = vadd.f32 %v2913, %v2916
      %v2950 = vmax.f32 %v2918, 0.0
      %v2951 = vmax.f32 %v2919, 0.0
      %v2952 = vmax.f32 %v2920, 0.0
      %v2953 = vmax.f32 %v2921, 0.0
      %v2954 = vmax.f32 %v2922, 0.0
      %v2955 = vmax.f32 %v2923, 0.0
      %v2956 = vmax.f32 %v2924, 0.0
      %v2957 = vmax.f32 %v2925, 0.0
      %v2958 = vmax.f32 %v2926, 0.0
      %v2959 = vmax.f32 %v2927, 0.0
      %v2960 = vmax.f32 %v2928, 0.0
      %v2961 = vmax.f32 %v2929, 0.0
      %v2962 = vmax.f32 %v2930, 0.0
      %v2963 = vmax.f32 %v2931, 0.0
      %v2964 = vmax.f32 %v2932, 0.0
      %v2965 = vmax.f32 %v2933, 0.0
      %v2966 = vmax.f32 %v2934, 0.0
      %v2967 = vmax.f32 %v2935, 0.0
      %v2968 = vmax.f32 %v2936, 0.0
      %v2969 = vmax.f32 %v2937, 0.0
      %v2970 = vmax.f32 %v2938, 0.0
      %v2971 = vmax.f32 %v2939, 0.0
      %v2972 = vmax.f32 %v2940, 0.0
      %v2973 = vmax.f32 %v2941, 0.0
      %v2974 = vmax.f32 %v2942, 0.0
      %v2975 = vmax.f32 %v2943, 0.0
      %v2976 = vmax.f32 %v2944, 0.0
      %v2977 = vmax.f32 %v2945, 0.0
      %v2978 = vmax.f32 %v2946, 0.0
      %v2979 = vmax.f32 %v2947, 0.0
      %v2980 = vmax.f32 %v2948, 0.0
      %v2981 = vmax.f32 %v2949, 0.0
      %2982 = vst.msk [vmem:[#allocation2] sm:$0xff] %vm475, 0.0
      %2983 = vst.msk [vmem:[#allocation2 + $0x8] sm:$0xff] %vm475, 0.0
      %2984 = vst.msk [vmem:[#allocation2 + $0x10] sm:$0x3] %vm478, 0.0
      %2985 = vst.msk [vmem:[#allocation2 + $0x18] sm:$0xff] %vm475, 0.0
      %2986 = vst.msk [vmem:[#allocation2 + $0x20] sm:$0xff] %vm475, 0.0
      %2987 = vst.msk [vmem:[#allocation2 + $0x28] sm:$0x3] %vm478, 0.0
      %2988 = vst.msk [vmem:[#allocation2 + $0x30] sm:$0xff] %vm475, 0.0
      %2989 = vst.msk [vmem:[#allocation2 + $0x38] sm:$0xff] %vm475, 0.0
      %2990 = vst.msk [vmem:[#allocation2 + $0x40] sm:$0x3] %vm478, 0.0
      %2991 = vst.msk [vmem:[#allocation2 + $0x48] sm:$0xff] %vm475, 0.0
      %2992 = vst.msk [vmem:[#allocation2 + $0x50] sm:$0xff] %vm475, 0.0
      %2993 = vst.msk [vmem:[#allocation2 + $0x58] sm:$0x3] %vm478, 0.0
      %2994 = vst.msk [vmem:[#allocation2 + $0x60] sm:$0xff] %vm475, 0.0
      %2995 = vst.msk [vmem:[#allocation2 + $0x68] sm:$0xff] %vm475, 0.0
      %2996 = vst.msk [vmem:[#allocation2 + $0x70] sm:$0x3] %vm478, 0.0
      %2997 = vst.msk [vmem:[#allocation2 + $0x78] sm:$0xff] %vm475, 0.0
      %2998 = vst.msk [vmem:[#allocation2 + $0x80] sm:$0xff] %vm475, 0.0
      %2999 = vst.msk [vmem:[#allocation2 + $0x88] sm:$0x3] %vm478, 0.0
      %3000 = vst.msk [vmem:[#allocation2 + $0x90] sm:$0xff] %vm475, 0.0
      %3001 = vst.msk [vmem:[#allocation2 + $0x98] sm:$0xff] %vm475, 0.0
      %3002 = vst.msk [vmem:[#allocation2 + $0xa0] sm:$0x3] %vm478, 0.0
      %3003 = vst.msk [vmem:[#allocation2 + $0xa8] sm:$0xff] %vm475, 0.0
      %3004 = vst.msk [vmem:[#allocation2 + $0xb0] sm:$0xff] %vm475, 0.0
      %3005 = vst.msk [vmem:[#allocation2 + $0xb8] sm:$0x3] %vm478, 0.0
      %3006 = vst.msk [vmem:[#allocation2 + $0xc0] sm:$0xff] %vm475, 0.0
      %3007 = vst.msk [vmem:[#allocation2 + $0xc8] sm:$0xff] %vm475, 0.0
      %3008 = vst.msk [vmem:[#allocation2 + $0xd0] sm:$0x3] %vm478, 0.0
      %3009 = vst.msk [vmem:[#allocation2 + $0xd8] sm:$0xff] %vm475, 0.0
      %3010 = vst.msk [vmem:[#allocation2 + $0xe0] sm:$0xff] %vm475, 0.0
      %3011 = vst.msk [vmem:[#allocation2 + $0xe8] sm:$0x3] %vm478, 0.0
      %3012 = vst.msk [vmem:[#allocation2 + $0xf0] sm:$0xff] %vm475, 0.0
      %3013 = vst.msk [vmem:[#allocation2 + $0xf8] sm:$0xff] %vm475, 0.0
      %3014 = vst.msk [vmem:[#allocation2 + $0x100] sm:$0x3] %vm478, 0.0
      %3015 = vst.msk [vmem:[#allocation2 + $0x108] sm:$0xff] %vm475, 0.0
      %3016 = vst.msk [vmem:[#allocation2 + $0x110] sm:$0xff] %vm475, 0.0
      %3017 = vst.msk [vmem:[#allocation2 + $0x118] sm:$0x3] %vm478, 0.0
      %3018 = vst.msk [vmem:[#allocation2 + $0x120] sm:$0xff] %vm475, 0.0
      %3019 = vst.msk [vmem:[#allocation2 + $0x128] sm:$0xff] %vm475, 0.0
      %3020 = vst.msk [vmem:[#allocation2 + $0x130] sm:$0x3] %vm478, 0.0
      %3021 = vst.msk [vmem:[#allocation2 + $0x138] sm:$0xff] %vm475, 0.0
      %3022 = vst.msk [vmem:[#allocation2 + $0x140] sm:$0xff] %vm475, 0.0
      %3023 = vst.msk [vmem:[#allocation2 + $0x148] sm:$0x3] %vm478, 0.0
      %3024 = vst.msk [vmem:[#allocation2 + $0x150] sm:$0xff] %vm475, 0.0
      %3025 = vst.msk [vmem:[#allocation2 + $0x158] sm:$0xff] %vm475, 0.0
      %3026 = vst.msk [vmem:[#allocation2 + $0x160] sm:$0x3] %vm478, 0.0
      %3027 = vst.msk [vmem:[#allocation2 + $0x168] sm:$0xff] %vm475, 0.0
      %3028 = vst.msk [vmem:[#allocation2 + $0x170] sm:$0xff] %vm475, 0.0
      %3029 = vst.msk [vmem:[#allocation2 + $0x178] sm:$0x3] %vm478, 0.0
      %3030 = vst.msk [vmem:[#allocation2 + $0x180] sm:$0xff] %vm475, 0.0
      %3031 = vst.msk [vmem:[#allocation2 + $0x188] sm:$0xff] %vm475, 0.0
      %3032 = vst.msk [vmem:[#allocation2 + $0x190] sm:$0x3] %vm478, 0.0
      %3033 = vst.msk [vmem:[#allocation2 + $0x198] sm:$0xff] %vm475, 0.0
      %3034 = vst.msk [vmem:[#allocation2 + $0x1a0] sm:$0xff] %vm475, 0.0
      %3035 = vst.msk [vmem:[#allocation2 + $0x1a8] sm:$0x3] %vm478, 0.0
      %vm3036 = vcmask 261120
      %3037 = vst.msk [vmem:[%s531 + $0x1] sm:$0xff] %vm3036, %v2950
      %3038 = vst.msk [vmem:[%s531 + $0x9] sm:$0xff] %vm3036, %v2951
      %3039 = vst.msk [vmem:[%s531 + $0x19] sm:$0xff] %vm3036, %v2952
      %3040 = vst.msk [vmem:[%s531 + $0x21] sm:$0xff] %vm3036, %v2953
      %3041 = vst.msk [vmem:[%s531 + $0x31] sm:$0xff] %vm3036, %v2954
      %3042 = vst.msk [vmem:[%s531 + $0x39] sm:$0xff] %vm3036, %v2955
      %3043 = vst.msk [vmem:[%s531 + $0x49] sm:$0xff] %vm3036, %v2956
      %3044 = vst.msk [vmem:[%s531 + $0x51] sm:$0xff] %vm3036, %v2957
      %3045 = vst.msk [vmem:[%s531 + $0x61] sm:$0xff] %vm3036, %v2958
      %3046 = vst.msk [vmem:[%s531 + $0x69] sm:$0xff] %vm3036, %v2959
      %3047 = vst.msk [vmem:[%s531 + $0x79] sm:$0xff] %vm3036, %v2960
      %3048 = vst.msk [vmem:[%s531 + $0x81] sm:$0xff] %vm3036, %v2961
      %3049 = vst.msk [vmem:[%s531 + $0x91] sm:$0xff] %vm3036, %v2962
      %3050 = vst.msk [vmem:[%s531 + $0x99] sm:$0xff] %vm3036, %v2963
      %3051 = vst.msk [vmem:[%s531 + $0xa9] sm:$0xff] %vm3036, %v2964
      %3052 = vst.msk [vmem:[%s531 + $0xb1] sm:$0xff] %vm3036, %v2965
      %3053 = vst.msk [vmem:[%s531 + $0xc1] sm:$0xff] %vm3036, %v2966
      %3054 = vst.msk [vmem:[%s531 + $0xc9] sm:$0xff] %vm3036, %v2967
      %3055 = vst.msk [vmem:[%s531 + $0xd9] sm:$0xff] %vm3036, %v2968
      %3056 = vst.msk [vmem:[%s531 + $0xe1] sm:$0xff] %vm3036, %v2969
      %3057 = vst.msk [vmem:[%s531 + $0xf1] sm:$0xff] %vm3036, %v2970
      %3058 = vst.msk [vmem:[%s531 + $0xf9] sm:$0xff] %vm3036, %v2971
      %3059 = vst.msk [vmem:[%s531 + $0x109] sm:$0xff] %vm3036, %v2972
      %3060 = vst.msk [vmem:[%s531 + $0x111] sm:$0xff] %vm3036, %v2973
      %3061 = vst.msk [vmem:[%s531 + $0x121] sm:$0xff] %vm3036, %v2974
      %3062 = vst.msk [vmem:[%s531 + $0x129] sm:$0xff] %vm3036, %v2975
      %3063 = vst.msk [vmem:[%s531 + $0x139] sm:$0xff] %vm3036, %v2976
      %3064 = vst.msk [vmem:[%s531 + $0x141] sm:$0xff] %vm3036, %v2977
      %3065 = vst.msk [vmem:[%s531 + $0x151] sm:$0xff] %vm3036, %v2978
      %3066 = vst.msk [vmem:[%s531 + $0x159] sm:$0xff] %vm3036, %v2979
      %3067 = vst.msk [vmem:[%s531 + $0x169] sm:$0xff] %vm3036, %v2980
      %3068 = vst.msk [vmem:[%s531 + $0x171] sm:$0xff] %vm3036, %v2981
      %v3069 = vld [vmem:[#allocation2] sm:$0xff]
      %v3070 = vld [vmem:[#allocation2 + $0x8] sm:$0xff]
      %v3071 = vld [vmem:[#allocation2 + $0x18] sm:$0xff]
      %v3072 = vld [vmem:[#allocation2 + $0x20] sm:$0xff]
      %v3073 = vld [vmem:[#allocation2 + $0x30] sm:$0xff]
      %v3074 = vld [vmem:[#allocation2 + $0x38] sm:$0xff]
      %v3075 = vld [vmem:[#allocation2 + $0x48] sm:$0xff]
      %v3076 = vld [vmem:[#allocation2 + $0x50] sm:$0xff]
      %v3077 = vld [vmem:[#allocation2 + $0x60] sm:$0xff]
      %v3078 = vld [vmem:[#allocation2 + $0x68] sm:$0xff]
      %v3079 = vld [vmem:[#allocation2 + $0x78] sm:$0xff]
      %v3080 = vld [vmem:[#allocation2 + $0x80] sm:$0xff]
      %v3081 = vld [vmem:[#allocation2 + $0x90] sm:$0xff]
      %v3082 = vld [vmem:[#allocation2 + $0x98] sm:$0xff]
      %v3083 = vld [vmem:[#allocation2 + $0xa8] sm:$0xff]
      %v3084 = vld [vmem:[#allocation2 + $0xb0] sm:$0xff]
      %v3085 = vld [vmem:[#allocation2 + $0xc0] sm:$0xff]
      %v3086 = vld [vmem:[#allocation2 + $0xc8] sm:$0xff]
      %v3087 = vld [vmem:[#allocation2 + $0xd8] sm:$0xff]
      %v3088 = vld [vmem:[#allocation2 + $0xe0] sm:$0xff]
      %v3089 = vld [vmem:[#allocation2 + $0xf0] sm:$0xff]
      %v3090 = vld [vmem:[#allocation2 + $0xf8] sm:$0xff]
      %v3091 = vld [vmem:[#allocation2 + $0x108] sm:$0xff]
      %v3092 = vld [vmem:[#allocation2 + $0x110] sm:$0xff]
      %v3093 = vld [vmem:[#allocation2 + $0x120] sm:$0xff]
      %v3094 = vld [vmem:[#allocation2 + $0x128] sm:$0xff]
      %v3095 = vld [vmem:[#allocation2 + $0x138] sm:$0xff]
      %v3096 = vld [vmem:[#allocation2 + $0x140] sm:$0xff]
      %v3097 = vld [vmem:[#allocation2 + $0x150] sm:$0xff]
      %v3098 = vld [vmem:[#allocation2 + $0x158] sm:$0xff]
      %v3099 = vld [vmem:[#allocation2 + $0x168] sm:$0xff]
      %v3100 = vld [vmem:[#allocation2 + $0x170] sm:$0xff]
      %v3101 = vld [vmem:[%s3] sm:$0xff]
      %v3102 = vld [vmem:[%s3 + $0x8] sm:$0xff]
      %v3103 = vld [vmem:[%s3 + $0x10] sm:$0xff]
      %v3104 = vld [vmem:[%s3 + $0x18] sm:$0xff]
      %v3105 = vld [vmem:[#allocation2 + $0x1] sm:$0xff]
      %v3106 = vld [vmem:[#allocation2 + $0x9] sm:$0xff]
      %v3107 = vld [vmem:[#allocation2 + $0x19] sm:$0xff]
      %v3108 = vld [vmem:[#allocation2 + $0x21] sm:$0xff]
      %v3109 = vld [vmem:[#allocation2 + $0x31] sm:$0xff]
      %v3110 = vld [vmem:[#allocation2 + $0x39] sm:$0xff]
      %v3111 = vld [vmem:[#allocation2 + $0x49] sm:$0xff]
      %v3112 = vld [vmem:[#allocation2 + $0x51] sm:$0xff]
      %v3113 = vld [vmem:[#allocation2 + $0x61] sm:$0xff]
      %v3114 = vld [vmem:[#allocation2 + $0x69] sm:$0xff]
      %v3115 = vld [vmem:[#allocation2 + $0x79] sm:$0xff]
      %v3116 = vld [vmem:[#allocation2 + $0x81] sm:$0xff]
      %v3117 = vld [vmem:[#allocation2 + $0x91] sm:$0xff]
      %v3118 = vld [vmem:[#allocation2 + $0x99] sm:$0xff]
      %v3119 = vld [vmem:[#allocation2 + $0xa9] sm:$0xff]
      %v3120 = vld [vmem:[#allocation2 + $0xb1] sm:$0xff]
      %v3121 = vld [vmem:[#allocation2 + $0xc1] sm:$0xff]
      %v3122 = vld [vmem:[#allocation2 + $0xc9] sm:$0xff]
      %v3123 = vld [vmem:[#allocation2 + $0xd9] sm:$0xff]
      %v3124 = vld [vmem:[#allocation2 + $0xe1] sm:$0xff]
      %v3125 = vld [vmem:[#allocation2 + $0xf1] sm:$0xff]
      %v3126 = vld [vmem:[#allocation2 + $0xf9] sm:$0xff]
      %v3127 = vld [vmem:[#allocation2 + $0x109] sm:$0xff]
      %v3128 = vld [vmem:[#allocation2 + $0x111] sm:$0xff]
      %v3129 = vld [vmem:[#allocation2 + $0x121] sm:$0xff]
      %v3130 = vld [vmem:[#allocation2 + $0x129] sm:$0xff]
      %v3131 = vld [vmem:[#allocation2 + $0x139] sm:$0xff]
      %v3132 = vld [vmem:[#allocation2 + $0x141] sm:$0xff]
      %v3133 = vld [vmem:[#allocation2 + $0x151] sm:$0xff]
      %v3134 = vld [vmem:[#allocation2 + $0x159] sm:$0xff]
      %v3135 = vld [vmem:[#allocation2 + $0x169] sm:$0xff]
      %v3136 = vld [vmem:[#allocation2 + $0x171] sm:$0xff]
      %s3137 = scalar_lea.vmem %s3, 32
      %v3138 = vld [vmem:[%s3137] sm:$0xff]
      %v3139 = vld [vmem:[%s3137 + $0x8] sm:$0xff]
      %v3140 = vld [vmem:[%s3137 + $0x10] sm:$0xff]
      %v3141 = vld [vmem:[%s3137 + $0x18] sm:$0xff]
      %v3143 = vsel %vm3036, %v3105, 0
      %v3146 = vsel %vm3036, %v3106, 0
      %v3149 = vsel %vm3036, %v3107, 0
      %v3152 = vsel %vm3036, %v3108, 0
      %v3155 = vsel %vm3036, %v3109, 0
      %v3158 = vsel %vm3036, %v3110, 0
      %v3161 = vsel %vm3036, %v3111, 0
      %v3164 = vsel %vm3036, %v3112, 0
      %v3167 = vsel %vm3036, %v3113, 0
      %v3170 = vsel %vm3036, %v3114, 0
      %v3173 = vsel %vm3036, %v3115, 0
      %v3176 = vsel %vm3036, %v3116, 0
      %v3179 = vsel %vm3036, %v3117, 0
      %v3182 = vsel %vm3036, %v3118, 0
      %v3185 = vsel %vm3036, %v3119, 0
      %v3188 = vsel %vm3036, %v3120, 0
      %v3191 = vsel %vm3036, %v3121, 0
      %v3194 = vsel %vm3036, %v3122, 0
      %v3197 = vsel %vm3036, %v3123, 0
      %v3200 = vsel %vm3036, %v3124, 0
      %v3203 = vsel %vm3036, %v3125, 0
      %v3206 = vsel %vm3036, %v3126, 0
      %v3209 = vsel %vm3036, %v3127, 0
      %v3212 = vsel %vm3036, %v3128, 0
      %v3215 = vsel %vm3036, %v3129, 0
      %v3218 = vsel %vm3036, %v3130, 0
      %v3221 = vsel %vm3036, %v3131, 0
      %v3224 = vsel %vm3036, %v3132, 0
      %v3227 = vsel %vm3036, %v3133, 0
      %v3230 = vsel %vm3036, %v3134, 0
      %v3233 = vsel %vm3036, %v3135, 0
      %v3236 = vsel %vm3036, %v3136, 0
      %3238 = vmatpush.msra.mxu0 0.0
      %3239 = vmatpush.msra.mxu0 0.0
      %3240 = vmatpush.msra.mxu0 0.0
      %3241 = vmatpush.msra.mxu0 0.0
      %3242 = vmatpush.msra.mxu0 0.0
      %3243 = vmatpush.msra.mxu0 0.0
      %3244 = vmatpush.msra.mxu0 0.0
      %3245 = vmatpush.msra.mxu0 0.0
      %3246 = vmatpush.msra.mxu0 0.0
      %3247 = vmatpush.msra.mxu0 0.0
      %3248 = vmatpush.msra.mxu0 0.0
      %3249 = vmatpush.msra.mxu0 0.0
      %3250 = vmatpush.msra.mxu0 %v3141
      %3251 = vmatpush.msra.mxu0 %v3140
      %3252 = vmatpush.msra.mxu0 %v3139
      %3253 = vmatpush.msra.mxu0 %v3138
      %3254 = vmatmul.f32.gmra.mxu0 %v3143
      %v3255 = vpop.f32.mrf.mxu0
      %v3256 = vadd.f32 0.0, %v3255
      %3257 = vmatmul.f32.gmra.mxu0 %v3146
      %v3258 = vpop.f32.mrf.mxu0
      %v3259 = vadd.f32 0.0, %v3258
      %3260 = vmatmul.f32.gmra.mxu0 %v3149
      %v3261 = vpop.f32.mrf.mxu0
      %v3262 = vadd.f32 0.0, %v3261
      %3263 = vmatmul.f32.gmra.mxu0 %v3152
      %v3264 = vpop.f32.mrf.mxu0
      %v3265 = vadd.f32 0.0, %v3264
      %3266 = vmatmul.f32.gmra.mxu0 %v3155
      %v3267 = vpop.f32.mrf.mxu0
      %v3268 = vadd.f32 0.0, %v3267
      %3269 = vmatmul.f32.gmra.mxu0 %v3158
      %v3270 = vpop.f32.mrf.mxu0
      %v3271 = vadd.f32 0.0, %v3270
      %3272 = vmatmul.f32.gmra.mxu0 %v3161
      %v3273 = vpop.f32.mrf.mxu0
      %v3274 = vadd.f32 0.0, %v3273
      %3275 = vmatmul.f32.gmra.mxu0 %v3164
      %v3276 = vpop.f32.mrf.mxu0
      %v3277 = vadd.f32 0.0, %v3276
      %3278 = vmatmul.f32.gmra.mxu0 %v3167
      %v3279 = vpop.f32.mrf.mxu0
      %v3280 = vadd.f32 0.0, %v3279
      %3281 = vmatmul.f32.gmra.mxu0 %v3170
      %v3282 = vpop.f32.mrf.mxu0
      %v3283 = vadd.f32 0.0, %v3282
      %3284 = vmatmul.f32.gmra.mxu0 %v3173
      %v3285 = vpop.f32.mrf.mxu0
      %v3286 = vadd.f32 0.0, %v3285
      %3287 = vmatmul.f32.gmra.mxu0 %v3176
      %v3288 = vpop.f32.mrf.mxu0
      %v3289 = vadd.f32 0.0, %v3288
      %3290 = vmatmul.f32.gmra.mxu0 %v3179
      %v3291 = vpop.f32.mrf.mxu0
      %v3292 = vadd.f32 0.0, %v3291
      %3293 = vmatmul.f32.gmra.mxu0 %v3182
      %v3294 = vpop.f32.mrf.mxu0
      %v3295 = vadd.f32 0.0, %v3294
      %3296 = vmatmul.f32.gmra.mxu0 %v3185
      %v3297 = vpop.f32.mrf.mxu0
      %v3298 = vadd.f32 0.0, %v3297
      %3299 = vmatmul.f32.gmra.mxu0 %v3188
      %v3300 = vpop.f32.mrf.mxu0
      %v3301 = vadd.f32 0.0, %v3300
      %3302 = vmatmul.f32.gmra.mxu0 %v3191
      %v3303 = vpop.f32.mrf.mxu0
      %v3304 = vadd.f32 0.0, %v3303
      %3305 = vmatmul.f32.gmra.mxu0 %v3194
      %v3306 = vpop.f32.mrf.mxu0
      %v3307 = vadd.f32 0.0, %v3306
      %3308 = vmatmul.f32.gmra.mxu0 %v3197
      %v3309 = vpop.f32.mrf.mxu0
      %v3310 = vadd.f32 0.0, %v3309
      %3311 = vmatmul.f32.gmra.mxu0 %v3200
      %v3312 = vpop.f32.mrf.mxu0
      %v3313 = vadd.f32 0.0, %v3312
      %3314 = vmatmul.f32.gmra.mxu0 %v3203
      %v3315 = vpop.f32.mrf.mxu0
      %v3316 = vadd.f32 0.0, %v3315
      %3317 = vmatmul.f32.gmra.mxu0 %v3206
      %v3318 = vpop.f32.mrf.mxu0
      %v3319 = vadd.f32 0.0, %v3318
      %3320 = vmatmul.f32.gmra.mxu0 %v3209
      %v3321 = vpop.f32.mrf.mxu0
      %v3322 = vadd.f32 0.0, %v3321
      %3323 = vmatmul.f32.gmra.mxu0 %v3212
      %v3324 = vpop.f32.mrf.mxu0
      %v3325 = vadd.f32 0.0, %v3324
      %3326 = vmatmul.f32.gmra.mxu0 %v3215
      %v3327 = vpop.f32.mrf.mxu0
      %v3328 = vadd.f32 0.0, %v3327
      %3329 = vmatmul.f32.gmra.mxu0 %v3218
      %v3330 = vpop.f32.mrf.mxu0
      %v3331 = vadd.f32 0.0, %v3330
      %3332 = vmatmul.f32.gmra.mxu0 %v3221
      %v3333 = vpop.f32.mrf.mxu0
      %v3334 = vadd.f32 0.0, %v3333
      %3335 = vmatmul.f32.gmra.mxu0 %v3224
      %v3336 = vpop.f32.mrf.mxu0
      %v3337 = vadd.f32 0.0, %v3336
      %3338 = vmatmul.f32.gmra.mxu0 %v3227
      %v3339 = vpop.f32.mrf.mxu0
      %v3340 = vadd.f32 0.0, %v3339
      %3341 = vmatmul.f32.gmra.mxu0 %v3230
      %v3342 = vpop.f32.mrf.mxu0
      %v3343 = vadd.f32 0.0, %v3342
      %3344 = vmatmul.f32.gmra.mxu0 %v3233
      %v3345 = vpop.f32.mrf.mxu0
      %v3346 = vadd.f32 0.0, %v3345
      %3347 = vmatmul.f32.gmra.mxu0 %v3236
      %v3348 = vpop.f32.mrf.mxu0
      %v3349 = vadd.f32 0.0, %v3348
      %3350 = vdwg.mxu0
      %v3352 = vsel %vm3036, %v3069, 0
      %v3355 = vsel %vm3036, %v3070, 0
      %v3358 = vsel %vm3036, %v3071, 0
      %v3361 = vsel %vm3036, %v3072, 0
      %v3364 = vsel %vm3036, %v3073, 0
      %v3367 = vsel %vm3036, %v3074, 0
      %v3370 = vsel %vm3036, %v3075, 0
      %v3373 = vsel %vm3036, %v3076, 0
      %v3376 = vsel %vm3036, %v3077, 0
      %v3379 = vsel %vm3036, %v3078, 0
      %v3382 = vsel %vm3036, %v3079, 0
      %v3385 = vsel %vm3036, %v3080, 0
      %v3388 = vsel %vm3036, %v3081, 0
      %v3391 = vsel %vm3036, %v3082, 0
      %v3394 = vsel %vm3036, %v3083, 0
      %v3397 = vsel %vm3036, %v3084, 0
      %v3400 = vsel %vm3036, %v3085, 0
      %v3403 = vsel %vm3036, %v3086, 0
      %v3406 = vsel %vm3036, %v3087, 0
      %v3409 = vsel %vm3036, %v3088, 0
      %v3412 = vsel %vm3036, %v3089, 0
      %v3415 = vsel %vm3036, %v3090, 0
      %v3418 = vsel %vm3036, %v3091, 0
      %v3421 = vsel %vm3036, %v3092, 0
      %v3424 = vsel %vm3036, %v3093, 0
      %v3427 = vsel %vm3036, %v3094, 0
      %v3430 = vsel %vm3036, %v3095, 0
      %v3433 = vsel %vm3036, %v3096, 0
      %v3436 = vsel %vm3036, %v3097, 0
      %v3439 = vsel %vm3036, %v3098, 0
      %v3442 = vsel %vm3036, %v3099, 0
      %v3445 = vsel %vm3036, %v3100, 0
      %3447 = vmatpush.msra.mxu0 0.0
      %3448 = vmatpush.msra.mxu0 0.0
      %3449 = vmatpush.msra.mxu0 0.0
      %3450 = vmatpush.msra.mxu0 0.0
      %3451 = vmatpush.msra.mxu0 0.0
      %3452 = vmatpush.msra.mxu0 0.0
      %3453 = vmatpush.msra.mxu0 0.0
      %3454 = vmatpush.msra.mxu0 0.0
      %3455 = vmatpush.msra.mxu0 0.0
      %3456 = vmatpush.msra.mxu0 0.0
      %3457 = vmatpush.msra.mxu0 0.0
      %3458 = vmatpush.msra.mxu0 0.0
      %3459 = vmatpush.msra.mxu0 %v3104
      %3460 = vmatpush.msra.mxu0 %v3103
      %3461 = vmatpush.msra.mxu0 %v3102
      %3462 = vmatpush.msra.mxu0 %v3101
      %3463 = vmatmul.f32.gmra.mxu0 %v3352
      %v3464 = vpop.f32.mrf.mxu0
      %v3465 = vadd.f32 %v3256, %v3464
      %3466 = vmatmul.f32.gmra.mxu0 %v3355
      %v3467 = vpop.f32.mrf.mxu0
      %v3468 = vadd.f32 %v3259, %v3467
      %3469 = vmatmul.f32.gmra.mxu0 %v3358
      %v3470 = vpop.f32.mrf.mxu0
      %v3471 = vadd.f32 %v3262, %v3470
      %3472 = vmatmul.f32.gmra.mxu0 %v3361
      %v3473 = vpop.f32.mrf.mxu0
      %v3474 = vadd.f32 %v3265, %v3473
      %3475 = vmatmul.f32.gmra.mxu0 %v3364
      %v3476 = vpop.f32.mrf.mxu0
      %v3477 = vadd.f32 %v3268, %v3476
      %3478 = vmatmul.f32.gmra.mxu0 %v3367
      %v3479 = vpop.f32.mrf.mxu0
      %v3480 = vadd.f32 %v3271, %v3479
      %3481 = vmatmul.f32.gmra.mxu0 %v3370
      %v3482 = vpop.f32.mrf.mxu0
      %v3483 = vadd.f32 %v3274, %v3482
      %3484 = vmatmul.f32.gmra.mxu0 %v3373
      %v3485 = vpop.f32.mrf.mxu0
      %v3486 = vadd.f32 %v3277, %v3485
      %3487 = vmatmul.f32.gmra.mxu0 %v3376
      %v3488 = vpop.f32.mrf.mxu0
      %v3489 = vadd.f32 %v3280, %v3488
      %3490 = vmatmul.f32.gmra.mxu0 %v3379
      %v3491 = vpop.f32.mrf.mxu0
      %v3492 = vadd.f32 %v3283, %v3491
      %3493 = vmatmul.f32.gmra.mxu0 %v3382
      %v3494 = vpop.f32.mrf.mxu0
      %v3495 = vadd.f32 %v3286, %v3494
      %3496 = vmatmul.f32.gmra.mxu0 %v3385
      %v3497 = vpop.f32.mrf.mxu0
      %v3498 = vadd.f32 %v3289, %v3497
      %3499 = vmatmul.f32.gmra.mxu0 %v3388
      %v3500 = vpop.f32.mrf.mxu0
      %v3501 = vadd.f32 %v3292, %v3500
      %3502 = vmatmul.f32.gmra.mxu0 %v3391
      %v3503 = vpop.f32.mrf.mxu0
      %v3504 = vadd.f32 %v3295, %v3503
      %3505 = vmatmul.f32.gmra.mxu0 %v3394
      %v3506 = vpop.f32.mrf.mxu0
      %v3507 = vadd.f32 %v3298, %v3506
      %3508 = vmatmul.f32.gmra.mxu0 %v3397
      %v3509 = vpop.f32.mrf.mxu0
      %v3510 = vadd.f32 %v3301, %v3509
      %3511 = vmatmul.f32.gmra.mxu0 %v3400
      %v3512 = vpop.f32.mrf.mxu0
      %v3513 = vadd.f32 %v3304, %v3512
      %3514 = vmatmul.f32.gmra.mxu0 %v3403
      %v3515 = vpop.f32.mrf.mxu0
      %v3516 = vadd.f32 %v3307, %v3515
      %3517 = vmatmul.f32.gmra.mxu0 %v3406
      %v3518 = vpop.f32.mrf.mxu0
      %v3519 = vadd.f32 %v3310, %v3518
      %3520 = vmatmul.f32.gmra.mxu0 %v3409
      %v3521 = vpop.f32.mrf.mxu0
      %v3522 = vadd.f32 %v3313, %v3521
      %3523 = vmatmul.f32.gmra.mxu0 %v3412
      %v3524 = vpop.f32.mrf.mxu0
      %v3525 = vadd.f32 %v3316, %v3524
      %3526 = vmatmul.f32.gmra.mxu0 %v3415
      %v3527 = vpop.f32.mrf.mxu0
      %v3528 = vadd.f32 %v3319, %v3527
      %3529 = vmatmul.f32.gmra.mxu0 %v3418
      %v3530 = vpop.f32.mrf.mxu0
      %v3531 = vadd.f32 %v3322, %v3530
      %3532 = vmatmul.f32.gmra.mxu0 %v3421
      %v3533 = vpop.f32.mrf.mxu0
      %v3534 = vadd.f32 %v3325, %v3533
      %3535 = vmatmul.f32.gmra.mxu0 %v3424
      %v3536 = vpop.f32.mrf.mxu0
      %v3537 = vadd.f32 %v3328, %v3536
      %3538 = vmatmul.f32.gmra.mxu0 %v3427
      %v3539 = vpop.f32.mrf.mxu0
      %v3540 = vadd.f32 %v3331, %v3539
      %3541 = vmatmul.f32.gmra.mxu0 %v3430
      %v3542 = vpop.f32.mrf.mxu0
      %v3543 = vadd.f32 %v3334, %v3542
      %3544 = vmatmul.f32.gmra.mxu0 %v3433
      %v3545 = vpop.f32.mrf.mxu0
      %v3546 = vadd.f32 %v3337, %v3545
      %3547 = vmatmul.f32.gmra.mxu0 %v3436
      %v3548 = vpop.f32.mrf.mxu0
      %v3549 = vadd.f32 %v3340, %v3548
      %3550 = vmatmul.f32.gmra.mxu0 %v3439
      %v3551 = vpop.f32.mrf.mxu0
      %v3552 = vadd.f32 %v3343, %v3551
      %3553 = vmatmul.f32.gmra.mxu0 %v3442
      %v3554 = vpop.f32.mrf.mxu0
      %v3555 = vadd.f32 %v3346, %v3554
      %3556 = vmatmul.f32.gmra.mxu0 %v3445
      %v3557 = vpop.f32.mrf.mxu0
      %v3558 = vadd.f32 %v3349, %v3557
      %3559 = vdwg.mxu0
      %v3560 = vld [vmem:[#allocation2 + $0x2] sm:$0xff]
      %v3561 = vld [vmem:[#allocation2 + $0xa] sm:$0xff]
      %v3562 = vld [vmem:[#allocation2 + $0x1a] sm:$0xff]
      %v3563 = vld [vmem:[#allocation2 + $0x22] sm:$0xff]
      %v3564 = vld [vmem:[#allocation2 + $0x32] sm:$0xff]
      %v3565 = vld [vmem:[#allocation2 + $0x3a] sm:$0xff]
      %v3566 = vld [vmem:[#allocation2 + $0x4a] sm:$0xff]
      %v3567 = vld [vmem:[#allocation2 + $0x52] sm:$0xff]
      %v3568 = vld [vmem:[#allocation2 + $0x62] sm:$0xff]
      %v3569 = vld [vmem:[#allocation2 + $0x6a] sm:$0xff]
      %v3570 = vld [vmem:[#allocation2 + $0x7a] sm:$0xff]
      %v3571 = vld [vmem:[#allocation2 + $0x82] sm:$0xff]
      %v3572 = vld [vmem:[#allocation2 + $0x92] sm:$0xff]
      %v3573 = vld [vmem:[#allocation2 + $0x9a] sm:$0xff]
      %v3574 = vld [vmem:[#allocation2 + $0xaa] sm:$0xff]
      %v3575 = vld [vmem:[#allocation2 + $0xb2] sm:$0xff]
      %v3576 = vld [vmem:[#allocation2 + $0xc2] sm:$0xff]
      %v3577 = vld [vmem:[#allocation2 + $0xca] sm:$0xff]
      %v3578 = vld [vmem:[#allocation2 + $0xda] sm:$0xff]
      %v3579 = vld [vmem:[#allocation2 + $0xe2] sm:$0xff]
      %v3580 = vld [vmem:[#allocation2 + $0xf2] sm:$0xff]
      %v3581 = vld [vmem:[#allocation2 + $0xfa] sm:$0xff]
      %v3582 = vld [vmem:[#allocation2 + $0x10a] sm:$0xff]
      %v3583 = vld [vmem:[#allocation2 + $0x112] sm:$0xff]
      %v3584 = vld [vmem:[#allocation2 + $0x122] sm:$0xff]
      %v3585 = vld [vmem:[#allocation2 + $0x12a] sm:$0xff]
      %v3586 = vld [vmem:[#allocation2 + $0x13a] sm:$0xff]
      %v3587 = vld [vmem:[#allocation2 + $0x142] sm:$0xff]
      %v3588 = vld [vmem:[#allocation2 + $0x152] sm:$0xff]
      %v3589 = vld [vmem:[#allocation2 + $0x15a] sm:$0xff]
      %v3590 = vld [vmem:[#allocation2 + $0x16a] sm:$0xff]
      %v3591 = vld [vmem:[#allocation2 + $0x172] sm:$0xff]
      %s3592 = scalar_lea.vmem %s3, 64
      %v3593 = vld [vmem:[%s3592] sm:$0xff]
      %v3594 = vld [vmem:[%s3592 + $0x8] sm:$0xff]
      %v3595 = vld [vmem:[%s3592 + $0x10] sm:$0xff]
      %v3596 = vld [vmem:[%s3592 + $0x18] sm:$0xff]
      %v3598 = vsel %vm3036, %v3560, 0
      %v3601 = vsel %vm3036, %v3561, 0
      %v3604 = vsel %vm3036, %v3562, 0
      %v3607 = vsel %vm3036, %v3563, 0
      %v3610 = vsel %vm3036, %v3564, 0
      %v3613 = vsel %vm3036, %v3565, 0
      %v3616 = vsel %vm3036, %v3566, 0
      %v3619 = vsel %vm3036, %v3567, 0
      %v3622 = vsel %vm3036, %v3568, 0
      %v3625 = vsel %vm3036, %v3569, 0
      %v3628 = vsel %vm3036, %v3570, 0
      %v3631 = vsel %vm3036, %v3571, 0
      %v3634 = vsel %vm3036, %v3572, 0
      %v3637 = vsel %vm3036, %v3573, 0
      %v3640 = vsel %vm3036, %v3574, 0
      %v3643 = vsel %vm3036, %v3575, 0
      %v3646 = vsel %vm3036, %v3576, 0
      %v3649 = vsel %vm3036, %v3577, 0
      %v3652 = vsel %vm3036, %v3578, 0
      %v3655 = vsel %vm3036, %v3579, 0
      %v3658 = vsel %vm3036, %v3580, 0
      %v3661 = vsel %vm3036, %v3581, 0
      %v3664 = vsel %vm3036, %v3582, 0
      %v3667 = vsel %vm3036, %v3583, 0
      %v3670 = vsel %vm3036, %v3584, 0
      %v3673 = vsel %vm3036, %v3585, 0
      %v3676 = vsel %vm3036, %v3586, 0
      %v3679 = vsel %vm3036, %v3587, 0
      %v3682 = vsel %vm3036, %v3588, 0
      %v3685 = vsel %vm3036, %v3589, 0
      %v3688 = vsel %vm3036, %v3590, 0
      %v3691 = vsel %vm3036, %v3591, 0
      %3693 = vmatpush.msra.mxu0 0.0
      %3694 = vmatpush.msra.mxu0 0.0
      %3695 = vmatpush.msra.mxu0 0.0
      %3696 = vmatpush.msra.mxu0 0.0
      %3697 = vmatpush.msra.mxu0 0.0
      %3698 = vmatpush.msra.mxu0 0.0
      %3699 = vmatpush.msra.mxu0 0.0
      %3700 = vmatpush.msra.mxu0 0.0
      %3701 = vmatpush.msra.mxu0 0.0
      %3702 = vmatpush.msra.mxu0 0.0
      %3703 = vmatpush.msra.mxu0 0.0
      %3704 = vmatpush.msra.mxu0 0.0
      %3705 = vmatpush.msra.mxu0 %v3596
      %3706 = vmatpush.msra.mxu0 %v3595
      %3707 = vmatpush.msra.mxu0 %v3594
      %3708 = vmatpush.msra.mxu0 %v3593
      %3709 = vmatmul.f32.gmra.mxu0 %v3598
      %v3710 = vpop.f32.mrf.mxu0
      %v3711 = vadd.f32 0.0, %v3710
      %3712 = vmatmul.f32.gmra.mxu0 %v3601
      %v3713 = vpop.f32.mrf.mxu0
      %v3714 = vadd.f32 0.0, %v3713
      %3715 = vmatmul.f32.gmra.mxu0 %v3604
      %v3716 = vpop.f32.mrf.mxu0
      %v3717 = vadd.f32 0.0, %v3716
      %3718 = vmatmul.f32.gmra.mxu0 %v3607
      %v3719 = vpop.f32.mrf.mxu0
      %v3720 = vadd.f32 0.0, %v3719
      %3721 = vmatmul.f32.gmra.mxu0 %v3610
      %v3722 = vpop.f32.mrf.mxu0
      %v3723 = vadd.f32 0.0, %v3722
      %3724 = vmatmul.f32.gmra.mxu0 %v3613
      %v3725 = vpop.f32.mrf.mxu0
      %v3726 = vadd.f32 0.0, %v3725
      %3727 = vmatmul.f32.gmra.mxu0 %v3616
      %v3728 = vpop.f32.mrf.mxu0
      %v3729 = vadd.f32 0.0, %v3728
      %3730 = vmatmul.f32.gmra.mxu0 %v3619
      %v3731 = vpop.f32.mrf.mxu0
      %v3732 = vadd.f32 0.0, %v3731
      %3733 = vmatmul.f32.gmra.mxu0 %v3622
      %v3734 = vpop.f32.mrf.mxu0
      %v3735 = vadd.f32 0.0, %v3734
      %3736 = vmatmul.f32.gmra.mxu0 %v3625
      %v3737 = vpop.f32.mrf.mxu0
      %v3738 = vadd.f32 0.0, %v3737
      %3739 = vmatmul.f32.gmra.mxu0 %v3628
      %v3740 = vpop.f32.mrf.mxu0
      %v3741 = vadd.f32 0.0, %v3740
      %3742 = vmatmul.f32.gmra.mxu0 %v3631
      %v3743 = vpop.f32.mrf.mxu0
      %v3744 = vadd.f32 0.0, %v3743
      %3745 = vmatmul.f32.gmra.mxu0 %v3634
      %v3746 = vpop.f32.mrf.mxu0
      %v3747 = vadd.f32 0.0, %v3746
      %3748 = vmatmul.f32.gmra.mxu0 %v3637
      %v3749 = vpop.f32.mrf.mxu0
      %v3750 = vadd.f32 0.0, %v3749
      %3751 = vmatmul.f32.gmra.mxu0 %v3640
      %v3752 = vpop.f32.mrf.mxu0
      %v3753 = vadd.f32 0.0, %v3752
      %3754 = vmatmul.f32.gmra.mxu0 %v3643
      %v3755 = vpop.f32.mrf.mxu0
      %v3756 = vadd.f32 0.0, %v3755
      %3757 = vmatmul.f32.gmra.mxu0 %v3646
      %v3758 = vpop.f32.mrf.mxu0
      %v3759 = vadd.f32 0.0, %v3758
      %3760 = vmatmul.f32.gmra.mxu0 %v3649
      %v3761 = vpop.f32.mrf.mxu0
      %v3762 = vadd.f32 0.0, %v3761
      %3763 = vmatmul.f32.gmra.mxu0 %v3652
      %v3764 = vpop.f32.mrf.mxu0
      %v3765 = vadd.f32 0.0, %v3764
      %3766 = vmatmul.f32.gmra.mxu0 %v3655
      %v3767 = vpop.f32.mrf.mxu0
      %v3768 = vadd.f32 0.0, %v3767
      %3769 = vmatmul.f32.gmra.mxu0 %v3658
      %v3770 = vpop.f32.mrf.mxu0
      %v3771 = vadd.f32 0.0, %v3770
      %3772 = vmatmul.f32.gmra.mxu0 %v3661
      %v3773 = vpop.f32.mrf.mxu0
      %v3774 = vadd.f32 0.0, %v3773
      %3775 = vmatmul.f32.gmra.mxu0 %v3664
      %v3776 = vpop.f32.mrf.mxu0
      %v3777 = vadd.f32 0.0, %v3776
      %3778 = vmatmul.f32.gmra.mxu0 %v3667
      %v3779 = vpop.f32.mrf.mxu0
      %v3780 = vadd.f32 0.0, %v3779
      %3781 = vmatmul.f32.gmra.mxu0 %v3670
      %v3782 = vpop.f32.mrf.mxu0
      %v3783 = vadd.f32 0.0, %v3782
      %3784 = vmatmul.f32.gmra.mxu0 %v3673
      %v3785 = vpop.f32.mrf.mxu0
      %v3786 = vadd.f32 0.0, %v3785
      %3787 = vmatmul.f32.gmra.mxu0 %v3676
      %v3788 = vpop.f32.mrf.mxu0
      %v3789 = vadd.f32 0.0, %v3788
      %3790 = vmatmul.f32.gmra.mxu0 %v3679
      %v3791 = vpop.f32.mrf.mxu0
      %v3792 = vadd.f32 0.0, %v3791
      %3793 = vmatmul.f32.gmra.mxu0 %v3682
      %v3794 = vpop.f32.mrf.mxu0
      %v3795 = vadd.f32 0.0, %v3794
      %3796 = vmatmul.f32.gmra.mxu0 %v3685
      %v3797 = vpop.f32.mrf.mxu0
      %v3798 = vadd.f32 0.0, %v3797
      %3799 = vmatmul.f32.gmra.mxu0 %v3688
      %v3800 = vpop.f32.mrf.mxu0
      %v3801 = vadd.f32 0.0, %v3800
      %3802 = vmatmul.f32.gmra.mxu0 %v3691
      %v3803 = vpop.f32.mrf.mxu0
      %v3804 = vadd.f32 0.0, %v3803
      %3805 = vdwg.mxu0
      %v3806 = vadd.f32 %v3465, %v3711
      %v3807 = vadd.f32 %v3468, %v3714
      %v3808 = vadd.f32 %v3471, %v3717
      %v3809 = vadd.f32 %v3474, %v3720
      %v3810 = vadd.f32 %v3477, %v3723
      %v3811 = vadd.f32 %v3480, %v3726
      %v3812 = vadd.f32 %v3483, %v3729
      %v3813 = vadd.f32 %v3486, %v3732
      %v3814 = vadd.f32 %v3489, %v3735
      %v3815 = vadd.f32 %v3492, %v3738
      %v3816 = vadd.f32 %v3495, %v3741
      %v3817 = vadd.f32 %v3498, %v3744
      %v3818 = vadd.f32 %v3501, %v3747
      %v3819 = vadd.f32 %v3504, %v3750
      %v3820 = vadd.f32 %v3507, %v3753
      %v3821 = vadd.f32 %v3510, %v3756
      %v3822 = vadd.f32 %v3513, %v3759
      %v3823 = vadd.f32 %v3516, %v3762
      %v3824 = vadd.f32 %v3519, %v3765
      %v3825 = vadd.f32 %v3522, %v3768
      %v3826 = vadd.f32 %v3525, %v3771
      %v3827 = vadd.f32 %v3528, %v3774
      %v3828 = vadd.f32 %v3531, %v3777
      %v3829 = vadd.f32 %v3534, %v3780
      %v3830 = vadd.f32 %v3537, %v3783
      %v3831 = vadd.f32 %v3540, %v3786
      %v3832 = vadd.f32 %v3543, %v3789
      %v3833 = vadd.f32 %v3546, %v3792
      %v3834 = vadd.f32 %v3549, %v3795
      %v3835 = vadd.f32 %v3552, %v3798
      %v3836 = vadd.f32 %v3555, %v3801
      %v3837 = vadd.f32 %v3558, %v3804
      %v3838 = vld [vmem:[%s531] sm:$0xff]
      %v3839 = vld [vmem:[%s531 + $0x8] sm:$0xff]
      %v3840 = vld [vmem:[%s531 + $0x18] sm:$0xff]
      %v3841 = vld [vmem:[%s531 + $0x20] sm:$0xff]
      %v3842 = vld [vmem:[%s531 + $0x30] sm:$0xff]
      %v3843 = vld [vmem:[%s531 + $0x38] sm:$0xff]
      %v3844 = vld [vmem:[%s531 + $0x48] sm:$0xff]
      %v3845 = vld [vmem:[%s531 + $0x50] sm:$0xff]
      %v3846 = vld [vmem:[%s531 + $0x60] sm:$0xff]
      %v3847 = vld [vmem:[%s531 + $0x68] sm:$0xff]
      %v3848 = vld [vmem:[%s531 + $0x78] sm:$0xff]
      %v3849 = vld [vmem:[%s531 + $0x80] sm:$0xff]
      %v3850 = vld [vmem:[%s531 + $0x90] sm:$0xff]
      %v3851 = vld [vmem:[%s531 + $0x98] sm:$0xff]
      %v3852 = vld [vmem:[%s531 + $0xa8] sm:$0xff]
      %v3853 = vld [vmem:[%s531 + $0xb0] sm:$0xff]
      %v3854 = vld [vmem:[%s531 + $0xc0] sm:$0xff]
      %v3855 = vld [vmem:[%s531 + $0xc8] sm:$0xff]
      %v3856 = vld [vmem:[%s531 + $0xd8] sm:$0xff]
      %v3857 = vld [vmem:[%s531 + $0xe0] sm:$0xff]
      %v3858 = vld [vmem:[%s531 + $0xf0] sm:$0xff]
      %v3859 = vld [vmem:[%s531 + $0xf8] sm:$0xff]
      %v3860 = vld [vmem:[%s531 + $0x108] sm:$0xff]
      %v3861 = vld [vmem:[%s531 + $0x110] sm:$0xff]
      %v3862 = vld [vmem:[%s531 + $0x120] sm:$0xff]
      %v3863 = vld [vmem:[%s531 + $0x128] sm:$0xff]
      %v3864 = vld [vmem:[%s531 + $0x138] sm:$0xff]
      %v3865 = vld [vmem:[%s531 + $0x140] sm:$0xff]
      %v3866 = vld [vmem:[%s531 + $0x150] sm:$0xff]
      %v3867 = vld [vmem:[%s531 + $0x158] sm:$0xff]
      %v3868 = vld [vmem:[%s531 + $0x168] sm:$0xff]
      %v3869 = vld [vmem:[%s531 + $0x170] sm:$0xff]
      %s3870 = scalar_lea.vmem %s3, 96
      %v3871 = vld [vmem:[%s3870] sm:$0xff]
      %v3872 = vld [vmem:[%s3870 + $0x8] sm:$0xff]
      %v3873 = vld [vmem:[%s3870 + $0x10] sm:$0xff]
      %v3874 = vld [vmem:[%s3870 + $0x18] sm:$0xff]
      %v3876 = vsel %vm3036, %v3838, 0
      %v3879 = vsel %vm3036, %v3839, 0
      %v3882 = vsel %vm3036, %v3840, 0
      %v3885 = vsel %vm3036, %v3841, 0
      %v3888 = vsel %vm3036, %v3842, 0
      %v3891 = vsel %vm3036, %v3843, 0
      %v3894 = vsel %vm3036, %v3844, 0
      %v3897 = vsel %vm3036, %v3845, 0
      %v3900 = vsel %vm3036, %v3846, 0
      %v3903 = vsel %vm3036, %v3847, 0
      %v3906 = vsel %vm3036, %v3848, 0
      %v3909 = vsel %vm3036, %v3849, 0
      %v3912 = vsel %vm3036, %v3850, 0
      %v3915 = vsel %vm3036, %v3851, 0
      %v3918 = vsel %vm3036, %v3852, 0
      %v3921 = vsel %vm3036, %v3853, 0
      %v3924 = vsel %vm3036, %v3854, 0
      %v3927 = vsel %vm3036, %v3855, 0
      %v3930 = vsel %vm3036, %v3856, 0
      %v3933 = vsel %vm3036, %v3857, 0
      %v3936 = vsel %vm3036, %v3858, 0
      %v3939 = vsel %vm3036, %v3859, 0
      %v3942 = vsel %vm3036, %v3860, 0
      %v3945 = vsel %vm3036, %v3861, 0
      %v3948 = vsel %vm3036, %v3862, 0
      %v3951 = vsel %vm3036, %v3863, 0
      %v3954 = vsel %vm3036, %v3864, 0
      %v3957 = vsel %vm3036, %v3865, 0
      %v3960 = vsel %vm3036, %v3866, 0
      %v3963 = vsel %vm3036, %v3867, 0
      %v3966 = vsel %vm3036, %v3868, 0
      %v3969 = vsel %vm3036, %v3869, 0
      %3971 = vmatpush.msra.mxu0 0.0
      %3972 = vmatpush.msra.mxu0 0.0
      %3973 = vmatpush.msra.mxu0 0.0
      %3974 = vmatpush.msra.mxu0 0.0
      %3975 = vmatpush.msra.mxu0 0.0
      %3976 = vmatpush.msra.mxu0 0.0
      %3977 = vmatpush.msra.mxu0 0.0
      %3978 = vmatpush.msra.mxu0 0.0
      %3979 = vmatpush.msra.mxu0 0.0
      %3980 = vmatpush.msra.mxu0 0.0
      %3981 = vmatpush.msra.mxu0 0.0
      %3982 = vmatpush.msra.mxu0 0.0
      %3983 = vmatpush.msra.mxu0 %v3874
      %3984 = vmatpush.msra.mxu0 %v3873
      %3985 = vmatpush.msra.mxu0 %v3872
      %3986 = vmatpush.msra.mxu0 %v3871
      %3987 = vmatmul.f32.gmra.mxu0 %v3876
      %v3988 = vpop.f32.mrf.mxu0
      %v3989 = vadd.f32 0.0, %v3988
      %3990 = vmatmul.f32.gmra.mxu0 %v3879
      %v3991 = vpop.f32.mrf.mxu0
      %v3992 = vadd.f32 0.0, %v3991
      %3993 = vmatmul.f32.gmra.mxu0 %v3882
      %v3994 = vpop.f32.mrf.mxu0
      %v3995 = vadd.f32 0.0, %v3994
      %3996 = vmatmul.f32.gmra.mxu0 %v3885
      %v3997 = vpop.f32.mrf.mxu0
      %v3998 = vadd.f32 0.0, %v3997
      %3999 = vmatmul.f32.gmra.mxu0 %v3888
      %v4000 = vpop.f32.mrf.mxu0
      %v4001 = vadd.f32 0.0, %v4000
      %4002 = vmatmul.f32.gmra.mxu0 %v3891
      %v4003 = vpop.f32.mrf.mxu0
      %v4004 = vadd.f32 0.0, %v4003
      %4005 = vmatmul.f32.gmra.mxu0 %v3894
      %v4006 = vpop.f32.mrf.mxu0
      %v4007 = vadd.f32 0.0, %v4006
      %4008 = vmatmul.f32.gmra.mxu0 %v3897
      %v4009 = vpop.f32.mrf.mxu0
      %v4010 = vadd.f32 0.0, %v4009
      %4011 = vmatmul.f32.gmra.mxu0 %v3900
      %v4012 = vpop.f32.mrf.mxu0
      %v4013 = vadd.f32 0.0, %v4012
      %4014 = vmatmul.f32.gmra.mxu0 %v3903
      %v4015 = vpop.f32.mrf.mxu0
      %v4016 = vadd.f32 0.0, %v4015
      %4017 = vmatmul.f32.gmra.mxu0 %v3906
      %v4018 = vpop.f32.mrf.mxu0
      %v4019 = vadd.f32 0.0, %v4018
      %4020 = vmatmul.f32.gmra.mxu0 %v3909
      %v4021 = vpop.f32.mrf.mxu0
      %v4022 = vadd.f32 0.0, %v4021
      %4023 = vmatmul.f32.gmra.mxu0 %v3912
      %v4024 = vpop.f32.mrf.mxu0
      %v4025 = vadd.f32 0.0, %v4024
      %4026 = vmatmul.f32.gmra.mxu0 %v3915
      %v4027 = vpop.f32.mrf.mxu0
      %v4028 = vadd.f32 0.0, %v4027
      %4029 = vmatmul.f32.gmra.mxu0 %v3918
      %v4030 = vpop.f32.mrf.mxu0
      %v4031 = vadd.f32 0.0, %v4030
      %4032 = vmatmul.f32.gmra.mxu0 %v3921
      %v4033 = vpop.f32.mrf.mxu0
      %v4034 = vadd.f32 0.0, %v4033
      %4035 = vmatmul.f32.gmra.mxu0 %v3924
      %v4036 = vpop.f32.mrf.mxu0
      %v4037 = vadd.f32 0.0, %v4036
      %4038 = vmatmul.f32.gmra.mxu0 %v3927
      %v4039 = vpop.f32.mrf.mxu0
      %v4040 = vadd.f32 0.0, %v4039
      %4041 = vmatmul.f32.gmra.mxu0 %v3930
      %v4042 = vpop.f32.mrf.mxu0
      %v4043 = vadd.f32 0.0, %v4042
      %4044 = vmatmul.f32.gmra.mxu0 %v3933
      %v4045 = vpop.f32.mrf.mxu0
      %v4046 = vadd.f32 0.0, %v4045
      %4047 = vmatmul.f32.gmra.mxu0 %v3936
      %v4048 = vpop.f32.mrf.mxu0
      %v4049 = vadd.f32 0.0, %v4048
      %4050 = vmatmul.f32.gmra.mxu0 %v3939
      %v4051 = vpop.f32.mrf.mxu0
      %v4052 = vadd.f32 0.0, %v4051
      %4053 = vmatmul.f32.gmra.mxu0 %v3942
      %v4054 = vpop.f32.mrf.mxu0
      %v4055 = vadd.f32 0.0, %v4054
      %4056 = vmatmul.f32.gmra.mxu0 %v3945
      %v4057 = vpop.f32.mrf.mxu0
      %v4058 = vadd.f32 0.0, %v4057
      %4059 = vmatmul.f32.gmra.mxu0 %v3948
      %v4060 = vpop.f32.mrf.mxu0
      %v4061 = vadd.f32 0.0, %v4060
      %4062 = vmatmul.f32.gmra.mxu0 %v3951
      %v4063 = vpop.f32.mrf.mxu0
      %v4064 = vadd.f32 0.0, %v4063
      %4065 = vmatmul.f32.gmra.mxu0 %v3954
      %v4066 = vpop.f32.mrf.mxu0
      %v4067 = vadd.f32 0.0, %v4066
      %4068 = vmatmul.f32.gmra.mxu0 %v3957
      %v4069 = vpop.f32.mrf.mxu0
      %v4070 = vadd.f32 0.0, %v4069
      %4071 = vmatmul.f32.gmra.mxu0 %v3960
      %v4072 = vpop.f32.mrf.mxu0
      %v4073 = vadd.f32 0.0, %v4072
      %4074 = vmatmul.f32.gmra.mxu0 %v3963
      %v4075 = vpop.f32.mrf.mxu0
      %v4076 = vadd.f32 0.0, %v4075
      %4077 = vmatmul.f32.gmra.mxu0 %v3966
      %v4078 = vpop.f32.mrf.mxu0
      %v4079 = vadd.f32 0.0, %v4078
      %4080 = vmatmul.f32.gmra.mxu0 %v3969
      %v4081 = vpop.f32.mrf.mxu0
      %v4082 = vadd.f32 0.0, %v4081
      %4083 = vdwg.mxu0
      %v4084 = vadd.f32 %v3806, %v3989
      %v4085 = vadd.f32 %v3807, %v3992
      %v4086 = vadd.f32 %v3808, %v3995
      %v4087 = vadd.f32 %v3809, %v3998
      %v4088 = vadd.f32 %v3810, %v4001
      %v4089 = vadd.f32 %v3811, %v4004
      %v4090 = vadd.f32 %v3812, %v4007
      %v4091 = vadd.f32 %v3813, %v4010
      %v4092 = vadd.f32 %v3814, %v4013
      %v4093 = vadd.f32 %v3815, %v4016
      %v4094 = vadd.f32 %v3816, %v4019
      %v4095 = vadd.f32 %v3817, %v4022
      %v4096 = vadd.f32 %v3818, %v4025
      %v4097 = vadd.f32 %v3819, %v4028
      %v4098 = vadd.f32 %v3820, %v4031
      %v4099 = vadd.f32 %v3821, %v4034
      %v4100 = vadd.f32 %v3822, %v4037
      %v4101 = vadd.f32 %v3823, %v4040
      %v4102 = vadd.f32 %v3824, %v4043
      %v4103 = vadd.f32 %v3825, %v4046
      %v4104 = vadd.f32 %v3826, %v4049
      %v4105 = vadd.f32 %v3827, %v4052
      %v4106 = vadd.f32 %v3828, %v4055
      %v4107 = vadd.f32 %v3829, %v4058
      %v4108 = vadd.f32 %v3830, %v4061
      %v4109 = vadd.f32 %v3831, %v4064
      %v4110 = vadd.f32 %v3832, %v4067
      %v4111 = vadd.f32 %v3833, %v4070
      %v4112 = vadd.f32 %v3834, %v4073
      %v4113 = vadd.f32 %v3835, %v4076
      %v4114 = vadd.f32 %v3836, %v4079
      %v4115 = vadd.f32 %v3837, %v4082
      %v4116 = vld [vmem:[%s531 + $0x1] sm:$0xff]
      %v4117 = vld [vmem:[%s531 + $0x9] sm:$0xff]
      %v4118 = vld [vmem:[%s531 + $0x19] sm:$0xff]
      %v4119 = vld [vmem:[%s531 + $0x21] sm:$0xff]
      %v4120 = vld [vmem:[%s531 + $0x31] sm:$0xff]
      %v4121 = vld [vmem:[%s531 + $0x39] sm:$0xff]
      %v4122 = vld [vmem:[%s531 + $0x49] sm:$0xff]
      %v4123 = vld [vmem:[%s531 + $0x51] sm:$0xff]
      %v4124 = vld [vmem:[%s531 + $0x61] sm:$0xff]
      %v4125 = vld [vmem:[%s531 + $0x69] sm:$0xff]
      %v4126 = vld [vmem:[%s531 + $0x79] sm:$0xff]
      %v4127 = vld [vmem:[%s531 + $0x81] sm:$0xff]
      %v4128 = vld [vmem:[%s531 + $0x91] sm:$0xff]
      %v4129 = vld [vmem:[%s531 + $0x99] sm:$0xff]
      %v4130 = vld [vmem:[%s531 + $0xa9] sm:$0xff]
      %v4131 = vld [vmem:[%s531 + $0xb1] sm:$0xff]
      %v4132 = vld [vmem:[%s531 + $0xc1] sm:$0xff]
      %v4133 = vld [vmem:[%s531 + $0xc9] sm:$0xff]
      %v4134 = vld [vmem:[%s531 + $0xd9] sm:$0xff]
      %v4135 = vld [vmem:[%s531 + $0xe1] sm:$0xff]
      %v4136 = vld [vmem:[%s531 + $0xf1] sm:$0xff]
      %v4137 = vld [vmem:[%s531 + $0xf9] sm:$0xff]
      %v4138 = vld [vmem:[%s531 + $0x109] sm:$0xff]
      %v4139 = vld [vmem:[%s531 + $0x111] sm:$0xff]
      %v4140 = vld [vmem:[%s531 + $0x121] sm:$0xff]
      %v4141 = vld [vmem:[%s531 + $0x129] sm:$0xff]
      %v4142 = vld [vmem:[%s531 + $0x139] sm:$0xff]
      %v4143 = vld [vmem:[%s531 + $0x141] sm:$0xff]
      %v4144 = vld [vmem:[%s531 + $0x151] sm:$0xff]
      %v4145 = vld [vmem:[%s531 + $0x159] sm:$0xff]
      %v4146 = vld [vmem:[%s531 + $0x169] sm:$0xff]
      %v4147 = vld [vmem:[%s531 + $0x171] sm:$0xff]
      %s4148 = scalar_lea.vmem %s3, 128
      %v4149 = vld [vmem:[%s4148] sm:$0xff]
      %v4150 = vld [vmem:[%s4148 + $0x8] sm:$0xff]
      %v4151 = vld [vmem:[%s4148 + $0x10] sm:$0xff]
      %v4152 = vld [vmem:[%s4148 + $0x18] sm:$0xff]
      %v4154 = vsel %vm3036, %v4116, 0
      %v4157 = vsel %vm3036, %v4117, 0
      %v4160 = vsel %vm3036, %v4118, 0
      %v4163 = vsel %vm3036, %v4119, 0
      %v4166 = vsel %vm3036, %v4120, 0
      %v4169 = vsel %vm3036, %v4121, 0
      %v4172 = vsel %vm3036, %v4122, 0
      %v4175 = vsel %vm3036, %v4123, 0
      %v4178 = vsel %vm3036, %v4124, 0
      %v4181 = vsel %vm3036, %v4125, 0
      %v4184 = vsel %vm3036, %v4126, 0
      %v4187 = vsel %vm3036, %v4127, 0
      %v4190 = vsel %vm3036, %v4128, 0
      %v4193 = vsel %vm3036, %v4129, 0
      %v4196 = vsel %vm3036, %v4130, 0
      %v4199 = vsel %vm3036, %v4131, 0
      %v4202 = vsel %vm3036, %v4132, 0
      %v4205 = vsel %vm3036, %v4133, 0
      %v4208 = vsel %vm3036, %v4134, 0
      %v4211 = vsel %vm3036, %v4135, 0
      %v4214 = vsel %vm3036, %v4136, 0
      %v4217 = vsel %vm3036, %v4137, 0
      %v4220 = vsel %vm3036, %v4138, 0
      %v4223 = vsel %vm3036, %v4139, 0
      %v4226 = vsel %vm3036, %v4140, 0
      %v4229 = vsel %vm3036, %v4141, 0
      %v4232 = vsel %vm3036, %v4142, 0
      %v4235 = vsel %vm3036, %v4143, 0
      %v4238 = vsel %vm3036, %v4144, 0
      %v4241 = vsel %vm3036, %v4145, 0
      %v4244 = vsel %vm3036, %v4146, 0
      %v4247 = vsel %vm3036, %v4147, 0
      %4249 = vmatpush.msra.mxu0 0.0
      %4250 = vmatpush.msra.mxu0 0.0
      %4251 = vmatpush.msra.mxu0 0.0
      %4252 = vmatpush.msra.mxu0 0.0
      %4253 = vmatpush.msra.mxu0 0.0
      %4254 = vmatpush.msra.mxu0 0.0
      %4255 = vmatpush.msra.mxu0 0.0
      %4256 = vmatpush.msra.mxu0 0.0
      %4257 = vmatpush.msra.mxu0 0.0
      %4258 = vmatpush.msra.mxu0 0.0
      %4259 = vmatpush.msra.mxu0 0.0
      %4260 = vmatpush.msra.mxu0 0.0
      %4261 = vmatpush.msra.mxu0 %v4152
      %4262 = vmatpush.msra.mxu0 %v4151
      %4263 = vmatpush.msra.mxu0 %v4150
      %4264 = vmatpush.msra.mxu0 %v4149
      %4265 = vmatmul.f32.gmra.mxu0 %v4154
      %v4266 = vpop.f32.mrf.mxu0
      %v4267 = vadd.f32 0.0, %v4266
      %4268 = vmatmul.f32.gmra.mxu0 %v4157
      %v4269 = vpop.f32.mrf.mxu0
      %v4270 = vadd.f32 0.0, %v4269
      %4271 = vmatmul.f32.gmra.mxu0 %v4160
      %v4272 = vpop.f32.mrf.mxu0
      %v4273 = vadd.f32 0.0, %v4272
      %4274 = vmatmul.f32.gmra.mxu0 %v4163
      %v4275 = vpop.f32.mrf.mxu0
      %v4276 = vadd.f32 0.0, %v4275
      %4277 = vmatmul.f32.gmra.mxu0 %v4166
      %v4278 = vpop.f32.mrf.mxu0
      %v4279 = vadd.f32 0.0, %v4278
      %4280 = vmatmul.f32.gmra.mxu0 %v4169
      %v4281 = vpop.f32.mrf.mxu0
      %v4282 = vadd.f32 0.0, %v4281
      %4283 = vmatmul.f32.gmra.mxu0 %v4172
      %v4284 = vpop.f32.mrf.mxu0
      %v4285 = vadd.f32 0.0, %v4284
      %4286 = vmatmul.f32.gmra.mxu0 %v4175
      %v4287 = vpop.f32.mrf.mxu0
      %v4288 = vadd.f32 0.0, %v4287
      %4289 = vmatmul.f32.gmra.mxu0 %v4178
      %v4290 = vpop.f32.mrf.mxu0
      %v4291 = vadd.f32 0.0, %v4290
      %4292 = vmatmul.f32.gmra.mxu0 %v4181
      %v4293 = vpop.f32.mrf.mxu0
      %v4294 = vadd.f32 0.0, %v4293
      %4295 = vmatmul.f32.gmra.mxu0 %v4184
      %v4296 = vpop.f32.mrf.mxu0
      %v4297 = vadd.f32 0.0, %v4296
      %4298 = vmatmul.f32.gmra.mxu0 %v4187
      %v4299 = vpop.f32.mrf.mxu0
      %v4300 = vadd.f32 0.0, %v4299
      %4301 = vmatmul.f32.gmra.mxu0 %v4190
      %v4302 = vpop.f32.mrf.mxu0
      %v4303 = vadd.f32 0.0, %v4302
      %4304 = vmatmul.f32.gmra.mxu0 %v4193
      %v4305 = vpop.f32.mrf.mxu0
      %v4306 = vadd.f32 0.0, %v4305
      %4307 = vmatmul.f32.gmra.mxu0 %v4196
      %v4308 = vpop.f32.mrf.mxu0
      %v4309 = vadd.f32 0.0, %v4308
      %4310 = vmatmul.f32.gmra.mxu0 %v4199
      %v4311 = vpop.f32.mrf.mxu0
      %v4312 = vadd.f32 0.0, %v4311
      %4313 = vmatmul.f32.gmra.mxu0 %v4202
      %v4314 = vpop.f32.mrf.mxu0
      %v4315 = vadd.f32 0.0, %v4314
      %4316 = vmatmul.f32.gmra.mxu0 %v4205
      %v4317 = vpop.f32.mrf.mxu0
      %v4318 = vadd.f32 0.0, %v4317
      %4319 = vmatmul.f32.gmra.mxu0 %v4208
      %v4320 = vpop.f32.mrf.mxu0
      %v4321 = vadd.f32 0.0, %v4320
      %4322 = vmatmul.f32.gmra.mxu0 %v4211
      %v4323 = vpop.f32.mrf.mxu0
      %v4324 = vadd.f32 0.0, %v4323
      %4325 = vmatmul.f32.gmra.mxu0 %v4214
      %v4326 = vpop.f32.mrf.mxu0
      %v4327 = vadd.f32 0.0, %v4326
      %4328 = vmatmul.f32.gmra.mxu0 %v4217
      %v4329 = vpop.f32.mrf.mxu0
      %v4330 = vadd.f32 0.0, %v4329
      %4331 = vmatmul.f32.gmra.mxu0 %v4220
      %v4332 = vpop.f32.mrf.mxu0
      %v4333 = vadd.f32 0.0, %v4332
      %4334 = vmatmul.f32.gmra.mxu0 %v4223
      %v4335 = vpop.f32.mrf.mxu0
      %v4336 = vadd.f32 0.0, %v4335
      %4337 = vmatmul.f32.gmra.mxu0 %v4226
      %v4338 = vpop.f32.mrf.mxu0
      %v4339 = vadd.f32 0.0, %v4338
      %4340 = vmatmul.f32.gmra.mxu0 %v4229
      %v4341 = vpop.f32.mrf.mxu0
      %v4342 = vadd.f32 0.0, %v4341
      %4343 = vmatmul.f32.gmra.mxu0 %v4232
      %v4344 = vpop.f32.mrf.mxu0
      %v4345 = vadd.f32 0.0, %v4344
      %4346 = vmatmul.f32.gmra.mxu0 %v4235
      %v4347 = vpop.f32.mrf.mxu0
      %v4348 = vadd.f32 0.0, %v4347
      %4349 = vmatmul.f32.gmra.mxu0 %v4238
      %v4350 = vpop.f32.mrf.mxu0
      %v4351 = vadd.f32 0.0, %v4350
      %4352 = vmatmul.f32.gmra.mxu0 %v4241
      %v4353 = vpop.f32.mrf.mxu0
      %v4354 = vadd.f32 0.0, %v4353
      %4355 = vmatmul.f32.gmra.mxu0 %v4244
      %v4356 = vpop.f32.mrf.mxu0
      %v4357 = vadd.f32 0.0, %v4356
      %4358 = vmatmul.f32.gmra.mxu0 %v4247
      %v4359 = vpop.f32.mrf.mxu0
      %v4360 = vadd.f32 0.0, %v4359
      %4361 = vdwg.mxu0
      %v4362 = vadd.f32 %v4084, %v4267
      %v4363 = vadd.f32 %v4085, %v4270
      %v4364 = vadd.f32 %v4086, %v4273
      %v4365 = vadd.f32 %v4087, %v4276
      %v4366 = vadd.f32 %v4088, %v4279
      %v4367 = vadd.f32 %v4089, %v4282
      %v4368 = vadd.f32 %v4090, %v4285
      %v4369 = vadd.f32 %v4091, %v4288
      %v4370 = vadd.f32 %v4092, %v4291
      %v4371 = vadd.f32 %v4093, %v4294
      %v4372 = vadd.f32 %v4094, %v4297
      %v4373 = vadd.f32 %v4095, %v4300
      %v4374 = vadd.f32 %v4096, %v4303
      %v4375 = vadd.f32 %v4097, %v4306
      %v4376 = vadd.f32 %v4098, %v4309
      %v4377 = vadd.f32 %v4099, %v4312
      %v4378 = vadd.f32 %v4100, %v4315
      %v4379 = vadd.f32 %v4101, %v4318
      %v4380 = vadd.f32 %v4102, %v4321
      %v4381 = vadd.f32 %v4103, %v4324
      %v4382 = vadd.f32 %v4104, %v4327
      %v4383 = vadd.f32 %v4105, %v4330
      %v4384 = vadd.f32 %v4106, %v4333
      %v4385 = vadd.f32 %v4107, %v4336
      %v4386 = vadd.f32 %v4108, %v4339
      %v4387 = vadd.f32 %v4109, %v4342
      %v4388 = vadd.f32 %v4110, %v4345
      %v4389 = vadd.f32 %v4111, %v4348
      %v4390 = vadd.f32 %v4112, %v4351
      %v4391 = vadd.f32 %v4113, %v4354
      %v4392 = vadd.f32 %v4114, %v4357
      %v4393 = vadd.f32 %v4115, %v4360
      %v4394 = vld [vmem:[%s531 + $0x2] sm:$0xff]
      %v4395 = vld [vmem:[%s531 + $0xa] sm:$0xff]
      %v4396 = vld [vmem:[%s531 + $0x1a] sm:$0xff]
      %v4397 = vld [vmem:[%s531 + $0x22] sm:$0xff]
      %v4398 = vld [vmem:[%s531 + $0x32] sm:$0xff]
      %v4399 = vld [vmem:[%s531 + $0x3a] sm:$0xff]
      %v4400 = vld [vmem:[%s531 + $0x4a] sm:$0xff]
      %v4401 = vld [vmem:[%s531 + $0x52] sm:$0xff]
      %v4402 = vld [vmem:[%s531 + $0x62] sm:$0xff]
      %v4403 = vld [vmem:[%s531 + $0x6a] sm:$0xff]
      %v4404 = vld [vmem:[%s531 + $0x7a] sm:$0xff]
      %v4405 = vld [vmem:[%s531 + $0x82] sm:$0xff]
      %v4406 = vld [vmem:[%s531 + $0x92] sm:$0xff]
      %v4407 = vld [vmem:[%s531 + $0x9a] sm:$0xff]
      %v4408 = vld [vmem:[%s531 + $0xaa] sm:$0xff]
      %v4409 = vld [vmem:[%s531 + $0xb2] sm:$0xff]
      %v4410 = vld [vmem:[%s531 + $0xc2] sm:$0xff]
      %v4411 = vld [vmem:[%s531 + $0xca] sm:$0xff]
      %v4412 = vld [vmem:[%s531 + $0xda] sm:$0xff]
      %v4413 = vld [vmem:[%s531 + $0xe2] sm:$0xff]
      %v4414 = vld [vmem:[%s531 + $0xf2] sm:$0xff]
      %v4415 = vld [vmem:[%s531 + $0xfa] sm:$0xff]
      %v4416 = vld [vmem:[%s531 + $0x10a] sm:$0xff]
      %v4417 = vld [vmem:[%s531 + $0x112] sm:$0xff]
      %v4418 = vld [vmem:[%s531 + $0x122] sm:$0xff]
      %v4419 = vld [vmem:[%s531 + $0x12a] sm:$0xff]
      %v4420 = vld [vmem:[%s531 + $0x13a] sm:$0xff]
      %v4421 = vld [vmem:[%s531 + $0x142] sm:$0xff]
      %v4422 = vld [vmem:[%s531 + $0x152] sm:$0xff]
      %v4423 = vld [vmem:[%s531 + $0x15a] sm:$0xff]
      %v4424 = vld [vmem:[%s531 + $0x16a] sm:$0xff]
      %v4425 = vld [vmem:[%s531 + $0x172] sm:$0xff]
      %s4426 = scalar_lea.vmem %s3, 160
      %v4427 = vld [vmem:[%s4426] sm:$0xff]
      %v4428 = vld [vmem:[%s4426 + $0x8] sm:$0xff]
      %v4429 = vld [vmem:[%s4426 + $0x10] sm:$0xff]
      %v4430 = vld [vmem:[%s4426 + $0x18] sm:$0xff]
      %v4432 = vsel %vm3036, %v4394, 0
      %v4435 = vsel %vm3036, %v4395, 0
      %v4438 = vsel %vm3036, %v4396, 0
      %v4441 = vsel %vm3036, %v4397, 0
      %v4444 = vsel %vm3036, %v4398, 0
      %v4447 = vsel %vm3036, %v4399, 0
      %v4450 = vsel %vm3036, %v4400, 0
      %v4453 = vsel %vm3036, %v4401, 0
      %v4456 = vsel %vm3036, %v4402, 0
      %v4459 = vsel %vm3036, %v4403, 0
      %v4462 = vsel %vm3036, %v4404, 0
      %v4465 = vsel %vm3036, %v4405, 0
      %v4468 = vsel %vm3036, %v4406, 0
      %v4471 = vsel %vm3036, %v4407, 0
      %v4474 = vsel %vm3036, %v4408, 0
      %v4477 = vsel %vm3036, %v4409, 0
      %v4480 = vsel %vm3036, %v4410, 0
      %v4483 = vsel %vm3036, %v4411, 0
      %v4486 = vsel %vm3036, %v4412, 0
      %v4489 = vsel %vm3036, %v4413, 0
      %v4492 = vsel %vm3036, %v4414, 0
      %v4495 = vsel %vm3036, %v4415, 0
      %v4498 = vsel %vm3036, %v4416, 0
      %v4501 = vsel %vm3036, %v4417, 0
      %v4504 = vsel %vm3036, %v4418, 0
      %v4507 = vsel %vm3036, %v4419, 0
      %v4510 = vsel %vm3036, %v4420, 0
      %v4513 = vsel %vm3036, %v4421, 0
      %v4516 = vsel %vm3036, %v4422, 0
      %v4519 = vsel %vm3036, %v4423, 0
      %v4522 = vsel %vm3036, %v4424, 0
      %v4525 = vsel %vm3036, %v4425, 0
      %4527 = vmatpush.msra.mxu0 0.0
      %4528 = vmatpush.msra.mxu0 0.0
      %4529 = vmatpush.msra.mxu0 0.0
      %4530 = vmatpush.msra.mxu0 0.0
      %4531 = vmatpush.msra.mxu0 0.0
      %4532 = vmatpush.msra.mxu0 0.0
      %4533 = vmatpush.msra.mxu0 0.0
      %4534 = vmatpush.msra.mxu0 0.0
      %4535 = vmatpush.msra.mxu0 0.0
      %4536 = vmatpush.msra.mxu0 0.0
      %4537 = vmatpush.msra.mxu0 0.0
      %4538 = vmatpush.msra.mxu0 0.0
      %4539 = vmatpush.msra.mxu0 %v4430
      %4540 = vmatpush.msra.mxu0 %v4429
      %4541 = vmatpush.msra.mxu0 %v4428
      %4542 = vmatpush.msra.mxu0 %v4427
      %4543 = vmatmul.f32.gmra.mxu0 %v4432
      %v4544 = vpop.f32.mrf.mxu0
      %v4545 = vadd.f32 0.0, %v4544
      %4546 = vmatmul.f32.gmra.mxu0 %v4435
      %v4547 = vpop.f32.mrf.mxu0
      %v4548 = vadd.f32 0.0, %v4547
      %4549 = vmatmul.f32.gmra.mxu0 %v4438
      %v4550 = vpop.f32.mrf.mxu0
      %v4551 = vadd.f32 0.0, %v4550
      %4552 = vmatmul.f32.gmra.mxu0 %v4441
      %v4553 = vpop.f32.mrf.mxu0
      %v4554 = vadd.f32 0.0, %v4553
      %4555 = vmatmul.f32.gmra.mxu0 %v4444
      %v4556 = vpop.f32.mrf.mxu0
      %v4557 = vadd.f32 0.0, %v4556
      %4558 = vmatmul.f32.gmra.mxu0 %v4447
      %v4559 = vpop.f32.mrf.mxu0
      %v4560 = vadd.f32 0.0, %v4559
      %4561 = vmatmul.f32.gmra.mxu0 %v4450
      %v4562 = vpop.f32.mrf.mxu0
      %v4563 = vadd.f32 0.0, %v4562
      %4564 = vmatmul.f32.gmra.mxu0 %v4453
      %v4565 = vpop.f32.mrf.mxu0
      %v4566 = vadd.f32 0.0, %v4565
      %4567 = vmatmul.f32.gmra.mxu0 %v4456
      %v4568 = vpop.f32.mrf.mxu0
      %v4569 = vadd.f32 0.0, %v4568
      %4570 = vmatmul.f32.gmra.mxu0 %v4459
      %v4571 = vpop.f32.mrf.mxu0
      %v4572 = vadd.f32 0.0, %v4571
      %4573 = vmatmul.f32.gmra.mxu0 %v4462
      %v4574 = vpop.f32.mrf.mxu0
      %v4575 = vadd.f32 0.0, %v4574
      %4576 = vmatmul.f32.gmra.mxu0 %v4465
      %v4577 = vpop.f32.mrf.mxu0
      %v4578 = vadd.f32 0.0, %v4577
      %4579 = vmatmul.f32.gmra.mxu0 %v4468
      %v4580 = vpop.f32.mrf.mxu0
      %v4581 = vadd.f32 0.0, %v4580
      %4582 = vmatmul.f32.gmra.mxu0 %v4471
      %v4583 = vpop.f32.mrf.mxu0
      %v4584 = vadd.f32 0.0, %v4583
      %4585 = vmatmul.f32.gmra.mxu0 %v4474
      %v4586 = vpop.f32.mrf.mxu0
      %v4587 = vadd.f32 0.0, %v4586
      %4588 = vmatmul.f32.gmra.mxu0 %v4477
      %v4589 = vpop.f32.mrf.mxu0
      %v4590 = vadd.f32 0.0, %v4589
      %4591 = vmatmul.f32.gmra.mxu0 %v4480
      %v4592 = vpop.f32.mrf.mxu0
      %v4593 = vadd.f32 0.0, %v4592
      %4594 = vmatmul.f32.gmra.mxu0 %v4483
      %v4595 = vpop.f32.mrf.mxu0
      %v4596 = vadd.f32 0.0, %v4595
      %4597 = vmatmul.f32.gmra.mxu0 %v4486
      %v4598 = vpop.f32.mrf.mxu0
      %v4599 = vadd.f32 0.0, %v4598
      %4600 = vmatmul.f32.gmra.mxu0 %v4489
      %v4601 = vpop.f32.mrf.mxu0
      %v4602 = vadd.f32 0.0, %v4601
      %4603 = vmatmul.f32.gmra.mxu0 %v4492
      %v4604 = vpop.f32.mrf.mxu0
      %v4605 = vadd.f32 0.0, %v4604
      %4606 = vmatmul.f32.gmra.mxu0 %v4495
      %v4607 = vpop.f32.mrf.mxu0
      %v4608 = vadd.f32 0.0, %v4607
      %4609 = vmatmul.f32.gmra.mxu0 %v4498
      %v4610 = vpop.f32.mrf.mxu0
      %v4611 = vadd.f32 0.0, %v4610
      %4612 = vmatmul.f32.gmra.mxu0 %v4501
      %v4613 = vpop.f32.mrf.mxu0
      %v4614 = vadd.f32 0.0, %v4613
      %4615 = vmatmul.f32.gmra.mxu0 %v4504
      %v4616 = vpop.f32.mrf.mxu0
      %v4617 = vadd.f32 0.0, %v4616
      %4618 = vmatmul.f32.gmra.mxu0 %v4507
      %v4619 = vpop.f32.mrf.mxu0
      %v4620 = vadd.f32 0.0, %v4619
      %4621 = vmatmul.f32.gmra.mxu0 %v4510
      %v4622 = vpop.f32.mrf.mxu0
      %v4623 = vadd.f32 0.0, %v4622
      %4624 = vmatmul.f32.gmra.mxu0 %v4513
      %v4625 = vpop.f32.mrf.mxu0
      %v4626 = vadd.f32 0.0, %v4625
      %4627 = vmatmul.f32.gmra.mxu0 %v4516
      %v4628 = vpop.f32.mrf.mxu0
      %v4629 = vadd.f32 0.0, %v4628
      %4630 = vmatmul.f32.gmra.mxu0 %v4519
      %v4631 = vpop.f32.mrf.mxu0
      %v4632 = vadd.f32 0.0, %v4631
      %4633 = vmatmul.f32.gmra.mxu0 %v4522
      %v4634 = vpop.f32.mrf.mxu0
      %v4635 = vadd.f32 0.0, %v4634
      %4636 = vmatmul.f32.gmra.mxu0 %v4525
      %v4637 = vpop.f32.mrf.mxu0
      %v4638 = vadd.f32 0.0, %v4637
      %4639 = vdwg.mxu0
      %v4640 = vadd.f32 %v4362, %v4545
      %v4641 = vadd.f32 %v4363, %v4548
      %v4642 = vadd.f32 %v4364, %v4551
      %v4643 = vadd.f32 %v4365, %v4554
      %v4644 = vadd.f32 %v4366, %v4557
      %v4645 = vadd.f32 %v4367, %v4560
      %v4646 = vadd.f32 %v4368, %v4563
      %v4647 = vadd.f32 %v4369, %v4566
      %v4648 = vadd.f32 %v4370, %v4569
      %v4649 = vadd.f32 %v4371, %v4572
      %v4650 = vadd.f32 %v4372, %v4575
      %v4651 = vadd.f32 %v4373, %v4578
      %v4652 = vadd.f32 %v4374, %v4581
      %v4653 = vadd.f32 %v4375, %v4584
      %v4654 = vadd.f32 %v4376, %v4587
      %v4655 = vadd.f32 %v4377, %v4590
      %v4656 = vadd.f32 %v4378, %v4593
      %v4657 = vadd.f32 %v4379, %v4596
      %v4658 = vadd.f32 %v4380, %v4599
      %v4659 = vadd.f32 %v4381, %v4602
      %v4660 = vadd.f32 %v4382, %v4605
      %v4661 = vadd.f32 %v4383, %v4608
      %v4662 = vadd.f32 %v4384, %v4611
      %v4663 = vadd.f32 %v4385, %v4614
      %v4664 = vadd.f32 %v4386, %v4617
      %v4665 = vadd.f32 %v4387, %v4620
      %v4666 = vadd.f32 %v4388, %v4623
      %v4667 = vadd.f32 %v4389, %v4626
      %v4668 = vadd.f32 %v4390, %v4629
      %v4669 = vadd.f32 %v4391, %v4632
      %v4670 = vadd.f32 %v4392, %v4635
      %v4671 = vadd.f32 %v4393, %v4638
      %v4672 = vld [vmem:[%s2130] sm:$0xff]
      %v4673 = vld [vmem:[%s2130 + $0x8] sm:$0xff]
      %v4674 = vld [vmem:[%s2130 + $0x18] sm:$0xff]
      %v4675 = vld [vmem:[%s2130 + $0x20] sm:$0xff]
      %v4676 = vld [vmem:[%s2130 + $0x30] sm:$0xff]
      %v4677 = vld [vmem:[%s2130 + $0x38] sm:$0xff]
      %v4678 = vld [vmem:[%s2130 + $0x48] sm:$0xff]
      %v4679 = vld [vmem:[%s2130 + $0x50] sm:$0xff]
      %v4680 = vld [vmem:[%s2130 + $0x60] sm:$0xff]
      %v4681 = vld [vmem:[%s2130 + $0x68] sm:$0xff]
      %v4682 = vld [vmem:[%s2130 + $0x78] sm:$0xff]
      %v4683 = vld [vmem:[%s2130 + $0x80] sm:$0xff]
      %v4684 = vld [vmem:[%s2130 + $0x90] sm:$0xff]
      %v4685 = vld [vmem:[%s2130 + $0x98] sm:$0xff]
      %v4686 = vld [vmem:[%s2130 + $0xa8] sm:$0xff]
      %v4687 = vld [vmem:[%s2130 + $0xb0] sm:$0xff]
      %v4688 = vld [vmem:[%s2130 + $0xc0] sm:$0xff]
      %v4689 = vld [vmem:[%s2130 + $0xc8] sm:$0xff]
      %v4690 = vld [vmem:[%s2130 + $0xd8] sm:$0xff]
      %v4691 = vld [vmem:[%s2130 + $0xe0] sm:$0xff]
      %v4692 = vld [vmem:[%s2130 + $0xf0] sm:$0xff]
      %v4693 = vld [vmem:[%s2130 + $0xf8] sm:$0xff]
      %v4694 = vld [vmem:[%s2130 + $0x108] sm:$0xff]
      %v4695 = vld [vmem:[%s2130 + $0x110] sm:$0xff]
      %v4696 = vld [vmem:[%s2130 + $0x120] sm:$0xff]
      %v4697 = vld [vmem:[%s2130 + $0x128] sm:$0xff]
      %v4698 = vld [vmem:[%s2130 + $0x138] sm:$0xff]
      %v4699 = vld [vmem:[%s2130 + $0x140] sm:$0xff]
      %v4700 = vld [vmem:[%s2130 + $0x150] sm:$0xff]
      %v4701 = vld [vmem:[%s2130 + $0x158] sm:$0xff]
      %v4702 = vld [vmem:[%s2130 + $0x168] sm:$0xff]
      %v4703 = vld [vmem:[%s2130 + $0x170] sm:$0xff]
      %s4704 = scalar_lea.vmem %s3, 192
      %v4705 = vld [vmem:[%s4704] sm:$0xff]
      %v4706 = vld [vmem:[%s4704 + $0x8] sm:$0xff]
      %v4707 = vld [vmem:[%s4704 + $0x10] sm:$0xff]
      %v4708 = vld [vmem:[%s4704 + $0x18] sm:$0xff]
      %v4710 = vsel %vm3036, %v4672, 0
      %v4713 = vsel %vm3036, %v4673, 0
      %v4716 = vsel %vm3036, %v4674, 0
      %v4719 = vsel %vm3036, %v4675, 0
      %v4722 = vsel %vm3036, %v4676, 0
      %v4725 = vsel %vm3036, %v4677, 0
      %v4728 = vsel %vm3036, %v4678, 0
      %v4731 = vsel %vm3036, %v4679, 0
      %v4734 = vsel %vm3036, %v4680, 0
      %v4737 = vsel %vm3036, %v4681, 0
      %v4740 = vsel %vm3036, %v4682, 0
      %v4743 = vsel %vm3036, %v4683, 0
      %v4746 = vsel %vm3036, %v4684, 0
      %v4749 = vsel %vm3036, %v4685, 0
      %v4752 = vsel %vm3036, %v4686, 0
      %v4755 = vsel %vm3036, %v4687, 0
      %v4758 = vsel %vm3036, %v4688, 0
      %v4761 = vsel %vm3036, %v4689, 0
      %v4764 = vsel %vm3036, %v4690, 0
      %v4767 = vsel %vm3036, %v4691, 0
      %v4770 = vsel %vm3036, %v4692, 0
      %v4773 = vsel %vm3036, %v4693, 0
      %v4776 = vsel %vm3036, %v4694, 0
      %v4779 = vsel %vm3036, %v4695, 0
      %v4782 = vsel %vm3036, %v4696, 0
      %v4785 = vsel %vm3036, %v4697, 0
      %v4788 = vsel %vm3036, %v4698, 0
      %v4791 = vsel %vm3036, %v4699, 0
      %v4794 = vsel %vm3036, %v4700, 0
      %v4797 = vsel %vm3036, %v4701, 0
      %v4800 = vsel %vm3036, %v4702, 0
      %v4803 = vsel %vm3036, %v4703, 0
      %4805 = vmatpush.msra.mxu0 0.0
      %4806 = vmatpush.msra.mxu0 0.0
      %4807 = vmatpush.msra.mxu0 0.0
      %4808 = vmatpush.msra.mxu0 0.0
      %4809 = vmatpush.msra.mxu0 0.0
      %4810 = vmatpush.msra.mxu0 0.0
      %4811 = vmatpush.msra.mxu0 0.0
      %4812 = vmatpush.msra.mxu0 0.0
      %4813 = vmatpush.msra.mxu0 0.0
      %4814 = vmatpush.msra.mxu0 0.0
      %4815 = vmatpush.msra.mxu0 0.0
      %4816 = vmatpush.msra.mxu0 0.0
      %4817 = vmatpush.msra.mxu0 %v4708
      %4818 = vmatpush.msra.mxu0 %v4707
      %4819 = vmatpush.msra.mxu0 %v4706
      %4820 = vmatpush.msra.mxu0 %v4705
      %4821 = vmatmul.f32.gmra.mxu0 %v4710
      %v4822 = vpop.f32.mrf.mxu0
      %v4823 = vadd.f32 0.0, %v4822
      %4824 = vmatmul.f32.gmra.mxu0 %v4713
      %v4825 = vpop.f32.mrf.mxu0
      %v4826 = vadd.f32 0.0, %v4825
      %4827 = vmatmul.f32.gmra.mxu0 %v4716
      %v4828 = vpop.f32.mrf.mxu0
      %v4829 = vadd.f32 0.0, %v4828
      %4830 = vmatmul.f32.gmra.mxu0 %v4719
      %v4831 = vpop.f32.mrf.mxu0
      %v4832 = vadd.f32 0.0, %v4831
      %4833 = vmatmul.f32.gmra.mxu0 %v4722
      %v4834 = vpop.f32.mrf.mxu0
      %v4835 = vadd.f32 0.0, %v4834
      %4836 = vmatmul.f32.gmra.mxu0 %v4725
      %v4837 = vpop.f32.mrf.mxu0
      %v4838 = vadd.f32 0.0, %v4837
      %4839 = vmatmul.f32.gmra.mxu0 %v4728
      %v4840 = vpop.f32.mrf.mxu0
      %v4841 = vadd.f32 0.0, %v4840
      %4842 = vmatmul.f32.gmra.mxu0 %v4731
      %v4843 = vpop.f32.mrf.mxu0
      %v4844 = vadd.f32 0.0, %v4843
      %4845 = vmatmul.f32.gmra.mxu0 %v4734
      %v4846 = vpop.f32.mrf.mxu0
      %v4847 = vadd.f32 0.0, %v4846
      %4848 = vmatmul.f32.gmra.mxu0 %v4737
      %v4849 = vpop.f32.mrf.mxu0
      %v4850 = vadd.f32 0.0, %v4849
      %4851 = vmatmul.f32.gmra.mxu0 %v4740
      %v4852 = vpop.f32.mrf.mxu0
      %v4853 = vadd.f32 0.0, %v4852
      %4854 = vmatmul.f32.gmra.mxu0 %v4743
      %v4855 = vpop.f32.mrf.mxu0
      %v4856 = vadd.f32 0.0, %v4855
      %4857 = vmatmul.f32.gmra.mxu0 %v4746
      %v4858 = vpop.f32.mrf.mxu0
      %v4859 = vadd.f32 0.0, %v4858
      %4860 = vmatmul.f32.gmra.mxu0 %v4749
      %v4861 = vpop.f32.mrf.mxu0
      %v4862 = vadd.f32 0.0, %v4861
      %4863 = vmatmul.f32.gmra.mxu0 %v4752
      %v4864 = vpop.f32.mrf.mxu0
      %v4865 = vadd.f32 0.0, %v4864
      %4866 = vmatmul.f32.gmra.mxu0 %v4755
      %v4867 = vpop.f32.mrf.mxu0
      %v4868 = vadd.f32 0.0, %v4867
      %4869 = vmatmul.f32.gmra.mxu0 %v4758
      %v4870 = vpop.f32.mrf.mxu0
      %v4871 = vadd.f32 0.0, %v4870
      %4872 = vmatmul.f32.gmra.mxu0 %v4761
      %v4873 = vpop.f32.mrf.mxu0
      %v4874 = vadd.f32 0.0, %v4873
      %4875 = vmatmul.f32.gmra.mxu0 %v4764
      %v4876 = vpop.f32.mrf.mxu0
      %v4877 = vadd.f32 0.0, %v4876
      %4878 = vmatmul.f32.gmra.mxu0 %v4767
      %v4879 = vpop.f32.mrf.mxu0
      %v4880 = vadd.f32 0.0, %v4879
      %4881 = vmatmul.f32.gmra.mxu0 %v4770
      %v4882 = vpop.f32.mrf.mxu0
      %v4883 = vadd.f32 0.0, %v4882
      %4884 = vmatmul.f32.gmra.mxu0 %v4773
      %v4885 = vpop.f32.mrf.mxu0
      %v4886 = vadd.f32 0.0, %v4885
      %4887 = vmatmul.f32.gmra.mxu0 %v4776
      %v4888 = vpop.f32.mrf.mxu0
      %v4889 = vadd.f32 0.0, %v4888
      %4890 = vmatmul.f32.gmra.mxu0 %v4779
      %v4891 = vpop.f32.mrf.mxu0
      %v4892 = vadd.f32 0.0, %v4891
      %4893 = vmatmul.f32.gmra.mxu0 %v4782
      %v4894 = vpop.f32.mrf.mxu0
      %v4895 = vadd.f32 0.0, %v4894
      %4896 = vmatmul.f32.gmra.mxu0 %v4785
      %v4897 = vpop.f32.mrf.mxu0
      %v4898 = vadd.f32 0.0, %v4897
      %4899 = vmatmul.f32.gmra.mxu0 %v4788
      %v4900 = vpop.f32.mrf.mxu0
      %v4901 = vadd.f32 0.0, %v4900
      %4902 = vmatmul.f32.gmra.mxu0 %v4791
      %v4903 = vpop.f32.mrf.mxu0
      %v4904 = vadd.f32 0.0, %v4903
      %4905 = vmatmul.f32.gmra.mxu0 %v4794
      %v4906 = vpop.f32.mrf.mxu0
      %v4907 = vadd.f32 0.0, %v4906
      %4908 = vmatmul.f32.gmra.mxu0 %v4797
      %v4909 = vpop.f32.mrf.mxu0
      %v4910 = vadd.f32 0.0, %v4909
      %4911 = vmatmul.f32.gmra.mxu0 %v4800
      %v4912 = vpop.f32.mrf.mxu0
      %v4913 = vadd.f32 0.0, %v4912
      %4914 = vmatmul.f32.gmra.mxu0 %v4803
      %v4915 = vpop.f32.mrf.mxu0
      %v4916 = vadd.f32 0.0, %v4915
      %4917 = vdwg.mxu0
      %v4918 = vadd.f32 %v4640, %v4823
      %v4919 = vadd.f32 %v4641, %v4826
      %v4920 = vadd.f32 %v4642, %v4829
      %v4921 = vadd.f32 %v4643, %v4832
      %v4922 = vadd.f32 %v4644, %v4835
      %v4923 = vadd.f32 %v4645, %v4838
      %v4924 = vadd.f32 %v4646, %v4841
      %v4925 = vadd.f32 %v4647, %v4844
      %v4926 = vadd.f32 %v4648, %v4847
      %v4927 = vadd.f32 %v4649, %v4850
      %v4928 = vadd.f32 %v4650, %v4853
      %v4929 = vadd.f32 %v4651, %v4856
      %v4930 = vadd.f32 %v4652, %v4859
      %v4931 = vadd.f32 %v4653, %v4862
      %v4932 = vadd.f32 %v4654, %v4865
      %v4933 = vadd.f32 %v4655, %v4868
      %v4934 = vadd.f32 %v4656, %v4871
      %v4935 = vadd.f32 %v4657, %v4874
      %v4936 = vadd.f32 %v4658, %v4877
      %v4937 = vadd.f32 %v4659, %v4880
      %v4938 = vadd.f32 %v4660, %v4883
      %v4939 = vadd.f32 %v4661, %v4886
      %v4940 = vadd.f32 %v4662, %v4889
      %v4941 = vadd.f32 %v4663, %v4892
      %v4942 = vadd.f32 %v4664, %v4895
      %v4943 = vadd.f32 %v4665, %v4898
      %v4944 = vadd.f32 %v4666, %v4901
      %v4945 = vadd.f32 %v4667, %v4904
      %v4946 = vadd.f32 %v4668, %v4907
      %v4947 = vadd.f32 %v4669, %v4910
      %v4948 = vadd.f32 %v4670, %v4913
      %v4949 = vadd.f32 %v4671, %v4916
      %v4950 = vld [vmem:[%s2130 + $0x1] sm:$0xff]
      %v4951 = vld [vmem:[%s2130 + $0x9] sm:$0xff]
      %v4952 = vld [vmem:[%s2130 + $0x19] sm:$0xff]
      %v4953 = vld [vmem:[%s2130 + $0x21] sm:$0xff]
      %v4954 = vld [vmem:[%s2130 + $0x31] sm:$0xff]
      %v4955 = vld [vmem:[%s2130 + $0x39] sm:$0xff]
      %v4956 = vld [vmem:[%s2130 + $0x49] sm:$0xff]
      %v4957 = vld [vmem:[%s2130 + $0x51] sm:$0xff]
      %v4958 = vld [vmem:[%s2130 + $0x61] sm:$0xff]
      %v4959 = vld [vmem:[%s2130 + $0x69] sm:$0xff]
      %v4960 = vld [vmem:[%s2130 + $0x79] sm:$0xff]
      %v4961 = vld [vmem:[%s2130 + $0x81] sm:$0xff]
      %v4962 = vld [vmem:[%s2130 + $0x91] sm:$0xff]
      %v4963 = vld [vmem:[%s2130 + $0x99] sm:$0xff]
      %v4964 = vld [vmem:[%s2130 + $0xa9] sm:$0xff]
      %v4965 = vld [vmem:[%s2130 + $0xb1] sm:$0xff]
      %v4966 = vld [vmem:[%s2130 + $0xc1] sm:$0xff]
      %v4967 = vld [vmem:[%s2130 + $0xc9] sm:$0xff]
      %v4968 = vld [vmem:[%s2130 + $0xd9] sm:$0xff]
      %v4969 = vld [vmem:[%s2130 + $0xe1] sm:$0xff]
      %v4970 = vld [vmem:[%s2130 + $0xf1] sm:$0xff]
      %v4971 = vld [vmem:[%s2130 + $0xf9] sm:$0xff]
      %v4972 = vld [vmem:[%s2130 + $0x109] sm:$0xff]
      %v4973 = vld [vmem:[%s2130 + $0x111] sm:$0xff]
      %v4974 = vld [vmem:[%s2130 + $0x121] sm:$0xff]
      %v4975 = vld [vmem:[%s2130 + $0x129] sm:$0xff]
      %v4976 = vld [vmem:[%s2130 + $0x139] sm:$0xff]
      %v4977 = vld [vmem:[%s2130 + $0x141] sm:$0xff]
      %v4978 = vld [vmem:[%s2130 + $0x151] sm:$0xff]
      %v4979 = vld [vmem:[%s2130 + $0x159] sm:$0xff]
      %v4980 = vld [vmem:[%s2130 + $0x169] sm:$0xff]
      %v4981 = vld [vmem:[%s2130 + $0x171] sm:$0xff]
      %s4982 = scalar_lea.vmem %s3, 224
      %v4983 = vld [vmem:[%s4982] sm:$0xff]
      %v4984 = vld [vmem:[%s4982 + $0x8] sm:$0xff]
      %v4985 = vld [vmem:[%s4982 + $0x10] sm:$0xff]
      %v4986 = vld [vmem:[%s4982 + $0x18] sm:$0xff]
      %v4988 = vsel %vm3036, %v4950, 0
      %v4991 = vsel %vm3036, %v4951, 0
      %v4994 = vsel %vm3036, %v4952, 0
      %v4997 = vsel %vm3036, %v4953, 0
      %v5000 = vsel %vm3036, %v4954, 0
      %v5003 = vsel %vm3036, %v4955, 0
      %v5006 = vsel %vm3036, %v4956, 0
      %v5009 = vsel %vm3036, %v4957, 0
      %v5012 = vsel %vm3036, %v4958, 0
      %v5015 = vsel %vm3036, %v4959, 0
      %v5018 = vsel %vm3036, %v4960, 0
      %v5021 = vsel %vm3036, %v4961, 0
      %v5024 = vsel %vm3036, %v4962, 0
      %v5027 = vsel %vm3036, %v4963, 0
      %v5030 = vsel %vm3036, %v4964, 0
      %v5033 = vsel %vm3036, %v4965, 0
      %v5036 = vsel %vm3036, %v4966, 0
      %v5039 = vsel %vm3036, %v4967, 0
      %v5042 = vsel %vm3036, %v4968, 0
      %v5045 = vsel %vm3036, %v4969, 0
      %v5048 = vsel %vm3036, %v4970, 0
      %v5051 = vsel %vm3036, %v4971, 0
      %v5054 = vsel %vm3036, %v4972, 0
      %v5057 = vsel %vm3036, %v4973, 0
      %v5060 = vsel %vm3036, %v4974, 0
      %v5063 = vsel %vm3036, %v4975, 0
      %v5066 = vsel %vm3036, %v4976, 0
      %v5069 = vsel %vm3036, %v4977, 0
      %v5072 = vsel %vm3036, %v4978, 0
      %v5075 = vsel %vm3036, %v4979, 0
      %v5078 = vsel %vm3036, %v4980, 0
      %v5081 = vsel %vm3036, %v4981, 0
      %5083 = vmatpush.msra.mxu0 0.0
      %5084 = vmatpush.msra.mxu0 0.0
      %5085 = vmatpush.msra.mxu0 0.0
      %5086 = vmatpush.msra.mxu0 0.0
      %5087 = vmatpush.msra.mxu0 0.0
      %5088 = vmatpush.msra.mxu0 0.0
      %5089 = vmatpush.msra.mxu0 0.0
      %5090 = vmatpush.msra.mxu0 0.0
      %5091 = vmatpush.msra.mxu0 0.0
      %5092 = vmatpush.msra.mxu0 0.0
      %5093 = vmatpush.msra.mxu0 0.0
      %5094 = vmatpush.msra.mxu0 0.0
      %5095 = vmatpush.msra.mxu0 %v4986
      %5096 = vmatpush.msra.mxu0 %v4985
      %5097 = vmatpush.msra.mxu0 %v4984
      %5098 = vmatpush.msra.mxu0 %v4983
      %5099 = vmatmul.f32.gmra.mxu0 %v4988
      %v5100 = vpop.f32.mrf.mxu0
      %v5101 = vadd.f32 0.0, %v5100
      %5102 = vmatmul.f32.gmra.mxu0 %v4991
      %v5103 = vpop.f32.mrf.mxu0
      %v5104 = vadd.f32 0.0, %v5103
      %5105 = vmatmul.f32.gmra.mxu0 %v4994
      %v5106 = vpop.f32.mrf.mxu0
      %v5107 = vadd.f32 0.0, %v5106
      %5108 = vmatmul.f32.gmra.mxu0 %v4997
      %v5109 = vpop.f32.mrf.mxu0
      %v5110 = vadd.f32 0.0, %v5109
      %5111 = vmatmul.f32.gmra.mxu0 %v5000
      %v5112 = vpop.f32.mrf.mxu0
      %v5113 = vadd.f32 0.0, %v5112
      %5114 = vmatmul.f32.gmra.mxu0 %v5003
      %v5115 = vpop.f32.mrf.mxu0
      %v5116 = vadd.f32 0.0, %v5115
      %5117 = vmatmul.f32.gmra.mxu0 %v5006
      %v5118 = vpop.f32.mrf.mxu0
      %v5119 = vadd.f32 0.0, %v5118
      %5120 = vmatmul.f32.gmra.mxu0 %v5009
      %v5121 = vpop.f32.mrf.mxu0
      %v5122 = vadd.f32 0.0, %v5121
      %5123 = vmatmul.f32.gmra.mxu0 %v5012
      %v5124 = vpop.f32.mrf.mxu0
      %v5125 = vadd.f32 0.0, %v5124
      %5126 = vmatmul.f32.gmra.mxu0 %v5015
      %v5127 = vpop.f32.mrf.mxu0
      %v5128 = vadd.f32 0.0, %v5127
      %5129 = vmatmul.f32.gmra.mxu0 %v5018
      %v5130 = vpop.f32.mrf.mxu0
      %v5131 = vadd.f32 0.0, %v5130
      %5132 = vmatmul.f32.gmra.mxu0 %v5021
      %v5133 = vpop.f32.mrf.mxu0
      %v5134 = vadd.f32 0.0, %v5133
      %5135 = vmatmul.f32.gmra.mxu0 %v5024
      %v5136 = vpop.f32.mrf.mxu0
      %v5137 = vadd.f32 0.0, %v5136
      %5138 = vmatmul.f32.gmra.mxu0 %v5027
      %v5139 = vpop.f32.mrf.mxu0
      %v5140 = vadd.f32 0.0, %v5139
      %5141 = vmatmul.f32.gmra.mxu0 %v5030
      %v5142 = vpop.f32.mrf.mxu0
      %v5143 = vadd.f32 0.0, %v5142
      %5144 = vmatmul.f32.gmra.mxu0 %v5033
      %v5145 = vpop.f32.mrf.mxu0
      %v5146 = vadd.f32 0.0, %v5145
      %5147 = vmatmul.f32.gmra.mxu0 %v5036
      %v5148 = vpop.f32.mrf.mxu0
      %v5149 = vadd.f32 0.0, %v5148
      %5150 = vmatmul.f32.gmra.mxu0 %v5039
      %v5151 = vpop.f32.mrf.mxu0
      %v5152 = vadd.f32 0.0, %v5151
      %5153 = vmatmul.f32.gmra.mxu0 %v5042
      %v5154 = vpop.f32.mrf.mxu0
      %v5155 = vadd.f32 0.0, %v5154
      %5156 = vmatmul.f32.gmra.mxu0 %v5045
      %v5157 = vpop.f32.mrf.mxu0
      %v5158 = vadd.f32 0.0, %v5157
      %5159 = vmatmul.f32.gmra.mxu0 %v5048
      %v5160 = vpop.f32.mrf.mxu0
      %v5161 = vadd.f32 0.0, %v5160
      %5162 = vmatmul.f32.gmra.mxu0 %v5051
      %v5163 = vpop.f32.mrf.mxu0
      %v5164 = vadd.f32 0.0, %v5163
      %5165 = vmatmul.f32.gmra.mxu0 %v5054
      %v5166 = vpop.f32.mrf.mxu0
      %v5167 = vadd.f32 0.0, %v5166
      %5168 = vmatmul.f32.gmra.mxu0 %v5057
      %v5169 = vpop.f32.mrf.mxu0
      %v5170 = vadd.f32 0.0, %v5169
      %5171 = vmatmul.f32.gmra.mxu0 %v5060
      %v5172 = vpop.f32.mrf.mxu0
      %v5173 = vadd.f32 0.0, %v5172
      %5174 = vmatmul.f32.gmra.mxu0 %v5063
      %v5175 = vpop.f32.mrf.mxu0
      %v5176 = vadd.f32 0.0, %v5175
      %5177 = vmatmul.f32.gmra.mxu0 %v5066
      %v5178 = vpop.f32.mrf.mxu0
      %v5179 = vadd.f32 0.0, %v5178
      %5180 = vmatmul.f32.gmra.mxu0 %v5069
      %v5181 = vpop.f32.mrf.mxu0
      %v5182 = vadd.f32 0.0, %v5181
      %5183 = vmatmul.f32.gmra.mxu0 %v5072
      %v5184 = vpop.f32.mrf.mxu0
      %v5185 = vadd.f32 0.0, %v5184
      %5186 = vmatmul.f32.gmra.mxu0 %v5075
      %v5187 = vpop.f32.mrf.mxu0
      %v5188 = vadd.f32 0.0, %v5187
      %5189 = vmatmul.f32.gmra.mxu0 %v5078
      %v5190 = vpop.f32.mrf.mxu0
      %v5191 = vadd.f32 0.0, %v5190
      %5192 = vmatmul.f32.gmra.mxu0 %v5081
      %v5193 = vpop.f32.mrf.mxu0
      %v5194 = vadd.f32 0.0, %v5193
      %5195 = vdwg.mxu0
      %v5196 = vadd.f32 %v4918, %v5101
      %v5197 = vadd.f32 %v4919, %v5104
      %v5198 = vadd.f32 %v4920, %v5107
      %v5199 = vadd.f32 %v4921, %v5110
      %v5200 = vadd.f32 %v4922, %v5113
      %v5201 = vadd.f32 %v4923, %v5116
      %v5202 = vadd.f32 %v4924, %v5119
      %v5203 = vadd.f32 %v4925, %v5122
      %v5204 = vadd.f32 %v4926, %v5125
      %v5205 = vadd.f32 %v4927, %v5128
      %v5206 = vadd.f32 %v4928, %v5131
      %v5207 = vadd.f32 %v4929, %v5134
      %v5208 = vadd.f32 %v4930, %v5137
      %v5209 = vadd.f32 %v4931, %v5140
      %v5210 = vadd.f32 %v4932, %v5143
      %v5211 = vadd.f32 %v4933, %v5146
      %v5212 = vadd.f32 %v4934, %v5149
      %v5213 = vadd.f32 %v4935, %v5152
      %v5214 = vadd.f32 %v4936, %v5155
      %v5215 = vadd.f32 %v4937, %v5158
      %v5216 = vadd.f32 %v4938, %v5161
      %v5217 = vadd.f32 %v4939, %v5164
      %v5218 = vadd.f32 %v4940, %v5167
      %v5219 = vadd.f32 %v4941, %v5170
      %v5220 = vadd.f32 %v4942, %v5173
      %v5221 = vadd.f32 %v4943, %v5176
      %v5222 = vadd.f32 %v4944, %v5179
      %v5223 = vadd.f32 %v4945, %v5182
      %v5224 = vadd.f32 %v4946, %v5185
      %v5225 = vadd.f32 %v4947, %v5188
      %v5226 = vadd.f32 %v4948, %v5191
      %v5227 = vadd.f32 %v4949, %v5194
      %v5228 = vld [vmem:[%s2130 + $0x2] sm:$0xff]
      %v5229 = vld [vmem:[%s2130 + $0xa] sm:$0xff]
      %v5230 = vld [vmem:[%s2130 + $0x1a] sm:$0xff]
      %v5231 = vld [vmem:[%s2130 + $0x22] sm:$0xff]
      %v5232 = vld [vmem:[%s2130 + $0x32] sm:$0xff]
      %v5233 = vld [vmem:[%s2130 + $0x3a] sm:$0xff]
      %v5234 = vld [vmem:[%s2130 + $0x4a] sm:$0xff]
      %v5235 = vld [vmem:[%s2130 + $0x52] sm:$0xff]
      %v5236 = vld [vmem:[%s2130 + $0x62] sm:$0xff]
      %v5237 = vld [vmem:[%s2130 + $0x6a] sm:$0xff]
      %v5238 = vld [vmem:[%s2130 + $0x7a] sm:$0xff]
      %v5239 = vld [vmem:[%s2130 + $0x82] sm:$0xff]
      %v5240 = vld [vmem:[%s2130 + $0x92] sm:$0xff]
      %v5241 = vld [vmem:[%s2130 + $0x9a] sm:$0xff]
      %v5242 = vld [vmem:[%s2130 + $0xaa] sm:$0xff]
      %v5243 = vld [vmem:[%s2130 + $0xb2] sm:$0xff]
      %v5244 = vld [vmem:[%s2130 + $0xc2] sm:$0xff]
      %v5245 = vld [vmem:[%s2130 + $0xca] sm:$0xff]
      %v5246 = vld [vmem:[%s2130 + $0xda] sm:$0xff]
      %v5247 = vld [vmem:[%s2130 + $0xe2] sm:$0xff]
      %v5248 = vld [vmem:[%s2130 + $0xf2] sm:$0xff]
      %v5249 = vld [vmem:[%s2130 + $0xfa] sm:$0xff]
      %v5250 = vld [vmem:[%s2130 + $0x10a] sm:$0xff]
      %v5251 = vld [vmem:[%s2130 + $0x112] sm:$0xff]
      %v5252 = vld [vmem:[%s2130 + $0x122] sm:$0xff]
      %v5253 = vld [vmem:[%s2130 + $0x12a] sm:$0xff]
      %v5254 = vld [vmem:[%s2130 + $0x13a] sm:$0xff]
      %v5255 = vld [vmem:[%s2130 + $0x142] sm:$0xff]
      %v5256 = vld [vmem:[%s2130 + $0x152] sm:$0xff]
      %v5257 = vld [vmem:[%s2130 + $0x15a] sm:$0xff]
      %v5258 = vld [vmem:[%s2130 + $0x16a] sm:$0xff]
      %v5259 = vld [vmem:[%s2130 + $0x172] sm:$0xff]
      %s5260 = scalar_lea.vmem %s3, 256
      %v5261 = vld [vmem:[%s5260] sm:$0xff]
      %v5262 = vld [vmem:[%s5260 + $0x8] sm:$0xff]
      %v5263 = vld [vmem:[%s5260 + $0x10] sm:$0xff]
      %v5264 = vld [vmem:[%s5260 + $0x18] sm:$0xff]
      %v5266 = vsel %vm3036, %v5228, 0
      %v5269 = vsel %vm3036, %v5229, 0
      %v5272 = vsel %vm3036, %v5230, 0
      %v5275 = vsel %vm3036, %v5231, 0
      %v5278 = vsel %vm3036, %v5232, 0
      %v5281 = vsel %vm3036, %v5233, 0
      %v5284 = vsel %vm3036, %v5234, 0
      %v5287 = vsel %vm3036, %v5235, 0
      %v5290 = vsel %vm3036, %v5236, 0
      %v5293 = vsel %vm3036, %v5237, 0
      %v5296 = vsel %vm3036, %v5238, 0
      %v5299 = vsel %vm3036, %v5239, 0
      %v5302 = vsel %vm3036, %v5240, 0
      %v5305 = vsel %vm3036, %v5241, 0
      %v5308 = vsel %vm3036, %v5242, 0
      %v5311 = vsel %vm3036, %v5243, 0
      %v5314 = vsel %vm3036, %v5244, 0
      %v5317 = vsel %vm3036, %v5245, 0
      %v5320 = vsel %vm3036, %v5246, 0
      %v5323 = vsel %vm3036, %v5247, 0
      %v5326 = vsel %vm3036, %v5248, 0
      %v5329 = vsel %vm3036, %v5249, 0
      %v5332 = vsel %vm3036, %v5250, 0
      %v5335 = vsel %vm3036, %v5251, 0
      %v5338 = vsel %vm3036, %v5252, 0
      %v5341 = vsel %vm3036, %v5253, 0
      %v5344 = vsel %vm3036, %v5254, 0
      %v5347 = vsel %vm3036, %v5255, 0
      %v5350 = vsel %vm3036, %v5256, 0
      %v5353 = vsel %vm3036, %v5257, 0
      %v5356 = vsel %vm3036, %v5258, 0
      %v5359 = vsel %vm3036, %v5259, 0
      %5361 = vmatpush.msra.mxu0 0.0
      %5362 = vmatpush.msra.mxu0 0.0
      %5363 = vmatpush.msra.mxu0 0.0
      %5364 = vmatpush.msra.mxu0 0.0
      %5365 = vmatpush.msra.mxu0 0.0
      %5366 = vmatpush.msra.mxu0 0.0
      %5367 = vmatpush.msra.mxu0 0.0
      %5368 = vmatpush.msra.mxu0 0.0
      %5369 = vmatpush.msra.mxu0 0.0
      %5370 = vmatpush.msra.mxu0 0.0
      %5371 = vmatpush.msra.mxu0 0.0
      %5372 = vmatpush.msra.mxu0 0.0
      %5373 = vmatpush.msra.mxu0 %v5264
      %5374 = vmatpush.msra.mxu0 %v5263
      %5375 = vmatpush.msra.mxu0 %v5262
      %5376 = vmatpush.msra.mxu0 %v5261
      %5377 = vmatmul.f32.gmra.mxu0 %v5266
      %v5378 = vpop.f32.mrf.mxu0
      %v5379 = vadd.f32 0.0, %v5378
      %5380 = vmatmul.f32.gmra.mxu0 %v5269
      %v5381 = vpop.f32.mrf.mxu0
      %v5382 = vadd.f32 0.0, %v5381
      %5383 = vmatmul.f32.gmra.mxu0 %v5272
      %v5384 = vpop.f32.mrf.mxu0
      %v5385 = vadd.f32 0.0, %v5384
      %5386 = vmatmul.f32.gmra.mxu0 %v5275
      %v5387 = vpop.f32.mrf.mxu0
      %v5388 = vadd.f32 0.0, %v5387
      %5389 = vmatmul.f32.gmra.mxu0 %v5278
      %v5390 = vpop.f32.mrf.mxu0
      %v5391 = vadd.f32 0.0, %v5390
      %5392 = vmatmul.f32.gmra.mxu0 %v5281
      %v5393 = vpop.f32.mrf.mxu0
      %v5394 = vadd.f32 0.0, %v5393
      %5395 = vmatmul.f32.gmra.mxu0 %v5284
      %v5396 = vpop.f32.mrf.mxu0
      %v5397 = vadd.f32 0.0, %v5396
      %5398 = vmatmul.f32.gmra.mxu0 %v5287
      %v5399 = vpop.f32.mrf.mxu0
      %v5400 = vadd.f32 0.0, %v5399
      %5401 = vmatmul.f32.gmra.mxu0 %v5290
      %v5402 = vpop.f32.mrf.mxu0
      %v5403 = vadd.f32 0.0, %v5402
      %5404 = vmatmul.f32.gmra.mxu0 %v5293
      %v5405 = vpop.f32.mrf.mxu0
      %v5406 = vadd.f32 0.0, %v5405
      %5407 = vmatmul.f32.gmra.mxu0 %v5296
      %v5408 = vpop.f32.mrf.mxu0
      %v5409 = vadd.f32 0.0, %v5408
      %5410 = vmatmul.f32.gmra.mxu0 %v5299
      %v5411 = vpop.f32.mrf.mxu0
      %v5412 = vadd.f32 0.0, %v5411
      %5413 = vmatmul.f32.gmra.mxu0 %v5302
      %v5414 = vpop.f32.mrf.mxu0
      %v5415 = vadd.f32 0.0, %v5414
      %5416 = vmatmul.f32.gmra.mxu0 %v5305
      %v5417 = vpop.f32.mrf.mxu0
      %v5418 = vadd.f32 0.0, %v5417
      %5419 = vmatmul.f32.gmra.mxu0 %v5308
      %v5420 = vpop.f32.mrf.mxu0
      %v5421 = vadd.f32 0.0, %v5420
      %5422 = vmatmul.f32.gmra.mxu0 %v5311
      %v5423 = vpop.f32.mrf.mxu0
      %v5424 = vadd.f32 0.0, %v5423
      %5425 = vmatmul.f32.gmra.mxu0 %v5314
      %v5426 = vpop.f32.mrf.mxu0
      %v5427 = vadd.f32 0.0, %v5426
      %5428 = vmatmul.f32.gmra.mxu0 %v5317
      %v5429 = vpop.f32.mrf.mxu0
      %v5430 = vadd.f32 0.0, %v5429
      %5431 = vmatmul.f32.gmra.mxu0 %v5320
      %v5432 = vpop.f32.mrf.mxu0
      %v5433 = vadd.f32 0.0, %v5432
      %5434 = vmatmul.f32.gmra.mxu0 %v5323
      %v5435 = vpop.f32.mrf.mxu0
      %v5436 = vadd.f32 0.0, %v5435
      %5437 = vmatmul.f32.gmra.mxu0 %v5326
      %v5438 = vpop.f32.mrf.mxu0
      %v5439 = vadd.f32 0.0, %v5438
      %5440 = vmatmul.f32.gmra.mxu0 %v5329
      %v5441 = vpop.f32.mrf.mxu0
      %v5442 = vadd.f32 0.0, %v5441
      %5443 = vmatmul.f32.gmra.mxu0 %v5332
      %v5444 = vpop.f32.mrf.mxu0
      %v5445 = vadd.f32 0.0, %v5444
      %5446 = vmatmul.f32.gmra.mxu0 %v5335
      %v5447 = vpop.f32.mrf.mxu0
      %v5448 = vadd.f32 0.0, %v5447
      %5449 = vmatmul.f32.gmra.mxu0 %v5338
      %v5450 = vpop.f32.mrf.mxu0
      %v5451 = vadd.f32 0.0, %v5450
      %5452 = vmatmul.f32.gmra.mxu0 %v5341
      %v5453 = vpop.f32.mrf.mxu0
      %v5454 = vadd.f32 0.0, %v5453
      %5455 = vmatmul.f32.gmra.mxu0 %v5344
      %v5456 = vpop.f32.mrf.mxu0
      %v5457 = vadd.f32 0.0, %v5456
      %5458 = vmatmul.f32.gmra.mxu0 %v5347
      %v5459 = vpop.f32.mrf.mxu0
      %v5460 = vadd.f32 0.0, %v5459
      %5461 = vmatmul.f32.gmra.mxu0 %v5350
      %v5462 = vpop.f32.mrf.mxu0
      %v5463 = vadd.f32 0.0, %v5462
      %5464 = vmatmul.f32.gmra.mxu0 %v5353
      %v5465 = vpop.f32.mrf.mxu0
      %v5466 = vadd.f32 0.0, %v5465
      %5467 = vmatmul.f32.gmra.mxu0 %v5356
      %v5468 = vpop.f32.mrf.mxu0
      %v5469 = vadd.f32 0.0, %v5468
      %5470 = vmatmul.f32.gmra.mxu0 %v5359
      %v5471 = vpop.f32.mrf.mxu0
      %v5472 = vadd.f32 0.0, %v5471
      %5473 = vdwg.mxu0
      %v5474 = vadd.f32 %v5196, %v5379
      %v5475 = vadd.f32 %v5197, %v5382
      %v5476 = vadd.f32 %v5198, %v5385
      %v5477 = vadd.f32 %v5199, %v5388
      %v5478 = vadd.f32 %v5200, %v5391
      %v5479 = vadd.f32 %v5201, %v5394
      %v5480 = vadd.f32 %v5202, %v5397
      %v5481 = vadd.f32 %v5203, %v5400
      %v5482 = vadd.f32 %v5204, %v5403
      %v5483 = vadd.f32 %v5205, %v5406
      %v5484 = vadd.f32 %v5206, %v5409
      %v5485 = vadd.f32 %v5207, %v5412
      %v5486 = vadd.f32 %v5208, %v5415
      %v5487 = vadd.f32 %v5209, %v5418
      %v5488 = vadd.f32 %v5210, %v5421
      %v5489 = vadd.f32 %v5211, %v5424
      %v5490 = vadd.f32 %v5212, %v5427
      %v5491 = vadd.f32 %v5213, %v5430
      %v5492 = vadd.f32 %v5214, %v5433
      %v5493 = vadd.f32 %v5215, %v5436
      %v5494 = vadd.f32 %v5216, %v5439
      %v5495 = vadd.f32 %v5217, %v5442
      %v5496 = vadd.f32 %v5218, %v5445
      %v5497 = vadd.f32 %v5219, %v5448
      %v5498 = vadd.f32 %v5220, %v5451
      %v5499 = vadd.f32 %v5221, %v5454
      %v5500 = vadd.f32 %v5222, %v5457
      %v5501 = vadd.f32 %v5223, %v5460
      %v5502 = vadd.f32 %v5224, %v5463
      %v5503 = vadd.f32 %v5225, %v5466
      %v5504 = vadd.f32 %v5226, %v5469
      %v5505 = vadd.f32 %v5227, %v5472
      %v5506 = vld [vmem:[%s4] sm:$0x1]
      %v5508 = vperm.slane %v5506, 0
      %v5510 = vadd.f32 %v5474, %v5508
      %v5511 = vadd.f32 %v5475, %v5508
      %v5512 = vadd.f32 %v5476, %v5508
      %v5513 = vadd.f32 %v5477, %v5508
      %v5514 = vadd.f32 %v5478, %v5508
      %v5515 = vadd.f32 %v5479, %v5508
      %v5516 = vadd.f32 %v5480, %v5508
      %v5517 = vadd.f32 %v5481, %v5508
      %v5518 = vadd.f32 %v5482, %v5508
      %v5519 = vadd.f32 %v5483, %v5508
      %v5520 = vadd.f32 %v5484, %v5508
      %v5521 = vadd.f32 %v5485, %v5508
      %v5522 = vadd.f32 %v5486, %v5508
      %v5523 = vadd.f32 %v5487, %v5508
      %v5524 = vadd.f32 %v5488, %v5508
      %v5525 = vadd.f32 %v5489, %v5508
      %v5526 = vadd.f32 %v5490, %v5508
      %v5527 = vadd.f32 %v5491, %v5508
      %v5528 = vadd.f32 %v5492, %v5508
      %v5529 = vadd.f32 %v5493, %v5508
      %v5530 = vadd.f32 %v5494, %v5508
      %v5531 = vadd.f32 %v5495, %v5508
      %v5532 = vadd.f32 %v5496, %v5508
      %v5533 = vadd.f32 %v5497, %v5508
      %v5534 = vadd.f32 %v5498, %v5508
      %v5535 = vadd.f32 %v5499, %v5508
      %v5536 = vadd.f32 %v5500, %v5508
      %v5537 = vadd.f32 %v5501, %v5508
      %v5538 = vadd.f32 %v5502, %v5508
      %v5539 = vadd.f32 %v5503, %v5508
      %v5540 = vadd.f32 %v5504, %v5508
      %v5541 = vadd.f32 %v5505, %v5508
      %v5542 = vmax.f32 %v5510, 0.0
      %v5543 = vmax.f32 %v5511, 0.0
      %v5544 = vmax.f32 %v5512, 0.0
      %v5545 = vmax.f32 %v5513, 0.0
      %v5546 = vmax.f32 %v5514, 0.0
      %v5547 = vmax.f32 %v5515, 0.0
      %v5548 = vmax.f32 %v5516, 0.0
      %v5549 = vmax.f32 %v5517, 0.0
      %v5550 = vmax.f32 %v5518, 0.0
      %v5551 = vmax.f32 %v5519, 0.0
      %v5552 = vmax.f32 %v5520, 0.0
      %v5553 = vmax.f32 %v5521, 0.0
      %v5554 = vmax.f32 %v5522, 0.0
      %v5555 = vmax.f32 %v5523, 0.0
      %v5556 = vmax.f32 %v5524, 0.0
      %v5557 = vmax.f32 %v5525, 0.0
      %v5558 = vmax.f32 %v5526, 0.0
      %v5559 = vmax.f32 %v5527, 0.0
      %v5560 = vmax.f32 %v5528, 0.0
      %v5561 = vmax.f32 %v5529, 0.0
      %v5562 = vmax.f32 %v5530, 0.0
      %v5563 = vmax.f32 %v5531, 0.0
      %v5564 = vmax.f32 %v5532, 0.0
      %v5565 = vmax.f32 %v5533, 0.0
      %v5566 = vmax.f32 %v5534, 0.0
      %v5567 = vmax.f32 %v5535, 0.0
      %v5568 = vmax.f32 %v5536, 0.0
      %v5569 = vmax.f32 %v5537, 0.0
      %v5570 = vmax.f32 %v5538, 0.0
      %v5571 = vmax.f32 %v5539, 0.0
      %v5572 = vmax.f32 %v5540, 0.0
      %v5573 = vmax.f32 %v5541, 0.0
      %v5574 = vld [vmem:[%s11] sm:$0xff]
      %v5575 = vld [vmem:[%s11 + $0x8] sm:$0xff]
      %v5576 = vld [vmem:[%s11 + $0x10] sm:$0xff]
      %v5577 = vld [vmem:[%s11 + $0x18] sm:$0xff]
      %v5578 = vld [vmem:[%s11 + $0x20] sm:$0xff]
      %v5579 = vld [vmem:[%s11 + $0x28] sm:$0xff]
      %v5580 = vld [vmem:[%s11 + $0x30] sm:$0xff]
      %v5581 = vld [vmem:[%s11 + $0x38] sm:$0xff]
      %v5582 = vld [vmem:[%s11 + $0x40] sm:$0xff]
      %v5583 = vld [vmem:[%s11 + $0x48] sm:$0xff]
      %v5584 = vld [vmem:[%s11 + $0x50] sm:$0xff]
      %v5585 = vld [vmem:[%s11 + $0x58] sm:$0xff]
      %v5586 = vld [vmem:[%s11 + $0x60] sm:$0xff]
      %v5587 = vld [vmem:[%s11 + $0x68] sm:$0xff]
      %v5588 = vld [vmem:[%s11 + $0x70] sm:$0xff]
      %v5589 = vld [vmem:[%s11 + $0x78] sm:$0xff]
      %v5590 = vld [vmem:[%s11 + $0x80] sm:$0xff]
      %v5591 = vld [vmem:[%s11 + $0x88] sm:$0xff]
      %v5592 = vld [vmem:[%s11 + $0x90] sm:$0xff]
      %v5593 = vld [vmem:[%s11 + $0x98] sm:$0xff]
      %v5594 = vld [vmem:[%s11 + $0xa0] sm:$0xff]
      %v5595 = vld [vmem:[%s11 + $0xa8] sm:$0xff]
      %v5596 = vld [vmem:[%s11 + $0xb0] sm:$0xff]
      %v5597 = vld [vmem:[%s11 + $0xb8] sm:$0xff]
      %v5598 = vld [vmem:[%s11 + $0xc0] sm:$0xff]
      %v5599 = vld [vmem:[%s11 + $0xc8] sm:$0xff]
      %v5600 = vld [vmem:[%s11 + $0xd0] sm:$0xff]
      %v5601 = vld [vmem:[%s11 + $0xd8] sm:$0xff]
      %v5602 = vld [vmem:[%s11 + $0xe0] sm:$0xff]
      %v5603 = vld [vmem:[%s11 + $0xe8] sm:$0xff]
      %v5604 = vld [vmem:[%s11 + $0xf0] sm:$0xff]
      %v5605 = vld [vmem:[%s11 + $0xf8] sm:$0xff]
      %v5606 = vld [vmem:[%s11 + $0x100] sm:$0xff]
      %v5607 = vld [vmem:[%s11 + $0x108] sm:$0xff]
      %v5608 = vld [vmem:[%s11 + $0x110] sm:$0xff]
      %v5609 = vld [vmem:[%s11 + $0x118] sm:$0xff]
      %v5610 = vld [vmem:[%s11 + $0x120] sm:$0xff]
      %v5611 = vld [vmem:[%s11 + $0x128] sm:$0xff]
      %v5612 = vld [vmem:[%s11 + $0x130] sm:$0xff]
      %v5613 = vld [vmem:[%s11 + $0x138] sm:$0xff]
      %v5614 = vld [vmem:[%s11 + $0x140] sm:$0xff]
      %v5615 = vld [vmem:[%s11 + $0x148] sm:$0xff]
      %v5616 = vld [vmem:[%s11 + $0x150] sm:$0xff]
      %v5617 = vld [vmem:[%s11 + $0x158] sm:$0xff]
      %v5618 = vld [vmem:[%s11 + $0x160] sm:$0xff]
      %v5619 = vld [vmem:[%s11 + $0x168] sm:$0xff]
      %v5620 = vld [vmem:[%s11 + $0x170] sm:$0xff]
      %v5621 = vld [vmem:[%s11 + $0x178] sm:$0xff]
      %v5622 = vld [vmem:[%s11 + $0x180] sm:$0xff]
      %v5623 = vld [vmem:[%s11 + $0x188] sm:$0xff]
      %v5624 = vld [vmem:[%s11 + $0x190] sm:$0xff]
      %v5625 = vld [vmem:[%s11 + $0x198] sm:$0xff]
      %v5626 = vld [vmem:[%s11 + $0x1a0] sm:$0xff]
      %v5627 = vld [vmem:[%s11 + $0x1a8] sm:$0xff]
      %v5628 = vld [vmem:[%s11 + $0x1b0] sm:$0xff]
      %v5629 = vld [vmem:[%s11 + $0x1b8] sm:$0xff]
      %v5630 = vld [vmem:[%s11 + $0x1c0] sm:$0xff]
      %v5631 = vld [vmem:[%s11 + $0x1c8] sm:$0xff]
      %v5632 = vld [vmem:[%s11 + $0x1d0] sm:$0xff]
      %v5633 = vld [vmem:[%s11 + $0x1d8] sm:$0xff]
      %v5634 = vld [vmem:[%s11 + $0x1e0] sm:$0xff]
      %v5635 = vld [vmem:[%s11 + $0x1e8] sm:$0xff]
      %v5636 = vld [vmem:[%s11 + $0x1f0] sm:$0xff]
      %v5637 = vld [vmem:[%s11 + $0x1f8] sm:$0xff]
      %5638 = vmatpush.msra.mxu0 %v5557
      %5639 = vmatpush.msra.mxu0 %v5556
      %5640 = vmatpush.msra.mxu0 %v5555
      %5641 = vmatpush.msra.mxu0 %v5554
      %5642 = vmatpush.msra.mxu0 %v5553
      %5643 = vmatpush.msra.mxu0 %v5552
      %5644 = vmatpush.msra.mxu0 %v5551
      %5645 = vmatpush.msra.mxu0 %v5550
      %5646 = vmatpush.msra.mxu0 %v5549
      %5647 = vmatpush.msra.mxu0 %v5548
      %5648 = vmatpush.msra.mxu0 %v5547
      %5649 = vmatpush.msra.mxu0 %v5546
      %5650 = vmatpush.msra.mxu0 %v5545
      %5651 = vmatpush.msra.mxu0 %v5544
      %5652 = vmatpush.msra.mxu0 %v5543
      %5653 = vmatpush.msra.mxu0 %v5542
      %5654 = vmatmul.f32.gmra.mxu0 %v5574
      %v5655 = vpop.f32.mrf.mxu0
      %v5656 = vadd.f32 0.0, %v5655
      %5657 = vmatmul.f32.gmra.mxu0 %v5576
      %v5658 = vpop.f32.mrf.mxu0
      %v5659 = vadd.f32 0.0, %v5658
      %5660 = vmatmul.f32.gmra.mxu0 %v5578
      %v5661 = vpop.f32.mrf.mxu0
      %v5662 = vadd.f32 0.0, %v5661
      %5663 = vmatmul.f32.gmra.mxu0 %v5580
      %v5664 = vpop.f32.mrf.mxu0
      %v5665 = vadd.f32 0.0, %v5664
      %5666 = vmatmul.f32.gmra.mxu0 %v5582
      %v5667 = vpop.f32.mrf.mxu0
      %v5668 = vadd.f32 0.0, %v5667
      %5669 = vmatmul.f32.gmra.mxu0 %v5584
      %v5670 = vpop.f32.mrf.mxu0
      %v5671 = vadd.f32 0.0, %v5670
      %5672 = vmatmul.f32.gmra.mxu0 %v5586
      %v5673 = vpop.f32.mrf.mxu0
      %v5674 = vadd.f32 0.0, %v5673
      %5675 = vmatmul.f32.gmra.mxu0 %v5588
      %v5676 = vpop.f32.mrf.mxu0
      %v5677 = vadd.f32 0.0, %v5676
      %5678 = vmatmul.f32.gmra.mxu0 %v5590
      %v5679 = vpop.f32.mrf.mxu0
      %v5680 = vadd.f32 0.0, %v5679
      %5681 = vmatmul.f32.gmra.mxu0 %v5592
      %v5682 = vpop.f32.mrf.mxu0
      %v5683 = vadd.f32 0.0, %v5682
      %5684 = vmatmul.f32.gmra.mxu0 %v5594
      %v5685 = vpop.f32.mrf.mxu0
      %v5686 = vadd.f32 0.0, %v5685
      %5687 = vmatmul.f32.gmra.mxu0 %v5596
      %v5688 = vpop.f32.mrf.mxu0
      %v5689 = vadd.f32 0.0, %v5688
      %5690 = vmatmul.f32.gmra.mxu0 %v5598
      %v5691 = vpop.f32.mrf.mxu0
      %v5692 = vadd.f32 0.0, %v5691
      %5693 = vmatmul.f32.gmra.mxu0 %v5600
      %v5694 = vpop.f32.mrf.mxu0
      %v5695 = vadd.f32 0.0, %v5694
      %5696 = vmatmul.f32.gmra.mxu0 %v5602
      %v5697 = vpop.f32.mrf.mxu0
      %v5698 = vadd.f32 0.0, %v5697
      %5699 = vmatmul.f32.gmra.mxu0 %v5604
      %v5700 = vpop.f32.mrf.mxu0
      %v5701 = vadd.f32 0.0, %v5700
      %5702 = vmatmul.f32.gmra.mxu0 %v5606
      %v5703 = vpop.f32.mrf.mxu0
      %v5704 = vadd.f32 0.0, %v5703
      %5705 = vmatmul.f32.gmra.mxu0 %v5608
      %v5706 = vpop.f32.mrf.mxu0
      %v5707 = vadd.f32 0.0, %v5706
      %5708 = vmatmul.f32.gmra.mxu0 %v5610
      %v5709 = vpop.f32.mrf.mxu0
      %v5710 = vadd.f32 0.0, %v5709
      %5711 = vmatmul.f32.gmra.mxu0 %v5612
      %v5712 = vpop.f32.mrf.mxu0
      %v5713 = vadd.f32 0.0, %v5712
      %5714 = vmatmul.f32.gmra.mxu0 %v5614
      %v5715 = vpop.f32.mrf.mxu0
      %v5716 = vadd.f32 0.0, %v5715
      %5717 = vmatmul.f32.gmra.mxu0 %v5616
      %v5718 = vpop.f32.mrf.mxu0
      %v5719 = vadd.f32 0.0, %v5718
      %5720 = vmatmul.f32.gmra.mxu0 %v5618
      %v5721 = vpop.f32.mrf.mxu0
      %v5722 = vadd.f32 0.0, %v5721
      %5723 = vmatmul.f32.gmra.mxu0 %v5620
      %v5724 = vpop.f32.mrf.mxu0
      %v5725 = vadd.f32 0.0, %v5724
      %5726 = vmatmul.f32.gmra.mxu0 %v5622
      %v5727 = vpop.f32.mrf.mxu0
      %v5728 = vadd.f32 0.0, %v5727
      %5729 = vmatmul.f32.gmra.mxu0 %v5624
      %v5730 = vpop.f32.mrf.mxu0
      %v5731 = vadd.f32 0.0, %v5730
      %5732 = vmatmul.f32.gmra.mxu0 %v5626
      %v5733 = vpop.f32.mrf.mxu0
      %v5734 = vadd.f32 0.0, %v5733
      %5735 = vmatmul.f32.gmra.mxu0 %v5628
      %v5736 = vpop.f32.mrf.mxu0
      %v5737 = vadd.f32 0.0, %v5736
      %5738 = vmatmul.f32.gmra.mxu0 %v5630
      %v5739 = vpop.f32.mrf.mxu0
      %v5740 = vadd.f32 0.0, %v5739
      %5741 = vmatmul.f32.gmra.mxu0 %v5632
      %v5742 = vpop.f32.mrf.mxu0
      %v5743 = vadd.f32 0.0, %v5742
      %5744 = vmatmul.f32.gmra.mxu0 %v5634
      %v5745 = vpop.f32.mrf.mxu0
      %v5746 = vadd.f32 0.0, %v5745
      %5747 = vmatmul.f32.gmra.mxu0 %v5636
      %v5748 = vpop.f32.mrf.mxu0
      %v5749 = vadd.f32 0.0, %v5748
      %5750 = vdwg.mxu0
      %5751 = vmatpush.msra.mxu0 %v5573
      %5752 = vmatpush.msra.mxu0 %v5572
      %5753 = vmatpush.msra.mxu0 %v5571
      %5754 = vmatpush.msra.mxu0 %v5570
      %5755 = vmatpush.msra.mxu0 %v5569
      %5756 = vmatpush.msra.mxu0 %v5568
      %5757 = vmatpush.msra.mxu0 %v5567
      %5758 = vmatpush.msra.mxu0 %v5566
      %5759 = vmatpush.msra.mxu0 %v5565
      %5760 = vmatpush.msra.mxu0 %v5564
      %5761 = vmatpush.msra.mxu0 %v5563
      %5762 = vmatpush.msra.mxu0 %v5562
      %5763 = vmatpush.msra.mxu0 %v5561
      %5764 = vmatpush.msra.mxu0 %v5560
      %5765 = vmatpush.msra.mxu0 %v5559
      %5766 = vmatpush.msra.mxu0 %v5558
      %5767 = vmatmul.f32.gmra.mxu0 %v5575
      %v5768 = vpop.f32.mrf.mxu0
      %v5769 = vadd.f32 %v5656, %v5768
      %5770 = vmatmul.f32.gmra.mxu0 %v5577
      %v5771 = vpop.f32.mrf.mxu0
      %v5772 = vadd.f32 %v5659, %v5771
      %5773 = vmatmul.f32.gmra.mxu0 %v5579
      %v5774 = vpop.f32.mrf.mxu0
      %v5775 = vadd.f32 %v5662, %v5774
      %5776 = vmatmul.f32.gmra.mxu0 %v5581
      %v5777 = vpop.f32.mrf.mxu0
      %v5778 = vadd.f32 %v5665, %v5777
      %5779 = vmatmul.f32.gmra.mxu0 %v5583
      %v5780 = vpop.f32.mrf.mxu0
      %v5781 = vadd.f32 %v5668, %v5780
      %5782 = vmatmul.f32.gmra.mxu0 %v5585
      %v5783 = vpop.f32.mrf.mxu0
      %v5784 = vadd.f32 %v5671, %v5783
      %5785 = vmatmul.f32.gmra.mxu0 %v5587
      %v5786 = vpop.f32.mrf.mxu0
      %v5787 = vadd.f32 %v5674, %v5786
      %5788 = vmatmul.f32.gmra.mxu0 %v5589
      %v5789 = vpop.f32.mrf.mxu0
      %v5790 = vadd.f32 %v5677, %v5789
      %5791 = vmatmul.f32.gmra.mxu0 %v5591
      %v5792 = vpop.f32.mrf.mxu0
      %v5793 = vadd.f32 %v5680, %v5792
      %5794 = vmatmul.f32.gmra.mxu0 %v5593
      %v5795 = vpop.f32.mrf.mxu0
      %v5796 = vadd.f32 %v5683, %v5795
      %5797 = vmatmul.f32.gmra.mxu0 %v5595
      %v5798 = vpop.f32.mrf.mxu0
      %v5799 = vadd.f32 %v5686, %v5798
      %5800 = vmatmul.f32.gmra.mxu0 %v5597
      %v5801 = vpop.f32.mrf.mxu0
      %v5802 = vadd.f32 %v5689, %v5801
      %5803 = vmatmul.f32.gmra.mxu0 %v5599
      %v5804 = vpop.f32.mrf.mxu0
      %v5805 = vadd.f32 %v5692, %v5804
      %5806 = vmatmul.f32.gmra.mxu0 %v5601
      %v5807 = vpop.f32.mrf.mxu0
      %v5808 = vadd.f32 %v5695, %v5807
      %5809 = vmatmul.f32.gmra.mxu0 %v5603
      %v5810 = vpop.f32.mrf.mxu0
      %v5811 = vadd.f32 %v5698, %v5810
      %5812 = vmatmul.f32.gmra.mxu0 %v5605
      %v5813 = vpop.f32.mrf.mxu0
      %v5814 = vadd.f32 %v5701, %v5813
      %5815 = vmatmul.f32.gmra.mxu0 %v5607
      %v5816 = vpop.f32.mrf.mxu0
      %v5817 = vadd.f32 %v5704, %v5816
      %5818 = vmatmul.f32.gmra.mxu0 %v5609
      %v5819 = vpop.f32.mrf.mxu0
      %v5820 = vadd.f32 %v5707, %v5819
      %5821 = vmatmul.f32.gmra.mxu0 %v5611
      %v5822 = vpop.f32.mrf.mxu0
      %v5823 = vadd.f32 %v5710, %v5822
      %5824 = vmatmul.f32.gmra.mxu0 %v5613
      %v5825 = vpop.f32.mrf.mxu0
      %v5826 = vadd.f32 %v5713, %v5825
      %5827 = vmatmul.f32.gmra.mxu0 %v5615
      %v5828 = vpop.f32.mrf.mxu0
      %v5829 = vadd.f32 %v5716, %v5828
      %5830 = vmatmul.f32.gmra.mxu0 %v5617
      %v5831 = vpop.f32.mrf.mxu0
      %v5832 = vadd.f32 %v5719, %v5831
      %5833 = vmatmul.f32.gmra.mxu0 %v5619
      %v5834 = vpop.f32.mrf.mxu0
      %v5835 = vadd.f32 %v5722, %v5834
      %5836 = vmatmul.f32.gmra.mxu0 %v5621
      %v5837 = vpop.f32.mrf.mxu0
      %v5838 = vadd.f32 %v5725, %v5837
      %5839 = vmatmul.f32.gmra.mxu0 %v5623
      %v5840 = vpop.f32.mrf.mxu0
      %v5841 = vadd.f32 %v5728, %v5840
      %5842 = vmatmul.f32.gmra.mxu0 %v5625
      %v5843 = vpop.f32.mrf.mxu0
      %v5844 = vadd.f32 %v5731, %v5843
      %5845 = vmatmul.f32.gmra.mxu0 %v5627
      %v5846 = vpop.f32.mrf.mxu0
      %v5847 = vadd.f32 %v5734, %v5846
      %5848 = vmatmul.f32.gmra.mxu0 %v5629
      %v5849 = vpop.f32.mrf.mxu0
      %v5850 = vadd.f32 %v5737, %v5849
      %5851 = vmatmul.f32.gmra.mxu0 %v5631
      %v5852 = vpop.f32.mrf.mxu0
      %v5853 = vadd.f32 %v5740, %v5852
      %5854 = vmatmul.f32.gmra.mxu0 %v5633
      %v5855 = vpop.f32.mrf.mxu0
      %v5856 = vadd.f32 %v5743, %v5855
      %5857 = vmatmul.f32.gmra.mxu0 %v5635
      %v5858 = vpop.f32.mrf.mxu0
      %v5859 = vadd.f32 %v5746, %v5858
      %5860 = vmatmul.f32.gmra.mxu0 %v5637
      %v5861 = vpop.f32.mrf.mxu0
      %v5862 = vadd.f32 %v5749, %v5861
      %5863 = vdwg.mxu0
      %v5864 = vmax.f32 %v5769, %v5793
      %v5865 = vmax.f32 %v5772, %v5796
      %v5866 = vmax.f32 %v5775, %v5799
      %v5867 = vmax.f32 %v5778, %v5802
      %v5868 = vmax.f32 %v5781, %v5805
      %v5869 = vmax.f32 %v5784, %v5808
      %v5870 = vmax.f32 %v5787, %v5811
      %v5871 = vmax.f32 %v5790, %v5814
      %v5872 = vmax.f32 %v5817, %v5841
      %v5873 = vmax.f32 %v5820, %v5844
      %v5874 = vmax.f32 %v5823, %v5847
      %v5875 = vmax.f32 %v5826, %v5850
      %v5876 = vmax.f32 %v5829, %v5853
      %v5877 = vmax.f32 %v5832, %v5856
      %v5878 = vmax.f32 %v5835, %v5859
      %v5879 = vmax.f32 %v5838, %v5862
      %v5880 = vmax.f32 %v5864, %v5872
      %v5881 = vmax.f32 %v5865, %v5873
      %v5882 = vmax.f32 %v5866, %v5874
      %v5883 = vmax.f32 %v5867, %v5875
      %v5884 = vmax.f32 %v5868, %v5876
      %v5885 = vmax.f32 %v5869, %v5877
      %v5886 = vmax.f32 %v5870, %v5878
      %v5887 = vmax.f32 %v5871, %v5879
      %5888 = vst.msk [vmem:[#allocation2] sm:$0xff] %vm475, 0.0
      %5889 = vst.msk [vmem:[#allocation2 + $0x8] sm:$0xff] %vm475, 0.0
      %5890 = vst.msk [vmem:[#allocation2 + $0x10] sm:$0x3] %vm478, 0.0
      %5891 = vst.msk [vmem:[#allocation2 + $0x18] sm:$0xff] %vm475, 0.0
      %5892 = vst.msk [vmem:[#allocation2 + $0x20] sm:$0xff] %vm475, 0.0
      %5893 = vst.msk [vmem:[#allocation2 + $0x28] sm:$0x3] %vm478, 0.0
      %5894 = vst.msk [vmem:[#allocation2 + $0x30] sm:$0xff] %vm475, 0.0
      %5895 = vst.msk [vmem:[#allocation2 + $0x38] sm:$0xff] %vm475, 0.0
      %5896 = vst.msk [vmem:[#allocation2 + $0x40] sm:$0x3] %vm478, 0.0
      %5897 = vst.msk [vmem:[#allocation2 + $0x48] sm:$0xff] %vm475, 0.0
      %5898 = vst.msk [vmem:[#allocation2 + $0x50] sm:$0xff] %vm475, 0.0
      %5899 = vst.msk [vmem:[#allocation2 + $0x58] sm:$0x3] %vm478, 0.0
      %5900 = vst.msk [vmem:[#allocation2 + $0x60] sm:$0xff] %vm475, 0.0
      %5901 = vst.msk [vmem:[#allocation2 + $0x68] sm:$0xff] %vm475, 0.0
      %5902 = vst.msk [vmem:[#allocation2 + $0x70] sm:$0x3] %vm478, 0.0
      %5903 = vst.msk [vmem:[#allocation2 + $0x78] sm:$0xff] %vm475, 0.0
      %5904 = vst.msk [vmem:[#allocation2 + $0x80] sm:$0xff] %vm475, 0.0
      %5905 = vst.msk [vmem:[#allocation2 + $0x88] sm:$0x3] %vm478, 0.0
      %5906 = vst.msk [vmem:[#allocation2 + $0x90] sm:$0xff] %vm475, 0.0
      %5907 = vst.msk [vmem:[#allocation2 + $0x98] sm:$0xff] %vm475, 0.0
      %5908 = vst.msk [vmem:[#allocation2 + $0xa0] sm:$0x3] %vm478, 0.0
      %5909 = vst.msk [vmem:[#allocation2 + $0xa8] sm:$0xff] %vm475, 0.0
      %5910 = vst.msk [vmem:[#allocation2 + $0xb0] sm:$0xff] %vm475, 0.0
      %5911 = vst.msk [vmem:[#allocation2 + $0xb8] sm:$0x3] %vm478, 0.0
      %5912 = vst.msk [vmem:[#allocation2 + $0xc0] sm:$0xff] %vm475, 0.0
      %5913 = vst.msk [vmem:[#allocation2 + $0xc8] sm:$0xff] %vm475, 0.0
      %5914 = vst.msk [vmem:[#allocation2 + $0xd0] sm:$0x3] %vm478, 0.0
      %5915 = vst.msk [vmem:[#allocation2 + $0xd8] sm:$0xff] %vm475, 0.0
      %5916 = vst.msk [vmem:[#allocation2 + $0xe0] sm:$0xff] %vm475, 0.0
      %5917 = vst.msk [vmem:[#allocation2 + $0xe8] sm:$0x3] %vm478, 0.0
      %5918 = vst.msk [vmem:[#allocation2 + $0xf0] sm:$0xff] %vm475, 0.0
      %5919 = vst.msk [vmem:[#allocation2 + $0xf8] sm:$0xff] %vm475, 0.0
      %5920 = vst.msk [vmem:[#allocation2 + $0x100] sm:$0x3] %vm478, 0.0
      %5921 = vst.msk [vmem:[#allocation2 + $0x108] sm:$0xff] %vm475, 0.0
      %5922 = vst.msk [vmem:[#allocation2 + $0x110] sm:$0xff] %vm475, 0.0
      %5923 = vst.msk [vmem:[#allocation2 + $0x118] sm:$0x3] %vm478, 0.0
      %5924 = vst.msk [vmem:[#allocation2 + $0x120] sm:$0xff] %vm475, 0.0
      %5925 = vst.msk [vmem:[#allocation2 + $0x128] sm:$0xff] %vm475, 0.0
      %5926 = vst.msk [vmem:[#allocation2 + $0x130] sm:$0x3] %vm478, 0.0
      %5927 = vst.msk [vmem:[#allocation2 + $0x138] sm:$0xff] %vm475, 0.0
      %5928 = vst.msk [vmem:[#allocation2 + $0x140] sm:$0xff] %vm475, 0.0
      %5929 = vst.msk [vmem:[#allocation2 + $0x148] sm:$0x3] %vm478, 0.0
      %5930 = vst.msk [vmem:[#allocation2 + $0x150] sm:$0xff] %vm475, 0.0
      %5931 = vst.msk [vmem:[#allocation2 + $0x158] sm:$0xff] %vm475, 0.0
      %5932 = vst.msk [vmem:[#allocation2 + $0x160] sm:$0x3] %vm478, 0.0
      %5933 = vst.msk [vmem:[#allocation2 + $0x168] sm:$0xff] %vm475, 0.0
      %5934 = vst.msk [vmem:[#allocation2 + $0x170] sm:$0xff] %vm475, 0.0
      %5935 = vst.msk [vmem:[#allocation2 + $0x178] sm:$0x3] %vm478, 0.0
      %5936 = vst.msk [vmem:[#allocation2 + $0x180] sm:$0xff] %vm475, 0.0
      %5937 = vst.msk [vmem:[#allocation2 + $0x188] sm:$0xff] %vm475, 0.0
      %5938 = vst.msk [vmem:[#allocation2 + $0x190] sm:$0x3] %vm478, 0.0
      %5939 = vst.msk [vmem:[#allocation2 + $0x198] sm:$0xff] %vm475, 0.0
      %5940 = vst.msk [vmem:[#allocation2 + $0x1a0] sm:$0xff] %vm475, 0.0
      %5941 = vst.msk [vmem:[#allocation2 + $0x1a8] sm:$0x3] %vm478, 0.0
      %5942 = vst.msk [vmem:[%s531 + $0x1] sm:$0xff] %vm475, %v5880
      %5943 = vst.msk [vmem:[%s531 + $0x19] sm:$0xff] %vm475, %v5881
      %5944 = vst.msk [vmem:[%s531 + $0x31] sm:$0xff] %vm475, %v5882
      %5945 = vst.msk [vmem:[%s531 + $0x49] sm:$0xff] %vm475, %v5883
      %5946 = vst.msk [vmem:[%s531 + $0x61] sm:$0xff] %vm475, %v5884
      %5947 = vst.msk [vmem:[%s531 + $0x79] sm:$0xff] %vm475, %v5885
      %5948 = vst.msk [vmem:[%s531 + $0x91] sm:$0xff] %vm475, %v5886
      %5949 = vst.msk [vmem:[%s531 + $0xa9] sm:$0xff] %vm475, %v5887
      %v5950 = vld [vmem:[#allocation2] sm:$0xff]
      %v5951 = vld [vmem:[#allocation2 + $0x18] sm:$0xff]
      %v5952 = vld [vmem:[#allocation2 + $0x30] sm:$0xff]
      %v5953 = vld [vmem:[#allocation2 + $0x48] sm:$0xff]
      %v5954 = vld [vmem:[#allocation2 + $0x60] sm:$0xff]
      %v5955 = vld [vmem:[#allocation2 + $0x78] sm:$0xff]
      %v5956 = vld [vmem:[#allocation2 + $0x90] sm:$0xff]
      %v5957 = vld [vmem:[#allocation2 + $0xa8] sm:$0xff]
      %v5958 = vld [vmem:[%s5] sm:$0xff]
      %v5959 = vld [vmem:[%s5 + $0x8] sm:$0xff]
      %v5960 = vld [vmem:[%s5 + $0x10] sm:$0xff]
      %v5961 = vld [vmem:[%s5 + $0x18] sm:$0xff]
      %v5962 = vld [vmem:[%s5 + $0x20] sm:$0xff]
      %v5963 = vld [vmem:[%s5 + $0x28] sm:$0xff]
      %v5964 = vld [vmem:[%s5 + $0x30] sm:$0xff]
      %v5965 = vld [vmem:[%s5 + $0x38] sm:$0xff]
      %v5966 = vld [vmem:[#allocation2 + $0x1] sm:$0xff]
      %v5967 = vld [vmem:[#allocation2 + $0x19] sm:$0xff]
      %v5968 = vld [vmem:[#allocation2 + $0x31] sm:$0xff]
      %v5969 = vld [vmem:[#allocation2 + $0x49] sm:$0xff]
      %v5970 = vld [vmem:[#allocation2 + $0x61] sm:$0xff]
      %v5971 = vld [vmem:[#allocation2 + $0x79] sm:$0xff]
      %v5972 = vld [vmem:[#allocation2 + $0x91] sm:$0xff]
      %v5973 = vld [vmem:[#allocation2 + $0xa9] sm:$0xff]
      %s5974 = scalar_lea.vmem %s5, 64
      %v5975 = vld [vmem:[%s5974] sm:$0xff]
      %v5976 = vld [vmem:[%s5974 + $0x8] sm:$0xff]
      %v5977 = vld [vmem:[%s5974 + $0x10] sm:$0xff]
      %v5978 = vld [vmem:[%s5974 + $0x18] sm:$0xff]
      %v5979 = vld [vmem:[%s5974 + $0x20] sm:$0xff]
      %v5980 = vld [vmem:[%s5974 + $0x28] sm:$0xff]
      %v5981 = vld [vmem:[%s5974 + $0x30] sm:$0xff]
      %v5982 = vld [vmem:[%s5974 + $0x38] sm:$0xff]
      %v5984 = vsel %vm475, %v5966, 0
      %v5987 = vsel %vm475, %v5967, 0
      %v5990 = vsel %vm475, %v5968, 0
      %v5993 = vsel %vm475, %v5969, 0
      %v5996 = vsel %vm475, %v5970, 0
      %v5999 = vsel %vm475, %v5971, 0
      %v6002 = vsel %vm475, %v5972, 0
      %v6005 = vsel %vm475, %v5973, 0
      %6007 = vmatpush.msra.mxu0 0.0
      %6008 = vmatpush.msra.mxu0 0.0
      %6009 = vmatpush.msra.mxu0 0.0
      %6010 = vmatpush.msra.mxu0 0.0
      %6011 = vmatpush.msra.mxu0 0.0
      %6012 = vmatpush.msra.mxu0 0.0
      %6013 = vmatpush.msra.mxu0 0.0
      %6014 = vmatpush.msra.mxu0 0.0
      %6015 = vmatpush.msra.mxu0 %v5982
      %6016 = vmatpush.msra.mxu0 %v5981
      %6017 = vmatpush.msra.mxu0 %v5980
      %6018 = vmatpush.msra.mxu0 %v5979
      %6019 = vmatpush.msra.mxu0 %v5978
      %6020 = vmatpush.msra.mxu0 %v5977
      %6021 = vmatpush.msra.mxu0 %v5976
      %6022 = vmatpush.msra.mxu0 %v5975
      %6023 = vmatmul.f32.gmra.mxu0 %v5984
      %v6024 = vpop.f32.mrf.mxu0
      %v6025 = vadd.f32 0.0, %v6024
      %6026 = vmatmul.f32.gmra.mxu0 %v5987
      %v6027 = vpop.f32.mrf.mxu0
      %v6028 = vadd.f32 0.0, %v6027
      %6029 = vmatmul.f32.gmra.mxu0 %v5990
      %v6030 = vpop.f32.mrf.mxu0
      %v6031 = vadd.f32 0.0, %v6030
      %6032 = vmatmul.f32.gmra.mxu0 %v5993
      %v6033 = vpop.f32.mrf.mxu0
      %v6034 = vadd.f32 0.0, %v6033
      %6035 = vmatmul.f32.gmra.mxu0 %v5996
      %v6036 = vpop.f32.mrf.mxu0
      %v6037 = vadd.f32 0.0, %v6036
      %6038 = vmatmul.f32.gmra.mxu0 %v5999
      %v6039 = vpop.f32.mrf.mxu0
      %v6040 = vadd.f32 0.0, %v6039
      %6041 = vmatmul.f32.gmra.mxu0 %v6002
      %v6042 = vpop.f32.mrf.mxu0
      %v6043 = vadd.f32 0.0, %v6042
      %6044 = vmatmul.f32.gmra.mxu0 %v6005
      %v6045 = vpop.f32.mrf.mxu0
      %v6046 = vadd.f32 0.0, %v6045
      %6047 = vdwg.mxu0
      %v6049 = vsel %vm475, %v5950, 0
      %v6052 = vsel %vm475, %v5951, 0
      %v6055 = vsel %vm475, %v5952, 0
      %v6058 = vsel %vm475, %v5953, 0
      %v6061 = vsel %vm475, %v5954, 0
      %v6064 = vsel %vm475, %v5955, 0
      %v6067 = vsel %vm475, %v5956, 0
      %v6070 = vsel %vm475, %v5957, 0
      %6072 = vmatpush.msra.mxu0 0.0
      %6073 = vmatpush.msra.mxu0 0.0
      %6074 = vmatpush.msra.mxu0 0.0
      %6075 = vmatpush.msra.mxu0 0.0
      %6076 = vmatpush.msra.mxu0 0.0
      %6077 = vmatpush.msra.mxu0 0.0
      %6078 = vmatpush.msra.mxu0 0.0
      %6079 = vmatpush.msra.mxu0 0.0
      %6080 = vmatpush.msra.mxu0 %v5965
      %6081 = vmatpush.msra.mxu0 %v5964
      %6082 = vmatpush.msra.mxu0 %v5963
      %6083 = vmatpush.msra.mxu0 %v5962
      %6084 = vmatpush.msra.mxu0 %v5961
      %6085 = vmatpush.msra.mxu0 %v5960
      %6086 = vmatpush.msra.mxu0 %v5959
      %6087 = vmatpush.msra.mxu0 %v5958
      %6088 = vmatmul.f32.gmra.mxu0 %v6049
      %v6089 = vpop.f32.mrf.mxu0
      %v6090 = vadd.f32 %v6025, %v6089
      %6091 = vmatmul.f32.gmra.mxu0 %v6052
      %v6092 = vpop.f32.mrf.mxu0
      %v6093 = vadd.f32 %v6028, %v6092
      %6094 = vmatmul.f32.gmra.mxu0 %v6055
      %v6095 = vpop.f32.mrf.mxu0
      %v6096 = vadd.f32 %v6031, %v6095
      %6097 = vmatmul.f32.gmra.mxu0 %v6058
      %v6098 = vpop.f32.mrf.mxu0
      %v6099 = vadd.f32 %v6034, %v6098
      %6100 = vmatmul.f32.gmra.mxu0 %v6061
      %v6101 = vpop.f32.mrf.mxu0
      %v6102 = vadd.f32 %v6037, %v6101
      %6103 = vmatmul.f32.gmra.mxu0 %v6064
      %v6104 = vpop.f32.mrf.mxu0
      %v6105 = vadd.f32 %v6040, %v6104
      %6106 = vmatmul.f32.gmra.mxu0 %v6067
      %v6107 = vpop.f32.mrf.mxu0
      %v6108 = vadd.f32 %v6043, %v6107
      %6109 = vmatmul.f32.gmra.mxu0 %v6070
      %v6110 = vpop.f32.mrf.mxu0
      %v6111 = vadd.f32 %v6046, %v6110
      %6112 = vdwg.mxu0
      %v6113 = vld [vmem:[#allocation2 + $0x2] sm:$0xff]
      %v6114 = vld [vmem:[#allocation2 + $0x1a] sm:$0xff]
      %v6115 = vld [vmem:[#allocation2 + $0x32] sm:$0xff]
      %v6116 = vld [vmem:[#allocation2 + $0x4a] sm:$0xff]
      %v6117 = vld [vmem:[#allocation2 + $0x62] sm:$0xff]
      %v6118 = vld [vmem:[#allocation2 + $0x7a] sm:$0xff]
      %v6119 = vld [vmem:[#allocation2 + $0x92] sm:$0xff]
      %v6120 = vld [vmem:[#allocation2 + $0xaa] sm:$0xff]
      %s6121 = scalar_lea.vmem %s5, 128
      %v6122 = vld [vmem:[%s6121] sm:$0xff]
      %v6123 = vld [vmem:[%s6121 + $0x8] sm:$0xff]
      %v6124 = vld [vmem:[%s6121 + $0x10] sm:$0xff]
      %v6125 = vld [vmem:[%s6121 + $0x18] sm:$0xff]
      %v6126 = vld [vmem:[%s6121 + $0x20] sm:$0xff]
      %v6127 = vld [vmem:[%s6121 + $0x28] sm:$0xff]
      %v6128 = vld [vmem:[%s6121 + $0x30] sm:$0xff]
      %v6129 = vld [vmem:[%s6121 + $0x38] sm:$0xff]
      %v6131 = vsel %vm475, %v6113, 0
      %v6134 = vsel %vm475, %v6114, 0
      %v6137 = vsel %vm475, %v6115, 0
      %v6140 = vsel %vm475, %v6116, 0
      %v6143 = vsel %vm475, %v6117, 0
      %v6146 = vsel %vm475, %v6118, 0
      %v6149 = vsel %vm475, %v6119, 0
      %v6152 = vsel %vm475, %v6120, 0
      %6154 = vmatpush.msra.mxu0 0.0
      %6155 = vmatpush.msra.mxu0 0.0
      %6156 = vmatpush.msra.mxu0 0.0
      %6157 = vmatpush.msra.mxu0 0.0
      %6158 = vmatpush.msra.mxu0 0.0
      %6159 = vmatpush.msra.mxu0 0.0
      %6160 = vmatpush.msra.mxu0 0.0
      %6161 = vmatpush.msra.mxu0 0.0
      %6162 = vmatpush.msra.mxu0 %v6129
      %6163 = vmatpush.msra.mxu0 %v6128
      %6164 = vmatpush.msra.mxu0 %v6127
      %6165 = vmatpush.msra.mxu0 %v6126
      %6166 = vmatpush.msra.mxu0 %v6125
      %6167 = vmatpush.msra.mxu0 %v6124
      %6168 = vmatpush.msra.mxu0 %v6123
      %6169 = vmatpush.msra.mxu0 %v6122
      %6170 = vmatmul.f32.gmra.mxu0 %v6131
      %v6171 = vpop.f32.mrf.mxu0
      %v6172 = vadd.f32 0.0, %v6171
      %6173 = vmatmul.f32.gmra.mxu0 %v6134
      %v6174 = vpop.f32.mrf.mxu0
      %v6175 = vadd.f32 0.0, %v6174
      %6176 = vmatmul.f32.gmra.mxu0 %v6137
      %v6177 = vpop.f32.mrf.mxu0
      %v6178 = vadd.f32 0.0, %v6177
      %6179 = vmatmul.f32.gmra.mxu0 %v6140
      %v6180 = vpop.f32.mrf.mxu0
      %v6181 = vadd.f32 0.0, %v6180
      %6182 = vmatmul.f32.gmra.mxu0 %v6143
      %v6183 = vpop.f32.mrf.mxu0
      %v6184 = vadd.f32 0.0, %v6183
      %6185 = vmatmul.f32.gmra.mxu0 %v6146
      %v6186 = vpop.f32.mrf.mxu0
      %v6187 = vadd.f32 0.0, %v6186
      %6188 = vmatmul.f32.gmra.mxu0 %v6149
      %v6189 = vpop.f32.mrf.mxu0
      %v6190 = vadd.f32 0.0, %v6189
      %6191 = vmatmul.f32.gmra.mxu0 %v6152
      %v6192 = vpop.f32.mrf.mxu0
      %v6193 = vadd.f32 0.0, %v6192
      %6194 = vdwg.mxu0
      %v6195 = vadd.f32 %v6090, %v6172
      %v6196 = vadd.f32 %v6093, %v6175
      %v6197 = vadd.f32 %v6096, %v6178
      %v6198 = vadd.f32 %v6099, %v6181
      %v6199 = vadd.f32 %v6102, %v6184
      %v6200 = vadd.f32 %v6105, %v6187
      %v6201 = vadd.f32 %v6108, %v6190
      %v6202 = vadd.f32 %v6111, %v6193
      %v6203 = vld [vmem:[%s531] sm:$0xff]
      %v6204 = vld [vmem:[%s531 + $0x18] sm:$0xff]
      %v6205 = vld [vmem:[%s531 + $0x30] sm:$0xff]
      %v6206 = vld [vmem:[%s531 + $0x48] sm:$0xff]
      %v6207 = vld [vmem:[%s531 + $0x60] sm:$0xff]
      %v6208 = vld [vmem:[%s531 + $0x78] sm:$0xff]
      %v6209 = vld [vmem:[%s531 + $0x90] sm:$0xff]
      %v6210 = vld [vmem:[%s531 + $0xa8] sm:$0xff]
      %s6211 = scalar_lea.vmem %s5, 192
      %v6212 = vld [vmem:[%s6211] sm:$0xff]
      %v6213 = vld [vmem:[%s6211 + $0x8] sm:$0xff]
      %v6214 = vld [vmem:[%s6211 + $0x10] sm:$0xff]
      %v6215 = vld [vmem:[%s6211 + $0x18] sm:$0xff]
      %v6216 = vld [vmem:[%s6211 + $0x20] sm:$0xff]
      %v6217 = vld [vmem:[%s6211 + $0x28] sm:$0xff]
      %v6218 = vld [vmem:[%s6211 + $0x30] sm:$0xff]
      %v6219 = vld [vmem:[%s6211 + $0x38] sm:$0xff]
      %v6221 = vsel %vm475, %v6203, 0
      %v6224 = vsel %vm475, %v6204, 0
      %v6227 = vsel %vm475, %v6205, 0
      %v6230 = vsel %vm475, %v6206, 0
      %v6233 = vsel %vm475, %v6207, 0
      %v6236 = vsel %vm475, %v6208, 0
      %v6239 = vsel %vm475, %v6209, 0
      %v6242 = vsel %vm475, %v6210, 0
      %6244 = vmatpush.msra.mxu0 0.0
      %6245 = vmatpush.msra.mxu0 0.0
      %6246 = vmatpush.msra.mxu0 0.0
      %6247 = vmatpush.msra.mxu0 0.0
      %6248 = vmatpush.msra.mxu0 0.0
      %6249 = vmatpush.msra.mxu0 0.0
      %6250 = vmatpush.msra.mxu0 0.0
      %6251 = vmatpush.msra.mxu0 0.0
      %6252 = vmatpush.msra.mxu0 %v6219
      %6253 = vmatpush.msra.mxu0 %v6218
      %6254 = vmatpush.msra.mxu0 %v6217
      %6255 = vmatpush.msra.mxu0 %v6216
      %6256 = vmatpush.msra.mxu0 %v6215
      %6257 = vmatpush.msra.mxu0 %v6214
      %6258 = vmatpush.msra.mxu0 %v6213
      %6259 = vmatpush.msra.mxu0 %v6212
      %6260 = vmatmul.f32.gmra.mxu0 %v6221
      %v6261 = vpop.f32.mrf.mxu0
      %v6262 = vadd.f32 0.0, %v6261
      %6263 = vmatmul.f32.gmra.mxu0 %v6224
      %v6264 = vpop.f32.mrf.mxu0
      %v6265 = vadd.f32 0.0, %v6264
      %6266 = vmatmul.f32.gmra.mxu0 %v6227
      %v6267 = vpop.f32.mrf.mxu0
      %v6268 = vadd.f32 0.0, %v6267
      %6269 = vmatmul.f32.gmra.mxu0 %v6230
      %v6270 = vpop.f32.mrf.mxu0
      %v6271 = vadd.f32 0.0, %v6270
      %6272 = vmatmul.f32.gmra.mxu0 %v6233
      %v6273 = vpop.f32.mrf.mxu0
      %v6274 = vadd.f32 0.0, %v6273
      %6275 = vmatmul.f32.gmra.mxu0 %v6236
      %v6276 = vpop.f32.mrf.mxu0
      %v6277 = vadd.f32 0.0, %v6276
      %6278 = vmatmul.f32.gmra.mxu0 %v6239
      %v6279 = vpop.f32.mrf.mxu0
      %v6280 = vadd.f32 0.0, %v6279
      %6281 = vmatmul.f32.gmra.mxu0 %v6242
      %v6282 = vpop.f32.mrf.mxu0
      %v6283 = vadd.f32 0.0, %v6282
      %6284 = vdwg.mxu0
      %v6285 = vadd.f32 %v6195, %v6262
      %v6286 = vadd.f32 %v6196, %v6265
      %v6287 = vadd.f32 %v6197, %v6268
      %v6288 = vadd.f32 %v6198, %v6271
      %v6289 = vadd.f32 %v6199, %v6274
      %v6290 = vadd.f32 %v6200, %v6277
      %v6291 = vadd.f32 %v6201, %v6280
      %v6292 = vadd.f32 %v6202, %v6283
      %v6293 = vld [vmem:[%s531 + $0x1] sm:$0xff]
      %v6294 = vld [vmem:[%s531 + $0x19] sm:$0xff]
      %v6295 = vld [vmem:[%s531 + $0x31] sm:$0xff]
      %v6296 = vld [vmem:[%s531 + $0x49] sm:$0xff]
      %v6297 = vld [vmem:[%s531 + $0x61] sm:$0xff]
      %v6298 = vld [vmem:[%s531 + $0x79] sm:$0xff]
      %v6299 = vld [vmem:[%s531 + $0x91] sm:$0xff]
      %v6300 = vld [vmem:[%s531 + $0xa9] sm:$0xff]
      %s6301 = scalar_lea.vmem %s5, 256
      %v6302 = vld [vmem:[%s6301] sm:$0xff]
      %v6303 = vld [vmem:[%s6301 + $0x8] sm:$0xff]
      %v6304 = vld [vmem:[%s6301 + $0x10] sm:$0xff]
      %v6305 = vld [vmem:[%s6301 + $0x18] sm:$0xff]
      %v6306 = vld [vmem:[%s6301 + $0x20] sm:$0xff]
      %v6307 = vld [vmem:[%s6301 + $0x28] sm:$0xff]
      %v6308 = vld [vmem:[%s6301 + $0x30] sm:$0xff]
      %v6309 = vld [vmem:[%s6301 + $0x38] sm:$0xff]
      %v6311 = vsel %vm475, %v6293, 0
      %v6314 = vsel %vm475, %v6294, 0
      %v6317 = vsel %vm475, %v6295, 0
      %v6320 = vsel %vm475, %v6296, 0
      %v6323 = vsel %vm475, %v6297, 0
      %v6326 = vsel %vm475, %v6298, 0
      %v6329 = vsel %vm475, %v6299, 0
      %v6332 = vsel %vm475, %v6300, 0
      %6334 = vmatpush.msra.mxu0 0.0
      %6335 = vmatpush.msra.mxu0 0.0
      %6336 = vmatpush.msra.mxu0 0.0
      %6337 = vmatpush.msra.mxu0 0.0
      %6338 = vmatpush.msra.mxu0 0.0
      %6339 = vmatpush.msra.mxu0 0.0
      %6340 = vmatpush.msra.mxu0 0.0
      %6341 = vmatpush.msra.mxu0 0.0
      %6342 = vmatpush.msra.mxu0 %v6309
      %6343 = vmatpush.msra.mxu0 %v6308
      %6344 = vmatpush.msra.mxu0 %v6307
      %6345 = vmatpush.msra.mxu0 %v6306
      %6346 = vmatpush.msra.mxu0 %v6305
      %6347 = vmatpush.msra.mxu0 %v6304
      %6348 = vmatpush.msra.mxu0 %v6303
      %6349 = vmatpush.msra.mxu0 %v6302
      %6350 = vmatmul.f32.gmra.mxu0 %v6311
      %v6351 = vpop.f32.mrf.mxu0
      %v6352 = vadd.f32 0.0, %v6351
      %6353 = vmatmul.f32.gmra.mxu0 %v6314
      %v6354 = vpop.f32.mrf.mxu0
      %v6355 = vadd.f32 0.0, %v6354
      %6356 = vmatmul.f32.gmra.mxu0 %v6317
      %v6357 = vpop.f32.mrf.mxu0
      %v6358 = vadd.f32 0.0, %v6357
      %6359 = vmatmul.f32.gmra.mxu0 %v6320
      %v6360 = vpop.f32.mrf.mxu0
      %v6361 = vadd.f32 0.0, %v6360
      %6362 = vmatmul.f32.gmra.mxu0 %v6323
      %v6363 = vpop.f32.mrf.mxu0
      %v6364 = vadd.f32 0.0, %v6363
      %6365 = vmatmul.f32.gmra.mxu0 %v6326
      %v6366 = vpop.f32.mrf.mxu0
      %v6367 = vadd.f32 0.0, %v6366
      %6368 = vmatmul.f32.gmra.mxu0 %v6329
      %v6369 = vpop.f32.mrf.mxu0
      %v6370 = vadd.f32 0.0, %v6369
      %6371 = vmatmul.f32.gmra.mxu0 %v6332
      %v6372 = vpop.f32.mrf.mxu0
      %v6373 = vadd.f32 0.0, %v6372
      %6374 = vdwg.mxu0
      %v6375 = vadd.f32 %v6285, %v6352
      %v6376 = vadd.f32 %v6286, %v6355
      %v6377 = vadd.f32 %v6287, %v6358
      %v6378 = vadd.f32 %v6288, %v6361
      %v6379 = vadd.f32 %v6289, %v6364
      %v6380 = vadd.f32 %v6290, %v6367
      %v6381 = vadd.f32 %v6291, %v6370
      %v6382 = vadd.f32 %v6292, %v6373
      %v6383 = vld [vmem:[%s531 + $0x2] sm:$0xff]
      %v6384 = vld [vmem:[%s531 + $0x1a] sm:$0xff]
      %v6385 = vld [vmem:[%s531 + $0x32] sm:$0xff]
      %v6386 = vld [vmem:[%s531 + $0x4a] sm:$0xff]
      %v6387 = vld [vmem:[%s531 + $0x62] sm:$0xff]
      %v6388 = vld [vmem:[%s531 + $0x7a] sm:$0xff]
      %v6389 = vld [vmem:[%s531 + $0x92] sm:$0xff]
      %v6390 = vld [vmem:[%s531 + $0xaa] sm:$0xff]
      %s6391 = scalar_lea.vmem %s5, 320
      %v6392 = vld [vmem:[%s6391] sm:$0xff]
      %v6393 = vld [vmem:[%s6391 + $0x8] sm:$0xff]
      %v6394 = vld [vmem:[%s6391 + $0x10] sm:$0xff]
      %v6395 = vld [vmem:[%s6391 + $0x18] sm:$0xff]
      %v6396 = vld [vmem:[%s6391 + $0x20] sm:$0xff]
      %v6397 = vld [vmem:[%s6391 + $0x28] sm:$0xff]
      %v6398 = vld [vmem:[%s6391 + $0x30] sm:$0xff]
      %v6399 = vld [vmem:[%s6391 + $0x38] sm:$0xff]
      %v6401 = vsel %vm475, %v6383, 0
      %v6404 = vsel %vm475, %v6384, 0
      %v6407 = vsel %vm475, %v6385, 0
      %v6410 = vsel %vm475, %v6386, 0
      %v6413 = vsel %vm475, %v6387, 0
      %v6416 = vsel %vm475, %v6388, 0
      %v6419 = vsel %vm475, %v6389, 0
      %v6422 = vsel %vm475, %v6390, 0
      %6424 = vmatpush.msra.mxu0 0.0
      %6425 = vmatpush.msra.mxu0 0.0
      %6426 = vmatpush.msra.mxu0 0.0
      %6427 = vmatpush.msra.mxu0 0.0
      %6428 = vmatpush.msra.mxu0 0.0
      %6429 = vmatpush.msra.mxu0 0.0
      %6430 = vmatpush.msra.mxu0 0.0
      %6431 = vmatpush.msra.mxu0 0.0
      %6432 = vmatpush.msra.mxu0 %v6399
      %6433 = vmatpush.msra.mxu0 %v6398
      %6434 = vmatpush.msra.mxu0 %v6397
      %6435 = vmatpush.msra.mxu0 %v6396
      %6436 = vmatpush.msra.mxu0 %v6395
      %6437 = vmatpush.msra.mxu0 %v6394
      %6438 = vmatpush.msra.mxu0 %v6393
      %6439 = vmatpush.msra.mxu0 %v6392
      %6440 = vmatmul.f32.gmra.mxu0 %v6401
      %v6441 = vpop.f32.mrf.mxu0
      %v6442 = vadd.f32 0.0, %v6441
      %6443 = vmatmul.f32.gmra.mxu0 %v6404
      %v6444 = vpop.f32.mrf.mxu0
      %v6445 = vadd.f32 0.0, %v6444
      %6446 = vmatmul.f32.gmra.mxu0 %v6407
      %v6447 = vpop.f32.mrf.mxu0
      %v6448 = vadd.f32 0.0, %v6447
      %6449 = vmatmul.f32.gmra.mxu0 %v6410
      %v6450 = vpop.f32.mrf.mxu0
      %v6451 = vadd.f32 0.0, %v6450
      %6452 = vmatmul.f32.gmra.mxu0 %v6413
      %v6453 = vpop.f32.mrf.mxu0
      %v6454 = vadd.f32 0.0, %v6453
      %6455 = vmatmul.f32.gmra.mxu0 %v6416
      %v6456 = vpop.f32.mrf.mxu0
      %v6457 = vadd.f32 0.0, %v6456
      %6458 = vmatmul.f32.gmra.mxu0 %v6419
      %v6459 = vpop.f32.mrf.mxu0
      %v6460 = vadd.f32 0.0, %v6459
      %6461 = vmatmul.f32.gmra.mxu0 %v6422
      %v6462 = vpop.f32.mrf.mxu0
      %v6463 = vadd.f32 0.0, %v6462
      %6464 = vdwg.mxu0
      %v6465 = vadd.f32 %v6375, %v6442
      %v6466 = vadd.f32 %v6376, %v6445
      %v6467 = vadd.f32 %v6377, %v6448
      %v6468 = vadd.f32 %v6378, %v6451
      %v6469 = vadd.f32 %v6379, %v6454
      %v6470 = vadd.f32 %v6380, %v6457
      %v6471 = vadd.f32 %v6381, %v6460
      %v6472 = vadd.f32 %v6382, %v6463
      %v6473 = vld [vmem:[%s2130] sm:$0xff]
      %v6474 = vld [vmem:[%s2130 + $0x18] sm:$0xff]
      %v6475 = vld [vmem:[%s2130 + $0x30] sm:$0xff]
      %v6476 = vld [vmem:[%s2130 + $0x48] sm:$0xff]
      %v6477 = vld [vmem:[%s2130 + $0x60] sm:$0xff]
      %v6478 = vld [vmem:[%s2130 + $0x78] sm:$0xff]
      %v6479 = vld [vmem:[%s2130 + $0x90] sm:$0xff]
      %v6480 = vld [vmem:[%s2130 + $0xa8] sm:$0xff]
      %s6481 = scalar_lea.vmem %s5, 384
      %v6482 = vld [vmem:[%s6481] sm:$0xff]
      %v6483 = vld [vmem:[%s6481 + $0x8] sm:$0xff]
      %v6484 = vld [vmem:[%s6481 + $0x10] sm:$0xff]
      %v6485 = vld [vmem:[%s6481 + $0x18] sm:$0xff]
      %v6486 = vld [vmem:[%s6481 + $0x20] sm:$0xff]
      %v6487 = vld [vmem:[%s6481 + $0x28] sm:$0xff]
      %v6488 = vld [vmem:[%s6481 + $0x30] sm:$0xff]
      %v6489 = vld [vmem:[%s6481 + $0x38] sm:$0xff]
      %v6491 = vsel %vm475, %v6473, 0
      %v6494 = vsel %vm475, %v6474, 0
      %v6497 = vsel %vm475, %v6475, 0
      %v6500 = vsel %vm475, %v6476, 0
      %v6503 = vsel %vm475, %v6477, 0
      %v6506 = vsel %vm475, %v6478, 0
      %v6509 = vsel %vm475, %v6479, 0
      %v6512 = vsel %vm475, %v6480, 0
      %6514 = vmatpush.msra.mxu0 0.0
      %6515 = vmatpush.msra.mxu0 0.0
      %6516 = vmatpush.msra.mxu0 0.0
      %6517 = vmatpush.msra.mxu0 0.0
      %6518 = vmatpush.msra.mxu0 0.0
      %6519 = vmatpush.msra.mxu0 0.0
      %6520 = vmatpush.msra.mxu0 0.0
      %6521 = vmatpush.msra.mxu0 0.0
      %6522 = vmatpush.msra.mxu0 %v6489
      %6523 = vmatpush.msra.mxu0 %v6488
      %6524 = vmatpush.msra.mxu0 %v6487
      %6525 = vmatpush.msra.mxu0 %v6486
      %6526 = vmatpush.msra.mxu0 %v6485
      %6527 = vmatpush.msra.mxu0 %v6484
      %6528 = vmatpush.msra.mxu0 %v6483
      %6529 = vmatpush.msra.mxu0 %v6482
      %6530 = vmatmul.f32.gmra.mxu0 %v6491
      %v6531 = vpop.f32.mrf.mxu0
      %v6532 = vadd.f32 0.0, %v6531
      %6533 = vmatmul.f32.gmra.mxu0 %v6494
      %v6534 = vpop.f32.mrf.mxu0
      %v6535 = vadd.f32 0.0, %v6534
      %6536 = vmatmul.f32.gmra.mxu0 %v6497
      %v6537 = vpop.f32.mrf.mxu0
      %v6538 = vadd.f32 0.0, %v6537
      %6539 = vmatmul.f32.gmra.mxu0 %v6500
      %v6540 = vpop.f32.mrf.mxu0
      %v6541 = vadd.f32 0.0, %v6540
      %6542 = vmatmul.f32.gmra.mxu0 %v6503
      %v6543 = vpop.f32.mrf.mxu0
      %v6544 = vadd.f32 0.0, %v6543
      %6545 = vmatmul.f32.gmra.mxu0 %v6506
      %v6546 = vpop.f32.mrf.mxu0
      %v6547 = vadd.f32 0.0, %v6546
      %6548 = vmatmul.f32.gmra.mxu0 %v6509
      %v6549 = vpop.f32.mrf.mxu0
      %v6550 = vadd.f32 0.0, %v6549
      %6551 = vmatmul.f32.gmra.mxu0 %v6512
      %v6552 = vpop.f32.mrf.mxu0
      %v6553 = vadd.f32 0.0, %v6552
      %6554 = vdwg.mxu0
      %v6555 = vadd.f32 %v6465, %v6532
      %v6556 = vadd.f32 %v6466, %v6535
      %v6557 = vadd.f32 %v6467, %v6538
      %v6558 = vadd.f32 %v6468, %v6541
      %v6559 = vadd.f32 %v6469, %v6544
      %v6560 = vadd.f32 %v6470, %v6547
      %v6561 = vadd.f32 %v6471, %v6550
      %v6562 = vadd.f32 %v6472, %v6553
      %v6563 = vld [vmem:[%s2130 + $0x1] sm:$0xff]
      %v6564 = vld [vmem:[%s2130 + $0x19] sm:$0xff]
      %v6565 = vld [vmem:[%s2130 + $0x31] sm:$0xff]
      %v6566 = vld [vmem:[%s2130 + $0x49] sm:$0xff]
      %v6567 = vld [vmem:[%s2130 + $0x61] sm:$0xff]
      %v6568 = vld [vmem:[%s2130 + $0x79] sm:$0xff]
      %v6569 = vld [vmem:[%s2130 + $0x91] sm:$0xff]
      %v6570 = vld [vmem:[%s2130 + $0xa9] sm:$0xff]
      %s6571 = scalar_lea.vmem %s5, 448
      %v6572 = vld [vmem:[%s6571] sm:$0xff]
      %v6573 = vld [vmem:[%s6571 + $0x8] sm:$0xff]
      %v6574 = vld [vmem:[%s6571 + $0x10] sm:$0xff]
      %v6575 = vld [vmem:[%s6571 + $0x18] sm:$0xff]
      %v6576 = vld [vmem:[%s6571 + $0x20] sm:$0xff]
      %v6577 = vld [vmem:[%s6571 + $0x28] sm:$0xff]
      %v6578 = vld [vmem:[%s6571 + $0x30] sm:$0xff]
      %v6579 = vld [vmem:[%s6571 + $0x38] sm:$0xff]
      %v6581 = vsel %vm475, %v6563, 0
      %v6584 = vsel %vm475, %v6564, 0
      %v6587 = vsel %vm475, %v6565, 0
      %v6590 = vsel %vm475, %v6566, 0
      %v6593 = vsel %vm475, %v6567, 0
      %v6596 = vsel %vm475, %v6568, 0
      %v6599 = vsel %vm475, %v6569, 0
      %v6602 = vsel %vm475, %v6570, 0
      %6604 = vmatpush.msra.mxu0 0.0
      %6605 = vmatpush.msra.mxu0 0.0
      %6606 = vmatpush.msra.mxu0 0.0
      %6607 = vmatpush.msra.mxu0 0.0
      %6608 = vmatpush.msra.mxu0 0.0
      %6609 = vmatpush.msra.mxu0 0.0
      %6610 = vmatpush.msra.mxu0 0.0
      %6611 = vmatpush.msra.mxu0 0.0
      %6612 = vmatpush.msra.mxu0 %v6579
      %6613 = vmatpush.msra.mxu0 %v6578
      %6614 = vmatpush.msra.mxu0 %v6577
      %6615 = vmatpush.msra.mxu0 %v6576
      %6616 = vmatpush.msra.mxu0 %v6575
      %6617 = vmatpush.msra.mxu0 %v6574
      %6618 = vmatpush.msra.mxu0 %v6573
      %6619 = vmatpush.msra.mxu0 %v6572
      %6620 = vmatmul.f32.gmra.mxu0 %v6581
      %v6621 = vpop.f32.mrf.mxu0
      %v6622 = vadd.f32 0.0, %v6621
      %6623 = vmatmul.f32.gmra.mxu0 %v6584
      %v6624 = vpop.f32.mrf.mxu0
      %v6625 = vadd.f32 0.0, %v6624
      %6626 = vmatmul.f32.gmra.mxu0 %v6587
      %v6627 = vpop.f32.mrf.mxu0
      %v6628 = vadd.f32 0.0, %v6627
      %6629 = vmatmul.f32.gmra.mxu0 %v6590
      %v6630 = vpop.f32.mrf.mxu0
      %v6631 = vadd.f32 0.0, %v6630
      %6632 = vmatmul.f32.gmra.mxu0 %v6593
      %v6633 = vpop.f32.mrf.mxu0
      %v6634 = vadd.f32 0.0, %v6633
      %6635 = vmatmul.f32.gmra.mxu0 %v6596
      %v6636 = vpop.f32.mrf.mxu0
      %v6637 = vadd.f32 0.0, %v6636
      %6638 = vmatmul.f32.gmra.mxu0 %v6599
      %v6639 = vpop.f32.mrf.mxu0
      %v6640 = vadd.f32 0.0, %v6639
      %6641 = vmatmul.f32.gmra.mxu0 %v6602
      %v6642 = vpop.f32.mrf.mxu0
      %v6643 = vadd.f32 0.0, %v6642
      %6644 = vdwg.mxu0
      %v6645 = vadd.f32 %v6555, %v6622
      %v6646 = vadd.f32 %v6556, %v6625
      %v6647 = vadd.f32 %v6557, %v6628
      %v6648 = vadd.f32 %v6558, %v6631
      %v6649 = vadd.f32 %v6559, %v6634
      %v6650 = vadd.f32 %v6560, %v6637
      %v6651 = vadd.f32 %v6561, %v6640
      %v6652 = vadd.f32 %v6562, %v6643
      %v6653 = vld [vmem:[%s2130 + $0x2] sm:$0xff]
      %v6654 = vld [vmem:[%s2130 + $0x1a] sm:$0xff]
      %v6655 = vld [vmem:[%s2130 + $0x32] sm:$0xff]
      %v6656 = vld [vmem:[%s2130 + $0x4a] sm:$0xff]
      %v6657 = vld [vmem:[%s2130 + $0x62] sm:$0xff]
      %v6658 = vld [vmem:[%s2130 + $0x7a] sm:$0xff]
      %v6659 = vld [vmem:[%s2130 + $0x92] sm:$0xff]
      %v6660 = vld [vmem:[%s2130 + $0xaa] sm:$0xff]
      %s6661 = scalar_lea.vmem %s5, 512
      %v6662 = vld [vmem:[%s6661] sm:$0xff]
      %v6663 = vld [vmem:[%s6661 + $0x8] sm:$0xff]
      %v6664 = vld [vmem:[%s6661 + $0x10] sm:$0xff]
      %v6665 = vld [vmem:[%s6661 + $0x18] sm:$0xff]
      %v6666 = vld [vmem:[%s6661 + $0x20] sm:$0xff]
      %v6667 = vld [vmem:[%s6661 + $0x28] sm:$0xff]
      %v6668 = vld [vmem:[%s6661 + $0x30] sm:$0xff]
      %v6669 = vld [vmem:[%s6661 + $0x38] sm:$0xff]
      %v6671 = vsel %vm475, %v6653, 0
      %v6674 = vsel %vm475, %v6654, 0
      %v6677 = vsel %vm475, %v6655, 0
      %v6680 = vsel %vm475, %v6656, 0
      %v6683 = vsel %vm475, %v6657, 0
      %v6686 = vsel %vm475, %v6658, 0
      %v6689 = vsel %vm475, %v6659, 0
      %v6692 = vsel %vm475, %v6660, 0
      %6694 = vmatpush.msra.mxu0 0.0
      %6695 = vmatpush.msra.mxu0 0.0
      %6696 = vmatpush.msra.mxu0 0.0
      %6697 = vmatpush.msra.mxu0 0.0
      %6698 = vmatpush.msra.mxu0 0.0
      %6699 = vmatpush.msra.mxu0 0.0
      %6700 = vmatpush.msra.mxu0 0.0
      %6701 = vmatpush.msra.mxu0 0.0
      %6702 = vmatpush.msra.mxu0 %v6669
      %6703 = vmatpush.msra.mxu0 %v6668
      %6704 = vmatpush.msra.mxu0 %v6667
      %6705 = vmatpush.msra.mxu0 %v6666
      %6706 = vmatpush.msra.mxu0 %v6665
      %6707 = vmatpush.msra.mxu0 %v6664
      %6708 = vmatpush.msra.mxu0 %v6663
      %6709 = vmatpush.msra.mxu0 %v6662
      %6710 = vmatmul.f32.gmra.mxu0 %v6671
      %v6711 = vpop.f32.mrf.mxu0
      %v6712 = vadd.f32 0.0, %v6711
      %6713 = vmatmul.f32.gmra.mxu0 %v6674
      %v6714 = vpop.f32.mrf.mxu0
      %v6715 = vadd.f32 0.0, %v6714
      %6716 = vmatmul.f32.gmra.mxu0 %v6677
      %v6717 = vpop.f32.mrf.mxu0
      %v6718 = vadd.f32 0.0, %v6717
      %6719 = vmatmul.f32.gmra.mxu0 %v6680
      %v6720 = vpop.f32.mrf.mxu0
      %v6721 = vadd.f32 0.0, %v6720
      %6722 = vmatmul.f32.gmra.mxu0 %v6683
      %v6723 = vpop.f32.mrf.mxu0
      %v6724 = vadd.f32 0.0, %v6723
      %6725 = vmatmul.f32.gmra.mxu0 %v6686
      %v6726 = vpop.f32.mrf.mxu0
      %v6727 = vadd.f32 0.0, %v6726
      %6728 = vmatmul.f32.gmra.mxu0 %v6689
      %v6729 = vpop.f32.mrf.mxu0
      %v6730 = vadd.f32 0.0, %v6729
      %6731 = vmatmul.f32.gmra.mxu0 %v6692
      %v6732 = vpop.f32.mrf.mxu0
      %v6733 = vadd.f32 0.0, %v6732
      %6734 = vdwg.mxu0
      %v6735 = vadd.f32 %v6645, %v6712
      %v6736 = vadd.f32 %v6646, %v6715
      %v6737 = vadd.f32 %v6647, %v6718
      %v6738 = vadd.f32 %v6648, %v6721
      %v6739 = vadd.f32 %v6649, %v6724
      %v6740 = vadd.f32 %v6650, %v6727
      %v6741 = vadd.f32 %v6651, %v6730
      %v6742 = vadd.f32 %v6652, %v6733
      %v6743 = vld [vmem:[%s6] sm:$0x1]
      %v6745 = vperm.slane %v6743, 0
      %v6747 = vadd.f32 %v6735, %v6745
      %v6748 = vadd.f32 %v6736, %v6745
      %v6749 = vadd.f32 %v6737, %v6745
      %v6750 = vadd.f32 %v6738, %v6745
      %v6751 = vadd.f32 %v6739, %v6745
      %v6752 = vadd.f32 %v6740, %v6745
      %v6753 = vadd.f32 %v6741, %v6745
      %v6754 = vadd.f32 %v6742, %v6745
      %v6755 = vmax.f32 %v6747, 0.0
      %v6756 = vmax.f32 %v6748, 0.0
      %v6757 = vmax.f32 %v6749, 0.0
      %v6758 = vmax.f32 %v6750, 0.0
      %v6759 = vmax.f32 %v6751, 0.0
      %v6760 = vmax.f32 %v6752, 0.0
      %v6761 = vmax.f32 %v6753, 0.0
      %v6762 = vmax.f32 %v6754, 0.0
      %v6763 = vld [vmem:[%s12] sm:$0xff]
      %v6764 = vld [vmem:[%s12 + $0x8] sm:$0xff]
      %v6765 = vld [vmem:[%s12 + $0x10] sm:$0xff]
      %v6766 = vld [vmem:[%s12 + $0x18] sm:$0xff]
      %v6767 = vld [vmem:[%s12 + $0x20] sm:$0xff]
      %v6768 = vld [vmem:[%s12 + $0x28] sm:$0xff]
      %v6769 = vld [vmem:[%s12 + $0x30] sm:$0xff]
      %v6770 = vld [vmem:[%s12 + $0x38] sm:$0xff]
      %v6771 = vld [vmem:[%s12 + $0x40] sm:$0xff]
      %v6772 = vld [vmem:[%s12 + $0x48] sm:$0xff]
      %v6773 = vld [vmem:[%s12 + $0x50] sm:$0xff]
      %v6774 = vld [vmem:[%s12 + $0x58] sm:$0xff]
      %v6775 = vld [vmem:[%s12 + $0x60] sm:$0xff]
      %v6776 = vld [vmem:[%s12 + $0x68] sm:$0xff]
      %v6777 = vld [vmem:[%s12 + $0x70] sm:$0xff]
      %v6778 = vld [vmem:[%s12 + $0x78] sm:$0xff]
      %v6779 = vld [vmem:[%s12 + $0x80] sm:$0xff]
      %v6780 = vld [vmem:[%s12 + $0x88] sm:$0xff]
      %v6781 = vld [vmem:[%s12 + $0x90] sm:$0xff]
      %v6782 = vld [vmem:[%s12 + $0x98] sm:$0xff]
      %v6783 = vld [vmem:[%s12 + $0xa0] sm:$0xff]
      %v6784 = vld [vmem:[%s12 + $0xa8] sm:$0xff]
      %v6785 = vld [vmem:[%s12 + $0xb0] sm:$0xff]
      %v6786 = vld [vmem:[%s12 + $0xb8] sm:$0xff]
      %v6787 = vld [vmem:[%s12 + $0xc0] sm:$0xff]
      %v6788 = vld [vmem:[%s12 + $0xc8] sm:$0xff]
      %v6789 = vld [vmem:[%s12 + $0xd0] sm:$0xff]
      %v6790 = vld [vmem:[%s12 + $0xd8] sm:$0xff]
      %v6791 = vld [vmem:[%s12 + $0xe0] sm:$0xff]
      %v6792 = vld [vmem:[%s12 + $0xe8] sm:$0xff]
      %v6793 = vld [vmem:[%s12 + $0xf0] sm:$0xff]
      %v6794 = vld [vmem:[%s12 + $0xf8] sm:$0xff]
      %v6796 = vsel %vm475, %v6763, 0
      %v6799 = vsel %vm475, %v6764, 0
      %v6802 = vsel %vm475, %v6765, 0
      %v6805 = vsel %vm475, %v6766, 0
      %v6808 = vsel %vm475, %v6767, 0
      %v6811 = vsel %vm475, %v6768, 0
      %v6814 = vsel %vm475, %v6769, 0
      %v6817 = vsel %vm475, %v6770, 0
      %v6820 = vsel %vm475, %v6771, 0
      %v6823 = vsel %vm475, %v6772, 0
      %v6826 = vsel %vm475, %v6773, 0
      %v6829 = vsel %vm475, %v6774, 0
      %v6832 = vsel %vm475, %v6775, 0
      %v6835 = vsel %vm475, %v6776, 0
      %v6838 = vsel %vm475, %v6777, 0
      %v6841 = vsel %vm475, %v6778, 0
      %v6844 = vsel %vm475, %v6779, 0
      %v6847 = vsel %vm475, %v6780, 0
      %v6850 = vsel %vm475, %v6781, 0
      %v6853 = vsel %vm475, %v6782, 0
      %v6856 = vsel %vm475, %v6783, 0
      %v6859 = vsel %vm475, %v6784, 0
      %v6862 = vsel %vm475, %v6785, 0
      %v6865 = vsel %vm475, %v6786, 0
      %v6868 = vsel %vm475, %v6787, 0
      %v6871 = vsel %vm475, %v6788, 0
      %v6874 = vsel %vm475, %v6789, 0
      %v6877 = vsel %vm475, %v6790, 0
      %v6880 = vsel %vm475, %v6791, 0
      %v6883 = vsel %vm475, %v6792, 0
      %v6886 = vsel %vm475, %v6793, 0
      %v6889 = vsel %vm475, %v6794, 0
      %6891 = vmatpush.msra.mxu0 0.0
      %6892 = vmatpush.msra.mxu0 0.0
      %6893 = vmatpush.msra.mxu0 0.0
      %6894 = vmatpush.msra.mxu0 0.0
      %6895 = vmatpush.msra.mxu0 0.0
      %6896 = vmatpush.msra.mxu0 0.0
      %6897 = vmatpush.msra.mxu0 0.0
      %6898 = vmatpush.msra.mxu0 0.0
      %6899 = vmatpush.msra.mxu0 %v6762
      %6900 = vmatpush.msra.mxu0 %v6761
      %6901 = vmatpush.msra.mxu0 %v6760
      %6902 = vmatpush.msra.mxu0 %v6759
      %6903 = vmatpush.msra.mxu0 %v6758
      %6904 = vmatpush.msra.mxu0 %v6757
      %6905 = vmatpush.msra.mxu0 %v6756
      %6906 = vmatpush.msra.mxu0 %v6755
      %6907 = vmatmul.f32.gmra.mxu0 %v6796
      %v6908 = vpop.f32.mrf.mxu0
      %v6909 = vadd.f32 0.0, %v6908
      %6910 = vmatmul.f32.gmra.mxu0 %v6799
      %v6911 = vpop.f32.mrf.mxu0
      %v6912 = vadd.f32 0.0, %v6911
      %6913 = vmatmul.f32.gmra.mxu0 %v6802
      %v6914 = vpop.f32.mrf.mxu0
      %v6915 = vadd.f32 0.0, %v6914
      %6916 = vmatmul.f32.gmra.mxu0 %v6805
      %v6917 = vpop.f32.mrf.mxu0
      %v6918 = vadd.f32 0.0, %v6917
      %6919 = vmatmul.f32.gmra.mxu0 %v6808
      %v6920 = vpop.f32.mrf.mxu0
      %v6921 = vadd.f32 0.0, %v6920
      %6922 = vmatmul.f32.gmra.mxu0 %v6811
      %v6923 = vpop.f32.mrf.mxu0
      %v6924 = vadd.f32 0.0, %v6923
      %6925 = vmatmul.f32.gmra.mxu0 %v6814
      %v6926 = vpop.f32.mrf.mxu0
      %v6927 = vadd.f32 0.0, %v6926
      %6928 = vmatmul.f32.gmra.mxu0 %v6817
      %v6929 = vpop.f32.mrf.mxu0
      %v6930 = vadd.f32 0.0, %v6929
      %6931 = vmatmul.f32.gmra.mxu0 %v6820
      %v6932 = vpop.f32.mrf.mxu0
      %v6933 = vadd.f32 0.0, %v6932
      %6934 = vmatmul.f32.gmra.mxu0 %v6823
      %v6935 = vpop.f32.mrf.mxu0
      %v6936 = vadd.f32 0.0, %v6935
      %6937 = vmatmul.f32.gmra.mxu0 %v6826
      %v6938 = vpop.f32.mrf.mxu0
      %v6939 = vadd.f32 0.0, %v6938
      %6940 = vmatmul.f32.gmra.mxu0 %v6829
      %v6941 = vpop.f32.mrf.mxu0
      %v6942 = vadd.f32 0.0, %v6941
      %6943 = vmatmul.f32.gmra.mxu0 %v6832
      %v6944 = vpop.f32.mrf.mxu0
      %v6945 = vadd.f32 0.0, %v6944
      %6946 = vmatmul.f32.gmra.mxu0 %v6835
      %v6947 = vpop.f32.mrf.mxu0
      %v6948 = vadd.f32 0.0, %v6947
      %6949 = vmatmul.f32.gmra.mxu0 %v6838
      %v6950 = vpop.f32.mrf.mxu0
      %v6951 = vadd.f32 0.0, %v6950
      %6952 = vmatmul.f32.gmra.mxu0 %v6841
      %v6953 = vpop.f32.mrf.mxu0
      %v6954 = vadd.f32 0.0, %v6953
      %6955 = vmatmul.f32.gmra.mxu0 %v6844
      %v6956 = vpop.f32.mrf.mxu0
      %v6957 = vadd.f32 0.0, %v6956
      %6958 = vmatmul.f32.gmra.mxu0 %v6847
      %v6959 = vpop.f32.mrf.mxu0
      %v6960 = vadd.f32 0.0, %v6959
      %6961 = vmatmul.f32.gmra.mxu0 %v6850
      %v6962 = vpop.f32.mrf.mxu0
      %v6963 = vadd.f32 0.0, %v6962
      %6964 = vmatmul.f32.gmra.mxu0 %v6853
      %v6965 = vpop.f32.mrf.mxu0
      %v6966 = vadd.f32 0.0, %v6965
      %6967 = vmatmul.f32.gmra.mxu0 %v6856
      %v6968 = vpop.f32.mrf.mxu0
      %v6969 = vadd.f32 0.0, %v6968
      %6970 = vmatmul.f32.gmra.mxu0 %v6859
      %v6971 = vpop.f32.mrf.mxu0
      %v6972 = vadd.f32 0.0, %v6971
      %6973 = vmatmul.f32.gmra.mxu0 %v6862
      %v6974 = vpop.f32.mrf.mxu0
      %v6975 = vadd.f32 0.0, %v6974
      %6976 = vmatmul.f32.gmra.mxu0 %v6865
      %v6977 = vpop.f32.mrf.mxu0
      %v6978 = vadd.f32 0.0, %v6977
      %6979 = vmatmul.f32.gmra.mxu0 %v6868
      %v6980 = vpop.f32.mrf.mxu0
      %v6981 = vadd.f32 0.0, %v6980
      %6982 = vmatmul.f32.gmra.mxu0 %v6871
      %v6983 = vpop.f32.mrf.mxu0
      %v6984 = vadd.f32 0.0, %v6983
      %6985 = vmatmul.f32.gmra.mxu0 %v6874
      %v6986 = vpop.f32.mrf.mxu0
      %v6987 = vadd.f32 0.0, %v6986
      %6988 = vmatmul.f32.gmra.mxu0 %v6877
      %v6989 = vpop.f32.mrf.mxu0
      %v6990 = vadd.f32 0.0, %v6989
      %6991 = vmatmul.f32.gmra.mxu0 %v6880
      %v6992 = vpop.f32.mrf.mxu0
      %v6993 = vadd.f32 0.0, %v6992
      %6994 = vmatmul.f32.gmra.mxu0 %v6883
      %v6995 = vpop.f32.mrf.mxu0
      %v6996 = vadd.f32 0.0, %v6995
      %6997 = vmatmul.f32.gmra.mxu0 %v6886
      %v6998 = vpop.f32.mrf.mxu0
      %v6999 = vadd.f32 0.0, %v6998
      %7000 = vmatmul.f32.gmra.mxu0 %v6889
      %v7001 = vpop.f32.mrf.mxu0
      %v7002 = vadd.f32 0.0, %v7001
      %7003 = vdwg.mxu0
      %7004 = vst.msk [vmem:[#allocation2] sm:$0xff] %vm475, 0.0
      %7005 = vst.msk [vmem:[#allocation2 + $0x8] sm:$0xff] %vm475, 0.0
      %7006 = vst.msk [vmem:[#allocation2 + $0x10] sm:$0x3] %vm478, 0.0
      %7007 = vst.msk [vmem:[#allocation2 + $0x18] sm:$0xff] %vm475, 0.0
      %7008 = vst.msk [vmem:[#allocation2 + $0x20] sm:$0xff] %vm475, 0.0
      %7009 = vst.msk [vmem:[#allocation2 + $0x28] sm:$0x3] %vm478, 0.0
      %7010 = vst.msk [vmem:[#allocation2 + $0x30] sm:$0xff] %vm475, 0.0
      %7011 = vst.msk [vmem:[#allocation2 + $0x38] sm:$0xff] %vm475, 0.0
      %7012 = vst.msk [vmem:[#allocation2 + $0x40] sm:$0x3] %vm478, 0.0
      %7013 = vst.msk [vmem:[#allocation2 + $0x48] sm:$0xff] %vm475, 0.0
      %7014 = vst.msk [vmem:[#allocation2 + $0x50] sm:$0xff] %vm475, 0.0
      %7015 = vst.msk [vmem:[#allocation2 + $0x58] sm:$0x3] %vm478, 0.0
      %7016 = vst.msk [vmem:[#allocation2 + $0x60] sm:$0xff] %vm475, 0.0
      %7017 = vst.msk [vmem:[#allocation2 + $0x68] sm:$0xff] %vm475, 0.0
      %7018 = vst.msk [vmem:[#allocation2 + $0x70] sm:$0x3] %vm478, 0.0
      %7019 = vst.msk [vmem:[#allocation2 + $0x78] sm:$0xff] %vm475, 0.0
      %7020 = vst.msk [vmem:[#allocation2 + $0x80] sm:$0xff] %vm475, 0.0
      %7021 = vst.msk [vmem:[#allocation2 + $0x88] sm:$0x3] %vm478, 0.0
      %7022 = vst.msk [vmem:[#allocation2 + $0x90] sm:$0xff] %vm475, 0.0
      %7023 = vst.msk [vmem:[#allocation2 + $0x98] sm:$0xff] %vm475, 0.0
      %7024 = vst.msk [vmem:[#allocation2 + $0xa0] sm:$0x3] %vm478, 0.0
      %7025 = vst.msk [vmem:[#allocation2 + $0xa8] sm:$0xff] %vm475, 0.0
      %7026 = vst.msk [vmem:[#allocation2 + $0xb0] sm:$0xff] %vm475, 0.0
      %7027 = vst.msk [vmem:[#allocation2 + $0xb8] sm:$0x3] %vm478, 0.0
      %7028 = vst.msk [vmem:[#allocation2 + $0xc0] sm:$0xff] %vm475, 0.0
      %7029 = vst.msk [vmem:[#allocation2 + $0xc8] sm:$0xff] %vm475, 0.0
      %7030 = vst.msk [vmem:[#allocation2 + $0xd0] sm:$0x3] %vm478, 0.0
      %7031 = vst.msk [vmem:[#allocation2 + $0xd8] sm:$0xff] %vm475, 0.0
      %7032 = vst.msk [vmem:[#allocation2 + $0xe0] sm:$0xff] %vm475, 0.0
      %7033 = vst.msk [vmem:[#allocation2 + $0xe8] sm:$0x3] %vm478, 0.0
      %7034 = vst.msk [vmem:[#allocation2 + $0xf0] sm:$0xff] %vm475, 0.0
      %7035 = vst.msk [vmem:[#allocation2 + $0xf8] sm:$0xff] %vm475, 0.0
      %7036 = vst.msk [vmem:[#allocation2 + $0x100] sm:$0x3] %vm478, 0.0
      %7037 = vst.msk [vmem:[#allocation2 + $0x108] sm:$0xff] %vm475, 0.0
      %7038 = vst.msk [vmem:[#allocation2 + $0x110] sm:$0xff] %vm475, 0.0
      %7039 = vst.msk [vmem:[#allocation2 + $0x118] sm:$0x3] %vm478, 0.0
      %7040 = vst.msk [vmem:[#allocation2 + $0x120] sm:$0xff] %vm475, 0.0
      %7041 = vst.msk [vmem:[#allocation2 + $0x128] sm:$0xff] %vm475, 0.0
      %7042 = vst.msk [vmem:[#allocation2 + $0x130] sm:$0x3] %vm478, 0.0
      %7043 = vst.msk [vmem:[#allocation2 + $0x138] sm:$0xff] %vm475, 0.0
      %7044 = vst.msk [vmem:[#allocation2 + $0x140] sm:$0xff] %vm475, 0.0
      %7045 = vst.msk [vmem:[#allocation2 + $0x148] sm:$0x3] %vm478, 0.0
      %7046 = vst.msk [vmem:[#allocation2 + $0x150] sm:$0xff] %vm475, 0.0
      %7047 = vst.msk [vmem:[#allocation2 + $0x158] sm:$0xff] %vm475, 0.0
      %7048 = vst.msk [vmem:[#allocation2 + $0x160] sm:$0x3] %vm478, 0.0
      %7049 = vst.msk [vmem:[#allocation2 + $0x168] sm:$0xff] %vm475, 0.0
      %7050 = vst.msk [vmem:[#allocation2 + $0x170] sm:$0xff] %vm475, 0.0
      %7051 = vst.msk [vmem:[#allocation2 + $0x178] sm:$0x3] %vm478, 0.0
      %7052 = vst.msk [vmem:[#allocation2 + $0x180] sm:$0xff] %vm475, 0.0
      %7053 = vst.msk [vmem:[#allocation2 + $0x188] sm:$0xff] %vm475, 0.0
      %7054 = vst.msk [vmem:[#allocation2 + $0x190] sm:$0x3] %vm478, 0.0
      %7055 = vst.msk [vmem:[#allocation2 + $0x198] sm:$0xff] %vm475, 0.0
      %7056 = vst.msk [vmem:[#allocation2 + $0x1a0] sm:$0xff] %vm475, 0.0
      %7057 = vst.msk [vmem:[#allocation2 + $0x1a8] sm:$0x3] %vm478, 0.0
      %7058 = vst.msk [vmem:[%s531 + $0x1] sm:$0xff] %vm475, %v6909
      %7059 = vst.msk [vmem:[%s531 + $0x9] sm:$0xff] %vm475, %v6912
      %7060 = vst.msk [vmem:[%s531 + $0x19] sm:$0xff] %vm475, %v6915
      %7061 = vst.msk [vmem:[%s531 + $0x21] sm:$0xff] %vm475, %v6918
      %7062 = vst.msk [vmem:[%s531 + $0x31] sm:$0xff] %vm475, %v6921
      %7063 = vst.msk [vmem:[%s531 + $0x39] sm:$0xff] %vm475, %v6924
      %7064 = vst.msk [vmem:[%s531 + $0x49] sm:$0xff] %vm475, %v6927
      %7065 = vst.msk [vmem:[%s531 + $0x51] sm:$0xff] %vm475, %v6930
      %7066 = vst.msk [vmem:[%s531 + $0x61] sm:$0xff] %vm475, %v6933
      %7067 = vst.msk [vmem:[%s531 + $0x69] sm:$0xff] %vm475, %v6936
      %7068 = vst.msk [vmem:[%s531 + $0x79] sm:$0xff] %vm475, %v6939
      %7069 = vst.msk [vmem:[%s531 + $0x81] sm:$0xff] %vm475, %v6942
      %7070 = vst.msk [vmem:[%s531 + $0x91] sm:$0xff] %vm475, %v6945
      %7071 = vst.msk [vmem:[%s531 + $0x99] sm:$0xff] %vm475, %v6948
      %7072 = vst.msk [vmem:[%s531 + $0xa9] sm:$0xff] %vm475, %v6951
      %7073 = vst.msk [vmem:[%s531 + $0xb1] sm:$0xff] %vm475, %v6954
      %7074 = vst.msk [vmem:[%s531 + $0xc1] sm:$0xff] %vm475, %v6957
      %7075 = vst.msk [vmem:[%s531 + $0xc9] sm:$0xff] %vm475, %v6960
      %7076 = vst.msk [vmem:[%s531 + $0xd9] sm:$0xff] %vm475, %v6963
      %7077 = vst.msk [vmem:[%s531 + $0xe1] sm:$0xff] %vm475, %v6966
      %7078 = vst.msk [vmem:[%s531 + $0xf1] sm:$0xff] %vm475, %v6969
      %7079 = vst.msk [vmem:[%s531 + $0xf9] sm:$0xff] %vm475, %v6972
      %7080 = vst.msk [vmem:[%s531 + $0x109] sm:$0xff] %vm475, %v6975
      %7081 = vst.msk [vmem:[%s531 + $0x111] sm:$0xff] %vm475, %v6978
      %7082 = vst.msk [vmem:[%s531 + $0x121] sm:$0xff] %vm475, %v6981
      %7083 = vst.msk [vmem:[%s531 + $0x129] sm:$0xff] %vm475, %v6984
      %7084 = vst.msk [vmem:[%s531 + $0x139] sm:$0xff] %vm475, %v6987
      %7085 = vst.msk [vmem:[%s531 + $0x141] sm:$0xff] %vm475, %v6990
      %7086 = vst.msk [vmem:[%s531 + $0x151] sm:$0xff] %vm475, %v6993
      %7087 = vst.msk [vmem:[%s531 + $0x159] sm:$0xff] %vm475, %v6996
      %7088 = vst.msk [vmem:[%s531 + $0x169] sm:$0xff] %vm475, %v6999
      %7089 = vst.msk [vmem:[%s531 + $0x171] sm:$0xff] %vm475, %v7002
      %v7090 = vld [vmem:[#allocation2] sm:$0xff]
      %v7091 = vld [vmem:[#allocation2 + $0x8] sm:$0xff]
      %v7092 = vld [vmem:[#allocation2 + $0x18] sm:$0xff]
      %v7093 = vld [vmem:[#allocation2 + $0x20] sm:$0xff]
      %v7094 = vld [vmem:[#allocation2 + $0x30] sm:$0xff]
      %v7095 = vld [vmem:[#allocation2 + $0x38] sm:$0xff]
      %v7096 = vld [vmem:[#allocation2 + $0x48] sm:$0xff]
      %v7097 = vld [vmem:[#allocation2 + $0x50] sm:$0xff]
      %v7098 = vld [vmem:[#allocation2 + $0x60] sm:$0xff]
      %v7099 = vld [vmem:[#allocation2 + $0x68] sm:$0xff]
      %v7100 = vld [vmem:[#allocation2 + $0x78] sm:$0xff]
      %v7101 = vld [vmem:[#allocation2 + $0x80] sm:$0xff]
      %v7102 = vld [vmem:[#allocation2 + $0x90] sm:$0xff]
      %v7103 = vld [vmem:[#allocation2 + $0x98] sm:$0xff]
      %v7104 = vld [vmem:[#allocation2 + $0xa8] sm:$0xff]
      %v7105 = vld [vmem:[#allocation2 + $0xb0] sm:$0xff]
      %v7106 = vld [vmem:[#allocation2 + $0xc0] sm:$0xff]
      %v7107 = vld [vmem:[#allocation2 + $0xc8] sm:$0xff]
      %v7108 = vld [vmem:[#allocation2 + $0xd8] sm:$0xff]
      %v7109 = vld [vmem:[#allocation2 + $0xe0] sm:$0xff]
      %v7110 = vld [vmem:[#allocation2 + $0xf0] sm:$0xff]
      %v7111 = vld [vmem:[#allocation2 + $0xf8] sm:$0xff]
      %v7112 = vld [vmem:[#allocation2 + $0x108] sm:$0xff]
      %v7113 = vld [vmem:[#allocation2 + $0x110] sm:$0xff]
      %v7114 = vld [vmem:[#allocation2 + $0x120] sm:$0xff]
      %v7115 = vld [vmem:[#allocation2 + $0x128] sm:$0xff]
      %v7116 = vld [vmem:[#allocation2 + $0x138] sm:$0xff]
      %v7117 = vld [vmem:[#allocation2 + $0x140] sm:$0xff]
      %v7118 = vld [vmem:[#allocation2 + $0x150] sm:$0xff]
      %v7119 = vld [vmem:[#allocation2 + $0x158] sm:$0xff]
      %v7120 = vld [vmem:[#allocation2 + $0x168] sm:$0xff]
      %v7121 = vld [vmem:[#allocation2 + $0x170] sm:$0xff]
      %v7122 = vld [vmem:[%s7] sm:$0xff]
      %v7123 = vld [vmem:[%s7 + $0x8] sm:$0xff]
      %v7124 = vld [vmem:[%s7 + $0x10] sm:$0xff]
      %v7125 = vld [vmem:[%s7 + $0x18] sm:$0xff]
      %v7126 = vld [vmem:[%s7 + $0x20] sm:$0xff]
      %v7127 = vld [vmem:[%s7 + $0x28] sm:$0xff]
      %v7128 = vld [vmem:[%s7 + $0x30] sm:$0xff]
      %v7129 = vld [vmem:[%s7 + $0x38] sm:$0xff]
      %v7130 = vld [vmem:[#allocation2 + $0x1] sm:$0xff]
      %v7131 = vld [vmem:[#allocation2 + $0x9] sm:$0xff]
      %v7132 = vld [vmem:[#allocation2 + $0x19] sm:$0xff]
      %v7133 = vld [vmem:[#allocation2 + $0x21] sm:$0xff]
      %v7134 = vld [vmem:[#allocation2 + $0x31] sm:$0xff]
      %v7135 = vld [vmem:[#allocation2 + $0x39] sm:$0xff]
      %v7136 = vld [vmem:[#allocation2 + $0x49] sm:$0xff]
      %v7137 = vld [vmem:[#allocation2 + $0x51] sm:$0xff]
      %v7138 = vld [vmem:[#allocation2 + $0x61] sm:$0xff]
      %v7139 = vld [vmem:[#allocation2 + $0x69] sm:$0xff]
      %v7140 = vld [vmem:[#allocation2 + $0x79] sm:$0xff]
      %v7141 = vld [vmem:[#allocation2 + $0x81] sm:$0xff]
      %v7142 = vld [vmem:[#allocation2 + $0x91] sm:$0xff]
      %v7143 = vld [vmem:[#allocation2 + $0x99] sm:$0xff]
      %v7144 = vld [vmem:[#allocation2 + $0xa9] sm:$0xff]
      %v7145 = vld [vmem:[#allocation2 + $0xb1] sm:$0xff]
      %v7146 = vld [vmem:[#allocation2 + $0xc1] sm:$0xff]
      %v7147 = vld [vmem:[#allocation2 + $0xc9] sm:$0xff]
      %v7148 = vld [vmem:[#allocation2 + $0xd9] sm:$0xff]
      %v7149 = vld [vmem:[#allocation2 + $0xe1] sm:$0xff]
      %v7150 = vld [vmem:[#allocation2 + $0xf1] sm:$0xff]
      %v7151 = vld [vmem:[#allocation2 + $0xf9] sm:$0xff]
      %v7152 = vld [vmem:[#allocation2 + $0x109] sm:$0xff]
      %v7153 = vld [vmem:[#allocation2 + $0x111] sm:$0xff]
      %v7154 = vld [vmem:[#allocation2 + $0x121] sm:$0xff]
      %v7155 = vld [vmem:[#allocation2 + $0x129] sm:$0xff]
      %v7156 = vld [vmem:[#allocation2 + $0x139] sm:$0xff]
      %v7157 = vld [vmem:[#allocation2 + $0x141] sm:$0xff]
      %v7158 = vld [vmem:[#allocation2 + $0x151] sm:$0xff]
      %v7159 = vld [vmem:[#allocation2 + $0x159] sm:$0xff]
      %v7160 = vld [vmem:[#allocation2 + $0x169] sm:$0xff]
      %v7161 = vld [vmem:[#allocation2 + $0x171] sm:$0xff]
      %s7162 = scalar_lea.vmem %s7, 64
      %v7163 = vld [vmem:[%s7162] sm:$0xff]
      %v7164 = vld [vmem:[%s7162 + $0x8] sm:$0xff]
      %v7165 = vld [vmem:[%s7162 + $0x10] sm:$0xff]
      %v7166 = vld [vmem:[%s7162 + $0x18] sm:$0xff]
      %v7167 = vld [vmem:[%s7162 + $0x20] sm:$0xff]
      %v7168 = vld [vmem:[%s7162 + $0x28] sm:$0xff]
      %v7169 = vld [vmem:[%s7162 + $0x30] sm:$0xff]
      %v7170 = vld [vmem:[%s7162 + $0x38] sm:$0xff]
      %v7172 = vsel %vm475, %v7130, 0
      %v7175 = vsel %vm475, %v7131, 0
      %v7178 = vsel %vm475, %v7132, 0
      %v7181 = vsel %vm475, %v7133, 0
      %v7184 = vsel %vm475, %v7134, 0
      %v7187 = vsel %vm475, %v7135, 0
      %v7190 = vsel %vm475, %v7136, 0
      %v7193 = vsel %vm475, %v7137, 0
      %v7196 = vsel %vm475, %v7138, 0
      %v7199 = vsel %vm475, %v7139, 0
      %v7202 = vsel %vm475, %v7140, 0
      %v7205 = vsel %vm475, %v7141, 0
      %v7208 = vsel %vm475, %v7142, 0
      %v7211 = vsel %vm475, %v7143, 0
      %v7214 = vsel %vm475, %v7144, 0
      %v7217 = vsel %vm475, %v7145, 0
      %v7220 = vsel %vm475, %v7146, 0
      %v7223 = vsel %vm475, %v7147, 0
      %v7226 = vsel %vm475, %v7148, 0
      %v7229 = vsel %vm475, %v7149, 0
      %v7232 = vsel %vm475, %v7150, 0
      %v7235 = vsel %vm475, %v7151, 0
      %v7238 = vsel %vm475, %v7152, 0
      %v7241 = vsel %vm475, %v7153, 0
      %v7244 = vsel %vm475, %v7154, 0
      %v7247 = vsel %vm475, %v7155, 0
      %v7250 = vsel %vm475, %v7156, 0
      %v7253 = vsel %vm475, %v7157, 0
      %v7256 = vsel %vm475, %v7158, 0
      %v7259 = vsel %vm475, %v7159, 0
      %v7262 = vsel %vm475, %v7160, 0
      %v7265 = vsel %vm475, %v7161, 0
      %7267 = vmatpush.msra.mxu0 0.0
      %7268 = vmatpush.msra.mxu0 0.0
      %7269 = vmatpush.msra.mxu0 0.0
      %7270 = vmatpush.msra.mxu0 0.0
      %7271 = vmatpush.msra.mxu0 0.0
      %7272 = vmatpush.msra.mxu0 0.0
      %7273 = vmatpush.msra.mxu0 0.0
      %7274 = vmatpush.msra.mxu0 0.0
      %7275 = vmatpush.msra.mxu0 %v7170
      %7276 = vmatpush.msra.mxu0 %v7169
      %7277 = vmatpush.msra.mxu0 %v7168
      %7278 = vmatpush.msra.mxu0 %v7167
      %7279 = vmatpush.msra.mxu0 %v7166
      %7280 = vmatpush.msra.mxu0 %v7165
      %7281 = vmatpush.msra.mxu0 %v7164
      %7282 = vmatpush.msra.mxu0 %v7163
      %7283 = vmatmul.f32.gmra.mxu0 %v7172
      %v7284 = vpop.f32.mrf.mxu0
      %v7285 = vadd.f32 0.0, %v7284
      %7286 = vmatmul.f32.gmra.mxu0 %v7175
      %v7287 = vpop.f32.mrf.mxu0
      %v7288 = vadd.f32 0.0, %v7287
      %7289 = vmatmul.f32.gmra.mxu0 %v7178
      %v7290 = vpop.f32.mrf.mxu0
      %v7291 = vadd.f32 0.0, %v7290
      %7292 = vmatmul.f32.gmra.mxu0 %v7181
      %v7293 = vpop.f32.mrf.mxu0
      %v7294 = vadd.f32 0.0, %v7293
      %7295 = vmatmul.f32.gmra.mxu0 %v7184
      %v7296 = vpop.f32.mrf.mxu0
      %v7297 = vadd.f32 0.0, %v7296
      %7298 = vmatmul.f32.gmra.mxu0 %v7187
      %v7299 = vpop.f32.mrf.mxu0
      %v7300 = vadd.f32 0.0, %v7299
      %7301 = vmatmul.f32.gmra.mxu0 %v7190
      %v7302 = vpop.f32.mrf.mxu0
      %v7303 = vadd.f32 0.0, %v7302
      %7304 = vmatmul.f32.gmra.mxu0 %v7193
      %v7305 = vpop.f32.mrf.mxu0
      %v7306 = vadd.f32 0.0, %v7305
      %7307 = vmatmul.f32.gmra.mxu0 %v7196
      %v7308 = vpop.f32.mrf.mxu0
      %v7309 = vadd.f32 0.0, %v7308
      %7310 = vmatmul.f32.gmra.mxu0 %v7199
      %v7311 = vpop.f32.mrf.mxu0
      %v7312 = vadd.f32 0.0, %v7311
      %7313 = vmatmul.f32.gmra.mxu0 %v7202
      %v7314 = vpop.f32.mrf.mxu0
      %v7315 = vadd.f32 0.0, %v7314
      %7316 = vmatmul.f32.gmra.mxu0 %v7205
      %v7317 = vpop.f32.mrf.mxu0
      %v7318 = vadd.f32 0.0, %v7317
      %7319 = vmatmul.f32.gmra.mxu0 %v7208
      %v7320 = vpop.f32.mrf.mxu0
      %v7321 = vadd.f32 0.0, %v7320
      %7322 = vmatmul.f32.gmra.mxu0 %v7211
      %v7323 = vpop.f32.mrf.mxu0
      %v7324 = vadd.f32 0.0, %v7323
      %7325 = vmatmul.f32.gmra.mxu0 %v7214
      %v7326 = vpop.f32.mrf.mxu0
      %v7327 = vadd.f32 0.0, %v7326
      %7328 = vmatmul.f32.gmra.mxu0 %v7217
      %v7329 = vpop.f32.mrf.mxu0
      %v7330 = vadd.f32 0.0, %v7329
      %7331 = vmatmul.f32.gmra.mxu0 %v7220
      %v7332 = vpop.f32.mrf.mxu0
      %v7333 = vadd.f32 0.0, %v7332
      %7334 = vmatmul.f32.gmra.mxu0 %v7223
      %v7335 = vpop.f32.mrf.mxu0
      %v7336 = vadd.f32 0.0, %v7335
      %7337 = vmatmul.f32.gmra.mxu0 %v7226
      %v7338 = vpop.f32.mrf.mxu0
      %v7339 = vadd.f32 0.0, %v7338
      %7340 = vmatmul.f32.gmra.mxu0 %v7229
      %v7341 = vpop.f32.mrf.mxu0
      %v7342 = vadd.f32 0.0, %v7341
      %7343 = vmatmul.f32.gmra.mxu0 %v7232
      %v7344 = vpop.f32.mrf.mxu0
      %v7345 = vadd.f32 0.0, %v7344
      %7346 = vmatmul.f32.gmra.mxu0 %v7235
      %v7347 = vpop.f32.mrf.mxu0
      %v7348 = vadd.f32 0.0, %v7347
      %7349 = vmatmul.f32.gmra.mxu0 %v7238
      %v7350 = vpop.f32.mrf.mxu0
      %v7351 = vadd.f32 0.0, %v7350
      %7352 = vmatmul.f32.gmra.mxu0 %v7241
      %v7353 = vpop.f32.mrf.mxu0
      %v7354 = vadd.f32 0.0, %v7353
      %7355 = vmatmul.f32.gmra.mxu0 %v7244
      %v7356 = vpop.f32.mrf.mxu0
      %v7357 = vadd.f32 0.0, %v7356
      %7358 = vmatmul.f32.gmra.mxu0 %v7247
      %v7359 = vpop.f32.mrf.mxu0
      %v7360 = vadd.f32 0.0, %v7359
      %7361 = vmatmul.f32.gmra.mxu0 %v7250
      %v7362 = vpop.f32.mrf.mxu0
      %v7363 = vadd.f32 0.0, %v7362
      %7364 = vmatmul.f32.gmra.mxu0 %v7253
      %v7365 = vpop.f32.mrf.mxu0
      %v7366 = vadd.f32 0.0, %v7365
      %7367 = vmatmul.f32.gmra.mxu0 %v7256
      %v7368 = vpop.f32.mrf.mxu0
      %v7369 = vadd.f32 0.0, %v7368
      %7370 = vmatmul.f32.gmra.mxu0 %v7259
      %v7371 = vpop.f32.mrf.mxu0
      %v7372 = vadd.f32 0.0, %v7371
      %7373 = vmatmul.f32.gmra.mxu0 %v7262
      %v7374 = vpop.f32.mrf.mxu0
      %v7375 = vadd.f32 0.0, %v7374
      %7376 = vmatmul.f32.gmra.mxu0 %v7265
      %v7377 = vpop.f32.mrf.mxu0
      %v7378 = vadd.f32 0.0, %v7377
      %7379 = vdwg.mxu0
      %v7381 = vsel %vm475, %v7090, 0
      %v7384 = vsel %vm475, %v7091, 0
      %v7387 = vsel %vm475, %v7092, 0
      %v7390 = vsel %vm475, %v7093, 0
      %v7393 = vsel %vm475, %v7094, 0
      %v7396 = vsel %vm475, %v7095, 0
      %v7399 = vsel %vm475, %v7096, 0
      %v7402 = vsel %vm475, %v7097, 0
      %v7405 = vsel %vm475, %v7098, 0
      %v7408 = vsel %vm475, %v7099, 0
      %v7411 = vsel %vm475, %v7100, 0
      %v7414 = vsel %vm475, %v7101, 0
      %v7417 = vsel %vm475, %v7102, 0
      %v7420 = vsel %vm475, %v7103, 0
      %v7423 = vsel %vm475, %v7104, 0
      %v7426 = vsel %vm475, %v7105, 0
      %v7429 = vsel %vm475, %v7106, 0
      %v7432 = vsel %vm475, %v7107, 0
      %v7435 = vsel %vm475, %v7108, 0
      %v7438 = vsel %vm475, %v7109, 0
      %v7441 = vsel %vm475, %v7110, 0
      %v7444 = vsel %vm475, %v7111, 0
      %v7447 = vsel %vm475, %v7112, 0
      %v7450 = vsel %vm475, %v7113, 0
      %v7453 = vsel %vm475, %v7114, 0
      %v7456 = vsel %vm475, %v7115, 0
      %v7459 = vsel %vm475, %v7116, 0
      %v7462 = vsel %vm475, %v7117, 0
      %v7465 = vsel %vm475, %v7118, 0
      %v7468 = vsel %vm475, %v7119, 0
      %v7471 = vsel %vm475, %v7120, 0
      %v7474 = vsel %vm475, %v7121, 0
      %7476 = vmatpush.msra.mxu0 0.0
      %7477 = vmatpush.msra.mxu0 0.0
      %7478 = vmatpush.msra.mxu0 0.0
      %7479 = vmatpush.msra.mxu0 0.0
      %7480 = vmatpush.msra.mxu0 0.0
      %7481 = vmatpush.msra.mxu0 0.0
      %7482 = vmatpush.msra.mxu0 0.0
      %7483 = vmatpush.msra.mxu0 0.0
      %7484 = vmatpush.msra.mxu0 %v7129
      %7485 = vmatpush.msra.mxu0 %v7128
      %7486 = vmatpush.msra.mxu0 %v7127
      %7487 = vmatpush.msra.mxu0 %v7126
      %7488 = vmatpush.msra.mxu0 %v7125
      %7489 = vmatpush.msra.mxu0 %v7124
      %7490 = vmatpush.msra.mxu0 %v7123
      %7491 = vmatpush.msra.mxu0 %v7122
      %7492 = vmatmul.f32.gmra.mxu0 %v7381
      %v7493 = vpop.f32.mrf.mxu0
      %v7494 = vadd.f32 %v7285, %v7493
      %7495 = vmatmul.f32.gmra.mxu0 %v7384
      %v7496 = vpop.f32.mrf.mxu0
      %v7497 = vadd.f32 %v7288, %v7496
      %7498 = vmatmul.f32.gmra.mxu0 %v7387
      %v7499 = vpop.f32.mrf.mxu0
      %v7500 = vadd.f32 %v7291, %v7499
      %7501 = vmatmul.f32.gmra.mxu0 %v7390
      %v7502 = vpop.f32.mrf.mxu0
      %v7503 = vadd.f32 %v7294, %v7502
      %7504 = vmatmul.f32.gmra.mxu0 %v7393
      %v7505 = vpop.f32.mrf.mxu0
      %v7506 = vadd.f32 %v7297, %v7505
      %7507 = vmatmul.f32.gmra.mxu0 %v7396
      %v7508 = vpop.f32.mrf.mxu0
      %v7509 = vadd.f32 %v7300, %v7508
      %7510 = vmatmul.f32.gmra.mxu0 %v7399
      %v7511 = vpop.f32.mrf.mxu0
      %v7512 = vadd.f32 %v7303, %v7511
      %7513 = vmatmul.f32.gmra.mxu0 %v7402
      %v7514 = vpop.f32.mrf.mxu0
      %v7515 = vadd.f32 %v7306, %v7514
      %7516 = vmatmul.f32.gmra.mxu0 %v7405
      %v7517 = vpop.f32.mrf.mxu0
      %v7518 = vadd.f32 %v7309, %v7517
      %7519 = vmatmul.f32.gmra.mxu0 %v7408
      %v7520 = vpop.f32.mrf.mxu0
      %v7521 = vadd.f32 %v7312, %v7520
      %7522 = vmatmul.f32.gmra.mxu0 %v7411
      %v7523 = vpop.f32.mrf.mxu0
      %v7524 = vadd.f32 %v7315, %v7523
      %7525 = vmatmul.f32.gmra.mxu0 %v7414
      %v7526 = vpop.f32.mrf.mxu0
      %v7527 = vadd.f32 %v7318, %v7526
      %7528 = vmatmul.f32.gmra.mxu0 %v7417
      %v7529 = vpop.f32.mrf.mxu0
      %v7530 = vadd.f32 %v7321, %v7529
      %7531 = vmatmul.f32.gmra.mxu0 %v7420
      %v7532 = vpop.f32.mrf.mxu0
      %v7533 = vadd.f32 %v7324, %v7532
      %7534 = vmatmul.f32.gmra.mxu0 %v7423
      %v7535 = vpop.f32.mrf.mxu0
      %v7536 = vadd.f32 %v7327, %v7535
      %7537 = vmatmul.f32.gmra.mxu0 %v7426
      %v7538 = vpop.f32.mrf.mxu0
      %v7539 = vadd.f32 %v7330, %v7538
      %7540 = vmatmul.f32.gmra.mxu0 %v7429
      %v7541 = vpop.f32.mrf.mxu0
      %v7542 = vadd.f32 %v7333, %v7541
      %7543 = vmatmul.f32.gmra.mxu0 %v7432
      %v7544 = vpop.f32.mrf.mxu0
      %v7545 = vadd.f32 %v7336, %v7544
      %7546 = vmatmul.f32.gmra.mxu0 %v7435
      %v7547 = vpop.f32.mrf.mxu0
      %v7548 = vadd.f32 %v7339, %v7547
      %7549 = vmatmul.f32.gmra.mxu0 %v7438
      %v7550 = vpop.f32.mrf.mxu0
      %v7551 = vadd.f32 %v7342, %v7550
      %7552 = vmatmul.f32.gmra.mxu0 %v7441
      %v7553 = vpop.f32.mrf.mxu0
      %v7554 = vadd.f32 %v7345, %v7553
      %7555 = vmatmul.f32.gmra.mxu0 %v7444
      %v7556 = vpop.f32.mrf.mxu0
      %v7557 = vadd.f32 %v7348, %v7556
      %7558 = vmatmul.f32.gmra.mxu0 %v7447
      %v7559 = vpop.f32.mrf.mxu0
      %v7560 = vadd.f32 %v7351, %v7559
      %7561 = vmatmul.f32.gmra.mxu0 %v7450
      %v7562 = vpop.f32.mrf.mxu0
      %v7563 = vadd.f32 %v7354, %v7562
      %7564 = vmatmul.f32.gmra.mxu0 %v7453
      %v7565 = vpop.f32.mrf.mxu0
      %v7566 = vadd.f32 %v7357, %v7565
      %7567 = vmatmul.f32.gmra.mxu0 %v7456
      %v7568 = vpop.f32.mrf.mxu0
      %v7569 = vadd.f32 %v7360, %v7568
      %7570 = vmatmul.f32.gmra.mxu0 %v7459
      %v7571 = vpop.f32.mrf.mxu0
      %v7572 = vadd.f32 %v7363, %v7571
      %7573 = vmatmul.f32.gmra.mxu0 %v7462
      %v7574 = vpop.f32.mrf.mxu0
      %v7575 = vadd.f32 %v7366, %v7574
      %7576 = vmatmul.f32.gmra.mxu0 %v7465
      %v7577 = vpop.f32.mrf.mxu0
      %v7578 = vadd.f32 %v7369, %v7577
      %7579 = vmatmul.f32.gmra.mxu0 %v7468
      %v7580 = vpop.f32.mrf.mxu0
      %v7581 = vadd.f32 %v7372, %v7580
      %7582 = vmatmul.f32.gmra.mxu0 %v7471
      %v7583 = vpop.f32.mrf.mxu0
      %v7584 = vadd.f32 %v7375, %v7583
      %7585 = vmatmul.f32.gmra.mxu0 %v7474
      %v7586 = vpop.f32.mrf.mxu0
      %v7587 = vadd.f32 %v7378, %v7586
      %7588 = vdwg.mxu0
      %v7589 = vld [vmem:[#allocation2 + $0x2] sm:$0xff]
      %v7590 = vld [vmem:[#allocation2 + $0xa] sm:$0xff]
      %v7591 = vld [vmem:[#allocation2 + $0x1a] sm:$0xff]
      %v7592 = vld [vmem:[#allocation2 + $0x22] sm:$0xff]
      %v7593 = vld [vmem:[#allocation2 + $0x32] sm:$0xff]
      %v7594 = vld [vmem:[#allocation2 + $0x3a] sm:$0xff]
      %v7595 = vld [vmem:[#allocation2 + $0x4a] sm:$0xff]
      %v7596 = vld [vmem:[#allocation2 + $0x52] sm:$0xff]
      %v7597 = vld [vmem:[#allocation2 + $0x62] sm:$0xff]
      %v7598 = vld [vmem:[#allocation2 + $0x6a] sm:$0xff]
      %v7599 = vld [vmem:[#allocation2 + $0x7a] sm:$0xff]
      %v7600 = vld [vmem:[#allocation2 + $0x82] sm:$0xff]
      %v7601 = vld [vmem:[#allocation2 + $0x92] sm:$0xff]
      %v7602 = vld [vmem:[#allocation2 + $0x9a] sm:$0xff]
      %v7603 = vld [vmem:[#allocation2 + $0xaa] sm:$0xff]
      %v7604 = vld [vmem:[#allocation2 + $0xb2] sm:$0xff]
      %v7605 = vld [vmem:[#allocation2 + $0xc2] sm:$0xff]
      %v7606 = vld [vmem:[#allocation2 + $0xca] sm:$0xff]
      %v7607 = vld [vmem:[#allocation2 + $0xda] sm:$0xff]
      %v7608 = vld [vmem:[#allocation2 + $0xe2] sm:$0xff]
      %v7609 = vld [vmem:[#allocation2 + $0xf2] sm:$0xff]
      %v7610 = vld [vmem:[#allocation2 + $0xfa] sm:$0xff]
      %v7611 = vld [vmem:[#allocation2 + $0x10a] sm:$0xff]
      %v7612 = vld [vmem:[#allocation2 + $0x112] sm:$0xff]
      %v7613 = vld [vmem:[#allocation2 + $0x122] sm:$0xff]
      %v7614 = vld [vmem:[#allocation2 + $0x12a] sm:$0xff]
      %v7615 = vld [vmem:[#allocation2 + $0x13a] sm:$0xff]
      %v7616 = vld [vmem:[#allocation2 + $0x142] sm:$0xff]
      %v7617 = vld [vmem:[#allocation2 + $0x152] sm:$0xff]
      %v7618 = vld [vmem:[#allocation2 + $0x15a] sm:$0xff]
      %v7619 = vld [vmem:[#allocation2 + $0x16a] sm:$0xff]
      %v7620 = vld [vmem:[#allocation2 + $0x172] sm:$0xff]
      %s7621 = scalar_lea.vmem %s7, 128
      %v7622 = vld [vmem:[%s7621] sm:$0xff]
      %v7623 = vld [vmem:[%s7621 + $0x8] sm:$0xff]
      %v7624 = vld [vmem:[%s7621 + $0x10] sm:$0xff]
      %v7625 = vld [vmem:[%s7621 + $0x18] sm:$0xff]
      %v7626 = vld [vmem:[%s7621 + $0x20] sm:$0xff]
      %v7627 = vld [vmem:[%s7621 + $0x28] sm:$0xff]
      %v7628 = vld [vmem:[%s7621 + $0x30] sm:$0xff]
      %v7629 = vld [vmem:[%s7621 + $0x38] sm:$0xff]
      %v7631 = vsel %vm475, %v7589, 0
      %v7634 = vsel %vm475, %v7590, 0
      %v7637 = vsel %vm475, %v7591, 0
      %v7640 = vsel %vm475, %v7592, 0
      %v7643 = vsel %vm475, %v7593, 0
      %v7646 = vsel %vm475, %v7594, 0
      %v7649 = vsel %vm475, %v7595, 0
      %v7652 = vsel %vm475, %v7596, 0
      %v7655 = vsel %vm475, %v7597, 0
      %v7658 = vsel %vm475, %v7598, 0
      %v7661 = vsel %vm475, %v7599, 0
      %v7664 = vsel %vm475, %v7600, 0
      %v7667 = vsel %vm475, %v7601, 0
      %v7670 = vsel %vm475, %v7602, 0
      %v7673 = vsel %vm475, %v7603, 0
      %v7676 = vsel %vm475, %v7604, 0
      %v7679 = vsel %vm475, %v7605, 0
      %v7682 = vsel %vm475, %v7606, 0
      %v7685 = vsel %vm475, %v7607, 0
      %v7688 = vsel %vm475, %v7608, 0
      %v7691 = vsel %vm475, %v7609, 0
      %v7694 = vsel %vm475, %v7610, 0
      %v7697 = vsel %vm475, %v7611, 0
      %v7700 = vsel %vm475, %v7612, 0
      %v7703 = vsel %vm475, %v7613, 0
      %v7706 = vsel %vm475, %v7614, 0
      %v7709 = vsel %vm475, %v7615, 0
      %v7712 = vsel %vm475, %v7616, 0
      %v7715 = vsel %vm475, %v7617, 0
      %v7718 = vsel %vm475, %v7618, 0
      %v7721 = vsel %vm475, %v7619, 0
      %v7724 = vsel %vm475, %v7620, 0
      %7726 = vmatpush.msra.mxu0 0.0
      %7727 = vmatpush.msra.mxu0 0.0
      %7728 = vmatpush.msra.mxu0 0.0
      %7729 = vmatpush.msra.mxu0 0.0
      %7730 = vmatpush.msra.mxu0 0.0
      %7731 = vmatpush.msra.mxu0 0.0
      %7732 = vmatpush.msra.mxu0 0.0
      %7733 = vmatpush.msra.mxu0 0.0
      %7734 = vmatpush.msra.mxu0 %v7629
      %7735 = vmatpush.msra.mxu0 %v7628
      %7736 = vmatpush.msra.mxu0 %v7627
      %7737 = vmatpush.msra.mxu0 %v7626
      %7738 = vmatpush.msra.mxu0 %v7625
      %7739 = vmatpush.msra.mxu0 %v7624
      %7740 = vmatpush.msra.mxu0 %v7623
      %7741 = vmatpush.msra.mxu0 %v7622
      %7742 = vmatmul.f32.gmra.mxu0 %v7631
      %v7743 = vpop.f32.mrf.mxu0
      %v7744 = vadd.f32 0.0, %v7743
      %7745 = vmatmul.f32.gmra.mxu0 %v7634
      %v7746 = vpop.f32.mrf.mxu0
      %v7747 = vadd.f32 0.0, %v7746
      %7748 = vmatmul.f32.gmra.mxu0 %v7637
      %v7749 = vpop.f32.mrf.mxu0
      %v7750 = vadd.f32 0.0, %v7749
      %7751 = vmatmul.f32.gmra.mxu0 %v7640
      %v7752 = vpop.f32.mrf.mxu0
      %v7753 = vadd.f32 0.0, %v7752
      %7754 = vmatmul.f32.gmra.mxu0 %v7643
      %v7755 = vpop.f32.mrf.mxu0
      %v7756 = vadd.f32 0.0, %v7755
      %7757 = vmatmul.f32.gmra.mxu0 %v7646
      %v7758 = vpop.f32.mrf.mxu0
      %v7759 = vadd.f32 0.0, %v7758
      %7760 = vmatmul.f32.gmra.mxu0 %v7649
      %v7761 = vpop.f32.mrf.mxu0
      %v7762 = vadd.f32 0.0, %v7761
      %7763 = vmatmul.f32.gmra.mxu0 %v7652
      %v7764 = vpop.f32.mrf.mxu0
      %v7765 = vadd.f32 0.0, %v7764
      %7766 = vmatmul.f32.gmra.mxu0 %v7655
      %v7767 = vpop.f32.mrf.mxu0
      %v7768 = vadd.f32 0.0, %v7767
      %7769 = vmatmul.f32.gmra.mxu0 %v7658
      %v7770 = vpop.f32.mrf.mxu0
      %v7771 = vadd.f32 0.0, %v7770
      %7772 = vmatmul.f32.gmra.mxu0 %v7661
      %v7773 = vpop.f32.mrf.mxu0
      %v7774 = vadd.f32 0.0, %v7773
      %7775 = vmatmul.f32.gmra.mxu0 %v7664
      %v7776 = vpop.f32.mrf.mxu0
      %v7777 = vadd.f32 0.0, %v7776
      %7778 = vmatmul.f32.gmra.mxu0 %v7667
      %v7779 = vpop.f32.mrf.mxu0
      %v7780 = vadd.f32 0.0, %v7779
      %7781 = vmatmul.f32.gmra.mxu0 %v7670
      %v7782 = vpop.f32.mrf.mxu0
      %v7783 = vadd.f32 0.0, %v7782
      %7784 = vmatmul.f32.gmra.mxu0 %v7673
      %v7785 = vpop.f32.mrf.mxu0
      %v7786 = vadd.f32 0.0, %v7785
      %7787 = vmatmul.f32.gmra.mxu0 %v7676
      %v7788 = vpop.f32.mrf.mxu0
      %v7789 = vadd.f32 0.0, %v7788
      %7790 = vmatmul.f32.gmra.mxu0 %v7679
      %v7791 = vpop.f32.mrf.mxu0
      %v7792 = vadd.f32 0.0, %v7791
      %7793 = vmatmul.f32.gmra.mxu0 %v7682
      %v7794 = vpop.f32.mrf.mxu0
      %v7795 = vadd.f32 0.0, %v7794
      %7796 = vmatmul.f32.gmra.mxu0 %v7685
      %v7797 = vpop.f32.mrf.mxu0
      %v7798 = vadd.f32 0.0, %v7797
      %7799 = vmatmul.f32.gmra.mxu0 %v7688
      %v7800 = vpop.f32.mrf.mxu0
      %v7801 = vadd.f32 0.0, %v7800
      %7802 = vmatmul.f32.gmra.mxu0 %v7691
      %v7803 = vpop.f32.mrf.mxu0
      %v7804 = vadd.f32 0.0, %v7803
      %7805 = vmatmul.f32.gmra.mxu0 %v7694
      %v7806 = vpop.f32.mrf.mxu0
      %v7807 = vadd.f32 0.0, %v7806
      %7808 = vmatmul.f32.gmra.mxu0 %v7697
      %v7809 = vpop.f32.mrf.mxu0
      %v7810 = vadd.f32 0.0, %v7809
      %7811 = vmatmul.f32.gmra.mxu0 %v7700
      %v7812 = vpop.f32.mrf.mxu0
      %v7813 = vadd.f32 0.0, %v7812
      %7814 = vmatmul.f32.gmra.mxu0 %v7703
      %v7815 = vpop.f32.mrf.mxu0
      %v7816 = vadd.f32 0.0, %v7815
      %7817 = vmatmul.f32.gmra.mxu0 %v7706
      %v7818 = vpop.f32.mrf.mxu0
      %v7819 = vadd.f32 0.0, %v7818
      %7820 = vmatmul.f32.gmra.mxu0 %v7709
      %v7821 = vpop.f32.mrf.mxu0
      %v7822 = vadd.f32 0.0, %v7821
      %7823 = vmatmul.f32.gmra.mxu0 %v7712
      %v7824 = vpop.f32.mrf.mxu0
      %v7825 = vadd.f32 0.0, %v7824
      %7826 = vmatmul.f32.gmra.mxu0 %v7715
      %v7827 = vpop.f32.mrf.mxu0
      %v7828 = vadd.f32 0.0, %v7827
      %7829 = vmatmul.f32.gmra.mxu0 %v7718
      %v7830 = vpop.f32.mrf.mxu0
      %v7831 = vadd.f32 0.0, %v7830
      %7832 = vmatmul.f32.gmra.mxu0 %v7721
      %v7833 = vpop.f32.mrf.mxu0
      %v7834 = vadd.f32 0.0, %v7833
      %7835 = vmatmul.f32.gmra.mxu0 %v7724
      %v7836 = vpop.f32.mrf.mxu0
      %v7837 = vadd.f32 0.0, %v7836
      %7838 = vdwg.mxu0
      %v7839 = vadd.f32 %v7494, %v7744
      %v7840 = vadd.f32 %v7497, %v7747
      %v7841 = vadd.f32 %v7500, %v7750
      %v7842 = vadd.f32 %v7503, %v7753
      %v7843 = vadd.f32 %v7506, %v7756
      %v7844 = vadd.f32 %v7509, %v7759
      %v7845 = vadd.f32 %v7512, %v7762
      %v7846 = vadd.f32 %v7515, %v7765
      %v7847 = vadd.f32 %v7518, %v7768
      %v7848 = vadd.f32 %v7521, %v7771
      %v7849 = vadd.f32 %v7524, %v7774
      %v7850 = vadd.f32 %v7527, %v7777
      %v7851 = vadd.f32 %v7530, %v7780
      %v7852 = vadd.f32 %v7533, %v7783
      %v7853 = vadd.f32 %v7536, %v7786
      %v7854 = vadd.f32 %v7539, %v7789
      %v7855 = vadd.f32 %v7542, %v7792
      %v7856 = vadd.f32 %v7545, %v7795
      %v7857 = vadd.f32 %v7548, %v7798
      %v7858 = vadd.f32 %v7551, %v7801
      %v7859 = vadd.f32 %v7554, %v7804
      %v7860 = vadd.f32 %v7557, %v7807
      %v7861 = vadd.f32 %v7560, %v7810
      %v7862 = vadd.f32 %v7563, %v7813
      %v7863 = vadd.f32 %v7566, %v7816
      %v7864 = vadd.f32 %v7569, %v7819
      %v7865 = vadd.f32 %v7572, %v7822
      %v7866 = vadd.f32 %v7575, %v7825
      %v7867 = vadd.f32 %v7578, %v7828
      %v7868 = vadd.f32 %v7581, %v7831
      %v7869 = vadd.f32 %v7584, %v7834
      %v7870 = vadd.f32 %v7587, %v7837
      %v7871 = vld [vmem:[%s531] sm:$0xff]
      %v7872 = vld [vmem:[%s531 + $0x8] sm:$0xff]
      %v7873 = vld [vmem:[%s531 + $0x18] sm:$0xff]
      %v7874 = vld [vmem:[%s531 + $0x20] sm:$0xff]
      %v7875 = vld [vmem:[%s531 + $0x30] sm:$0xff]
      %v7876 = vld [vmem:[%s531 + $0x38] sm:$0xff]
      %v7877 = vld [vmem:[%s531 + $0x48] sm:$0xff]
      %v7878 = vld [vmem:[%s531 + $0x50] sm:$0xff]
      %v7879 = vld [vmem:[%s531 + $0x60] sm:$0xff]
      %v7880 = vld [vmem:[%s531 + $0x68] sm:$0xff]
      %v7881 = vld [vmem:[%s531 + $0x78] sm:$0xff]
      %v7882 = vld [vmem:[%s531 + $0x80] sm:$0xff]
      %v7883 = vld [vmem:[%s531 + $0x90] sm:$0xff]
      %v7884 = vld [vmem:[%s531 + $0x98] sm:$0xff]
      %v7885 = vld [vmem:[%s531 + $0xa8] sm:$0xff]
      %v7886 = vld [vmem:[%s531 + $0xb0] sm:$0xff]
      %v7887 = vld [vmem:[%s531 + $0xc0] sm:$0xff]
      %v7888 = vld [vmem:[%s531 + $0xc8] sm:$0xff]
      %v7889 = vld [vmem:[%s531 + $0xd8] sm:$0xff]
      %v7890 = vld [vmem:[%s531 + $0xe0] sm:$0xff]
      %v7891 = vld [vmem:[%s531 + $0xf0] sm:$0xff]
      %v7892 = vld [vmem:[%s531 + $0xf8] sm:$0xff]
      %v7893 = vld [vmem:[%s531 + $0x108] sm:$0xff]
      %v7894 = vld [vmem:[%s531 + $0x110] sm:$0xff]
      %v7895 = vld [vmem:[%s531 + $0x120] sm:$0xff]
      %v7896 = vld [vmem:[%s531 + $0x128] sm:$0xff]
      %v7897 = vld [vmem:[%s531 + $0x138] sm:$0xff]
      %v7898 = vld [vmem:[%s531 + $0x140] sm:$0xff]
      %v7899 = vld [vmem:[%s531 + $0x150] sm:$0xff]
      %v7900 = vld [vmem:[%s531 + $0x158] sm:$0xff]
      %v7901 = vld [vmem:[%s531 + $0x168] sm:$0xff]
      %v7902 = vld [vmem:[%s531 + $0x170] sm:$0xff]
      %s7903 = scalar_lea.vmem %s7, 192
      %v7904 = vld [vmem:[%s7903] sm:$0xff]
      %v7905 = vld [vmem:[%s7903 + $0x8] sm:$0xff]
      %v7906 = vld [vmem:[%s7903 + $0x10] sm:$0xff]
      %v7907 = vld [vmem:[%s7903 + $0x18] sm:$0xff]
      %v7908 = vld [vmem:[%s7903 + $0x20] sm:$0xff]
      %v7909 = vld [vmem:[%s7903 + $0x28] sm:$0xff]
      %v7910 = vld [vmem:[%s7903 + $0x30] sm:$0xff]
      %v7911 = vld [vmem:[%s7903 + $0x38] sm:$0xff]
      %v7913 = vsel %vm475, %v7871, 0
      %v7916 = vsel %vm475, %v7872, 0
      %v7919 = vsel %vm475, %v7873, 0
      %v7922 = vsel %vm475, %v7874, 0
      %v7925 = vsel %vm475, %v7875, 0
      %v7928 = vsel %vm475, %v7876, 0
      %v7931 = vsel %vm475, %v7877, 0
      %v7934 = vsel %vm475, %v7878, 0
      %v7937 = vsel %vm475, %v7879, 0
      %v7940 = vsel %vm475, %v7880, 0
      %v7943 = vsel %vm475, %v7881, 0
      %v7946 = vsel %vm475, %v7882, 0
      %v7949 = vsel %vm475, %v7883, 0
      %v7952 = vsel %vm475, %v7884, 0
      %v7955 = vsel %vm475, %v7885, 0
      %v7958 = vsel %vm475, %v7886, 0
      %v7961 = vsel %vm475, %v7887, 0
      %v7964 = vsel %vm475, %v7888, 0
      %v7967 = vsel %vm475, %v7889, 0
      %v7970 = vsel %vm475, %v7890, 0
      %v7973 = vsel %vm475, %v7891, 0
      %v7976 = vsel %vm475, %v7892, 0
      %v7979 = vsel %vm475, %v7893, 0
      %v7982 = vsel %vm475, %v7894, 0
      %v7985 = vsel %vm475, %v7895, 0
      %v7988 = vsel %vm475, %v7896, 0
      %v7991 = vsel %vm475, %v7897, 0
      %v7994 = vsel %vm475, %v7898, 0
      %v7997 = vsel %vm475, %v7899, 0
      %v8000 = vsel %vm475, %v7900, 0
      %v8003 = vsel %vm475, %v7901, 0
      %v8006 = vsel %vm475, %v7902, 0
      %8008 = vmatpush.msra.mxu0 0.0
      %8009 = vmatpush.msra.mxu0 0.0
      %8010 = vmatpush.msra.mxu0 0.0
      %8011 = vmatpush.msra.mxu0 0.0
      %8012 = vmatpush.msra.mxu0 0.0
      %8013 = vmatpush.msra.mxu0 0.0
      %8014 = vmatpush.msra.mxu0 0.0
      %8015 = vmatpush.msra.mxu0 0.0
      %8016 = vmatpush.msra.mxu0 %v7911
      %8017 = vmatpush.msra.mxu0 %v7910
      %8018 = vmatpush.msra.mxu0 %v7909
      %8019 = vmatpush.msra.mxu0 %v7908
      %8020 = vmatpush.msra.mxu0 %v7907
      %8021 = vmatpush.msra.mxu0 %v7906
      %8022 = vmatpush.msra.mxu0 %v7905
      %8023 = vmatpush.msra.mxu0 %v7904
      %8024 = vmatmul.f32.gmra.mxu0 %v7913
      %v8025 = vpop.f32.mrf.mxu0
      %v8026 = vadd.f32 0.0, %v8025
      %8027 = vmatmul.f32.gmra.mxu0 %v7916
      %v8028 = vpop.f32.mrf.mxu0
      %v8029 = vadd.f32 0.0, %v8028
      %8030 = vmatmul.f32.gmra.mxu0 %v7919
      %v8031 = vpop.f32.mrf.mxu0
      %v8032 = vadd.f32 0.0, %v8031
      %8033 = vmatmul.f32.gmra.mxu0 %v7922
      %v8034 = vpop.f32.mrf.mxu0
      %v8035 = vadd.f32 0.0, %v8034
      %8036 = vmatmul.f32.gmra.mxu0 %v7925
      %v8037 = vpop.f32.mrf.mxu0
      %v8038 = vadd.f32 0.0, %v8037
      %8039 = vmatmul.f32.gmra.mxu0 %v7928
      %v8040 = vpop.f32.mrf.mxu0
      %v8041 = vadd.f32 0.0, %v8040
      %8042 = vmatmul.f32.gmra.mxu0 %v7931
      %v8043 = vpop.f32.mrf.mxu0
      %v8044 = vadd.f32 0.0, %v8043
      %8045 = vmatmul.f32.gmra.mxu0 %v7934
      %v8046 = vpop.f32.mrf.mxu0
      %v8047 = vadd.f32 0.0, %v8046
      %8048 = vmatmul.f32.gmra.mxu0 %v7937
      %v8049 = vpop.f32.mrf.mxu0
      %v8050 = vadd.f32 0.0, %v8049
      %8051 = vmatmul.f32.gmra.mxu0 %v7940
      %v8052 = vpop.f32.mrf.mxu0
      %v8053 = vadd.f32 0.0, %v8052
      %8054 = vmatmul.f32.gmra.mxu0 %v7943
      %v8055 = vpop.f32.mrf.mxu0
      %v8056 = vadd.f32 0.0, %v8055
      %8057 = vmatmul.f32.gmra.mxu0 %v7946
      %v8058 = vpop.f32.mrf.mxu0
      %v8059 = vadd.f32 0.0, %v8058
      %8060 = vmatmul.f32.gmra.mxu0 %v7949
      %v8061 = vpop.f32.mrf.mxu0
      %v8062 = vadd.f32 0.0, %v8061
      %8063 = vmatmul.f32.gmra.mxu0 %v7952
      %v8064 = vpop.f32.mrf.mxu0
      %v8065 = vadd.f32 0.0, %v8064
      %8066 = vmatmul.f32.gmra.mxu0 %v7955
      %v8067 = vpop.f32.mrf.mxu0
      %v8068 = vadd.f32 0.0, %v8067
      %8069 = vmatmul.f32.gmra.mxu0 %v7958
      %v8070 = vpop.f32.mrf.mxu0
      %v8071 = vadd.f32 0.0, %v8070
      %8072 = vmatmul.f32.gmra.mxu0 %v7961
      %v8073 = vpop.f32.mrf.mxu0
      %v8074 = vadd.f32 0.0, %v8073
      %8075 = vmatmul.f32.gmra.mxu0 %v7964
      %v8076 = vpop.f32.mrf.mxu0
      %v8077 = vadd.f32 0.0, %v8076
      %8078 = vmatmul.f32.gmra.mxu0 %v7967
      %v8079 = vpop.f32.mrf.mxu0
      %v8080 = vadd.f32 0.0, %v8079
      %8081 = vmatmul.f32.gmra.mxu0 %v7970
      %v8082 = vpop.f32.mrf.mxu0
      %v8083 = vadd.f32 0.0, %v8082
      %8084 = vmatmul.f32.gmra.mxu0 %v7973
      %v8085 = vpop.f32.mrf.mxu0
      %v8086 = vadd.f32 0.0, %v8085
      %8087 = vmatmul.f32.gmra.mxu0 %v7976
      %v8088 = vpop.f32.mrf.mxu0
      %v8089 = vadd.f32 0.0, %v8088
      %8090 = vmatmul.f32.gmra.mxu0 %v7979
      %v8091 = vpop.f32.mrf.mxu0
      %v8092 = vadd.f32 0.0, %v8091
      %8093 = vmatmul.f32.gmra.mxu0 %v7982
      %v8094 = vpop.f32.mrf.mxu0
      %v8095 = vadd.f32 0.0, %v8094
      %8096 = vmatmul.f32.gmra.mxu0 %v7985
      %v8097 = vpop.f32.mrf.mxu0
      %v8098 = vadd.f32 0.0, %v8097
      %8099 = vmatmul.f32.gmra.mxu0 %v7988
      %v8100 = vpop.f32.mrf.mxu0
      %v8101 = vadd.f32 0.0, %v8100
      %8102 = vmatmul.f32.gmra.mxu0 %v7991
      %v8103 = vpop.f32.mrf.mxu0
      %v8104 = vadd.f32 0.0, %v8103
      %8105 = vmatmul.f32.gmra.mxu0 %v7994
      %v8106 = vpop.f32.mrf.mxu0
      %v8107 = vadd.f32 0.0, %v8106
      %8108 = vmatmul.f32.gmra.mxu0 %v7997
      %v8109 = vpop.f32.mrf.mxu0
      %v8110 = vadd.f32 0.0, %v8109
      %8111 = vmatmul.f32.gmra.mxu0 %v8000
      %v8112 = vpop.f32.mrf.mxu0
      %v8113 = vadd.f32 0.0, %v8112
      %8114 = vmatmul.f32.gmra.mxu0 %v8003
      %v8115 = vpop.f32.mrf.mxu0
      %v8116 = vadd.f32 0.0, %v8115
      %8117 = vmatmul.f32.gmra.mxu0 %v8006
      %v8118 = vpop.f32.mrf.mxu0
      %v8119 = vadd.f32 0.0, %v8118
      %8120 = vdwg.mxu0
      %v8121 = vadd.f32 %v7839, %v8026
      %v8122 = vadd.f32 %v7840, %v8029
      %v8123 = vadd.f32 %v7841, %v8032
      %v8124 = vadd.f32 %v7842, %v8035
      %v8125 = vadd.f32 %v7843, %v8038
      %v8126 = vadd.f32 %v7844, %v8041
      %v8127 = vadd.f32 %v7845, %v8044
      %v8128 = vadd.f32 %v7846, %v8047
      %v8129 = vadd.f32 %v7847, %v8050
      %v8130 = vadd.f32 %v7848, %v8053
      %v8131 = vadd.f32 %v7849, %v8056
      %v8132 = vadd.f32 %v7850, %v8059
      %v8133 = vadd.f32 %v7851, %v8062
      %v8134 = vadd.f32 %v7852, %v8065
      %v8135 = vadd.f32 %v7853, %v8068
      %v8136 = vadd.f32 %v7854, %v8071
      %v8137 = vadd.f32 %v7855, %v8074
      %v8138 = vadd.f32 %v7856, %v8077
      %v8139 = vadd.f32 %v7857, %v8080
      %v8140 = vadd.f32 %v7858, %v8083
      %v8141 = vadd.f32 %v7859, %v8086
      %v8142 = vadd.f32 %v7860, %v8089
      %v8143 = vadd.f32 %v7861, %v8092
      %v8144 = vadd.f32 %v7862, %v8095
      %v8145 = vadd.f32 %v7863, %v8098
      %v8146 = vadd.f32 %v7864, %v8101
      %v8147 = vadd.f32 %v7865, %v8104
      %v8148 = vadd.f32 %v7866, %v8107
      %v8149 = vadd.f32 %v7867, %v8110
      %v8150 = vadd.f32 %v7868, %v8113
      %v8151 = vadd.f32 %v7869, %v8116
      %v8152 = vadd.f32 %v7870, %v8119
      %v8153 = vld [vmem:[%s531 + $0x1] sm:$0xff]
      %v8154 = vld [vmem:[%s531 + $0x9] sm:$0xff]
      %v8155 = vld [vmem:[%s531 + $0x19] sm:$0xff]
      %v8156 = vld [vmem:[%s531 + $0x21] sm:$0xff]
      %v8157 = vld [vmem:[%s531 + $0x31] sm:$0xff]
      %v8158 = vld [vmem:[%s531 + $0x39] sm:$0xff]
      %v8159 = vld [vmem:[%s531 + $0x49] sm:$0xff]
      %v8160 = vld [vmem:[%s531 + $0x51] sm:$0xff]
      %v8161 = vld [vmem:[%s531 + $0x61] sm:$0xff]
      %v8162 = vld [vmem:[%s531 + $0x69] sm:$0xff]
      %v8163 = vld [vmem:[%s531 + $0x79] sm:$0xff]
      %v8164 = vld [vmem:[%s531 + $0x81] sm:$0xff]
      %v8165 = vld [vmem:[%s531 + $0x91] sm:$0xff]
      %v8166 = vld [vmem:[%s531 + $0x99] sm:$0xff]
      %v8167 = vld [vmem:[%s531 + $0xa9] sm:$0xff]
      %v8168 = vld [vmem:[%s531 + $0xb1] sm:$0xff]
      %v8169 = vld [vmem:[%s531 + $0xc1] sm:$0xff]
      %v8170 = vld [vmem:[%s531 + $0xc9] sm:$0xff]
      %v8171 = vld [vmem:[%s531 + $0xd9] sm:$0xff]
      %v8172 = vld [vmem:[%s531 + $0xe1] sm:$0xff]
      %v8173 = vld [vmem:[%s531 + $0xf1] sm:$0xff]
      %v8174 = vld [vmem:[%s531 + $0xf9] sm:$0xff]
      %v8175 = vld [vmem:[%s531 + $0x109] sm:$0xff]
      %v8176 = vld [vmem:[%s531 + $0x111] sm:$0xff]
      %v8177 = vld [vmem:[%s531 + $0x121] sm:$0xff]
      %v8178 = vld [vmem:[%s531 + $0x129] sm:$0xff]
      %v8179 = vld [vmem:[%s531 + $0x139] sm:$0xff]
      %v8180 = vld [vmem:[%s531 + $0x141] sm:$0xff]
      %v8181 = vld [vmem:[%s531 + $0x151] sm:$0xff]
      %v8182 = vld [vmem:[%s531 + $0x159] sm:$0xff]
      %v8183 = vld [vmem:[%s531 + $0x169] sm:$0xff]
      %v8184 = vld [vmem:[%s531 + $0x171] sm:$0xff]
      %s8185 = scalar_lea.vmem %s7, 256
      %v8186 = vld [vmem:[%s8185] sm:$0xff]
      %v8187 = vld [vmem:[%s8185 + $0x8] sm:$0xff]
      %v8188 = vld [vmem:[%s8185 + $0x10] sm:$0xff]
      %v8189 = vld [vmem:[%s8185 + $0x18] sm:$0xff]
      %v8190 = vld [vmem:[%s8185 + $0x20] sm:$0xff]
      %v8191 = vld [vmem:[%s8185 + $0x28] sm:$0xff]
      %v8192 = vld [vmem:[%s8185 + $0x30] sm:$0xff]
      %v8193 = vld [vmem:[%s8185 + $0x38] sm:$0xff]
      %v8195 = vsel %vm475, %v8153, 0
      %v8198 = vsel %vm475, %v8154, 0
      %v8201 = vsel %vm475, %v8155, 0
      %v8204 = vsel %vm475, %v8156, 0
      %v8207 = vsel %vm475, %v8157, 0
      %v8210 = vsel %vm475, %v8158, 0
      %v8213 = vsel %vm475, %v8159, 0
      %v8216 = vsel %vm475, %v8160, 0
      %v8219 = vsel %vm475, %v8161, 0
      %v8222 = vsel %vm475, %v8162, 0
      %v8225 = vsel %vm475, %v8163, 0
      %v8228 = vsel %vm475, %v8164, 0
      %v8231 = vsel %vm475, %v8165, 0
      %v8234 = vsel %vm475, %v8166, 0
      %v8237 = vsel %vm475, %v8167, 0
      %v8240 = vsel %vm475, %v8168, 0
      %v8243 = vsel %vm475, %v8169, 0
      %v8246 = vsel %vm475, %v8170, 0
      %v8249 = vsel %vm475, %v8171, 0
      %v8252 = vsel %vm475, %v8172, 0
      %v8255 = vsel %vm475, %v8173, 0
      %v8258 = vsel %vm475, %v8174, 0
      %v8261 = vsel %vm475, %v8175, 0
      %v8264 = vsel %vm475, %v8176, 0
      %v8267 = vsel %vm475, %v8177, 0
      %v8270 = vsel %vm475, %v8178, 0
      %v8273 = vsel %vm475, %v8179, 0
      %v8276 = vsel %vm475, %v8180, 0
      %v8279 = vsel %vm475, %v8181, 0
      %v8282 = vsel %vm475, %v8182, 0
      %v8285 = vsel %vm475, %v8183, 0
      %v8288 = vsel %vm475, %v8184, 0
      %8290 = vmatpush.msra.mxu0 0.0
      %8291 = vmatpush.msra.mxu0 0.0
      %8292 = vmatpush.msra.mxu0 0.0
      %8293 = vmatpush.msra.mxu0 0.0
      %8294 = vmatpush.msra.mxu0 0.0
      %8295 = vmatpush.msra.mxu0 0.0
      %8296 = vmatpush.msra.mxu0 0.0
      %8297 = vmatpush.msra.mxu0 0.0
      %8298 = vmatpush.msra.mxu0 %v8193
      %8299 = vmatpush.msra.mxu0 %v8192
      %8300 = vmatpush.msra.mxu0 %v8191
      %8301 = vmatpush.msra.mxu0 %v8190
      %8302 = vmatpush.msra.mxu0 %v8189
      %8303 = vmatpush.msra.mxu0 %v8188
      %8304 = vmatpush.msra.mxu0 %v8187
      %8305 = vmatpush.msra.mxu0 %v8186
      %8306 = vmatmul.f32.gmra.mxu0 %v8195
      %v8307 = vpop.f32.mrf.mxu0
      %v8308 = vadd.f32 0.0, %v8307
      %8309 = vmatmul.f32.gmra.mxu0 %v8198
      %v8310 = vpop.f32.mrf.mxu0
      %v8311 = vadd.f32 0.0, %v8310
      %8312 = vmatmul.f32.gmra.mxu0 %v8201
      %v8313 = vpop.f32.mrf.mxu0
      %v8314 = vadd.f32 0.0, %v8313
      %8315 = vmatmul.f32.gmra.mxu0 %v8204
      %v8316 = vpop.f32.mrf.mxu0
      %v8317 = vadd.f32 0.0, %v8316
      %8318 = vmatmul.f32.gmra.mxu0 %v8207
      %v8319 = vpop.f32.mrf.mxu0
      %v8320 = vadd.f32 0.0, %v8319
      %8321 = vmatmul.f32.gmra.mxu0 %v8210
      %v8322 = vpop.f32.mrf.mxu0
      %v8323 = vadd.f32 0.0, %v8322
      %8324 = vmatmul.f32.gmra.mxu0 %v8213
      %v8325 = vpop.f32.mrf.mxu0
      %v8326 = vadd.f32 0.0, %v8325
      %8327 = vmatmul.f32.gmra.mxu0 %v8216
      %v8328 = vpop.f32.mrf.mxu0
      %v8329 = vadd.f32 0.0, %v8328
      %8330 = vmatmul.f32.gmra.mxu0 %v8219
      %v8331 = vpop.f32.mrf.mxu0
      %v8332 = vadd.f32 0.0, %v8331
      %8333 = vmatmul.f32.gmra.mxu0 %v8222
      %v8334 = vpop.f32.mrf.mxu0
      %v8335 = vadd.f32 0.0, %v8334
      %8336 = vmatmul.f32.gmra.mxu0 %v8225
      %v8337 = vpop.f32.mrf.mxu0
      %v8338 = vadd.f32 0.0, %v8337
      %8339 = vmatmul.f32.gmra.mxu0 %v8228
      %v8340 = vpop.f32.mrf.mxu0
      %v8341 = vadd.f32 0.0, %v8340
      %8342 = vmatmul.f32.gmra.mxu0 %v8231
      %v8343 = vpop.f32.mrf.mxu0
      %v8344 = vadd.f32 0.0, %v8343
      %8345 = vmatmul.f32.gmra.mxu0 %v8234
      %v8346 = vpop.f32.mrf.mxu0
      %v8347 = vadd.f32 0.0, %v8346
      %8348 = vmatmul.f32.gmra.mxu0 %v8237
      %v8349 = vpop.f32.mrf.mxu0
      %v8350 = vadd.f32 0.0, %v8349
      %8351 = vmatmul.f32.gmra.mxu0 %v8240
      %v8352 = vpop.f32.mrf.mxu0
      %v8353 = vadd.f32 0.0, %v8352
      %8354 = vmatmul.f32.gmra.mxu0 %v8243
      %v8355 = vpop.f32.mrf.mxu0
      %v8356 = vadd.f32 0.0, %v8355
      %8357 = vmatmul.f32.gmra.mxu0 %v8246
      %v8358 = vpop.f32.mrf.mxu0
      %v8359 = vadd.f32 0.0, %v8358
      %8360 = vmatmul.f32.gmra.mxu0 %v8249
      %v8361 = vpop.f32.mrf.mxu0
      %v8362 = vadd.f32 0.0, %v8361
      %8363 = vmatmul.f32.gmra.mxu0 %v8252
      %v8364 = vpop.f32.mrf.mxu0
      %v8365 = vadd.f32 0.0, %v8364
      %8366 = vmatmul.f32.gmra.mxu0 %v8255
      %v8367 = vpop.f32.mrf.mxu0
      %v8368 = vadd.f32 0.0, %v8367
      %8369 = vmatmul.f32.gmra.mxu0 %v8258
      %v8370 = vpop.f32.mrf.mxu0
      %v8371 = vadd.f32 0.0, %v8370
      %8372 = vmatmul.f32.gmra.mxu0 %v8261
      %v8373 = vpop.f32.mrf.mxu0
      %v8374 = vadd.f32 0.0, %v8373
      %8375 = vmatmul.f32.gmra.mxu0 %v8264
      %v8376 = vpop.f32.mrf.mxu0
      %v8377 = vadd.f32 0.0, %v8376
      %8378 = vmatmul.f32.gmra.mxu0 %v8267
      %v8379 = vpop.f32.mrf.mxu0
      %v8380 = vadd.f32 0.0, %v8379
      %8381 = vmatmul.f32.gmra.mxu0 %v8270
      %v8382 = vpop.f32.mrf.mxu0
      %v8383 = vadd.f32 0.0, %v8382
      %8384 = vmatmul.f32.gmra.mxu0 %v8273
      %v8385 = vpop.f32.mrf.mxu0
      %v8386 = vadd.f32 0.0, %v8385
      %8387 = vmatmul.f32.gmra.mxu0 %v8276
      %v8388 = vpop.f32.mrf.mxu0
      %v8389 = vadd.f32 0.0, %v8388
      %8390 = vmatmul.f32.gmra.mxu0 %v8279
      %v8391 = vpop.f32.mrf.mxu0
      %v8392 = vadd.f32 0.0, %v8391
      %8393 = vmatmul.f32.gmra.mxu0 %v8282
      %v8394 = vpop.f32.mrf.mxu0
      %v8395 = vadd.f32 0.0, %v8394
      %8396 = vmatmul.f32.gmra.mxu0 %v8285
      %v8397 = vpop.f32.mrf.mxu0
      %v8398 = vadd.f32 0.0, %v8397
      %8399 = vmatmul.f32.gmra.mxu0 %v8288
      %v8400 = vpop.f32.mrf.mxu0
      %v8401 = vadd.f32 0.0, %v8400
      %8402 = vdwg.mxu0
      %v8403 = vadd.f32 %v8121, %v8308
      %v8404 = vadd.f32 %v8122, %v8311
      %v8405 = vadd.f32 %v8123, %v8314
      %v8406 = vadd.f32 %v8124, %v8317
      %v8407 = vadd.f32 %v8125, %v8320
      %v8408 = vadd.f32 %v8126, %v8323
      %v8409 = vadd.f32 %v8127, %v8326
      %v8410 = vadd.f32 %v8128, %v8329
      %v8411 = vadd.f32 %v8129, %v8332
      %v8412 = vadd.f32 %v8130, %v8335
      %v8413 = vadd.f32 %v8131, %v8338
      %v8414 = vadd.f32 %v8132, %v8341
      %v8415 = vadd.f32 %v8133, %v8344
      %v8416 = vadd.f32 %v8134, %v8347
      %v8417 = vadd.f32 %v8135, %v8350
      %v8418 = vadd.f32 %v8136, %v8353
      %v8419 = vadd.f32 %v8137, %v8356
      %v8420 = vadd.f32 %v8138, %v8359
      %v8421 = vadd.f32 %v8139, %v8362
      %v8422 = vadd.f32 %v8140, %v8365
      %v8423 = vadd.f32 %v8141, %v8368
      %v8424 = vadd.f32 %v8142, %v8371
      %v8425 = vadd.f32 %v8143, %v8374
      %v8426 = vadd.f32 %v8144, %v8377
      %v8427 = vadd.f32 %v8145, %v8380
      %v8428 = vadd.f32 %v8146, %v8383
      %v8429 = vadd.f32 %v8147, %v8386
      %v8430 = vadd.f32 %v8148, %v8389
      %v8431 = vadd.f32 %v8149, %v8392
      %v8432 = vadd.f32 %v8150, %v8395
      %v8433 = vadd.f32 %v8151, %v8398
      %v8434 = vadd.f32 %v8152, %v8401
      %v8435 = vld [vmem:[%s531 + $0x2] sm:$0xff]
      %v8436 = vld [vmem:[%s531 + $0xa] sm:$0xff]
      %v8437 = vld [vmem:[%s531 + $0x1a] sm:$0xff]
      %v8438 = vld [vmem:[%s531 + $0x22] sm:$0xff]
      %v8439 = vld [vmem:[%s531 + $0x32] sm:$0xff]
      %v8440 = vld [vmem:[%s531 + $0x3a] sm:$0xff]
      %v8441 = vld [vmem:[%s531 + $0x4a] sm:$0xff]
      %v8442 = vld [vmem:[%s531 + $0x52] sm:$0xff]
      %v8443 = vld [vmem:[%s531 + $0x62] sm:$0xff]
      %v8444 = vld [vmem:[%s531 + $0x6a] sm:$0xff]
      %v8445 = vld [vmem:[%s531 + $0x7a] sm:$0xff]
      %v8446 = vld [vmem:[%s531 + $0x82] sm:$0xff]
      %v8447 = vld [vmem:[%s531 + $0x92] sm:$0xff]
      %v8448 = vld [vmem:[%s531 + $0x9a] sm:$0xff]
      %v8449 = vld [vmem:[%s531 + $0xaa] sm:$0xff]
      %v8450 = vld [vmem:[%s531 + $0xb2] sm:$0xff]
      %v8451 = vld [vmem:[%s531 + $0xc2] sm:$0xff]
      %v8452 = vld [vmem:[%s531 + $0xca] sm:$0xff]
      %v8453 = vld [vmem:[%s531 + $0xda] sm:$0xff]
      %v8454 = vld [vmem:[%s531 + $0xe2] sm:$0xff]
      %v8455 = vld [vmem:[%s531 + $0xf2] sm:$0xff]
      %v8456 = vld [vmem:[%s531 + $0xfa] sm:$0xff]
      %v8457 = vld [vmem:[%s531 + $0x10a] sm:$0xff]
      %v8458 = vld [vmem:[%s531 + $0x112] sm:$0xff]
      %v8459 = vld [vmem:[%s531 + $0x122] sm:$0xff]
      %v8460 = vld [vmem:[%s531 + $0x12a] sm:$0xff]
      %v8461 = vld [vmem:[%s531 + $0x13a] sm:$0xff]
      %v8462 = vld [vmem:[%s531 + $0x142] sm:$0xff]
      %v8463 = vld [vmem:[%s531 + $0x152] sm:$0xff]
      %v8464 = vld [vmem:[%s531 + $0x15a] sm:$0xff]
      %v8465 = vld [vmem:[%s531 + $0x16a] sm:$0xff]
      %v8466 = vld [vmem:[%s531 + $0x172] sm:$0xff]
      %s8467 = scalar_lea.vmem %s7, 320
      %v8468 = vld [vmem:[%s8467] sm:$0xff]
      %v8469 = vld [vmem:[%s8467 + $0x8] sm:$0xff]
      %v8470 = vld [vmem:[%s8467 + $0x10] sm:$0xff]
      %v8471 = vld [vmem:[%s8467 + $0x18] sm:$0xff]
      %v8472 = vld [vmem:[%s8467 + $0x20] sm:$0xff]
      %v8473 = vld [vmem:[%s8467 + $0x28] sm:$0xff]
      %v8474 = vld [vmem:[%s8467 + $0x30] sm:$0xff]
      %v8475 = vld [vmem:[%s8467 + $0x38] sm:$0xff]
      %v8477 = vsel %vm475, %v8435, 0
      %v8480 = vsel %vm475, %v8436, 0
      %v8483 = vsel %vm475, %v8437, 0
      %v8486 = vsel %vm475, %v8438, 0
      %v8489 = vsel %vm475, %v8439, 0
      %v8492 = vsel %vm475, %v8440, 0
      %v8495 = vsel %vm475, %v8441, 0
      %v8498 = vsel %vm475, %v8442, 0
      %v8501 = vsel %vm475, %v8443, 0
      %v8504 = vsel %vm475, %v8444, 0
      %v8507 = vsel %vm475, %v8445, 0
      %v8510 = vsel %vm475, %v8446, 0
      %v8513 = vsel %vm475, %v8447, 0
      %v8516 = vsel %vm475, %v8448, 0
      %v8519 = vsel %vm475, %v8449, 0
      %v8522 = vsel %vm475, %v8450, 0
      %v8525 = vsel %vm475, %v8451, 0
      %v8528 = vsel %vm475, %v8452, 0
      %v8531 = vsel %vm475, %v8453, 0
      %v8534 = vsel %vm475, %v8454, 0
      %v8537 = vsel %vm475, %v8455, 0
      %v8540 = vsel %vm475, %v8456, 0
      %v8543 = vsel %vm475, %v8457, 0
      %v8546 = vsel %vm475, %v8458, 0
      %v8549 = vsel %vm475, %v8459, 0
      %v8552 = vsel %vm475, %v8460, 0
      %v8555 = vsel %vm475, %v8461, 0
      %v8558 = vsel %vm475, %v8462, 0
      %v8561 = vsel %vm475, %v8463, 0
      %v8564 = vsel %vm475, %v8464, 0
      %v8567 = vsel %vm475, %v8465, 0
      %v8570 = vsel %vm475, %v8466, 0
      %8572 = vmatpush.msra.mxu0 0.0
      %8573 = vmatpush.msra.mxu0 0.0
      %8574 = vmatpush.msra.mxu0 0.0
      %8575 = vmatpush.msra.mxu0 0.0
      %8576 = vmatpush.msra.mxu0 0.0
      %8577 = vmatpush.msra.mxu0 0.0
      %8578 = vmatpush.msra.mxu0 0.0
      %8579 = vmatpush.msra.mxu0 0.0
      %8580 = vmatpush.msra.mxu0 %v8475
      %8581 = vmatpush.msra.mxu0 %v8474
      %8582 = vmatpush.msra.mxu0 %v8473
      %8583 = vmatpush.msra.mxu0 %v8472
      %8584 = vmatpush.msra.mxu0 %v8471
      %8585 = vmatpush.msra.mxu0 %v8470
      %8586 = vmatpush.msra.mxu0 %v8469
      %8587 = vmatpush.msra.mxu0 %v8468
      %8588 = vmatmul.f32.gmra.mxu0 %v8477
      %v8589 = vpop.f32.mrf.mxu0
      %v8590 = vadd.f32 0.0, %v8589
      %8591 = vmatmul.f32.gmra.mxu0 %v8480
      %v8592 = vpop.f32.mrf.mxu0
      %v8593 = vadd.f32 0.0, %v8592
      %8594 = vmatmul.f32.gmra.mxu0 %v8483
      %v8595 = vpop.f32.mrf.mxu0
      %v8596 = vadd.f32 0.0, %v8595
      %8597 = vmatmul.f32.gmra.mxu0 %v8486
      %v8598 = vpop.f32.mrf.mxu0
      %v8599 = vadd.f32 0.0, %v8598
      %8600 = vmatmul.f32.gmra.mxu0 %v8489
      %v8601 = vpop.f32.mrf.mxu0
      %v8602 = vadd.f32 0.0, %v8601
      %8603 = vmatmul.f32.gmra.mxu0 %v8492
      %v8604 = vpop.f32.mrf.mxu0
      %v8605 = vadd.f32 0.0, %v8604
      %8606 = vmatmul.f32.gmra.mxu0 %v8495
      %v8607 = vpop.f32.mrf.mxu0
      %v8608 = vadd.f32 0.0, %v8607
      %8609 = vmatmul.f32.gmra.mxu0 %v8498
      %v8610 = vpop.f32.mrf.mxu0
      %v8611 = vadd.f32 0.0, %v8610
      %8612 = vmatmul.f32.gmra.mxu0 %v8501
      %v8613 = vpop.f32.mrf.mxu0
      %v8614 = vadd.f32 0.0, %v8613
      %8615 = vmatmul.f32.gmra.mxu0 %v8504
      %v8616 = vpop.f32.mrf.mxu0
      %v8617 = vadd.f32 0.0, %v8616
      %8618 = vmatmul.f32.gmra.mxu0 %v8507
      %v8619 = vpop.f32.mrf.mxu0
      %v8620 = vadd.f32 0.0, %v8619
      %8621 = vmatmul.f32.gmra.mxu0 %v8510
      %v8622 = vpop.f32.mrf.mxu0
      %v8623 = vadd.f32 0.0, %v8622
      %8624 = vmatmul.f32.gmra.mxu0 %v8513
      %v8625 = vpop.f32.mrf.mxu0
      %v8626 = vadd.f32 0.0, %v8625
      %8627 = vmatmul.f32.gmra.mxu0 %v8516
      %v8628 = vpop.f32.mrf.mxu0
      %v8629 = vadd.f32 0.0, %v8628
      %8630 = vmatmul.f32.gmra.mxu0 %v8519
      %v8631 = vpop.f32.mrf.mxu0
      %v8632 = vadd.f32 0.0, %v8631
      %8633 = vmatmul.f32.gmra.mxu0 %v8522
      %v8634 = vpop.f32.mrf.mxu0
      %v8635 = vadd.f32 0.0, %v8634
      %8636 = vmatmul.f32.gmra.mxu0 %v8525
      %v8637 = vpop.f32.mrf.mxu0
      %v8638 = vadd.f32 0.0, %v8637
      %8639 = vmatmul.f32.gmra.mxu0 %v8528
      %v8640 = vpop.f32.mrf.mxu0
      %v8641 = vadd.f32 0.0, %v8640
      %8642 = vmatmul.f32.gmra.mxu0 %v8531
      %v8643 = vpop.f32.mrf.mxu0
      %v8644 = vadd.f32 0.0, %v8643
      %8645 = vmatmul.f32.gmra.mxu0 %v8534
      %v8646 = vpop.f32.mrf.mxu0
      %v8647 = vadd.f32 0.0, %v8646
      %8648 = vmatmul.f32.gmra.mxu0 %v8537
      %v8649 = vpop.f32.mrf.mxu0
      %v8650 = vadd.f32 0.0, %v8649
      %8651 = vmatmul.f32.gmra.mxu0 %v8540
      %v8652 = vpop.f32.mrf.mxu0
      %v8653 = vadd.f32 0.0, %v8652
      %8654 = vmatmul.f32.gmra.mxu0 %v8543
      %v8655 = vpop.f32.mrf.mxu0
      %v8656 = vadd.f32 0.0, %v8655
      %8657 = vmatmul.f32.gmra.mxu0 %v8546
      %v8658 = vpop.f32.mrf.mxu0
      %v8659 = vadd.f32 0.0, %v8658
      %8660 = vmatmul.f32.gmra.mxu0 %v8549
      %v8661 = vpop.f32.mrf.mxu0
      %v8662 = vadd.f32 0.0, %v8661
      %8663 = vmatmul.f32.gmra.mxu0 %v8552
      %v8664 = vpop.f32.mrf.mxu0
      %v8665 = vadd.f32 0.0, %v8664
      %8666 = vmatmul.f32.gmra.mxu0 %v8555
      %v8667 = vpop.f32.mrf.mxu0
      %v8668 = vadd.f32 0.0, %v8667
      %8669 = vmatmul.f32.gmra.mxu0 %v8558
      %v8670 = vpop.f32.mrf.mxu0
      %v8671 = vadd.f32 0.0, %v8670
      %8672 = vmatmul.f32.gmra.mxu0 %v8561
      %v8673 = vpop.f32.mrf.mxu0
      %v8674 = vadd.f32 0.0, %v8673
      %8675 = vmatmul.f32.gmra.mxu0 %v8564
      %v8676 = vpop.f32.mrf.mxu0
      %v8677 = vadd.f32 0.0, %v8676
      %8678 = vmatmul.f32.gmra.mxu0 %v8567
      %v8679 = vpop.f32.mrf.mxu0
      %v8680 = vadd.f32 0.0, %v8679
      %8681 = vmatmul.f32.gmra.mxu0 %v8570
      %v8682 = vpop.f32.mrf.mxu0
      %v8683 = vadd.f32 0.0, %v8682
      %8684 = vdwg.mxu0
      %v8685 = vadd.f32 %v8403, %v8590
      %v8686 = vadd.f32 %v8404, %v8593
      %v8687 = vadd.f32 %v8405, %v8596
      %v8688 = vadd.f32 %v8406, %v8599
      %v8689 = vadd.f32 %v8407, %v8602
      %v8690 = vadd.f32 %v8408, %v8605
      %v8691 = vadd.f32 %v8409, %v8608
      %v8692 = vadd.f32 %v8410, %v8611
      %v8693 = vadd.f32 %v8411, %v8614
      %v8694 = vadd.f32 %v8412, %v8617
      %v8695 = vadd.f32 %v8413, %v8620
      %v8696 = vadd.f32 %v8414, %v8623
      %v8697 = vadd.f32 %v8415, %v8626
      %v8698 = vadd.f32 %v8416, %v8629
      %v8699 = vadd.f32 %v8417, %v8632
      %v8700 = vadd.f32 %v8418, %v8635
      %v8701 = vadd.f32 %v8419, %v8638
      %v8702 = vadd.f32 %v8420, %v8641
      %v8703 = vadd.f32 %v8421, %v8644
      %v8704 = vadd.f32 %v8422, %v8647
      %v8705 = vadd.f32 %v8423, %v8650
      %v8706 = vadd.f32 %v8424, %v8653
      %v8707 = vadd.f32 %v8425, %v8656
      %v8708 = vadd.f32 %v8426, %v8659
      %v8709 = vadd.f32 %v8427, %v8662
      %v8710 = vadd.f32 %v8428, %v8665
      %v8711 = vadd.f32 %v8429, %v8668
      %v8712 = vadd.f32 %v8430, %v8671
      %v8713 = vadd.f32 %v8431, %v8674
      %v8714 = vadd.f32 %v8432, %v8677
      %v8715 = vadd.f32 %v8433, %v8680
      %v8716 = vadd.f32 %v8434, %v8683
      %v8717 = vld [vmem:[%s2130] sm:$0xff]
      %v8718 = vld [vmem:[%s2130 + $0x8] sm:$0xff]
      %v8719 = vld [vmem:[%s2130 + $0x18] sm:$0xff]
      %v8720 = vld [vmem:[%s2130 + $0x20] sm:$0xff]
      %v8721 = vld [vmem:[%s2130 + $0x30] sm:$0xff]
      %v8722 = vld [vmem:[%s2130 + $0x38] sm:$0xff]
      %v8723 = vld [vmem:[%s2130 + $0x48] sm:$0xff]
      %v8724 = vld [vmem:[%s2130 + $0x50] sm:$0xff]
      %v8725 = vld [vmem:[%s2130 + $0x60] sm:$0xff]
      %v8726 = vld [vmem:[%s2130 + $0x68] sm:$0xff]
      %v8727 = vld [vmem:[%s2130 + $0x78] sm:$0xff]
      %v8728 = vld [vmem:[%s2130 + $0x80] sm:$0xff]
      %v8729 = vld [vmem:[%s2130 + $0x90] sm:$0xff]
      %v8730 = vld [vmem:[%s2130 + $0x98] sm:$0xff]
      %v8731 = vld [vmem:[%s2130 + $0xa8] sm:$0xff]
      %v8732 = vld [vmem:[%s2130 + $0xb0] sm:$0xff]
      %v8733 = vld [vmem:[%s2130 + $0xc0] sm:$0xff]
      %v8734 = vld [vmem:[%s2130 + $0xc8] sm:$0xff]
      %v8735 = vld [vmem:[%s2130 + $0xd8] sm:$0xff]
      %v8736 = vld [vmem:[%s2130 + $0xe0] sm:$0xff]
      %v8737 = vld [vmem:[%s2130 + $0xf0] sm:$0xff]
      %v8738 = vld [vmem:[%s2130 + $0xf8] sm:$0xff]
      %v8739 = vld [vmem:[%s2130 + $0x108] sm:$0xff]
      %v8740 = vld [vmem:[%s2130 + $0x110] sm:$0xff]
      %v8741 = vld [vmem:[%s2130 + $0x120] sm:$0xff]
      %v8742 = vld [vmem:[%s2130 + $0x128] sm:$0xff]
      %v8743 = vld [vmem:[%s2130 + $0x138] sm:$0xff]
      %v8744 = vld [vmem:[%s2130 + $0x140] sm:$0xff]
      %v8745 = vld [vmem:[%s2130 + $0x150] sm:$0xff]
      %v8746 = vld [vmem:[%s2130 + $0x158] sm:$0xff]
      %v8747 = vld [vmem:[%s2130 + $0x168] sm:$0xff]
      %v8748 = vld [vmem:[%s2130 + $0x170] sm:$0xff]
      %s8749 = scalar_lea.vmem %s7, 384
      %v8750 = vld [vmem:[%s8749] sm:$0xff]
      %v8751 = vld [vmem:[%s8749 + $0x8] sm:$0xff]
      %v8752 = vld [vmem:[%s8749 + $0x10] sm:$0xff]
      %v8753 = vld [vmem:[%s8749 + $0x18] sm:$0xff]
      %v8754 = vld [vmem:[%s8749 + $0x20] sm:$0xff]
      %v8755 = vld [vmem:[%s8749 + $0x28] sm:$0xff]
      %v8756 = vld [vmem:[%s8749 + $0x30] sm:$0xff]
      %v8757 = vld [vmem:[%s8749 + $0x38] sm:$0xff]
      %v8759 = vsel %vm475, %v8717, 0
      %v8762 = vsel %vm475, %v8718, 0
      %v8765 = vsel %vm475, %v8719, 0
      %v8768 = vsel %vm475, %v8720, 0
      %v8771 = vsel %vm475, %v8721, 0
      %v8774 = vsel %vm475, %v8722, 0
      %v8777 = vsel %vm475, %v8723, 0
      %v8780 = vsel %vm475, %v8724, 0
      %v8783 = vsel %vm475, %v8725, 0
      %v8786 = vsel %vm475, %v8726, 0
      %v8789 = vsel %vm475, %v8727, 0
      %v8792 = vsel %vm475, %v8728, 0
      %v8795 = vsel %vm475, %v8729, 0
      %v8798 = vsel %vm475, %v8730, 0
      %v8801 = vsel %vm475, %v8731, 0
      %v8804 = vsel %vm475, %v8732, 0
      %v8807 = vsel %vm475, %v8733, 0
      %v8810 = vsel %vm475, %v8734, 0
      %v8813 = vsel %vm475, %v8735, 0
      %v8816 = vsel %vm475, %v8736, 0
      %v8819 = vsel %vm475, %v8737, 0
      %v8822 = vsel %vm475, %v8738, 0
      %v8825 = vsel %vm475, %v8739, 0
      %v8828 = vsel %vm475, %v8740, 0
      %v8831 = vsel %vm475, %v8741, 0
      %v8834 = vsel %vm475, %v8742, 0
      %v8837 = vsel %vm475, %v8743, 0
      %v8840 = vsel %vm475, %v8744, 0
      %v8843 = vsel %vm475, %v8745, 0
      %v8846 = vsel %vm475, %v8746, 0
      %v8849 = vsel %vm475, %v8747, 0
      %v8852 = vsel %vm475, %v8748, 0
      %8854 = vmatpush.msra.mxu0 0.0
      %8855 = vmatpush.msra.mxu0 0.0
      %8856 = vmatpush.msra.mxu0 0.0
      %8857 = vmatpush.msra.mxu0 0.0
      %8858 = vmatpush.msra.mxu0 0.0
      %8859 = vmatpush.msra.mxu0 0.0
      %8860 = vmatpush.msra.mxu0 0.0
      %8861 = vmatpush.msra.mxu0 0.0
      %8862 = vmatpush.msra.mxu0 %v8757
      %8863 = vmatpush.msra.mxu0 %v8756
      %8864 = vmatpush.msra.mxu0 %v8755
      %8865 = vmatpush.msra.mxu0 %v8754
      %8866 = vmatpush.msra.mxu0 %v8753
      %8867 = vmatpush.msra.mxu0 %v8752
      %8868 = vmatpush.msra.mxu0 %v8751
      %8869 = vmatpush.msra.mxu0 %v8750
      %8870 = vmatmul.f32.gmra.mxu0 %v8759
      %v8871 = vpop.f32.mrf.mxu0
      %v8872 = vadd.f32 0.0, %v8871
      %8873 = vmatmul.f32.gmra.mxu0 %v8762
      %v8874 = vpop.f32.mrf.mxu0
      %v8875 = vadd.f32 0.0, %v8874
      %8876 = vmatmul.f32.gmra.mxu0 %v8765
      %v8877 = vpop.f32.mrf.mxu0
      %v8878 = vadd.f32 0.0, %v8877
      %8879 = vmatmul.f32.gmra.mxu0 %v8768
      %v8880 = vpop.f32.mrf.mxu0
      %v8881 = vadd.f32 0.0, %v8880
      %8882 = vmatmul.f32.gmra.mxu0 %v8771
      %v8883 = vpop.f32.mrf.mxu0
      %v8884 = vadd.f32 0.0, %v8883
      %8885 = vmatmul.f32.gmra.mxu0 %v8774
      %v8886 = vpop.f32.mrf.mxu0
      %v8887 = vadd.f32 0.0, %v8886
      %8888 = vmatmul.f32.gmra.mxu0 %v8777
      %v8889 = vpop.f32.mrf.mxu0
      %v8890 = vadd.f32 0.0, %v8889
      %8891 = vmatmul.f32.gmra.mxu0 %v8780
      %v8892 = vpop.f32.mrf.mxu0
      %v8893 = vadd.f32 0.0, %v8892
      %8894 = vmatmul.f32.gmra.mxu0 %v8783
      %v8895 = vpop.f32.mrf.mxu0
      %v8896 = vadd.f32 0.0, %v8895
      %8897 = vmatmul.f32.gmra.mxu0 %v8786
      %v8898 = vpop.f32.mrf.mxu0
      %v8899 = vadd.f32 0.0, %v8898
      %8900 = vmatmul.f32.gmra.mxu0 %v8789
      %v8901 = vpop.f32.mrf.mxu0
      %v8902 = vadd.f32 0.0, %v8901
      %8903 = vmatmul.f32.gmra.mxu0 %v8792
      %v8904 = vpop.f32.mrf.mxu0
      %v8905 = vadd.f32 0.0, %v8904
      %8906 = vmatmul.f32.gmra.mxu0 %v8795
      %v8907 = vpop.f32.mrf.mxu0
      %v8908 = vadd.f32 0.0, %v8907
      %8909 = vmatmul.f32.gmra.mxu0 %v8798
      %v8910 = vpop.f32.mrf.mxu0
      %v8911 = vadd.f32 0.0, %v8910
      %8912 = vmatmul.f32.gmra.mxu0 %v8801
      %v8913 = vpop.f32.mrf.mxu0
      %v8914 = vadd.f32 0.0, %v8913
      %8915 = vmatmul.f32.gmra.mxu0 %v8804
      %v8916 = vpop.f32.mrf.mxu0
      %v8917 = vadd.f32 0.0, %v8916
      %8918 = vmatmul.f32.gmra.mxu0 %v8807
      %v8919 = vpop.f32.mrf.mxu0
      %v8920 = vadd.f32 0.0, %v8919
      %8921 = vmatmul.f32.gmra.mxu0 %v8810
      %v8922 = vpop.f32.mrf.mxu0
      %v8923 = vadd.f32 0.0, %v8922
      %8924 = vmatmul.f32.gmra.mxu0 %v8813
      %v8925 = vpop.f32.mrf.mxu0
      %v8926 = vadd.f32 0.0, %v8925
      %8927 = vmatmul.f32.gmra.mxu0 %v8816
      %v8928 = vpop.f32.mrf.mxu0
      %v8929 = vadd.f32 0.0, %v8928
      %8930 = vmatmul.f32.gmra.mxu0 %v8819
      %v8931 = vpop.f32.mrf.mxu0
      %v8932 = vadd.f32 0.0, %v8931
      %8933 = vmatmul.f32.gmra.mxu0 %v8822
      %v8934 = vpop.f32.mrf.mxu0
      %v8935 = vadd.f32 0.0, %v8934
      %8936 = vmatmul.f32.gmra.mxu0 %v8825
      %v8937 = vpop.f32.mrf.mxu0
      %v8938 = vadd.f32 0.0, %v8937
      %8939 = vmatmul.f32.gmra.mxu0 %v8828
      %v8940 = vpop.f32.mrf.mxu0
      %v8941 = vadd.f32 0.0, %v8940
      %8942 = vmatmul.f32.gmra.mxu0 %v8831
      %v8943 = vpop.f32.mrf.mxu0
      %v8944 = vadd.f32 0.0, %v8943
      %8945 = vmatmul.f32.gmra.mxu0 %v8834
      %v8946 = vpop.f32.mrf.mxu0
      %v8947 = vadd.f32 0.0, %v8946
      %8948 = vmatmul.f32.gmra.mxu0 %v8837
      %v8949 = vpop.f32.mrf.mxu0
      %v8950 = vadd.f32 0.0, %v8949
      %8951 = vmatmul.f32.gmra.mxu0 %v8840
      %v8952 = vpop.f32.mrf.mxu0
      %v8953 = vadd.f32 0.0, %v8952
      %8954 = vmatmul.f32.gmra.mxu0 %v8843
      %v8955 = vpop.f32.mrf.mxu0
      %v8956 = vadd.f32 0.0, %v8955
      %8957 = vmatmul.f32.gmra.mxu0 %v8846
      %v8958 = vpop.f32.mrf.mxu0
      %v8959 = vadd.f32 0.0, %v8958
      %8960 = vmatmul.f32.gmra.mxu0 %v8849
      %v8961 = vpop.f32.mrf.mxu0
      %v8962 = vadd.f32 0.0, %v8961
      %8963 = vmatmul.f32.gmra.mxu0 %v8852
      %v8964 = vpop.f32.mrf.mxu0
      %v8965 = vadd.f32 0.0, %v8964
      %8966 = vdwg.mxu0
      %v8967 = vadd.f32 %v8685, %v8872
      %v8968 = vadd.f32 %v8686, %v8875
      %v8969 = vadd.f32 %v8687, %v8878
      %v8970 = vadd.f32 %v8688, %v8881
      %v8971 = vadd.f32 %v8689, %v8884
      %v8972 = vadd.f32 %v8690, %v8887
      %v8973 = vadd.f32 %v8691, %v8890
      %v8974 = vadd.f32 %v8692, %v8893
      %v8975 = vadd.f32 %v8693, %v8896
      %v8976 = vadd.f32 %v8694, %v8899
      %v8977 = vadd.f32 %v8695, %v8902
      %v8978 = vadd.f32 %v8696, %v8905
      %v8979 = vadd.f32 %v8697, %v8908
      %v8980 = vadd.f32 %v8698, %v8911
      %v8981 = vadd.f32 %v8699, %v8914
      %v8982 = vadd.f32 %v8700, %v8917
      %v8983 = vadd.f32 %v8701, %v8920
      %v8984 = vadd.f32 %v8702, %v8923
      %v8985 = vadd.f32 %v8703, %v8926
      %v8986 = vadd.f32 %v8704, %v8929
      %v8987 = vadd.f32 %v8705, %v8932
      %v8988 = vadd.f32 %v8706, %v8935
      %v8989 = vadd.f32 %v8707, %v8938
      %v8990 = vadd.f32 %v8708, %v8941
      %v8991 = vadd.f32 %v8709, %v8944
      %v8992 = vadd.f32 %v8710, %v8947
      %v8993 = vadd.f32 %v8711, %v8950
      %v8994 = vadd.f32 %v8712, %v8953
      %v8995 = vadd.f32 %v8713, %v8956
      %v8996 = vadd.f32 %v8714, %v8959
      %v8997 = vadd.f32 %v8715, %v8962
      %v8998 = vadd.f32 %v8716, %v8965
      %v8999 = vld [vmem:[%s2130 + $0x1] sm:$0xff]
      %v9000 = vld [vmem:[%s2130 + $0x9] sm:$0xff]
      %v9001 = vld [vmem:[%s2130 + $0x19] sm:$0xff]
      %v9002 = vld [vmem:[%s2130 + $0x21] sm:$0xff]
      %v9003 = vld [vmem:[%s2130 + $0x31] sm:$0xff]
      %v9004 = vld [vmem:[%s2130 + $0x39] sm:$0xff]
      %v9005 = vld [vmem:[%s2130 + $0x49] sm:$0xff]
      %v9006 = vld [vmem:[%s2130 + $0x51] sm:$0xff]
      %v9007 = vld [vmem:[%s2130 + $0x61] sm:$0xff]
      %v9008 = vld [vmem:[%s2130 + $0x69] sm:$0xff]
      %v9009 = vld [vmem:[%s2130 + $0x79] sm:$0xff]
      %v9010 = vld [vmem:[%s2130 + $0x81] sm:$0xff]
      %v9011 = vld [vmem:[%s2130 + $0x91] sm:$0xff]
      %v9012 = vld [vmem:[%s2130 + $0x99] sm:$0xff]
      %v9013 = vld [vmem:[%s2130 + $0xa9] sm:$0xff]
      %v9014 = vld [vmem:[%s2130 + $0xb1] sm:$0xff]
      %v9015 = vld [vmem:[%s2130 + $0xc1] sm:$0xff]
      %v9016 = vld [vmem:[%s2130 + $0xc9] sm:$0xff]
      %v9017 = vld [vmem:[%s2130 + $0xd9] sm:$0xff]
      %v9018 = vld [vmem:[%s2130 + $0xe1] sm:$0xff]
      %v9019 = vld [vmem:[%s2130 + $0xf1] sm:$0xff]
      %v9020 = vld [vmem:[%s2130 + $0xf9] sm:$0xff]
      %v9021 = vld [vmem:[%s2130 + $0x109] sm:$0xff]
      %v9022 = vld [vmem:[%s2130 + $0x111] sm:$0xff]
      %v9023 = vld [vmem:[%s2130 + $0x121] sm:$0xff]
      %v9024 = vld [vmem:[%s2130 + $0x129] sm:$0xff]
      %v9025 = vld [vmem:[%s2130 + $0x139] sm:$0xff]
      %v9026 = vld [vmem:[%s2130 + $0x141] sm:$0xff]
      %v9027 = vld [vmem:[%s2130 + $0x151] sm:$0xff]
      %v9028 = vld [vmem:[%s2130 + $0x159] sm:$0xff]
      %v9029 = vld [vmem:[%s2130 + $0x169] sm:$0xff]
      %v9030 = vld [vmem:[%s2130 + $0x171] sm:$0xff]
      %s9031 = scalar_lea.vmem %s7, 448
      %v9032 = vld [vmem:[%s9031] sm:$0xff]
      %v9033 = vld [vmem:[%s9031 + $0x8] sm:$0xff]
      %v9034 = vld [vmem:[%s9031 + $0x10] sm:$0xff]
      %v9035 = vld [vmem:[%s9031 + $0x18] sm:$0xff]
      %v9036 = vld [vmem:[%s9031 + $0x20] sm:$0xff]
      %v9037 = vld [vmem:[%s9031 + $0x28] sm:$0xff]
      %v9038 = vld [vmem:[%s9031 + $0x30] sm:$0xff]
      %v9039 = vld [vmem:[%s9031 + $0x38] sm:$0xff]
      %v9041 = vsel %vm475, %v8999, 0
      %v9044 = vsel %vm475, %v9000, 0
      %v9047 = vsel %vm475, %v9001, 0
      %v9050 = vsel %vm475, %v9002, 0
      %v9053 = vsel %vm475, %v9003, 0
      %v9056 = vsel %vm475, %v9004, 0
      %v9059 = vsel %vm475, %v9005, 0
      %v9062 = vsel %vm475, %v9006, 0
      %v9065 = vsel %vm475, %v9007, 0
      %v9068 = vsel %vm475, %v9008, 0
      %v9071 = vsel %vm475, %v9009, 0
      %v9074 = vsel %vm475, %v9010, 0
      %v9077 = vsel %vm475, %v9011, 0
      %v9080 = vsel %vm475, %v9012, 0
      %v9083 = vsel %vm475, %v9013, 0
      %v9086 = vsel %vm475, %v9014, 0
      %v9089 = vsel %vm475, %v9015, 0
      %v9092 = vsel %vm475, %v9016, 0
      %v9095 = vsel %vm475, %v9017, 0
      %v9098 = vsel %vm475, %v9018, 0
      %v9101 = vsel %vm475, %v9019, 0
      %v9104 = vsel %vm475, %v9020, 0
      %v9107 = vsel %vm475, %v9021, 0
      %v9110 = vsel %vm475, %v9022, 0
      %v9113 = vsel %vm475, %v9023, 0
      %v9116 = vsel %vm475, %v9024, 0
      %v9119 = vsel %vm475, %v9025, 0
      %v9122 = vsel %vm475, %v9026, 0
      %v9125 = vsel %vm475, %v9027, 0
      %v9128 = vsel %vm475, %v9028, 0
      %v9131 = vsel %vm475, %v9029, 0
      %v9134 = vsel %vm475, %v9030, 0
      %9136 = vmatpush.msra.mxu0 0.0
      %9137 = vmatpush.msra.mxu0 0.0
      %9138 = vmatpush.msra.mxu0 0.0
      %9139 = vmatpush.msra.mxu0 0.0
      %9140 = vmatpush.msra.mxu0 0.0
      %9141 = vmatpush.msra.mxu0 0.0
      %9142 = vmatpush.msra.mxu0 0.0
      %9143 = vmatpush.msra.mxu0 0.0
      %9144 = vmatpush.msra.mxu0 %v9039
      %9145 = vmatpush.msra.mxu0 %v9038
      %9146 = vmatpush.msra.mxu0 %v9037
      %9147 = vmatpush.msra.mxu0 %v9036
      %9148 = vmatpush.msra.mxu0 %v9035
      %9149 = vmatpush.msra.mxu0 %v9034
      %9150 = vmatpush.msra.mxu0 %v9033
      %9151 = vmatpush.msra.mxu0 %v9032
      %9152 = vmatmul.f32.gmra.mxu0 %v9041
      %v9153 = vpop.f32.mrf.mxu0
      %v9154 = vadd.f32 0.0, %v9153
      %9155 = vmatmul.f32.gmra.mxu0 %v9044
      %v9156 = vpop.f32.mrf.mxu0
      %v9157 = vadd.f32 0.0, %v9156
      %9158 = vmatmul.f32.gmra.mxu0 %v9047
      %v9159 = vpop.f32.mrf.mxu0
      %v9160 = vadd.f32 0.0, %v9159
      %9161 = vmatmul.f32.gmra.mxu0 %v9050
      %v9162 = vpop.f32.mrf.mxu0
      %v9163 = vadd.f32 0.0, %v9162
      %9164 = vmatmul.f32.gmra.mxu0 %v9053
      %v9165 = vpop.f32.mrf.mxu0
      %v9166 = vadd.f32 0.0, %v9165
      %9167 = vmatmul.f32.gmra.mxu0 %v9056
      %v9168 = vpop.f32.mrf.mxu0
      %v9169 = vadd.f32 0.0, %v9168
      %9170 = vmatmul.f32.gmra.mxu0 %v9059
      %v9171 = vpop.f32.mrf.mxu0
      %v9172 = vadd.f32 0.0, %v9171
      %9173 = vmatmul.f32.gmra.mxu0 %v9062
      %v9174 = vpop.f32.mrf.mxu0
      %v9175 = vadd.f32 0.0, %v9174
      %9176 = vmatmul.f32.gmra.mxu0 %v9065
      %v9177 = vpop.f32.mrf.mxu0
      %v9178 = vadd.f32 0.0, %v9177
      %9179 = vmatmul.f32.gmra.mxu0 %v9068
      %v9180 = vpop.f32.mrf.mxu0
      %v9181 = vadd.f32 0.0, %v9180
      %9182 = vmatmul.f32.gmra.mxu0 %v9071
      %v9183 = vpop.f32.mrf.mxu0
      %v9184 = vadd.f32 0.0, %v9183
      %9185 = vmatmul.f32.gmra.mxu0 %v9074
      %v9186 = vpop.f32.mrf.mxu0
      %v9187 = vadd.f32 0.0, %v9186
      %9188 = vmatmul.f32.gmra.mxu0 %v9077
      %v9189 = vpop.f32.mrf.mxu0
      %v9190 = vadd.f32 0.0, %v9189
      %9191 = vmatmul.f32.gmra.mxu0 %v9080
      %v9192 = vpop.f32.mrf.mxu0
      %v9193 = vadd.f32 0.0, %v9192
      %9194 = vmatmul.f32.gmra.mxu0 %v9083
      %v9195 = vpop.f32.mrf.mxu0
      %v9196 = vadd.f32 0.0, %v9195
      %9197 = vmatmul.f32.gmra.mxu0 %v9086
      %v9198 = vpop.f32.mrf.mxu0
      %v9199 = vadd.f32 0.0, %v9198
      %9200 = vmatmul.f32.gmra.mxu0 %v9089
      %v9201 = vpop.f32.mrf.mxu0
      %v9202 = vadd.f32 0.0, %v9201
      %9203 = vmatmul.f32.gmra.mxu0 %v9092
      %v9204 = vpop.f32.mrf.mxu0
      %v9205 = vadd.f32 0.0, %v9204
      %9206 = vmatmul.f32.gmra.mxu0 %v9095
      %v9207 = vpop.f32.mrf.mxu0
      %v9208 = vadd.f32 0.0, %v9207
      %9209 = vmatmul.f32.gmra.mxu0 %v9098
      %v9210 = vpop.f32.mrf.mxu0
      %v9211 = vadd.f32 0.0, %v9210
      %9212 = vmatmul.f32.gmra.mxu0 %v9101
      %v9213 = vpop.f32.mrf.mxu0
      %v9214 = vadd.f32 0.0, %v9213
      %9215 = vmatmul.f32.gmra.mxu0 %v9104
      %v9216 = vpop.f32.mrf.mxu0
      %v9217 = vadd.f32 0.0, %v9216
      %9218 = vmatmul.f32.gmra.mxu0 %v9107
      %v9219 = vpop.f32.mrf.mxu0
      %v9220 = vadd.f32 0.0, %v9219
      %9221 = vmatmul.f32.gmra.mxu0 %v9110
      %v9222 = vpop.f32.mrf.mxu0
      %v9223 = vadd.f32 0.0, %v9222
      %9224 = vmatmul.f32.gmra.mxu0 %v9113
      %v9225 = vpop.f32.mrf.mxu0
      %v9226 = vadd.f32 0.0, %v9225
      %9227 = vmatmul.f32.gmra.mxu0 %v9116
      %v9228 = vpop.f32.mrf.mxu0
      %v9229 = vadd.f32 0.0, %v9228
      %9230 = vmatmul.f32.gmra.mxu0 %v9119
      %v9231 = vpop.f32.mrf.mxu0
      %v9232 = vadd.f32 0.0, %v9231
      %9233 = vmatmul.f32.gmra.mxu0 %v9122
      %v9234 = vpop.f32.mrf.mxu0
      %v9235 = vadd.f32 0.0, %v9234
      %9236 = vmatmul.f32.gmra.mxu0 %v9125
      %v9237 = vpop.f32.mrf.mxu0
      %v9238 = vadd.f32 0.0, %v9237
      %9239 = vmatmul.f32.gmra.mxu0 %v9128
      %v9240 = vpop.f32.mrf.mxu0
      %v9241 = vadd.f32 0.0, %v9240
      %9242 = vmatmul.f32.gmra.mxu0 %v9131
      %v9243 = vpop.f32.mrf.mxu0
      %v9244 = vadd.f32 0.0, %v9243
      %9245 = vmatmul.f32.gmra.mxu0 %v9134
      %v9246 = vpop.f32.mrf.mxu0
      %v9247 = vadd.f32 0.0, %v9246
      %9248 = vdwg.mxu0
      %v9249 = vadd.f32 %v8967, %v9154
      %v9250 = vadd.f32 %v8968, %v9157
      %v9251 = vadd.f32 %v8969, %v9160
      %v9252 = vadd.f32 %v8970, %v9163
      %v9253 = vadd.f32 %v8971, %v9166
      %v9254 = vadd.f32 %v8972, %v9169
      %v9255 = vadd.f32 %v8973, %v9172
      %v9256 = vadd.f32 %v8974, %v9175
      %v9257 = vadd.f32 %v8975, %v9178
      %v9258 = vadd.f32 %v8976, %v9181
      %v9259 = vadd.f32 %v8977, %v9184
      %v9260 = vadd.f32 %v8978, %v9187
      %v9261 = vadd.f32 %v8979, %v9190
      %v9262 = vadd.f32 %v8980, %v9193
      %v9263 = vadd.f32 %v8981, %v9196
      %v9264 = vadd.f32 %v8982, %v9199
      %v9265 = vadd.f32 %v8983, %v9202
      %v9266 = vadd.f32 %v8984, %v9205
      %v9267 = vadd.f32 %v8985, %v9208
      %v9268 = vadd.f32 %v8986, %v9211
      %v9269 = vadd.f32 %v8987, %v9214
      %v9270 = vadd.f32 %v8988, %v9217
      %v9271 = vadd.f32 %v8989, %v9220
      %v9272 = vadd.f32 %v8990, %v9223
      %v9273 = vadd.f32 %v8991, %v9226
      %v9274 = vadd.f32 %v8992, %v9229
      %v9275 = vadd.f32 %v8993, %v9232
      %v9276 = vadd.f32 %v8994, %v9235
      %v9277 = vadd.f32 %v8995, %v9238
      %v9278 = vadd.f32 %v8996, %v9241
      %v9279 = vadd.f32 %v8997, %v9244
      %v9280 = vadd.f32 %v8998, %v9247
      %v9281 = vld [vmem:[%s2130 + $0x2] sm:$0xff]
      %v9282 = vld [vmem:[%s2130 + $0xa] sm:$0xff]
      %v9283 = vld [vmem:[%s2130 + $0x1a] sm:$0xff]
      %v9284 = vld [vmem:[%s2130 + $0x22] sm:$0xff]
      %v9285 = vld [vmem:[%s2130 + $0x32] sm:$0xff]
      %v9286 = vld [vmem:[%s2130 + $0x3a] sm:$0xff]
      %v9287 = vld [vmem:[%s2130 + $0x4a] sm:$0xff]
      %v9288 = vld [vmem:[%s2130 + $0x52] sm:$0xff]
      %v9289 = vld [vmem:[%s2130 + $0x62] sm:$0xff]
      %v9290 = vld [vmem:[%s2130 + $0x6a] sm:$0xff]
      %v9291 = vld [vmem:[%s2130 + $0x7a] sm:$0xff]
      %v9292 = vld [vmem:[%s2130 + $0x82] sm:$0xff]
      %v9293 = vld [vmem:[%s2130 + $0x92] sm:$0xff]
      %v9294 = vld [vmem:[%s2130 + $0x9a] sm:$0xff]
      %v9295 = vld [vmem:[%s2130 + $0xaa] sm:$0xff]
      %v9296 = vld [vmem:[%s2130 + $0xb2] sm:$0xff]
      %v9297 = vld [vmem:[%s2130 + $0xc2] sm:$0xff]
      %v9298 = vld [vmem:[%s2130 + $0xca] sm:$0xff]
      %v9299 = vld [vmem:[%s2130 + $0xda] sm:$0xff]
      %v9300 = vld [vmem:[%s2130 + $0xe2] sm:$0xff]
      %v9301 = vld [vmem:[%s2130 + $0xf2] sm:$0xff]
      %v9302 = vld [vmem:[%s2130 + $0xfa] sm:$0xff]
      %v9303 = vld [vmem:[%s2130 + $0x10a] sm:$0xff]
      %v9304 = vld [vmem:[%s2130 + $0x112] sm:$0xff]
      %v9305 = vld [vmem:[%s2130 + $0x122] sm:$0xff]
      %v9306 = vld [vmem:[%s2130 + $0x12a] sm:$0xff]
      %v9307 = vld [vmem:[%s2130 + $0x13a] sm:$0xff]
      %v9308 = vld [vmem:[%s2130 + $0x142] sm:$0xff]
      %v9309 = vld [vmem:[%s2130 + $0x152] sm:$0xff]
      %v9310 = vld [vmem:[%s2130 + $0x15a] sm:$0xff]
      %v9311 = vld [vmem:[%s2130 + $0x16a] sm:$0xff]
      %v9312 = vld [vmem:[%s2130 + $0x172] sm:$0xff]
      %s9313 = scalar_lea.vmem %s7, 512
      %v9314 = vld [vmem:[%s9313] sm:$0xff]
      %v9315 = vld [vmem:[%s9313 + $0x8] sm:$0xff]
      %v9316 = vld [vmem:[%s9313 + $0x10] sm:$0xff]
      %v9317 = vld [vmem:[%s9313 + $0x18] sm:$0xff]
      %v9318 = vld [vmem:[%s9313 + $0x20] sm:$0xff]
      %v9319 = vld [vmem:[%s9313 + $0x28] sm:$0xff]
      %v9320 = vld [vmem:[%s9313 + $0x30] sm:$0xff]
      %v9321 = vld [vmem:[%s9313 + $0x38] sm:$0xff]
      %v9323 = vsel %vm475, %v9281, 0
      %v9326 = vsel %vm475, %v9282, 0
      %v9329 = vsel %vm475, %v9283, 0
      %v9332 = vsel %vm475, %v9284, 0
      %v9335 = vsel %vm475, %v9285, 0
      %v9338 = vsel %vm475, %v9286, 0
      %v9341 = vsel %vm475, %v9287, 0
      %v9344 = vsel %vm475, %v9288, 0
      %v9347 = vsel %vm475, %v9289, 0
      %v9350 = vsel %vm475, %v9290, 0
      %v9353 = vsel %vm475, %v9291, 0
      %v9356 = vsel %vm475, %v9292, 0
      %v9359 = vsel %vm475, %v9293, 0
      %v9362 = vsel %vm475, %v9294, 0
      %v9365 = vsel %vm475, %v9295, 0
      %v9368 = vsel %vm475, %v9296, 0
      %v9371 = vsel %vm475, %v9297, 0
      %v9374 = vsel %vm475, %v9298, 0
      %v9377 = vsel %vm475, %v9299, 0
      %v9380 = vsel %vm475, %v9300, 0
      %v9383 = vsel %vm475, %v9301, 0
      %v9386 = vsel %vm475, %v9302, 0
      %v9389 = vsel %vm475, %v9303, 0
      %v9392 = vsel %vm475, %v9304, 0
      %v9395 = vsel %vm475, %v9305, 0
      %v9398 = vsel %vm475, %v9306, 0
      %v9401 = vsel %vm475, %v9307, 0
      %v9404 = vsel %vm475, %v9308, 0
      %v9407 = vsel %vm475, %v9309, 0
      %v9410 = vsel %vm475, %v9310, 0
      %v9413 = vsel %vm475, %v9311, 0
      %v9416 = vsel %vm475, %v9312, 0
      %9418 = vmatpush.msra.mxu0 0.0
      %9419 = vmatpush.msra.mxu0 0.0
      %9420 = vmatpush.msra.mxu0 0.0
      %9421 = vmatpush.msra.mxu0 0.0
      %9422 = vmatpush.msra.mxu0 0.0
      %9423 = vmatpush.msra.mxu0 0.0
      %9424 = vmatpush.msra.mxu0 0.0
      %9425 = vmatpush.msra.mxu0 0.0
      %9426 = vmatpush.msra.mxu0 %v9321
      %9427 = vmatpush.msra.mxu0 %v9320
      %9428 = vmatpush.msra.mxu0 %v9319
      %9429 = vmatpush.msra.mxu0 %v9318
      %9430 = vmatpush.msra.mxu0 %v9317
      %9431 = vmatpush.msra.mxu0 %v9316
      %9432 = vmatpush.msra.mxu0 %v9315
      %9433 = vmatpush.msra.mxu0 %v9314
      %9434 = vmatmul.f32.gmra.mxu0 %v9323
      %v9435 = vpop.f32.mrf.mxu0
      %v9436 = vadd.f32 0.0, %v9435
      %9437 = vmatmul.f32.gmra.mxu0 %v9326
      %v9438 = vpop.f32.mrf.mxu0
      %v9439 = vadd.f32 0.0, %v9438
      %9440 = vmatmul.f32.gmra.mxu0 %v9329
      %v9441 = vpop.f32.mrf.mxu0
      %v9442 = vadd.f32 0.0, %v9441
      %9443 = vmatmul.f32.gmra.mxu0 %v9332
      %v9444 = vpop.f32.mrf.mxu0
      %v9445 = vadd.f32 0.0, %v9444
      %9446 = vmatmul.f32.gmra.mxu0 %v9335
      %v9447 = vpop.f32.mrf.mxu0
      %v9448 = vadd.f32 0.0, %v9447
      %9449 = vmatmul.f32.gmra.mxu0 %v9338
      %v9450 = vpop.f32.mrf.mxu0
      %v9451 = vadd.f32 0.0, %v9450
      %9452 = vmatmul.f32.gmra.mxu0 %v9341
      %v9453 = vpop.f32.mrf.mxu0
      %v9454 = vadd.f32 0.0, %v9453
      %9455 = vmatmul.f32.gmra.mxu0 %v9344
      %v9456 = vpop.f32.mrf.mxu0
      %v9457 = vadd.f32 0.0, %v9456
      %9458 = vmatmul.f32.gmra.mxu0 %v9347
      %v9459 = vpop.f32.mrf.mxu0
      %v9460 = vadd.f32 0.0, %v9459
      %9461 = vmatmul.f32.gmra.mxu0 %v9350
      %v9462 = vpop.f32.mrf.mxu0
      %v9463 = vadd.f32 0.0, %v9462
      %9464 = vmatmul.f32.gmra.mxu0 %v9353
      %v9465 = vpop.f32.mrf.mxu0
      %v9466 = vadd.f32 0.0, %v9465
      %9467 = vmatmul.f32.gmra.mxu0 %v9356
      %v9468 = vpop.f32.mrf.mxu0
      %v9469 = vadd.f32 0.0, %v9468
      %9470 = vmatmul.f32.gmra.mxu0 %v9359
      %v9471 = vpop.f32.mrf.mxu0
      %v9472 = vadd.f32 0.0, %v9471
      %9473 = vmatmul.f32.gmra.mxu0 %v9362
      %v9474 = vpop.f32.mrf.mxu0
      %v9475 = vadd.f32 0.0, %v9474
      %9476 = vmatmul.f32.gmra.mxu0 %v9365
      %v9477 = vpop.f32.mrf.mxu0
      %v9478 = vadd.f32 0.0, %v9477
      %9479 = vmatmul.f32.gmra.mxu0 %v9368
      %v9480 = vpop.f32.mrf.mxu0
      %v9481 = vadd.f32 0.0, %v9480
      %9482 = vmatmul.f32.gmra.mxu0 %v9371
      %v9483 = vpop.f32.mrf.mxu0
      %v9484 = vadd.f32 0.0, %v9483
      %9485 = vmatmul.f32.gmra.mxu0 %v9374
      %v9486 = vpop.f32.mrf.mxu0
      %v9487 = vadd.f32 0.0, %v9486
      %9488 = vmatmul.f32.gmra.mxu0 %v9377
      %v9489 = vpop.f32.mrf.mxu0
      %v9490 = vadd.f32 0.0, %v9489
      %9491 = vmatmul.f32.gmra.mxu0 %v9380
      %v9492 = vpop.f32.mrf.mxu0
      %v9493 = vadd.f32 0.0, %v9492
      %9494 = vmatmul.f32.gmra.mxu0 %v9383
      %v9495 = vpop.f32.mrf.mxu0
      %v9496 = vadd.f32 0.0, %v9495
      %9497 = vmatmul.f32.gmra.mxu0 %v9386
      %v9498 = vpop.f32.mrf.mxu0
      %v9499 = vadd.f32 0.0, %v9498
      %9500 = vmatmul.f32.gmra.mxu0 %v9389
      %v9501 = vpop.f32.mrf.mxu0
      %v9502 = vadd.f32 0.0, %v9501
      %9503 = vmatmul.f32.gmra.mxu0 %v9392
      %v9504 = vpop.f32.mrf.mxu0
      %v9505 = vadd.f32 0.0, %v9504
      %9506 = vmatmul.f32.gmra.mxu0 %v9395
      %v9507 = vpop.f32.mrf.mxu0
      %v9508 = vadd.f32 0.0, %v9507
      %9509 = vmatmul.f32.gmra.mxu0 %v9398
      %v9510 = vpop.f32.mrf.mxu0
      %v9511 = vadd.f32 0.0, %v9510
      %9512 = vmatmul.f32.gmra.mxu0 %v9401
      %v9513 = vpop.f32.mrf.mxu0
      %v9514 = vadd.f32 0.0, %v9513
      %9515 = vmatmul.f32.gmra.mxu0 %v9404
      %v9516 = vpop.f32.mrf.mxu0
      %v9517 = vadd.f32 0.0, %v9516
      %9518 = vmatmul.f32.gmra.mxu0 %v9407
      %v9519 = vpop.f32.mrf.mxu0
      %v9520 = vadd.f32 0.0, %v9519
      %9521 = vmatmul.f32.gmra.mxu0 %v9410
      %v9522 = vpop.f32.mrf.mxu0
      %v9523 = vadd.f32 0.0, %v9522
      %9524 = vmatmul.f32.gmra.mxu0 %v9413
      %v9525 = vpop.f32.mrf.mxu0
      %v9526 = vadd.f32 0.0, %v9525
      %9527 = vmatmul.f32.gmra.mxu0 %v9416
      %v9528 = vpop.f32.mrf.mxu0
      %v9529 = vadd.f32 0.0, %v9528
      %9530 = vdwg.mxu0
      %v9531 = vadd.f32 %v9249, %v9436
      %v9532 = vadd.f32 %v9250, %v9439
      %v9533 = vadd.f32 %v9251, %v9442
      %v9534 = vadd.f32 %v9252, %v9445
      %v9535 = vadd.f32 %v9253, %v9448
      %v9536 = vadd.f32 %v9254, %v9451
      %v9537 = vadd.f32 %v9255, %v9454
      %v9538 = vadd.f32 %v9256, %v9457
      %v9539 = vadd.f32 %v9257, %v9460
      %v9540 = vadd.f32 %v9258, %v9463
      %v9541 = vadd.f32 %v9259, %v9466
      %v9542 = vadd.f32 %v9260, %v9469
      %v9543 = vadd.f32 %v9261, %v9472
      %v9544 = vadd.f32 %v9262, %v9475
      %v9545 = vadd.f32 %v9263, %v9478
      %v9546 = vadd.f32 %v9264, %v9481
      %v9547 = vadd.f32 %v9265, %v9484
      %v9548 = vadd.f32 %v9266, %v9487
      %v9549 = vadd.f32 %v9267, %v9490
      %v9550 = vadd.f32 %v9268, %v9493
      %v9551 = vadd.f32 %v9269, %v9496
      %v9552 = vadd.f32 %v9270, %v9499
      %v9553 = vadd.f32 %v9271, %v9502
      %v9554 = vadd.f32 %v9272, %v9505
      %v9555 = vadd.f32 %v9273, %v9508
      %v9556 = vadd.f32 %v9274, %v9511
      %v9557 = vadd.f32 %v9275, %v9514
      %v9558 = vadd.f32 %v9276, %v9517
      %v9559 = vadd.f32 %v9277, %v9520
      %v9560 = vadd.f32 %v9278, %v9523
      %v9561 = vadd.f32 %v9279, %v9526
      %v9562 = vadd.f32 %v9280, %v9529
      %v9563 = vld [vmem:[%s8] sm:$0x1]
      %v9565 = vperm.slane %v9563, 0
      %v9567 = vadd.f32 %v9531, %v9565
      %v9568 = vadd.f32 %v9532, %v9565
      %v9569 = vadd.f32 %v9533, %v9565
      %v9570 = vadd.f32 %v9534, %v9565
      %v9571 = vadd.f32 %v9535, %v9565
      %v9572 = vadd.f32 %v9536, %v9565
      %v9573 = vadd.f32 %v9537, %v9565
      %v9574 = vadd.f32 %v9538, %v9565
      %v9575 = vadd.f32 %v9539, %v9565
      %v9576 = vadd.f32 %v9540, %v9565
      %v9577 = vadd.f32 %v9541, %v9565
      %v9578 = vadd.f32 %v9542, %v9565
      %v9579 = vadd.f32 %v9543, %v9565
      %v9580 = vadd.f32 %v9544, %v9565
      %v9581 = vadd.f32 %v9545, %v9565
      %v9582 = vadd.f32 %v9546, %v9565
      %v9583 = vadd.f32 %v9547, %v9565
      %v9584 = vadd.f32 %v9548, %v9565
      %v9585 = vadd.f32 %v9549, %v9565
      %v9586 = vadd.f32 %v9550, %v9565
      %v9587 = vadd.f32 %v9551, %v9565
      %v9588 = vadd.f32 %v9552, %v9565
      %v9589 = vadd.f32 %v9553, %v9565
      %v9590 = vadd.f32 %v9554, %v9565
      %v9591 = vadd.f32 %v9555, %v9565
      %v9592 = vadd.f32 %v9556, %v9565
      %v9593 = vadd.f32 %v9557, %v9565
      %v9594 = vadd.f32 %v9558, %v9565
      %v9595 = vadd.f32 %v9559, %v9565
      %v9596 = vadd.f32 %v9560, %v9565
      %v9597 = vadd.f32 %v9561, %v9565
      %v9598 = vadd.f32 %v9562, %v9565
      %v9599 = vmax.f32 %v9567, 0.0
      %v9600 = vmax.f32 %v9568, 0.0
      %v9601 = vmax.f32 %v9569, 0.0
      %v9602 = vmax.f32 %v9570, 0.0
      %v9603 = vmax.f32 %v9571, 0.0
      %v9604 = vmax.f32 %v9572, 0.0
      %v9605 = vmax.f32 %v9573, 0.0
      %v9606 = vmax.f32 %v9574, 0.0
      %v9607 = vmax.f32 %v9575, 0.0
      %v9608 = vmax.f32 %v9576, 0.0
      %v9609 = vmax.f32 %v9577, 0.0
      %v9610 = vmax.f32 %v9578, 0.0
      %v9611 = vmax.f32 %v9579, 0.0
      %v9612 = vmax.f32 %v9580, 0.0
      %v9613 = vmax.f32 %v9581, 0.0
      %v9614 = vmax.f32 %v9582, 0.0
      %v9615 = vmax.f32 %v9583, 0.0
      %v9616 = vmax.f32 %v9584, 0.0
      %v9617 = vmax.f32 %v9585, 0.0
      %v9618 = vmax.f32 %v9586, 0.0
      %v9619 = vmax.f32 %v9587, 0.0
      %v9620 = vmax.f32 %v9588, 0.0
      %v9621 = vmax.f32 %v9589, 0.0
      %v9622 = vmax.f32 %v9590, 0.0
      %v9623 = vmax.f32 %v9591, 0.0
      %v9624 = vmax.f32 %v9592, 0.0
      %v9625 = vmax.f32 %v9593, 0.0
      %v9626 = vmax.f32 %v9594, 0.0
      %v9627 = vmax.f32 %v9595, 0.0
      %v9628 = vmax.f32 %v9596, 0.0
      %v9629 = vmax.f32 %v9597, 0.0
      %v9630 = vmax.f32 %v9598, 0.0
      %9631 = vst.msk [vmem:[#allocation2] sm:$0xff] %vm475, 0.0
      %9632 = vst.msk [vmem:[#allocation2 + $0x8] sm:$0xff] %vm475, 0.0
      %9633 = vst.msk [vmem:[#allocation2 + $0x10] sm:$0x3] %vm478, 0.0
      %9634 = vst.msk [vmem:[#allocation2 + $0x18] sm:$0xff] %vm475, 0.0
      %9635 = vst.msk [vmem:[#allocation2 + $0x20] sm:$0xff] %vm475, 0.0
      %9636 = vst.msk [vmem:[#allocation2 + $0x28] sm:$0x3] %vm478, 0.0
      %9637 = vst.msk [vmem:[#allocation2 + $0x30] sm:$0xff] %vm475, 0.0
      %9638 = vst.msk [vmem:[#allocation2 + $0x38] sm:$0xff] %vm475, 0.0
      %9639 = vst.msk [vmem:[#allocation2 + $0x40] sm:$0x3] %vm478, 0.0
      %9640 = vst.msk [vmem:[#allocation2 + $0x48] sm:$0xff] %vm475, 0.0
      %9641 = vst.msk [vmem:[#allocation2 + $0x50] sm:$0xff] %vm475, 0.0
      %9642 = vst.msk [vmem:[#allocation2 + $0x58] sm:$0x3] %vm478, 0.0
      %9643 = vst.msk [vmem:[#allocation2 + $0x60] sm:$0xff] %vm475, 0.0
      %9644 = vst.msk [vmem:[#allocation2 + $0x68] sm:$0xff] %vm475, 0.0
      %9645 = vst.msk [vmem:[#allocation2 + $0x70] sm:$0x3] %vm478, 0.0
      %9646 = vst.msk [vmem:[#allocation2 + $0x78] sm:$0xff] %vm475, 0.0
      %9647 = vst.msk [vmem:[#allocation2 + $0x80] sm:$0xff] %vm475, 0.0
      %9648 = vst.msk [vmem:[#allocation2 + $0x88] sm:$0x3] %vm478, 0.0
      %9649 = vst.msk [vmem:[#allocation2 + $0x90] sm:$0xff] %vm475, 0.0
      %9650 = vst.msk [vmem:[#allocation2 + $0x98] sm:$0xff] %vm475, 0.0
      %9651 = vst.msk [vmem:[#allocation2 + $0xa0] sm:$0x3] %vm478, 0.0
      %9652 = vst.msk [vmem:[#allocation2 + $0xa8] sm:$0xff] %vm475, 0.0
      %9653 = vst.msk [vmem:[#allocation2 + $0xb0] sm:$0xff] %vm475, 0.0
      %9654 = vst.msk [vmem:[#allocation2 + $0xb8] sm:$0x3] %vm478, 0.0
      %9655 = vst.msk [vmem:[#allocation2 + $0xc0] sm:$0xff] %vm475, 0.0
      %9656 = vst.msk [vmem:[#allocation2 + $0xc8] sm:$0xff] %vm475, 0.0
      %9657 = vst.msk [vmem:[#allocation2 + $0xd0] sm:$0x3] %vm478, 0.0
      %9658 = vst.msk [vmem:[#allocation2 + $0xd8] sm:$0xff] %vm475, 0.0
      %9659 = vst.msk [vmem:[#allocation2 + $0xe0] sm:$0xff] %vm475, 0.0
      %9660 = vst.msk [vmem:[#allocation2 + $0xe8] sm:$0x3] %vm478, 0.0
      %9661 = vst.msk [vmem:[#allocation2 + $0xf0] sm:$0xff] %vm475, 0.0
      %9662 = vst.msk [vmem:[#allocation2 + $0xf8] sm:$0xff] %vm475, 0.0
      %9663 = vst.msk [vmem:[#allocation2 + $0x100] sm:$0x3] %vm478, 0.0
      %9664 = vst.msk [vmem:[#allocation2 + $0x108] sm:$0xff] %vm475, 0.0
      %9665 = vst.msk [vmem:[#allocation2 + $0x110] sm:$0xff] %vm475, 0.0
      %9666 = vst.msk [vmem:[#allocation2 + $0x118] sm:$0x3] %vm478, 0.0
      %9667 = vst.msk [vmem:[#allocation2 + $0x120] sm:$0xff] %vm475, 0.0
      %9668 = vst.msk [vmem:[#allocation2 + $0x128] sm:$0xff] %vm475, 0.0
      %9669 = vst.msk [vmem:[#allocation2 + $0x130] sm:$0x3] %vm478, 0.0
      %9670 = vst.msk [vmem:[#allocation2 + $0x138] sm:$0xff] %vm475, 0.0
      %9671 = vst.msk [vmem:[#allocation2 + $0x140] sm:$0xff] %vm475, 0.0
      %9672 = vst.msk [vmem:[#allocation2 + $0x148] sm:$0x3] %vm478, 0.0
      %9673 = vst.msk [vmem:[#allocation2 + $0x150] sm:$0xff] %vm475, 0.0
      %9674 = vst.msk [vmem:[#allocation2 + $0x158] sm:$0xff] %vm475, 0.0
      %9675 = vst.msk [vmem:[#allocation2 + $0x160] sm:$0x3] %vm478, 0.0
      %9676 = vst.msk [vmem:[#allocation2 + $0x168] sm:$0xff] %vm475, 0.0
      %9677 = vst.msk [vmem:[#allocation2 + $0x170] sm:$0xff] %vm475, 0.0
      %9678 = vst.msk [vmem:[#allocation2 + $0x178] sm:$0x3] %vm478, 0.0
      %9679 = vst.msk [vmem:[#allocation2 + $0x180] sm:$0xff] %vm475, 0.0
      %9680 = vst.msk [vmem:[#allocation2 + $0x188] sm:$0xff] %vm475, 0.0
      %9681 = vst.msk [vmem:[#allocation2 + $0x190] sm:$0x3] %vm478, 0.0
      %9682 = vst.msk [vmem:[#allocation2 + $0x198] sm:$0xff] %vm475, 0.0
      %9683 = vst.msk [vmem:[#allocation2 + $0x1a0] sm:$0xff] %vm475, 0.0
      %9684 = vst.msk [vmem:[#allocation2 + $0x1a8] sm:$0x3] %vm478, 0.0
      %9685 = vst.msk [vmem:[%s531 + $0x1] sm:$0xff] %vm3036, %v9599
      %9686 = vst.msk [vmem:[%s531 + $0x9] sm:$0xff] %vm3036, %v9600
      %9687 = vst.msk [vmem:[%s531 + $0x19] sm:$0xff] %vm3036, %v9601
      %9688 = vst.msk [vmem:[%s531 + $0x21] sm:$0xff] %vm3036, %v9602
      %9689 = vst.msk [vmem:[%s531 + $0x31] sm:$0xff] %vm3036, %v9603
      %9690 = vst.msk [vmem:[%s531 + $0x39] sm:$0xff] %vm3036, %v9604
      %9691 = vst.msk [vmem:[%s531 + $0x49] sm:$0xff] %vm3036, %v9605
      %9692 = vst.msk [vmem:[%s531 + $0x51] sm:$0xff] %vm3036, %v9606
      %9693 = vst.msk [vmem:[%s531 + $0x61] sm:$0xff] %vm3036, %v9607
      %9694 = vst.msk [vmem:[%s531 + $0x69] sm:$0xff] %vm3036, %v9608
      %9695 = vst.msk [vmem:[%s531 + $0x79] sm:$0xff] %vm3036, %v9609
      %9696 = vst.msk [vmem:[%s531 + $0x81] sm:$0xff] %vm3036, %v9610
      %9697 = vst.msk [vmem:[%s531 + $0x91] sm:$0xff] %vm3036, %v9611
      %9698 = vst.msk [vmem:[%s531 + $0x99] sm:$0xff] %vm3036, %v9612
      %9699 = vst.msk [vmem:[%s531 + $0xa9] sm:$0xff] %vm3036, %v9613
      %9700 = vst.msk [vmem:[%s531 + $0xb1] sm:$0xff] %vm3036, %v9614
      %9701 = vst.msk [vmem:[%s531 + $0xc1] sm:$0xff] %vm3036, %v9615
      %9702 = vst.msk [vmem:[%s531 + $0xc9] sm:$0xff] %vm3036, %v9616
      %9703 = vst.msk [vmem:[%s531 + $0xd9] sm:$0xff] %vm3036, %v9617
      %9704 = vst.msk [vmem:[%s531 + $0xe1] sm:$0xff] %vm3036, %v9618
      %9705 = vst.msk [vmem:[%s531 + $0xf1] sm:$0xff] %vm3036, %v9619
      %9706 = vst.msk [vmem:[%s531 + $0xf9] sm:$0xff] %vm3036, %v9620
      %9707 = vst.msk [vmem:[%s531 + $0x109] sm:$0xff] %vm3036, %v9621
      %9708 = vst.msk [vmem:[%s531 + $0x111] sm:$0xff] %vm3036, %v9622
      %9709 = vst.msk [vmem:[%s531 + $0x121] sm:$0xff] %vm3036, %v9623
      %9710 = vst.msk [vmem:[%s531 + $0x129] sm:$0xff] %vm3036, %v9624
      %9711 = vst.msk [vmem:[%s531 + $0x139] sm:$0xff] %vm3036, %v9625
      %9712 = vst.msk [vmem:[%s531 + $0x141] sm:$0xff] %vm3036, %v9626
      %9713 = vst.msk [vmem:[%s531 + $0x151] sm:$0xff] %vm3036, %v9627
      %9714 = vst.msk [vmem:[%s531 + $0x159] sm:$0xff] %vm3036, %v9628
      %9715 = vst.msk [vmem:[%s531 + $0x169] sm:$0xff] %vm3036, %v9629
      %9716 = vst.msk [vmem:[%s531 + $0x171] sm:$0xff] %vm3036, %v9630
      %v9717 = vld [vmem:[#allocation2] sm:$0xff]
      %v9718 = vld [vmem:[#allocation2 + $0x8] sm:$0xff]
      %v9719 = vld [vmem:[#allocation2 + $0x18] sm:$0xff]
      %v9720 = vld [vmem:[#allocation2 + $0x20] sm:$0xff]
      %v9721 = vld [vmem:[#allocation2 + $0x30] sm:$0xff]
      %v9722 = vld [vmem:[#allocation2 + $0x38] sm:$0xff]
      %v9723 = vld [vmem:[#allocation2 + $0x48] sm:$0xff]
      %v9724 = vld [vmem:[#allocation2 + $0x50] sm:$0xff]
      %v9725 = vld [vmem:[#allocation2 + $0x60] sm:$0xff]
      %v9726 = vld [vmem:[#allocation2 + $0x68] sm:$0xff]
      %v9727 = vld [vmem:[#allocation2 + $0x78] sm:$0xff]
      %v9728 = vld [vmem:[#allocation2 + $0x80] sm:$0xff]
      %v9729 = vld [vmem:[#allocation2 + $0x90] sm:$0xff]
      %v9730 = vld [vmem:[#allocation2 + $0x98] sm:$0xff]
      %v9731 = vld [vmem:[#allocation2 + $0xa8] sm:$0xff]
      %v9732 = vld [vmem:[#allocation2 + $0xb0] sm:$0xff]
      %v9733 = vld [vmem:[#allocation2 + $0xc0] sm:$0xff]
      %v9734 = vld [vmem:[#allocation2 + $0xc8] sm:$0xff]
      %v9735 = vld [vmem:[#allocation2 + $0xd8] sm:$0xff]
      %v9736 = vld [vmem:[#allocation2 + $0xe0] sm:$0xff]
      %v9737 = vld [vmem:[#allocation2 + $0xf0] sm:$0xff]
      %v9738 = vld [vmem:[#allocation2 + $0xf8] sm:$0xff]
      %v9739 = vld [vmem:[#allocation2 + $0x108] sm:$0xff]
      %v9740 = vld [vmem:[#allocation2 + $0x110] sm:$0xff]
      %v9741 = vld [vmem:[#allocation2 + $0x120] sm:$0xff]
      %v9742 = vld [vmem:[#allocation2 + $0x128] sm:$0xff]
      %v9743 = vld [vmem:[#allocation2 + $0x138] sm:$0xff]
      %v9744 = vld [vmem:[#allocation2 + $0x140] sm:$0xff]
      %v9745 = vld [vmem:[#allocation2 + $0x150] sm:$0xff]
      %v9746 = vld [vmem:[#allocation2 + $0x158] sm:$0xff]
      %v9747 = vld [vmem:[#allocation2 + $0x168] sm:$0xff]
      %v9748 = vld [vmem:[#allocation2 + $0x170] sm:$0xff]
      %v9749 = vld [vmem:[%s9] sm:$0xff]
      %v9750 = vld [vmem:[%s9 + $0x8] sm:$0xff]
      %v9751 = vld [vmem:[%s9 + $0x10] sm:$0xff]
      %v9752 = vld [vmem:[%s9 + $0x18] sm:$0xff]
      %v9753 = vld [vmem:[#allocation2 + $0x1] sm:$0xff]
      %v9754 = vld [vmem:[#allocation2 + $0x9] sm:$0xff]
      %v9755 = vld [vmem:[#allocation2 + $0x19] sm:$0xff]
      %v9756 = vld [vmem:[#allocation2 + $0x21] sm:$0xff]
      %v9757 = vld [vmem:[#allocation2 + $0x31] sm:$0xff]
      %v9758 = vld [vmem:[#allocation2 + $0x39] sm:$0xff]
      %v9759 = vld [vmem:[#allocation2 + $0x49] sm:$0xff]
      %v9760 = vld [vmem:[#allocation2 + $0x51] sm:$0xff]
      %v9761 = vld [vmem:[#allocation2 + $0x61] sm:$0xff]
      %v9762 = vld [vmem:[#allocation2 + $0x69] sm:$0xff]
      %v9763 = vld [vmem:[#allocation2 + $0x79] sm:$0xff]
      %v9764 = vld [vmem:[#allocation2 + $0x81] sm:$0xff]
      %v9765 = vld [vmem:[#allocation2 + $0x91] sm:$0xff]
      %v9766 = vld [vmem:[#allocation2 + $0x99] sm:$0xff]
      %v9767 = vld [vmem:[#allocation2 + $0xa9] sm:$0xff]
      %v9768 = vld [vmem:[#allocation2 + $0xb1] sm:$0xff]
      %v9769 = vld [vmem:[#allocation2 + $0xc1] sm:$0xff]
      %v9770 = vld [vmem:[#allocation2 + $0xc9] sm:$0xff]
      %v9771 = vld [vmem:[#allocation2 + $0xd9] sm:$0xff]
      %v9772 = vld [vmem:[#allocation2 + $0xe1] sm:$0xff]
      %v9773 = vld [vmem:[#allocation2 + $0xf1] sm:$0xff]
      %v9774 = vld [vmem:[#allocation2 + $0xf9] sm:$0xff]
      %v9775 = vld [vmem:[#allocation2 + $0x109] sm:$0xff]
      %v9776 = vld [vmem:[#allocation2 + $0x111] sm:$0xff]
      %v9777 = vld [vmem:[#allocation2 + $0x121] sm:$0xff]
      %v9778 = vld [vmem:[#allocation2 + $0x129] sm:$0xff]
      %v9779 = vld [vmem:[#allocation2 + $0x139] sm:$0xff]
      %v9780 = vld [vmem:[#allocation2 + $0x141] sm:$0xff]
      %v9781 = vld [vmem:[#allocation2 + $0x151] sm:$0xff]
      %v9782 = vld [vmem:[#allocation2 + $0x159] sm:$0xff]
      %v9783 = vld [vmem:[#allocation2 + $0x169] sm:$0xff]
      %v9784 = vld [vmem:[#allocation2 + $0x171] sm:$0xff]
      %s9785 = scalar_lea.vmem %s9, 32
      %v9786 = vld [vmem:[%s9785] sm:$0xff]
      %v9787 = vld [vmem:[%s9785 + $0x8] sm:$0xff]
      %v9788 = vld [vmem:[%s9785 + $0x10] sm:$0xff]
      %v9789 = vld [vmem:[%s9785 + $0x18] sm:$0xff]
      %v9791 = vsel %vm3036, %v9753, 0
      %v9794 = vsel %vm3036, %v9754, 0
      %v9797 = vsel %vm3036, %v9755, 0
      %v9800 = vsel %vm3036, %v9756, 0
      %v9803 = vsel %vm3036, %v9757, 0
      %v9806 = vsel %vm3036, %v9758, 0
      %v9809 = vsel %vm3036, %v9759, 0
      %v9812 = vsel %vm3036, %v9760, 0
      %v9815 = vsel %vm3036, %v9761, 0
      %v9818 = vsel %vm3036, %v9762, 0
      %v9821 = vsel %vm3036, %v9763, 0
      %v9824 = vsel %vm3036, %v9764, 0
      %v9827 = vsel %vm3036, %v9765, 0
      %v9830 = vsel %vm3036, %v9766, 0
      %v9833 = vsel %vm3036, %v9767, 0
      %v9836 = vsel %vm3036, %v9768, 0
      %v9839 = vsel %vm3036, %v9769, 0
      %v9842 = vsel %vm3036, %v9770, 0
      %v9845 = vsel %vm3036, %v9771, 0
      %v9848 = vsel %vm3036, %v9772, 0
      %v9851 = vsel %vm3036, %v9773, 0
      %v9854 = vsel %vm3036, %v9774, 0
      %v9857 = vsel %vm3036, %v9775, 0
      %v9860 = vsel %vm3036, %v9776, 0
      %v9863 = vsel %vm3036, %v9777, 0
      %v9866 = vsel %vm3036, %v9778, 0
      %v9869 = vsel %vm3036, %v9779, 0
      %v9872 = vsel %vm3036, %v9780, 0
      %v9875 = vsel %vm3036, %v9781, 0
      %v9878 = vsel %vm3036, %v9782, 0
      %v9881 = vsel %vm3036, %v9783, 0
      %v9884 = vsel %vm3036, %v9784, 0
      %9886 = vmatpush.msra.mxu0 0.0
      %9887 = vmatpush.msra.mxu0 0.0
      %9888 = vmatpush.msra.mxu0 0.0
      %9889 = vmatpush.msra.mxu0 0.0
      %9890 = vmatpush.msra.mxu0 0.0
      %9891 = vmatpush.msra.mxu0 0.0
      %9892 = vmatpush.msra.mxu0 0.0
      %9893 = vmatpush.msra.mxu0 0.0
      %9894 = vmatpush.msra.mxu0 0.0
      %9895 = vmatpush.msra.mxu0 0.0
      %9896 = vmatpush.msra.mxu0 0.0
      %9897 = vmatpush.msra.mxu0 0.0
      %9898 = vmatpush.msra.mxu0 %v9789
      %9899 = vmatpush.msra.mxu0 %v9788
      %9900 = vmatpush.msra.mxu0 %v9787
      %9901 = vmatpush.msra.mxu0 %v9786
      %9902 = vmatmul.f32.gmra.mxu0 %v9791
      %v9903 = vpop.f32.mrf.mxu0
      %v9904 = vadd.f32 0.0, %v9903
      %9905 = vmatmul.f32.gmra.mxu0 %v9794
      %v9906 = vpop.f32.mrf.mxu0
      %v9907 = vadd.f32 0.0, %v9906
      %9908 = vmatmul.f32.gmra.mxu0 %v9797
      %v9909 = vpop.f32.mrf.mxu0
      %v9910 = vadd.f32 0.0, %v9909
      %9911 = vmatmul.f32.gmra.mxu0 %v9800
      %v9912 = vpop.f32.mrf.mxu0
      %v9913 = vadd.f32 0.0, %v9912
      %9914 = vmatmul.f32.gmra.mxu0 %v9803
      %v9915 = vpop.f32.mrf.mxu0
      %v9916 = vadd.f32 0.0, %v9915
      %9917 = vmatmul.f32.gmra.mxu0 %v9806
      %v9918 = vpop.f32.mrf.mxu0
      %v9919 = vadd.f32 0.0, %v9918
      %9920 = vmatmul.f32.gmra.mxu0 %v9809
      %v9921 = vpop.f32.mrf.mxu0
      %v9922 = vadd.f32 0.0, %v9921
      %9923 = vmatmul.f32.gmra.mxu0 %v9812
      %v9924 = vpop.f32.mrf.mxu0
      %v9925 = vadd.f32 0.0, %v9924
      %9926 = vmatmul.f32.gmra.mxu0 %v9815
      %v9927 = vpop.f32.mrf.mxu0
      %v9928 = vadd.f32 0.0, %v9927
      %9929 = vmatmul.f32.gmra.mxu0 %v9818
      %v9930 = vpop.f32.mrf.mxu0
      %v9931 = vadd.f32 0.0, %v9930
      %9932 = vmatmul.f32.gmra.mxu0 %v9821
      %v9933 = vpop.f32.mrf.mxu0
      %v9934 = vadd.f32 0.0, %v9933
      %9935 = vmatmul.f32.gmra.mxu0 %v9824
      %v9936 = vpop.f32.mrf.mxu0
      %v9937 = vadd.f32 0.0, %v9936
      %9938 = vmatmul.f32.gmra.mxu0 %v9827
      %v9939 = vpop.f32.mrf.mxu0
      %v9940 = vadd.f32 0.0, %v9939
      %9941 = vmatmul.f32.gmra.mxu0 %v9830
      %v9942 = vpop.f32.mrf.mxu0
      %v9943 = vadd.f32 0.0, %v9942
      %9944 = vmatmul.f32.gmra.mxu0 %v9833
      %v9945 = vpop.f32.mrf.mxu0
      %v9946 = vadd.f32 0.0, %v9945
      %9947 = vmatmul.f32.gmra.mxu0 %v9836
      %v9948 = vpop.f32.mrf.mxu0
      %v9949 = vadd.f32 0.0, %v9948
      %9950 = vmatmul.f32.gmra.mxu0 %v9839
      %v9951 = vpop.f32.mrf.mxu0
      %v9952 = vadd.f32 0.0, %v9951
      %9953 = vmatmul.f32.gmra.mxu0 %v9842
      %v9954 = vpop.f32.mrf.mxu0
      %v9955 = vadd.f32 0.0, %v9954
      %9956 = vmatmul.f32.gmra.mxu0 %v9845
      %v9957 = vpop.f32.mrf.mxu0
      %v9958 = vadd.f32 0.0, %v9957
      %9959 = vmatmul.f32.gmra.mxu0 %v9848
      %v9960 = vpop.f32.mrf.mxu0
      %v9961 = vadd.f32 0.0, %v9960
      %9962 = vmatmul.f32.gmra.mxu0 %v9851
      %v9963 = vpop.f32.mrf.mxu0
      %v9964 = vadd.f32 0.0, %v9963
      %9965 = vmatmul.f32.gmra.mxu0 %v9854
      %v9966 = vpop.f32.mrf.mxu0
      %v9967 = vadd.f32 0.0, %v9966
      %9968 = vmatmul.f32.gmra.mxu0 %v9857
      %v9969 = vpop.f32.mrf.mxu0
      %v9970 = vadd.f32 0.0, %v9969
      %9971 = vmatmul.f32.gmra.mxu0 %v9860
      %v9972 = vpop.f32.mrf.mxu0
      %v9973 = vadd.f32 0.0, %v9972
      %9974 = vmatmul.f32.gmra.mxu0 %v9863
      %v9975 = vpop.f32.mrf.mxu0
      %v9976 = vadd.f32 0.0, %v9975
      %9977 = vmatmul.f32.gmra.mxu0 %v9866
      %v9978 = vpop.f32.mrf.mxu0
      %v9979 = vadd.f32 0.0, %v9978
      %9980 = vmatmul.f32.gmra.mxu0 %v9869
      %v9981 = vpop.f32.mrf.mxu0
      %v9982 = vadd.f32 0.0, %v9981
      %9983 = vmatmul.f32.gmra.mxu0 %v9872
      %v9984 = vpop.f32.mrf.mxu0
      %v9985 = vadd.f32 0.0, %v9984
      %9986 = vmatmul.f32.gmra.mxu0 %v9875
      %v9987 = vpop.f32.mrf.mxu0
      %v9988 = vadd.f32 0.0, %v9987
      %9989 = vmatmul.f32.gmra.mxu0 %v9878
      %v9990 = vpop.f32.mrf.mxu0
      %v9991 = vadd.f32 0.0, %v9990
      %9992 = vmatmul.f32.gmra.mxu0 %v9881
      %v9993 = vpop.f32.mrf.mxu0
      %v9994 = vadd.f32 0.0, %v9993
      %9995 = vmatmul.f32.gmra.mxu0 %v9884
      %v9996 = vpop.f32.mrf.mxu0
      %v9997 = vadd.f32 0.0, %v9996
      %9998 = vdwg.mxu0
      %v10000 = vsel %vm3036, %v9717, 0
      %v10003 = vsel %vm3036, %v9718, 0
      %v10006 = vsel %vm3036, %v9719, 0
      %v10009 = vsel %vm3036, %v9720, 0
      %v10012 = vsel %vm3036, %v9721, 0
      %v10015 = vsel %vm3036, %v9722, 0
      %v10018 = vsel %vm3036, %v9723, 0
      %v10021 = vsel %vm3036, %v9724, 0
      %v10024 = vsel %vm3036, %v9725, 0
      %v10027 = vsel %vm3036, %v9726, 0
      %v10030 = vsel %vm3036, %v9727, 0
      %v10033 = vsel %vm3036, %v9728, 0
      %v10036 = vsel %vm3036, %v9729, 0
      %v10039 = vsel %vm3036, %v9730, 0
      %v10042 = vsel %vm3036, %v9731, 0
      %v10045 = vsel %vm3036, %v9732, 0
      %v10048 = vsel %vm3036, %v9733, 0
      %v10051 = vsel %vm3036, %v9734, 0
      %v10054 = vsel %vm3036, %v9735, 0
      %v10057 = vsel %vm3036, %v9736, 0
      %v10060 = vsel %vm3036, %v9737, 0
      %v10063 = vsel %vm3036, %v9738, 0
      %v10066 = vsel %vm3036, %v9739, 0
      %v10069 = vsel %vm3036, %v9740, 0
      %v10072 = vsel %vm3036, %v9741, 0
      %v10075 = vsel %vm3036, %v9742, 0
      %v10078 = vsel %vm3036, %v9743, 0
      %v10081 = vsel %vm3036, %v9744, 0
      %v10084 = vsel %vm3036, %v9745, 0
      %v10087 = vsel %vm3036, %v9746, 0
      %v10090 = vsel %vm3036, %v9747, 0
      %v10093 = vsel %vm3036, %v9748, 0
      %10095 = vmatpush.msra.mxu0 0.0
      %10096 = vmatpush.msra.mxu0 0.0
      %10097 = vmatpush.msra.mxu0 0.0
      %10098 = vmatpush.msra.mxu0 0.0
      %10099 = vmatpush.msra.mxu0 0.0
      %10100 = vmatpush.msra.mxu0 0.0
      %10101 = vmatpush.msra.mxu0 0.0
      %10102 = vmatpush.msra.mxu0 0.0
      %10103 = vmatpush.msra.mxu0 0.0
      %10104 = vmatpush.msra.mxu0 0.0
      %10105 = vmatpush.msra.mxu0 0.0
      %10106 = vmatpush.msra.mxu0 0.0
      %10107 = vmatpush.msra.mxu0 %v9752
      %10108 = vmatpush.msra.mxu0 %v9751
      %10109 = vmatpush.msra.mxu0 %v9750
      %10110 = vmatpush.msra.mxu0 %v9749
      %10111 = vmatmul.f32.gmra.mxu0 %v10000
      %v10112 = vpop.f32.mrf.mxu0
      %v10113 = vadd.f32 %v9904, %v10112
      %10114 = vmatmul.f32.gmra.mxu0 %v10003
      %v10115 = vpop.f32.mrf.mxu0
      %v10116 = vadd.f32 %v9907, %v10115
      %10117 = vmatmul.f32.gmra.mxu0 %v10006
      %v10118 = vpop.f32.mrf.mxu0
      %v10119 = vadd.f32 %v9910, %v10118
      %10120 = vmatmul.f32.gmra.mxu0 %v10009
      %v10121 = vpop.f32.mrf.mxu0
      %v10122 = vadd.f32 %v9913, %v10121
      %10123 = vmatmul.f32.gmra.mxu0 %v10012
      %v10124 = vpop.f32.mrf.mxu0
      %v10125 = vadd.f32 %v9916, %v10124
      %10126 = vmatmul.f32.gmra.mxu0 %v10015
      %v10127 = vpop.f32.mrf.mxu0
      %v10128 = vadd.f32 %v9919, %v10127
      %10129 = vmatmul.f32.gmra.mxu0 %v10018
      %v10130 = vpop.f32.mrf.mxu0
      %v10131 = vadd.f32 %v9922, %v10130
      %10132 = vmatmul.f32.gmra.mxu0 %v10021
      %v10133 = vpop.f32.mrf.mxu0
      %v10134 = vadd.f32 %v9925, %v10133
      %10135 = vmatmul.f32.gmra.mxu0 %v10024
      %v10136 = vpop.f32.mrf.mxu0
      %v10137 = vadd.f32 %v9928, %v10136
      %10138 = vmatmul.f32.gmra.mxu0 %v10027
      %v10139 = vpop.f32.mrf.mxu0
      %v10140 = vadd.f32 %v9931, %v10139
      %10141 = vmatmul.f32.gmra.mxu0 %v10030
      %v10142 = vpop.f32.mrf.mxu0
      %v10143 = vadd.f32 %v9934, %v10142
      %10144 = vmatmul.f32.gmra.mxu0 %v10033
      %v10145 = vpop.f32.mrf.mxu0
      %v10146 = vadd.f32 %v9937, %v10145
      %10147 = vmatmul.f32.gmra.mxu0 %v10036
      %v10148 = vpop.f32.mrf.mxu0
      %v10149 = vadd.f32 %v9940, %v10148
      %10150 = vmatmul.f32.gmra.mxu0 %v10039
      %v10151 = vpop.f32.mrf.mxu0
      %v10152 = vadd.f32 %v9943, %v10151
      %10153 = vmatmul.f32.gmra.mxu0 %v10042
      %v10154 = vpop.f32.mrf.mxu0
      %v10155 = vadd.f32 %v9946, %v10154
      %10156 = vmatmul.f32.gmra.mxu0 %v10045
      %v10157 = vpop.f32.mrf.mxu0
      %v10158 = vadd.f32 %v9949, %v10157
      %10159 = vmatmul.f32.gmra.mxu0 %v10048
      %v10160 = vpop.f32.mrf.mxu0
      %v10161 = vadd.f32 %v9952, %v10160
      %10162 = vmatmul.f32.gmra.mxu0 %v10051
      %v10163 = vpop.f32.mrf.mxu0
      %v10164 = vadd.f32 %v9955, %v10163
      %10165 = vmatmul.f32.gmra.mxu0 %v10054
      %v10166 = vpop.f32.mrf.mxu0
      %v10167 = vadd.f32 %v9958, %v10166
      %10168 = vmatmul.f32.gmra.mxu0 %v10057
      %v10169 = vpop.f32.mrf.mxu0
      %v10170 = vadd.f32 %v9961, %v10169
      %10171 = vmatmul.f32.gmra.mxu0 %v10060
      %v10172 = vpop.f32.mrf.mxu0
      %v10173 = vadd.f32 %v9964, %v10172
      %10174 = vmatmul.f32.gmra.mxu0 %v10063
      %v10175 = vpop.f32.mrf.mxu0
      %v10176 = vadd.f32 %v9967, %v10175
      %10177 = vmatmul.f32.gmra.mxu0 %v10066
      %v10178 = vpop.f32.mrf.mxu0
      %v10179 = vadd.f32 %v9970, %v10178
      %10180 = vmatmul.f32.gmra.mxu0 %v10069
      %v10181 = vpop.f32.mrf.mxu0
      %v10182 = vadd.f32 %v9973, %v10181
      %10183 = vmatmul.f32.gmra.mxu0 %v10072
      %v10184 = vpop.f32.mrf.mxu0
      %v10185 = vadd.f32 %v9976, %v10184
      %10186 = vmatmul.f32.gmra.mxu0 %v10075
      %v10187 = vpop.f32.mrf.mxu0
      %v10188 = vadd.f32 %v9979, %v10187
      %10189 = vmatmul.f32.gmra.mxu0 %v10078
      %v10190 = vpop.f32.mrf.mxu0
      %v10191 = vadd.f32 %v9982, %v10190
      %10192 = vmatmul.f32.gmra.mxu0 %v10081
      %v10193 = vpop.f32.mrf.mxu0
      %v10194 = vadd.f32 %v9985, %v10193
      %10195 = vmatmul.f32.gmra.mxu0 %v10084
      %v10196 = vpop.f32.mrf.mxu0
      %v10197 = vadd.f32 %v9988, %v10196
      %10198 = vmatmul.f32.gmra.mxu0 %v10087
      %v10199 = vpop.f32.mrf.mxu0
      %v10200 = vadd.f32 %v9991, %v10199
      %10201 = vmatmul.f32.gmra.mxu0 %v10090
      %v10202 = vpop.f32.mrf.mxu0
      %v10203 = vadd.f32 %v9994, %v10202
      %10204 = vmatmul.f32.gmra.mxu0 %v10093
      %v10205 = vpop.f32.mrf.mxu0
      %v10206 = vadd.f32 %v9997, %v10205
      %10207 = vdwg.mxu0
      %v10208 = vld [vmem:[#allocation2 + $0x2] sm:$0xff]
      %v10209 = vld [vmem:[#allocation2 + $0xa] sm:$0xff]
      %v10210 = vld [vmem:[#allocation2 + $0x1a] sm:$0xff]
      %v10211 = vld [vmem:[#allocation2 + $0x22] sm:$0xff]
      %v10212 = vld [vmem:[#allocation2 + $0x32] sm:$0xff]
      %v10213 = vld [vmem:[#allocation2 + $0x3a] sm:$0xff]
      %v10214 = vld [vmem:[#allocation2 + $0x4a] sm:$0xff]
      %v10215 = vld [vmem:[#allocation2 + $0x52] sm:$0xff]
      %v10216 = vld [vmem:[#allocation2 + $0x62] sm:$0xff]
      %v10217 = vld [vmem:[#allocation2 + $0x6a] sm:$0xff]
      %v10218 = vld [vmem:[#allocation2 + $0x7a] sm:$0xff]
      %v10219 = vld [vmem:[#allocation2 + $0x82] sm:$0xff]
      %v10220 = vld [vmem:[#allocation2 + $0x92] sm:$0xff]
      %v10221 = vld [vmem:[#allocation2 + $0x9a] sm:$0xff]
      %v10222 = vld [vmem:[#allocation2 + $0xaa] sm:$0xff]
      %v10223 = vld [vmem:[#allocation2 + $0xb2] sm:$0xff]
      %v10224 = vld [vmem:[#allocation2 + $0xc2] sm:$0xff]
      %v10225 = vld [vmem:[#allocation2 + $0xca] sm:$0xff]
      %v10226 = vld [vmem:[#allocation2 + $0xda] sm:$0xff]
      %v10227 = vld [vmem:[#allocation2 + $0xe2] sm:$0xff]
      %v10228 = vld [vmem:[#allocation2 + $0xf2] sm:$0xff]
      %v10229 = vld [vmem:[#allocation2 + $0xfa] sm:$0xff]
      %v10230 = vld [vmem:[#allocation2 + $0x10a] sm:$0xff]
      %v10231 = vld [vmem:[#allocation2 + $0x112] sm:$0xff]
      %v10232 = vld [vmem:[#allocation2 + $0x122] sm:$0xff]
      %v10233 = vld [vmem:[#allocation2 + $0x12a] sm:$0xff]
      %v10234 = vld [vmem:[#allocation2 + $0x13a] sm:$0xff]
      %v10235 = vld [vmem:[#allocation2 + $0x142] sm:$0xff]
      %v10236 = vld [vmem:[#allocation2 + $0x152] sm:$0xff]
      %v10237 = vld [vmem:[#allocation2 + $0x15a] sm:$0xff]
      %v10238 = vld [vmem:[#allocation2 + $0x16a] sm:$0xff]
      %v10239 = vld [vmem:[#allocation2 + $0x172] sm:$0xff]
      %s10240 = scalar_lea.vmem %s9, 64
      %v10241 = vld [vmem:[%s10240] sm:$0xff]
      %v10242 = vld [vmem:[%s10240 + $0x8] sm:$0xff]
      %v10243 = vld [vmem:[%s10240 + $0x10] sm:$0xff]
      %v10244 = vld [vmem:[%s10240 + $0x18] sm:$0xff]
      %v10246 = vsel %vm3036, %v10208, 0
      %v10249 = vsel %vm3036, %v10209, 0
      %v10252 = vsel %vm3036, %v10210, 0
      %v10255 = vsel %vm3036, %v10211, 0
      %v10258 = vsel %vm3036, %v10212, 0
      %v10261 = vsel %vm3036, %v10213, 0
      %v10264 = vsel %vm3036, %v10214, 0
      %v10267 = vsel %vm3036, %v10215, 0
      %v10270 = vsel %vm3036, %v10216, 0
      %v10273 = vsel %vm3036, %v10217, 0
      %v10276 = vsel %vm3036, %v10218, 0
      %v10279 = vsel %vm3036, %v10219, 0
      %v10282 = vsel %vm3036, %v10220, 0
      %v10285 = vsel %vm3036, %v10221, 0
      %v10288 = vsel %vm3036, %v10222, 0
      %v10291 = vsel %vm3036, %v10223, 0
      %v10294 = vsel %vm3036, %v10224, 0
      %v10297 = vsel %vm3036, %v10225, 0
      %v10300 = vsel %vm3036, %v10226, 0
      %v10303 = vsel %vm3036, %v10227, 0
      %v10306 = vsel %vm3036, %v10228, 0
      %v10309 = vsel %vm3036, %v10229, 0
      %v10312 = vsel %vm3036, %v10230, 0
      %v10315 = vsel %vm3036, %v10231, 0
      %v10318 = vsel %vm3036, %v10232, 0
      %v10321 = vsel %vm3036, %v10233, 0
      %v10324 = vsel %vm3036, %v10234, 0
      %v10327 = vsel %vm3036, %v10235, 0
      %v10330 = vsel %vm3036, %v10236, 0
      %v10333 = vsel %vm3036, %v10237, 0
      %v10336 = vsel %vm3036, %v10238, 0
      %v10339 = vsel %vm3036, %v10239, 0
      %10341 = vmatpush.msra.mxu0 0.0
      %10342 = vmatpush.msra.mxu0 0.0
      %10343 = vmatpush.msra.mxu0 0.0
      %10344 = vmatpush.msra.mxu0 0.0
      %10345 = vmatpush.msra.mxu0 0.0
      %10346 = vmatpush.msra.mxu0 0.0
      %10347 = vmatpush.msra.mxu0 0.0
      %10348 = vmatpush.msra.mxu0 0.0
      %10349 = vmatpush.msra.mxu0 0.0
      %10350 = vmatpush.msra.mxu0 0.0
      %10351 = vmatpush.msra.mxu0 0.0
      %10352 = vmatpush.msra.mxu0 0.0
      %10353 = vmatpush.msra.mxu0 %v10244
      %10354 = vmatpush.msra.mxu0 %v10243
      %10355 = vmatpush.msra.mxu0 %v10242
      %10356 = vmatpush.msra.mxu0 %v10241
      %10357 = vmatmul.f32.gmra.mxu0 %v10246
      %v10358 = vpop.f32.mrf.mxu0
      %v10359 = vadd.f32 0.0, %v10358
      %10360 = vmatmul.f32.gmra.mxu0 %v10249
      %v10361 = vpop.f32.mrf.mxu0
      %v10362 = vadd.f32 0.0, %v10361
      %10363 = vmatmul.f32.gmra.mxu0 %v10252
      %v10364 = vpop.f32.mrf.mxu0
      %v10365 = vadd.f32 0.0, %v10364
      %10366 = vmatmul.f32.gmra.mxu0 %v10255
      %v10367 = vpop.f32.mrf.mxu0
      %v10368 = vadd.f32 0.0, %v10367
      %10369 = vmatmul.f32.gmra.mxu0 %v10258
      %v10370 = vpop.f32.mrf.mxu0
      %v10371 = vadd.f32 0.0, %v10370
      %10372 = vmatmul.f32.gmra.mxu0 %v10261
      %v10373 = vpop.f32.mrf.mxu0
      %v10374 = vadd.f32 0.0, %v10373
      %10375 = vmatmul.f32.gmra.mxu0 %v10264
      %v10376 = vpop.f32.mrf.mxu0
      %v10377 = vadd.f32 0.0, %v10376
      %10378 = vmatmul.f32.gmra.mxu0 %v10267
      %v10379 = vpop.f32.mrf.mxu0
      %v10380 = vadd.f32 0.0, %v10379
      %10381 = vmatmul.f32.gmra.mxu0 %v10270
      %v10382 = vpop.f32.mrf.mxu0
      %v10383 = vadd.f32 0.0, %v10382
      %10384 = vmatmul.f32.gmra.mxu0 %v10273
      %v10385 = vpop.f32.mrf.mxu0
      %v10386 = vadd.f32 0.0, %v10385
      %10387 = vmatmul.f32.gmra.mxu0 %v10276
      %v10388 = vpop.f32.mrf.mxu0
      %v10389 = vadd.f32 0.0, %v10388
      %10390 = vmatmul.f32.gmra.mxu0 %v10279
      %v10391 = vpop.f32.mrf.mxu0
      %v10392 = vadd.f32 0.0, %v10391
      %10393 = vmatmul.f32.gmra.mxu0 %v10282
      %v10394 = vpop.f32.mrf.mxu0
      %v10395 = vadd.f32 0.0, %v10394
      %10396 = vmatmul.f32.gmra.mxu0 %v10285
      %v10397 = vpop.f32.mrf.mxu0
      %v10398 = vadd.f32 0.0, %v10397
      %10399 = vmatmul.f32.gmra.mxu0 %v10288
      %v10400 = vpop.f32.mrf.mxu0
      %v10401 = vadd.f32 0.0, %v10400
      %10402 = vmatmul.f32.gmra.mxu0 %v10291
      %v10403 = vpop.f32.mrf.mxu0
      %v10404 = vadd.f32 0.0, %v10403
      %10405 = vmatmul.f32.gmra.mxu0 %v10294
      %v10406 = vpop.f32.mrf.mxu0
      %v10407 = vadd.f32 0.0, %v10406
      %10408 = vmatmul.f32.gmra.mxu0 %v10297
      %v10409 = vpop.f32.mrf.mxu0
      %v10410 = vadd.f32 0.0, %v10409
      %10411 = vmatmul.f32.gmra.mxu0 %v10300
      %v10412 = vpop.f32.mrf.mxu0
      %v10413 = vadd.f32 0.0, %v10412
      %10414 = vmatmul.f32.gmra.mxu0 %v10303
      %v10415 = vpop.f32.mrf.mxu0
      %v10416 = vadd.f32 0.0, %v10415
      %10417 = vmatmul.f32.gmra.mxu0 %v10306
      %v10418 = vpop.f32.mrf.mxu0
      %v10419 = vadd.f32 0.0, %v10418
      %10420 = vmatmul.f32.gmra.mxu0 %v10309
      %v10421 = vpop.f32.mrf.mxu0
      %v10422 = vadd.f32 0.0, %v10421
      %10423 = vmatmul.f32.gmra.mxu0 %v10312
      %v10424 = vpop.f32.mrf.mxu0
      %v10425 = vadd.f32 0.0, %v10424
      %10426 = vmatmul.f32.gmra.mxu0 %v10315
      %v10427 = vpop.f32.mrf.mxu0
      %v10428 = vadd.f32 0.0, %v10427
      %10429 = vmatmul.f32.gmra.mxu0 %v10318
      %v10430 = vpop.f32.mrf.mxu0
      %v10431 = vadd.f32 0.0, %v10430
      %10432 = vmatmul.f32.gmra.mxu0 %v10321
      %v10433 = vpop.f32.mrf.mxu0
      %v10434 = vadd.f32 0.0, %v10433
      %10435 = vmatmul.f32.gmra.mxu0 %v10324
      %v10436 = vpop.f32.mrf.mxu0
      %v10437 = vadd.f32 0.0, %v10436
      %10438 = vmatmul.f32.gmra.mxu0 %v10327
      %v10439 = vpop.f32.mrf.mxu0
      %v10440 = vadd.f32 0.0, %v10439
      %10441 = vmatmul.f32.gmra.mxu0 %v10330
      %v10442 = vpop.f32.mrf.mxu0
      %v10443 = vadd.f32 0.0, %v10442
      %10444 = vmatmul.f32.gmra.mxu0 %v10333
      %v10445 = vpop.f32.mrf.mxu0
      %v10446 = vadd.f32 0.0, %v10445
      %10447 = vmatmul.f32.gmra.mxu0 %v10336
      %v10448 = vpop.f32.mrf.mxu0
      %v10449 = vadd.f32 0.0, %v10448
      %10450 = vmatmul.f32.gmra.mxu0 %v10339
      %v10451 = vpop.f32.mrf.mxu0
      %v10452 = vadd.f32 0.0, %v10451
      %10453 = vdwg.mxu0
      %v10454 = vadd.f32 %v10113, %v10359
      %v10455 = vadd.f32 %v10116, %v10362
      %v10456 = vadd.f32 %v10119, %v10365
      %v10457 = vadd.f32 %v10122, %v10368
      %v10458 = vadd.f32 %v10125, %v10371
      %v10459 = vadd.f32 %v10128, %v10374
      %v10460 = vadd.f32 %v10131, %v10377
      %v10461 = vadd.f32 %v10134, %v10380
      %v10462 = vadd.f32 %v10137, %v10383
      %v10463 = vadd.f32 %v10140, %v10386
      %v10464 = vadd.f32 %v10143, %v10389
      %v10465 = vadd.f32 %v10146, %v10392
      %v10466 = vadd.f32 %v10149, %v10395
      %v10467 = vadd.f32 %v10152, %v10398
      %v10468 = vadd.f32 %v10155, %v10401
      %v10469 = vadd.f32 %v10158, %v10404
      %v10470 = vadd.f32 %v10161, %v10407
      %v10471 = vadd.f32 %v10164, %v10410
      %v10472 = vadd.f32 %v10167, %v10413
      %v10473 = vadd.f32 %v10170, %v10416
      %v10474 = vadd.f32 %v10173, %v10419
      %v10475 = vadd.f32 %v10176, %v10422
      %v10476 = vadd.f32 %v10179, %v10425
      %v10477 = vadd.f32 %v10182, %v10428
      %v10478 = vadd.f32 %v10185, %v10431
      %v10479 = vadd.f32 %v10188, %v10434
      %v10480 = vadd.f32 %v10191, %v10437
      %v10481 = vadd.f32 %v10194, %v10440
      %v10482 = vadd.f32 %v10197, %v10443
      %v10483 = vadd.f32 %v10200, %v10446
      %v10484 = vadd.f32 %v10203, %v10449
      %v10485 = vadd.f32 %v10206, %v10452
      %v10486 = vld [vmem:[%s531] sm:$0xff]
      %v10487 = vld [vmem:[%s531 + $0x8] sm:$0xff]
      %v10488 = vld [vmem:[%s531 + $0x18] sm:$0xff]
      %v10489 = vld [vmem:[%s531 + $0x20] sm:$0xff]
      %v10490 = vld [vmem:[%s531 + $0x30] sm:$0xff]
      %v10491 = vld [vmem:[%s531 + $0x38] sm:$0xff]
      %v10492 = vld [vmem:[%s531 + $0x48] sm:$0xff]
      %v10493 = vld [vmem:[%s531 + $0x50] sm:$0xff]
      %v10494 = vld [vmem:[%s531 + $0x60] sm:$0xff]
      %v10495 = vld [vmem:[%s531 + $0x68] sm:$0xff]
      %v10496 = vld [vmem:[%s531 + $0x78] sm:$0xff]
      %v10497 = vld [vmem:[%s531 + $0x80] sm:$0xff]
      %v10498 = vld [vmem:[%s531 + $0x90] sm:$0xff]
      %v10499 = vld [vmem:[%s531 + $0x98] sm:$0xff]
      %v10500 = vld [vmem:[%s531 + $0xa8] sm:$0xff]
      %v10501 = vld [vmem:[%s531 + $0xb0] sm:$0xff]
      %v10502 = vld [vmem:[%s531 + $0xc0] sm:$0xff]
      %v10503 = vld [vmem:[%s531 + $0xc8] sm:$0xff]
      %v10504 = vld [vmem:[%s531 + $0xd8] sm:$0xff]
      %v10505 = vld [vmem:[%s531 + $0xe0] sm:$0xff]
      %v10506 = vld [vmem:[%s531 + $0xf0] sm:$0xff]
      %v10507 = vld [vmem:[%s531 + $0xf8] sm:$0xff]
      %v10508 = vld [vmem:[%s531 + $0x108] sm:$0xff]
      %v10509 = vld [vmem:[%s531 + $0x110] sm:$0xff]
      %v10510 = vld [vmem:[%s531 + $0x120] sm:$0xff]
      %v10511 = vld [vmem:[%s531 + $0x128] sm:$0xff]
      %v10512 = vld [vmem:[%s531 + $0x138] sm:$0xff]
      %v10513 = vld [vmem:[%s531 + $0x140] sm:$0xff]
      %v10514 = vld [vmem:[%s531 + $0x150] sm:$0xff]
      %v10515 = vld [vmem:[%s531 + $0x158] sm:$0xff]
      %v10516 = vld [vmem:[%s531 + $0x168] sm:$0xff]
      %v10517 = vld [vmem:[%s531 + $0x170] sm:$0xff]
      %s10518 = scalar_lea.vmem %s9, 96
      %v10519 = vld [vmem:[%s10518] sm:$0xff]
      %v10520 = vld [vmem:[%s10518 + $0x8] sm:$0xff]
      %v10521 = vld [vmem:[%s10518 + $0x10] sm:$0xff]
      %v10522 = vld [vmem:[%s10518 + $0x18] sm:$0xff]
      %v10524 = vsel %vm3036, %v10486, 0
      %v10527 = vsel %vm3036, %v10487, 0
      %v10530 = vsel %vm3036, %v10488, 0
      %v10533 = vsel %vm3036, %v10489, 0
      %v10536 = vsel %vm3036, %v10490, 0
      %v10539 = vsel %vm3036, %v10491, 0
      %v10542 = vsel %vm3036, %v10492, 0
      %v10545 = vsel %vm3036, %v10493, 0
      %v10548 = vsel %vm3036, %v10494, 0
      %v10551 = vsel %vm3036, %v10495, 0
      %v10554 = vsel %vm3036, %v10496, 0
      %v10557 = vsel %vm3036, %v10497, 0
      %v10560 = vsel %vm3036, %v10498, 0
      %v10563 = vsel %vm3036, %v10499, 0
      %v10566 = vsel %vm3036, %v10500, 0
      %v10569 = vsel %vm3036, %v10501, 0
      %v10572 = vsel %vm3036, %v10502, 0
      %v10575 = vsel %vm3036, %v10503, 0
      %v10578 = vsel %vm3036, %v10504, 0
      %v10581 = vsel %vm3036, %v10505, 0
      %v10584 = vsel %vm3036, %v10506, 0
      %v10587 = vsel %vm3036, %v10507, 0
      %v10590 = vsel %vm3036, %v10508, 0
      %v10593 = vsel %vm3036, %v10509, 0
      %v10596 = vsel %vm3036, %v10510, 0
      %v10599 = vsel %vm3036, %v10511, 0
      %v10602 = vsel %vm3036, %v10512, 0
      %v10605 = vsel %vm3036, %v10513, 0
      %v10608 = vsel %vm3036, %v10514, 0
      %v10611 = vsel %vm3036, %v10515, 0
      %v10614 = vsel %vm3036, %v10516, 0
      %v10617 = vsel %vm3036, %v10517, 0
      %10619 = vmatpush.msra.mxu0 0.0
      %10620 = vmatpush.msra.mxu0 0.0
      %10621 = vmatpush.msra.mxu0 0.0
      %10622 = vmatpush.msra.mxu0 0.0
      %10623 = vmatpush.msra.mxu0 0.0
      %10624 = vmatpush.msra.mxu0 0.0
      %10625 = vmatpush.msra.mxu0 0.0
      %10626 = vmatpush.msra.mxu0 0.0
      %10627 = vmatpush.msra.mxu0 0.0
      %10628 = vmatpush.msra.mxu0 0.0
      %10629 = vmatpush.msra.mxu0 0.0
      %10630 = vmatpush.msra.mxu0 0.0
      %10631 = vmatpush.msra.mxu0 %v10522
      %10632 = vmatpush.msra.mxu0 %v10521
      %10633 = vmatpush.msra.mxu0 %v10520
      %10634 = vmatpush.msra.mxu0 %v10519
      %10635 = vmatmul.f32.gmra.mxu0 %v10524
      %v10636 = vpop.f32.mrf.mxu0
      %v10637 = vadd.f32 0.0, %v10636
      %10638 = vmatmul.f32.gmra.mxu0 %v10527
      %v10639 = vpop.f32.mrf.mxu0
      %v10640 = vadd.f32 0.0, %v10639
      %10641 = vmatmul.f32.gmra.mxu0 %v10530
      %v10642 = vpop.f32.mrf.mxu0
      %v10643 = vadd.f32 0.0, %v10642
      %10644 = vmatmul.f32.gmra.mxu0 %v10533
      %v10645 = vpop.f32.mrf.mxu0
      %v10646 = vadd.f32 0.0, %v10645
      %10647 = vmatmul.f32.gmra.mxu0 %v10536
      %v10648 = vpop.f32.mrf.mxu0
      %v10649 = vadd.f32 0.0, %v10648
      %10650 = vmatmul.f32.gmra.mxu0 %v10539
      %v10651 = vpop.f32.mrf.mxu0
      %v10652 = vadd.f32 0.0, %v10651
      %10653 = vmatmul.f32.gmra.mxu0 %v10542
      %v10654 = vpop.f32.mrf.mxu0
      %v10655 = vadd.f32 0.0, %v10654
      %10656 = vmatmul.f32.gmra.mxu0 %v10545
      %v10657 = vpop.f32.mrf.mxu0
      %v10658 = vadd.f32 0.0, %v10657
      %10659 = vmatmul.f32.gmra.mxu0 %v10548
      %v10660 = vpop.f32.mrf.mxu0
      %v10661 = vadd.f32 0.0, %v10660
      %10662 = vmatmul.f32.gmra.mxu0 %v10551
      %v10663 = vpop.f32.mrf.mxu0
      %v10664 = vadd.f32 0.0, %v10663
      %10665 = vmatmul.f32.gmra.mxu0 %v10554
      %v10666 = vpop.f32.mrf.mxu0
      %v10667 = vadd.f32 0.0, %v10666
      %10668 = vmatmul.f32.gmra.mxu0 %v10557
      %v10669 = vpop.f32.mrf.mxu0
      %v10670 = vadd.f32 0.0, %v10669
      %10671 = vmatmul.f32.gmra.mxu0 %v10560
      %v10672 = vpop.f32.mrf.mxu0
      %v10673 = vadd.f32 0.0, %v10672
      %10674 = vmatmul.f32.gmra.mxu0 %v10563
      %v10675 = vpop.f32.mrf.mxu0
      %v10676 = vadd.f32 0.0, %v10675
      %10677 = vmatmul.f32.gmra.mxu0 %v10566
      %v10678 = vpop.f32.mrf.mxu0
      %v10679 = vadd.f32 0.0, %v10678
      %10680 = vmatmul.f32.gmra.mxu0 %v10569
      %v10681 = vpop.f32.mrf.mxu0
      %v10682 = vadd.f32 0.0, %v10681
      %10683 = vmatmul.f32.gmra.mxu0 %v10572
      %v10684 = vpop.f32.mrf.mxu0
      %v10685 = vadd.f32 0.0, %v10684
      %10686 = vmatmul.f32.gmra.mxu0 %v10575
      %v10687 = vpop.f32.mrf.mxu0
      %v10688 = vadd.f32 0.0, %v10687
      %10689 = vmatmul.f32.gmra.mxu0 %v10578
      %v10690 = vpop.f32.mrf.mxu0
      %v10691 = vadd.f32 0.0, %v10690
      %10692 = vmatmul.f32.gmra.mxu0 %v10581
      %v10693 = vpop.f32.mrf.mxu0
      %v10694 = vadd.f32 0.0, %v10693
      %10695 = vmatmul.f32.gmra.mxu0 %v10584
      %v10696 = vpop.f32.mrf.mxu0
      %v10697 = vadd.f32 0.0, %v10696
      %10698 = vmatmul.f32.gmra.mxu0 %v10587
      %v10699 = vpop.f32.mrf.mxu0
      %v10700 = vadd.f32 0.0, %v10699
      %10701 = vmatmul.f32.gmra.mxu0 %v10590
      %v10702 = vpop.f32.mrf.mxu0
      %v10703 = vadd.f32 0.0, %v10702
      %10704 = vmatmul.f32.gmra.mxu0 %v10593
      %v10705 = vpop.f32.mrf.mxu0
      %v10706 = vadd.f32 0.0, %v10705
      %10707 = vmatmul.f32.gmra.mxu0 %v10596
      %v10708 = vpop.f32.mrf.mxu0
      %v10709 = vadd.f32 0.0, %v10708
      %10710 = vmatmul.f32.gmra.mxu0 %v10599
      %v10711 = vpop.f32.mrf.mxu0
      %v10712 = vadd.f32 0.0, %v10711
      %10713 = vmatmul.f32.gmra.mxu0 %v10602
      %v10714 = vpop.f32.mrf.mxu0
      %v10715 = vadd.f32 0.0, %v10714
      %10716 = vmatmul.f32.gmra.mxu0 %v10605
      %v10717 = vpop.f32.mrf.mxu0
      %v10718 = vadd.f32 0.0, %v10717
      %10719 = vmatmul.f32.gmra.mxu0 %v10608
      %v10720 = vpop.f32.mrf.mxu0
      %v10721 = vadd.f32 0.0, %v10720
      %10722 = vmatmul.f32.gmra.mxu0 %v10611
      %v10723 = vpop.f32.mrf.mxu0
      %v10724 = vadd.f32 0.0, %v10723
      %10725 = vmatmul.f32.gmra.mxu0 %v10614
      %v10726 = vpop.f32.mrf.mxu0
      %v10727 = vadd.f32 0.0, %v10726
      %10728 = vmatmul.f32.gmra.mxu0 %v10617
      %v10729 = vpop.f32.mrf.mxu0
      %v10730 = vadd.f32 0.0, %v10729
      %10731 = vdwg.mxu0
      %v10732 = vadd.f32 %v10454, %v10637
      %v10733 = vadd.f32 %v10455, %v10640
      %v10734 = vadd.f32 %v10456, %v10643
      %v10735 = vadd.f32 %v10457, %v10646
      %v10736 = vadd.f32 %v10458, %v10649
      %v10737 = vadd.f32 %v10459, %v10652
      %v10738 = vadd.f32 %v10460, %v10655
      %v10739 = vadd.f32 %v10461, %v10658
      %v10740 = vadd.f32 %v10462, %v10661
      %v10741 = vadd.f32 %v10463, %v10664
      %v10742 = vadd.f32 %v10464, %v10667
      %v10743 = vadd.f32 %v10465, %v10670
      %v10744 = vadd.f32 %v10466, %v10673
      %v10745 = vadd.f32 %v10467, %v10676
      %v10746 = vadd.f32 %v10468, %v10679
      %v10747 = vadd.f32 %v10469, %v10682
      %v10748 = vadd.f32 %v10470, %v10685
      %v10749 = vadd.f32 %v10471, %v10688
      %v10750 = vadd.f32 %v10472, %v10691
      %v10751 = vadd.f32 %v10473, %v10694
      %v10752 = vadd.f32 %v10474, %v10697
      %v10753 = vadd.f32 %v10475, %v10700
      %v10754 = vadd.f32 %v10476, %v10703
      %v10755 = vadd.f32 %v10477, %v10706
      %v10756 = vadd.f32 %v10478, %v10709
      %v10757 = vadd.f32 %v10479, %v10712
      %v10758 = vadd.f32 %v10480, %v10715
      %v10759 = vadd.f32 %v10481, %v10718
      %v10760 = vadd.f32 %v10482, %v10721
      %v10761 = vadd.f32 %v10483, %v10724
      %v10762 = vadd.f32 %v10484, %v10727
      %v10763 = vadd.f32 %v10485, %v10730
      %v10764 = vld [vmem:[%s531 + $0x1] sm:$0xff]
      %v10765 = vld [vmem:[%s531 + $0x9] sm:$0xff]
      %v10766 = vld [vmem:[%s531 + $0x19] sm:$0xff]
      %v10767 = vld [vmem:[%s531 + $0x21] sm:$0xff]
      %v10768 = vld [vmem:[%s531 + $0x31] sm:$0xff]
      %v10769 = vld [vmem:[%s531 + $0x39] sm:$0xff]
      %v10770 = vld [vmem:[%s531 + $0x49] sm:$0xff]
      %v10771 = vld [vmem:[%s531 + $0x51] sm:$0xff]
      %v10772 = vld [vmem:[%s531 + $0x61] sm:$0xff]
      %v10773 = vld [vmem:[%s531 + $0x69] sm:$0xff]
      %v10774 = vld [vmem:[%s531 + $0x79] sm:$0xff]
      %v10775 = vld [vmem:[%s531 + $0x81] sm:$0xff]
      %v10776 = vld [vmem:[%s531 + $0x91] sm:$0xff]
      %v10777 = vld [vmem:[%s531 + $0x99] sm:$0xff]
      %v10778 = vld [vmem:[%s531 + $0xa9] sm:$0xff]
      %v10779 = vld [vmem:[%s531 + $0xb1] sm:$0xff]
      %v10780 = vld [vmem:[%s531 + $0xc1] sm:$0xff]
      %v10781 = vld [vmem:[%s531 + $0xc9] sm:$0xff]
      %v10782 = vld [vmem:[%s531 + $0xd9] sm:$0xff]
      %v10783 = vld [vmem:[%s531 + $0xe1] sm:$0xff]
      %v10784 = vld [vmem:[%s531 + $0xf1] sm:$0xff]
      %v10785 = vld [vmem:[%s531 + $0xf9] sm:$0xff]
      %v10786 = vld [vmem:[%s531 + $0x109] sm:$0xff]
      %v10787 = vld [vmem:[%s531 + $0x111] sm:$0xff]
      %v10788 = vld [vmem:[%s531 + $0x121] sm:$0xff]
      %v10789 = vld [vmem:[%s531 + $0x129] sm:$0xff]
      %v10790 = vld [vmem:[%s531 + $0x139] sm:$0xff]
      %v10791 = vld [vmem:[%s531 + $0x141] sm:$0xff]
      %v10792 = vld [vmem:[%s531 + $0x151] sm:$0xff]
      %v10793 = vld [vmem:[%s531 + $0x159] sm:$0xff]
      %v10794 = vld [vmem:[%s531 + $0x169] sm:$0xff]
      %v10795 = vld [vmem:[%s531 + $0x171] sm:$0xff]
      %s10796 = scalar_lea.vmem %s9, 128
      %v10797 = vld [vmem:[%s10796] sm:$0xff]
      %v10798 = vld [vmem:[%s10796 + $0x8] sm:$0xff]
      %v10799 = vld [vmem:[%s10796 + $0x10] sm:$0xff]
      %v10800 = vld [vmem:[%s10796 + $0x18] sm:$0xff]
      %v10802 = vsel %vm3036, %v10764, 0
      %v10805 = vsel %vm3036, %v10765, 0
      %v10808 = vsel %vm3036, %v10766, 0
      %v10811 = vsel %vm3036, %v10767, 0
      %v10814 = vsel %vm3036, %v10768, 0
      %v10817 = vsel %vm3036, %v10769, 0
      %v10820 = vsel %vm3036, %v10770, 0
      %v10823 = vsel %vm3036, %v10771, 0
      %v10826 = vsel %vm3036, %v10772, 0
      %v10829 = vsel %vm3036, %v10773, 0
      %v10832 = vsel %vm3036, %v10774, 0
      %v10835 = vsel %vm3036, %v10775, 0
      %v10838 = vsel %vm3036, %v10776, 0
      %v10841 = vsel %vm3036, %v10777, 0
      %v10844 = vsel %vm3036, %v10778, 0
      %v10847 = vsel %vm3036, %v10779, 0
      %v10850 = vsel %vm3036, %v10780, 0
      %v10853 = vsel %vm3036, %v10781, 0
      %v10856 = vsel %vm3036, %v10782, 0
      %v10859 = vsel %vm3036, %v10783, 0
      %v10862 = vsel %vm3036, %v10784, 0
      %v10865 = vsel %vm3036, %v10785, 0
      %v10868 = vsel %vm3036, %v10786, 0
      %v10871 = vsel %vm3036, %v10787, 0
      %v10874 = vsel %vm3036, %v10788, 0
      %v10877 = vsel %vm3036, %v10789, 0
      %v10880 = vsel %vm3036, %v10790, 0
      %v10883 = vsel %vm3036, %v10791, 0
      %v10886 = vsel %vm3036, %v10792, 0
      %v10889 = vsel %vm3036, %v10793, 0
      %v10892 = vsel %vm3036, %v10794, 0
      %v10895 = vsel %vm3036, %v10795, 0
      %10897 = vmatpush.msra.mxu0 0.0
      %10898 = vmatpush.msra.mxu0 0.0
      %10899 = vmatpush.msra.mxu0 0.0
      %10900 = vmatpush.msra.mxu0 0.0
      %10901 = vmatpush.msra.mxu0 0.0
      %10902 = vmatpush.msra.mxu0 0.0
      %10903 = vmatpush.msra.mxu0 0.0
      %10904 = vmatpush.msra.mxu0 0.0
      %10905 = vmatpush.msra.mxu0 0.0
      %10906 = vmatpush.msra.mxu0 0.0
      %10907 = vmatpush.msra.mxu0 0.0
      %10908 = vmatpush.msra.mxu0 0.0
      %10909 = vmatpush.msra.mxu0 %v10800
      %10910 = vmatpush.msra.mxu0 %v10799
      %10911 = vmatpush.msra.mxu0 %v10798
      %10912 = vmatpush.msra.mxu0 %v10797
      %10913 = vmatmul.f32.gmra.mxu0 %v10802
      %v10914 = vpop.f32.mrf.mxu0
      %v10915 = vadd.f32 0.0, %v10914
      %10916 = vmatmul.f32.gmra.mxu0 %v10805
      %v10917 = vpop.f32.mrf.mxu0
      %v10918 = vadd.f32 0.0, %v10917
      %10919 = vmatmul.f32.gmra.mxu0 %v10808
      %v10920 = vpop.f32.mrf.mxu0
      %v10921 = vadd.f32 0.0, %v10920
      %10922 = vmatmul.f32.gmra.mxu0 %v10811
      %v10923 = vpop.f32.mrf.mxu0
      %v10924 = vadd.f32 0.0, %v10923
      %10925 = vmatmul.f32.gmra.mxu0 %v10814
      %v10926 = vpop.f32.mrf.mxu0
      %v10927 = vadd.f32 0.0, %v10926
      %10928 = vmatmul.f32.gmra.mxu0 %v10817
      %v10929 = vpop.f32.mrf.mxu0
      %v10930 = vadd.f32 0.0, %v10929
      %10931 = vmatmul.f32.gmra.mxu0 %v10820
      %v10932 = vpop.f32.mrf.mxu0
      %v10933 = vadd.f32 0.0, %v10932
      %10934 = vmatmul.f32.gmra.mxu0 %v10823
      %v10935 = vpop.f32.mrf.mxu0
      %v10936 = vadd.f32 0.0, %v10935
      %10937 = vmatmul.f32.gmra.mxu0 %v10826
      %v10938 = vpop.f32.mrf.mxu0
      %v10939 = vadd.f32 0.0, %v10938
      %10940 = vmatmul.f32.gmra.mxu0 %v10829
      %v10941 = vpop.f32.mrf.mxu0
      %v10942 = vadd.f32 0.0, %v10941
      %10943 = vmatmul.f32.gmra.mxu0 %v10832
      %v10944 = vpop.f32.mrf.mxu0
      %v10945 = vadd.f32 0.0, %v10944
      %10946 = vmatmul.f32.gmra.mxu0 %v10835
      %v10947 = vpop.f32.mrf.mxu0
      %v10948 = vadd.f32 0.0, %v10947
      %10949 = vmatmul.f32.gmra.mxu0 %v10838
      %v10950 = vpop.f32.mrf.mxu0
      %v10951 = vadd.f32 0.0, %v10950
      %10952 = vmatmul.f32.gmra.mxu0 %v10841
      %v10953 = vpop.f32.mrf.mxu0
      %v10954 = vadd.f32 0.0, %v10953
      %10955 = vmatmul.f32.gmra.mxu0 %v10844
      %v10956 = vpop.f32.mrf.mxu0
      %v10957 = vadd.f32 0.0, %v10956
      %10958 = vmatmul.f32.gmra.mxu0 %v10847
      %v10959 = vpop.f32.mrf.mxu0
      %v10960 = vadd.f32 0.0, %v10959
      %10961 = vmatmul.f32.gmra.mxu0 %v10850
      %v10962 = vpop.f32.mrf.mxu0
      %v10963 = vadd.f32 0.0, %v10962
      %10964 = vmatmul.f32.gmra.mxu0 %v10853
      %v10965 = vpop.f32.mrf.mxu0
      %v10966 = vadd.f32 0.0, %v10965
      %10967 = vmatmul.f32.gmra.mxu0 %v10856
      %v10968 = vpop.f32.mrf.mxu0
      %v10969 = vadd.f32 0.0, %v10968
      %10970 = vmatmul.f32.gmra.mxu0 %v10859
      %v10971 = vpop.f32.mrf.mxu0
      %v10972 = vadd.f32 0.0, %v10971
      %10973 = vmatmul.f32.gmra.mxu0 %v10862
      %v10974 = vpop.f32.mrf.mxu0
      %v10975 = vadd.f32 0.0, %v10974
      %10976 = vmatmul.f32.gmra.mxu0 %v10865
      %v10977 = vpop.f32.mrf.mxu0
      %v10978 = vadd.f32 0.0, %v10977
      %10979 = vmatmul.f32.gmra.mxu0 %v10868
      %v10980 = vpop.f32.mrf.mxu0
      %v10981 = vadd.f32 0.0, %v10980
      %10982 = vmatmul.f32.gmra.mxu0 %v10871
      %v10983 = vpop.f32.mrf.mxu0
      %v10984 = vadd.f32 0.0, %v10983
      %10985 = vmatmul.f32.gmra.mxu0 %v10874
      %v10986 = vpop.f32.mrf.mxu0
      %v10987 = vadd.f32 0.0, %v10986
      %10988 = vmatmul.f32.gmra.mxu0 %v10877
      %v10989 = vpop.f32.mrf.mxu0
      %v10990 = vadd.f32 0.0, %v10989
      %10991 = vmatmul.f32.gmra.mxu0 %v10880
      %v10992 = vpop.f32.mrf.mxu0
      %v10993 = vadd.f32 0.0, %v10992
      %10994 = vmatmul.f32.gmra.mxu0 %v10883
      %v10995 = vpop.f32.mrf.mxu0
      %v10996 = vadd.f32 0.0, %v10995
      %10997 = vmatmul.f32.gmra.mxu0 %v10886
      %v10998 = vpop.f32.mrf.mxu0
      %v10999 = vadd.f32 0.0, %v10998
      %11000 = vmatmul.f32.gmra.mxu0 %v10889
      %v11001 = vpop.f32.mrf.mxu0
      %v11002 = vadd.f32 0.0, %v11001
      %11003 = vmatmul.f32.gmra.mxu0 %v10892
      %v11004 = vpop.f32.mrf.mxu0
      %v11005 = vadd.f32 0.0, %v11004
      %11006 = vmatmul.f32.gmra.mxu0 %v10895
      %v11007 = vpop.f32.mrf.mxu0
      %v11008 = vadd.f32 0.0, %v11007
      %11009 = vdwg.mxu0
      %v11010 = vadd.f32 %v10732, %v10915
      %v11011 = vadd.f32 %v10733, %v10918
      %v11012 = vadd.f32 %v10734, %v10921
      %v11013 = vadd.f32 %v10735, %v10924
      %v11014 = vadd.f32 %v10736, %v10927
      %v11015 = vadd.f32 %v10737, %v10930
      %v11016 = vadd.f32 %v10738, %v10933
      %v11017 = vadd.f32 %v10739, %v10936
      %v11018 = vadd.f32 %v10740, %v10939
      %v11019 = vadd.f32 %v10741, %v10942
      %v11020 = vadd.f32 %v10742, %v10945
      %v11021 = vadd.f32 %v10743, %v10948
      %v11022 = vadd.f32 %v10744, %v10951
      %v11023 = vadd.f32 %v10745, %v10954
      %v11024 = vadd.f32 %v10746, %v10957
      %v11025 = vadd.f32 %v10747, %v10960
      %v11026 = vadd.f32 %v10748, %v10963
      %v11027 = vadd.f32 %v10749, %v10966
      %v11028 = vadd.f32 %v10750, %v10969
      %v11029 = vadd.f32 %v10751, %v10972
      %v11030 = vadd.f32 %v10752, %v10975
      %v11031 = vadd.f32 %v10753, %v10978
      %v11032 = vadd.f32 %v10754, %v10981
      %v11033 = vadd.f32 %v10755, %v10984
      %v11034 = vadd.f32 %v10756, %v10987
      %v11035 = vadd.f32 %v10757, %v10990
      %v11036 = vadd.f32 %v10758, %v10993
      %v11037 = vadd.f32 %v10759, %v10996
      %v11038 = vadd.f32 %v10760, %v10999
      %v11039 = vadd.f32 %v10761, %v11002
      %v11040 = vadd.f32 %v10762, %v11005
      %v11041 = vadd.f32 %v10763, %v11008
      %v11042 = vld [vmem:[%s531 + $0x2] sm:$0xff]
      %v11043 = vld [vmem:[%s531 + $0xa] sm:$0xff]
      %v11044 = vld [vmem:[%s531 + $0x1a] sm:$0xff]
      %v11045 = vld [vmem:[%s531 + $0x22] sm:$0xff]
      %v11046 = vld [vmem:[%s531 + $0x32] sm:$0xff]
      %v11047 = vld [vmem:[%s531 + $0x3a] sm:$0xff]
      %v11048 = vld [vmem:[%s531 + $0x4a] sm:$0xff]
      %v11049 = vld [vmem:[%s531 + $0x52] sm:$0xff]
      %v11050 = vld [vmem:[%s531 + $0x62] sm:$0xff]
      %v11051 = vld [vmem:[%s531 + $0x6a] sm:$0xff]
      %v11052 = vld [vmem:[%s531 + $0x7a] sm:$0xff]
      %v11053 = vld [vmem:[%s531 + $0x82] sm:$0xff]
      %v11054 = vld [vmem:[%s531 + $0x92] sm:$0xff]
      %v11055 = vld [vmem:[%s531 + $0x9a] sm:$0xff]
      %v11056 = vld [vmem:[%s531 + $0xaa] sm:$0xff]
      %v11057 = vld [vmem:[%s531 + $0xb2] sm:$0xff]
      %v11058 = vld [vmem:[%s531 + $0xc2] sm:$0xff]
      %v11059 = vld [vmem:[%s531 + $0xca] sm:$0xff]
      %v11060 = vld [vmem:[%s531 + $0xda] sm:$0xff]
      %v11061 = vld [vmem:[%s531 + $0xe2] sm:$0xff]
      %v11062 = vld [vmem:[%s531 + $0xf2] sm:$0xff]
      %v11063 = vld [vmem:[%s531 + $0xfa] sm:$0xff]
      %v11064 = vld [vmem:[%s531 + $0x10a] sm:$0xff]
      %v11065 = vld [vmem:[%s531 + $0x112] sm:$0xff]
      %v11066 = vld [vmem:[%s531 + $0x122] sm:$0xff]
      %v11067 = vld [vmem:[%s531 + $0x12a] sm:$0xff]
      %v11068 = vld [vmem:[%s531 + $0x13a] sm:$0xff]
      %v11069 = vld [vmem:[%s531 + $0x142] sm:$0xff]
      %v11070 = vld [vmem:[%s531 + $0x152] sm:$0xff]
      %v11071 = vld [vmem:[%s531 + $0x15a] sm:$0xff]
      %v11072 = vld [vmem:[%s531 + $0x16a] sm:$0xff]
      %v11073 = vld [vmem:[%s531 + $0x172] sm:$0xff]
      %s11074 = scalar_lea.vmem %s9, 160
      %v11075 = vld [vmem:[%s11074] sm:$0xff]
      %v11076 = vld [vmem:[%s11074 + $0x8] sm:$0xff]
      %v11077 = vld [vmem:[%s11074 + $0x10] sm:$0xff]
      %v11078 = vld [vmem:[%s11074 + $0x18] sm:$0xff]
      %v11080 = vsel %vm3036, %v11042, 0
      %v11083 = vsel %vm3036, %v11043, 0
      %v11086 = vsel %vm3036, %v11044, 0
      %v11089 = vsel %vm3036, %v11045, 0
      %v11092 = vsel %vm3036, %v11046, 0
      %v11095 = vsel %vm3036, %v11047, 0
      %v11098 = vsel %vm3036, %v11048, 0
      %v11101 = vsel %vm3036, %v11049, 0
      %v11104 = vsel %vm3036, %v11050, 0
      %v11107 = vsel %vm3036, %v11051, 0
      %v11110 = vsel %vm3036, %v11052, 0
      %v11113 = vsel %vm3036, %v11053, 0
      %v11116 = vsel %vm3036, %v11054, 0
      %v11119 = vsel %vm3036, %v11055, 0
      %v11122 = vsel %vm3036, %v11056, 0
      %v11125 = vsel %vm3036, %v11057, 0
      %v11128 = vsel %vm3036, %v11058, 0
      %v11131 = vsel %vm3036, %v11059, 0
      %v11134 = vsel %vm3036, %v11060, 0
      %v11137 = vsel %vm3036, %v11061, 0
      %v11140 = vsel %vm3036, %v11062, 0
      %v11143 = vsel %vm3036, %v11063, 0
      %v11146 = vsel %vm3036, %v11064, 0
      %v11149 = vsel %vm3036, %v11065, 0
      %v11152 = vsel %vm3036, %v11066, 0
      %v11155 = vsel %vm3036, %v11067, 0
      %v11158 = vsel %vm3036, %v11068, 0
      %v11161 = vsel %vm3036, %v11069, 0
      %v11164 = vsel %vm3036, %v11070, 0
      %v11167 = vsel %vm3036, %v11071, 0
      %v11170 = vsel %vm3036, %v11072, 0
      %v11173 = vsel %vm3036, %v11073, 0
      %11175 = vmatpush.msra.mxu0 0.0
      %11176 = vmatpush.msra.mxu0 0.0
      %11177 = vmatpush.msra.mxu0 0.0
      %11178 = vmatpush.msra.mxu0 0.0
      %11179 = vmatpush.msra.mxu0 0.0
      %11180 = vmatpush.msra.mxu0 0.0
      %11181 = vmatpush.msra.mxu0 0.0
      %11182 = vmatpush.msra.mxu0 0.0
      %11183 = vmatpush.msra.mxu0 0.0
      %11184 = vmatpush.msra.mxu0 0.0
      %11185 = vmatpush.msra.mxu0 0.0
      %11186 = vmatpush.msra.mxu0 0.0
      %11187 = vmatpush.msra.mxu0 %v11078
      %11188 = vmatpush.msra.mxu0 %v11077
      %11189 = vmatpush.msra.mxu0 %v11076
      %11190 = vmatpush.msra.mxu0 %v11075
      %11191 = vmatmul.f32.gmra.mxu0 %v11080
      %v11192 = vpop.f32.mrf.mxu0
      %v11193 = vadd.f32 0.0, %v11192
      %11194 = vmatmul.f32.gmra.mxu0 %v11083
      %v11195 = vpop.f32.mrf.mxu0
      %v11196 = vadd.f32 0.0, %v11195
      %11197 = vmatmul.f32.gmra.mxu0 %v11086
      %v11198 = vpop.f32.mrf.mxu0
      %v11199 = vadd.f32 0.0, %v11198
      %11200 = vmatmul.f32.gmra.mxu0 %v11089
      %v11201 = vpop.f32.mrf.mxu0
      %v11202 = vadd.f32 0.0, %v11201
      %11203 = vmatmul.f32.gmra.mxu0 %v11092
      %v11204 = vpop.f32.mrf.mxu0
      %v11205 = vadd.f32 0.0, %v11204
      %11206 = vmatmul.f32.gmra.mxu0 %v11095
      %v11207 = vpop.f32.mrf.mxu0
      %v11208 = vadd.f32 0.0, %v11207
      %11209 = vmatmul.f32.gmra.mxu0 %v11098
      %v11210 = vpop.f32.mrf.mxu0
      %v11211 = vadd.f32 0.0, %v11210
      %11212 = vmatmul.f32.gmra.mxu0 %v11101
      %v11213 = vpop.f32.mrf.mxu0
      %v11214 = vadd.f32 0.0, %v11213
      %11215 = vmatmul.f32.gmra.mxu0 %v11104
      %v11216 = vpop.f32.mrf.mxu0
      %v11217 = vadd.f32 0.0, %v11216
      %11218 = vmatmul.f32.gmra.mxu0 %v11107
      %v11219 = vpop.f32.mrf.mxu0
      %v11220 = vadd.f32 0.0, %v11219
      %11221 = vmatmul.f32.gmra.mxu0 %v11110
      %v11222 = vpop.f32.mrf.mxu0
      %v11223 = vadd.f32 0.0, %v11222
      %11224 = vmatmul.f32.gmra.mxu0 %v11113
      %v11225 = vpop.f32.mrf.mxu0
      %v11226 = vadd.f32 0.0, %v11225
      %11227 = vmatmul.f32.gmra.mxu0 %v11116
      %v11228 = vpop.f32.mrf.mxu0
      %v11229 = vadd.f32 0.0, %v11228
      %11230 = vmatmul.f32.gmra.mxu0 %v11119
      %v11231 = vpop.f32.mrf.mxu0
      %v11232 = vadd.f32 0.0, %v11231
      %11233 = vmatmul.f32.gmra.mxu0 %v11122
      %v11234 = vpop.f32.mrf.mxu0
      %v11235 = vadd.f32 0.0, %v11234
      %11236 = vmatmul.f32.gmra.mxu0 %v11125
      %v11237 = vpop.f32.mrf.mxu0
      %v11238 = vadd.f32 0.0, %v11237
      %11239 = vmatmul.f32.gmra.mxu0 %v11128
      %v11240 = vpop.f32.mrf.mxu0
      %v11241 = vadd.f32 0.0, %v11240
      %11242 = vmatmul.f32.gmra.mxu0 %v11131
      %v11243 = vpop.f32.mrf.mxu0
      %v11244 = vadd.f32 0.0, %v11243
      %11245 = vmatmul.f32.gmra.mxu0 %v11134
      %v11246 = vpop.f32.mrf.mxu0
      %v11247 = vadd.f32 0.0, %v11246
      %11248 = vmatmul.f32.gmra.mxu0 %v11137
      %v11249 = vpop.f32.mrf.mxu0
      %v11250 = vadd.f32 0.0, %v11249
      %11251 = vmatmul.f32.gmra.mxu0 %v11140
      %v11252 = vpop.f32.mrf.mxu0
      %v11253 = vadd.f32 0.0, %v11252
      %11254 = vmatmul.f32.gmra.mxu0 %v11143
      %v11255 = vpop.f32.mrf.mxu0
      %v11256 = vadd.f32 0.0, %v11255
      %11257 = vmatmul.f32.gmra.mxu0 %v11146
      %v11258 = vpop.f32.mrf.mxu0
      %v11259 = vadd.f32 0.0, %v11258
      %11260 = vmatmul.f32.gmra.mxu0 %v11149
      %v11261 = vpop.f32.mrf.mxu0
      %v11262 = vadd.f32 0.0, %v11261
      %11263 = vmatmul.f32.gmra.mxu0 %v11152
      %v11264 = vpop.f32.mrf.mxu0
      %v11265 = vadd.f32 0.0, %v11264
      %11266 = vmatmul.f32.gmra.mxu0 %v11155
      %v11267 = vpop.f32.mrf.mxu0
      %v11268 = vadd.f32 0.0, %v11267
      %11269 = vmatmul.f32.gmra.mxu0 %v11158
      %v11270 = vpop.f32.mrf.mxu0
      %v11271 = vadd.f32 0.0, %v11270
      %11272 = vmatmul.f32.gmra.mxu0 %v11161
      %v11273 = vpop.f32.mrf.mxu0
      %v11274 = vadd.f32 0.0, %v11273
      %11275 = vmatmul.f32.gmra.mxu0 %v11164
      %v11276 = vpop.f32.mrf.mxu0
      %v11277 = vadd.f32 0.0, %v11276
      %11278 = vmatmul.f32.gmra.mxu0 %v11167
      %v11279 = vpop.f32.mrf.mxu0
      %v11280 = vadd.f32 0.0, %v11279
      %11281 = vmatmul.f32.gmra.mxu0 %v11170
      %v11282 = vpop.f32.mrf.mxu0
      %v11283 = vadd.f32 0.0, %v11282
      %11284 = vmatmul.f32.gmra.mxu0 %v11173
      %v11285 = vpop.f32.mrf.mxu0
      %v11286 = vadd.f32 0.0, %v11285
      %11287 = vdwg.mxu0
      %v11288 = vadd.f32 %v11010, %v11193
      %v11289 = vadd.f32 %v11011, %v11196
      %v11290 = vadd.f32 %v11012, %v11199
      %v11291 = vadd.f32 %v11013, %v11202
      %v11292 = vadd.f32 %v11014, %v11205
      %v11293 = vadd.f32 %v11015, %v11208
      %v11294 = vadd.f32 %v11016, %v11211
      %v11295 = vadd.f32 %v11017, %v11214
      %v11296 = vadd.f32 %v11018, %v11217
      %v11297 = vadd.f32 %v11019, %v11220
      %v11298 = vadd.f32 %v11020, %v11223
      %v11299 = vadd.f32 %v11021, %v11226
      %v11300 = vadd.f32 %v11022, %v11229
      %v11301 = vadd.f32 %v11023, %v11232
      %v11302 = vadd.f32 %v11024, %v11235
      %v11303 = vadd.f32 %v11025, %v11238
      %v11304 = vadd.f32 %v11026, %v11241
      %v11305 = vadd.f32 %v11027, %v11244
      %v11306 = vadd.f32 %v11028, %v11247
      %v11307 = vadd.f32 %v11029, %v11250
      %v11308 = vadd.f32 %v11030, %v11253
      %v11309 = vadd.f32 %v11031, %v11256
      %v11310 = vadd.f32 %v11032, %v11259
      %v11311 = vadd.f32 %v11033, %v11262
      %v11312 = vadd.f32 %v11034, %v11265
      %v11313 = vadd.f32 %v11035, %v11268
      %v11314 = vadd.f32 %v11036, %v11271
      %v11315 = vadd.f32 %v11037, %v11274
      %v11316 = vadd.f32 %v11038, %v11277
      %v11317 = vadd.f32 %v11039, %v11280
      %v11318 = vadd.f32 %v11040, %v11283
      %v11319 = vadd.f32 %v11041, %v11286
      %v11320 = vld [vmem:[%s2130] sm:$0xff]
      %v11321 = vld [vmem:[%s2130 + $0x8] sm:$0xff]
      %v11322 = vld [vmem:[%s2130 + $0x18] sm:$0xff]
      %v11323 = vld [vmem:[%s2130 + $0x20] sm:$0xff]
      %v11324 = vld [vmem:[%s2130 + $0x30] sm:$0xff]
      %v11325 = vld [vmem:[%s2130 + $0x38] sm:$0xff]
      %v11326 = vld [vmem:[%s2130 + $0x48] sm:$0xff]
      %v11327 = vld [vmem:[%s2130 + $0x50] sm:$0xff]
      %v11328 = vld [vmem:[%s2130 + $0x60] sm:$0xff]
      %v11329 = vld [vmem:[%s2130 + $0x68] sm:$0xff]
      %v11330 = vld [vmem:[%s2130 + $0x78] sm:$0xff]
      %v11331 = vld [vmem:[%s2130 + $0x80] sm:$0xff]
      %v11332 = vld [vmem:[%s2130 + $0x90] sm:$0xff]
      %v11333 = vld [vmem:[%s2130 + $0x98] sm:$0xff]
      %v11334 = vld [vmem:[%s2130 + $0xa8] sm:$0xff]
      %v11335 = vld [vmem:[%s2130 + $0xb0] sm:$0xff]
      %v11336 = vld [vmem:[%s2130 + $0xc0] sm:$0xff]
      %v11337 = vld [vmem:[%s2130 + $0xc8] sm:$0xff]
      %v11338 = vld [vmem:[%s2130 + $0xd8] sm:$0xff]
      %v11339 = vld [vmem:[%s2130 + $0xe0] sm:$0xff]
      %v11340 = vld [vmem:[%s2130 + $0xf0] sm:$0xff]
      %v11341 = vld [vmem:[%s2130 + $0xf8] sm:$0xff]
      %v11342 = vld [vmem:[%s2130 + $0x108] sm:$0xff]
      %v11343 = vld [vmem:[%s2130 + $0x110] sm:$0xff]
      %v11344 = vld [vmem:[%s2130 + $0x120] sm:$0xff]
      %v11345 = vld [vmem:[%s2130 + $0x128] sm:$0xff]
      %v11346 = vld [vmem:[%s2130 + $0x138] sm:$0xff]
      %v11347 = vld [vmem:[%s2130 + $0x140] sm:$0xff]
      %v11348 = vld [vmem:[%s2130 + $0x150] sm:$0xff]
      %v11349 = vld [vmem:[%s2130 + $0x158] sm:$0xff]
      %v11350 = vld [vmem:[%s2130 + $0x168] sm:$0xff]
      %v11351 = vld [vmem:[%s2130 + $0x170] sm:$0xff]
      %s11352 = scalar_lea.vmem %s9, 192
      %v11353 = vld [vmem:[%s11352] sm:$0xff]
      %v11354 = vld [vmem:[%s11352 + $0x8] sm:$0xff]
      %v11355 = vld [vmem:[%s11352 + $0x10] sm:$0xff]
      %v11356 = vld [vmem:[%s11352 + $0x18] sm:$0xff]
      %v11358 = vsel %vm3036, %v11320, 0
      %v11361 = vsel %vm3036, %v11321, 0
      %v11364 = vsel %vm3036, %v11322, 0
      %v11367 = vsel %vm3036, %v11323, 0
      %v11370 = vsel %vm3036, %v11324, 0
      %v11373 = vsel %vm3036, %v11325, 0
      %v11376 = vsel %vm3036, %v11326, 0
      %v11379 = vsel %vm3036, %v11327, 0
      %v11382 = vsel %vm3036, %v11328, 0
      %v11385 = vsel %vm3036, %v11329, 0
      %v11388 = vsel %vm3036, %v11330, 0
      %v11391 = vsel %vm3036, %v11331, 0
      %v11394 = vsel %vm3036, %v11332, 0
      %v11397 = vsel %vm3036, %v11333, 0
      %v11400 = vsel %vm3036, %v11334, 0
      %v11403 = vsel %vm3036, %v11335, 0
      %v11406 = vsel %vm3036, %v11336, 0
      %v11409 = vsel %vm3036, %v11337, 0
      %v11412 = vsel %vm3036, %v11338, 0
      %v11415 = vsel %vm3036, %v11339, 0
      %v11418 = vsel %vm3036, %v11340, 0
      %v11421 = vsel %vm3036, %v11341, 0
      %v11424 = vsel %vm3036, %v11342, 0
      %v11427 = vsel %vm3036, %v11343, 0
      %v11430 = vsel %vm3036, %v11344, 0
      %v11433 = vsel %vm3036, %v11345, 0
      %v11436 = vsel %vm3036, %v11346, 0
      %v11439 = vsel %vm3036, %v11347, 0
      %v11442 = vsel %vm3036, %v11348, 0
      %v11445 = vsel %vm3036, %v11349, 0
      %v11448 = vsel %vm3036, %v11350, 0
      %v11451 = vsel %vm3036, %v11351, 0
      %11453 = vmatpush.msra.mxu0 0.0
      %11454 = vmatpush.msra.mxu0 0.0
      %11455 = vmatpush.msra.mxu0 0.0
      %11456 = vmatpush.msra.mxu0 0.0
      %11457 = vmatpush.msra.mxu0 0.0
      %11458 = vmatpush.msra.mxu0 0.0
      %11459 = vmatpush.msra.mxu0 0.0
      %11460 = vmatpush.msra.mxu0 0.0
      %11461 = vmatpush.msra.mxu0 0.0
      %11462 = vmatpush.msra.mxu0 0.0
      %11463 = vmatpush.msra.mxu0 0.0
      %11464 = vmatpush.msra.mxu0 0.0
      %11465 = vmatpush.msra.mxu0 %v11356
      %11466 = vmatpush.msra.mxu0 %v11355
      %11467 = vmatpush.msra.mxu0 %v11354
      %11468 = vmatpush.msra.mxu0 %v11353
      %11469 = vmatmul.f32.gmra.mxu0 %v11358
      %v11470 = vpop.f32.mrf.mxu0
      %v11471 = vadd.f32 0.0, %v11470
      %11472 = vmatmul.f32.gmra.mxu0 %v11361
      %v11473 = vpop.f32.mrf.mxu0
      %v11474 = vadd.f32 0.0, %v11473
      %11475 = vmatmul.f32.gmra.mxu0 %v11364
      %v11476 = vpop.f32.mrf.mxu0
      %v11477 = vadd.f32 0.0, %v11476
      %11478 = vmatmul.f32.gmra.mxu0 %v11367
      %v11479 = vpop.f32.mrf.mxu0
      %v11480 = vadd.f32 0.0, %v11479
      %11481 = vmatmul.f32.gmra.mxu0 %v11370
      %v11482 = vpop.f32.mrf.mxu0
      %v11483 = vadd.f32 0.0, %v11482
      %11484 = vmatmul.f32.gmra.mxu0 %v11373
      %v11485 = vpop.f32.mrf.mxu0
      %v11486 = vadd.f32 0.0, %v11485
      %11487 = vmatmul.f32.gmra.mxu0 %v11376
      %v11488 = vpop.f32.mrf.mxu0
      %v11489 = vadd.f32 0.0, %v11488
      %11490 = vmatmul.f32.gmra.mxu0 %v11379
      %v11491 = vpop.f32.mrf.mxu0
      %v11492 = vadd.f32 0.0, %v11491
      %11493 = vmatmul.f32.gmra.mxu0 %v11382
      %v11494 = vpop.f32.mrf.mxu0
      %v11495 = vadd.f32 0.0, %v11494
      %11496 = vmatmul.f32.gmra.mxu0 %v11385
      %v11497 = vpop.f32.mrf.mxu0
      %v11498 = vadd.f32 0.0, %v11497
      %11499 = vmatmul.f32.gmra.mxu0 %v11388
      %v11500 = vpop.f32.mrf.mxu0
      %v11501 = vadd.f32 0.0, %v11500
      %11502 = vmatmul.f32.gmra.mxu0 %v11391
      %v11503 = vpop.f32.mrf.mxu0
      %v11504 = vadd.f32 0.0, %v11503
      %11505 = vmatmul.f32.gmra.mxu0 %v11394
      %v11506 = vpop.f32.mrf.mxu0
      %v11507 = vadd.f32 0.0, %v11506
      %11508 = vmatmul.f32.gmra.mxu0 %v11397
      %v11509 = vpop.f32.mrf.mxu0
      %v11510 = vadd.f32 0.0, %v11509
      %11511 = vmatmul.f32.gmra.mxu0 %v11400
      %v11512 = vpop.f32.mrf.mxu0
      %v11513 = vadd.f32 0.0, %v11512
      %11514 = vmatmul.f32.gmra.mxu0 %v11403
      %v11515 = vpop.f32.mrf.mxu0
      %v11516 = vadd.f32 0.0, %v11515
      %11517 = vmatmul.f32.gmra.mxu0 %v11406
      %v11518 = vpop.f32.mrf.mxu0
      %v11519 = vadd.f32 0.0, %v11518
      %11520 = vmatmul.f32.gmra.mxu0 %v11409
      %v11521 = vpop.f32.mrf.mxu0
      %v11522 = vadd.f32 0.0, %v11521
      %11523 = vmatmul.f32.gmra.mxu0 %v11412
      %v11524 = vpop.f32.mrf.mxu0
      %v11525 = vadd.f32 0.0, %v11524
      %11526 = vmatmul.f32.gmra.mxu0 %v11415
      %v11527 = vpop.f32.mrf.mxu0
      %v11528 = vadd.f32 0.0, %v11527
      %11529 = vmatmul.f32.gmra.mxu0 %v11418
      %v11530 = vpop.f32.mrf.mxu0
      %v11531 = vadd.f32 0.0, %v11530
      %11532 = vmatmul.f32.gmra.mxu0 %v11421
      %v11533 = vpop.f32.mrf.mxu0
      %v11534 = vadd.f32 0.0, %v11533
      %11535 = vmatmul.f32.gmra.mxu0 %v11424
      %v11536 = vpop.f32.mrf.mxu0
      %v11537 = vadd.f32 0.0, %v11536
      %11538 = vmatmul.f32.gmra.mxu0 %v11427
      %v11539 = vpop.f32.mrf.mxu0
      %v11540 = vadd.f32 0.0, %v11539
      %11541 = vmatmul.f32.gmra.mxu0 %v11430
      %v11542 = vpop.f32.mrf.mxu0
      %v11543 = vadd.f32 0.0, %v11542
      %11544 = vmatmul.f32.gmra.mxu0 %v11433
      %v11545 = vpop.f32.mrf.mxu0
      %v11546 = vadd.f32 0.0, %v11545
      %11547 = vmatmul.f32.gmra.mxu0 %v11436
      %v11548 = vpop.f32.mrf.mxu0
      %v11549 = vadd.f32 0.0, %v11548
      %11550 = vmatmul.f32.gmra.mxu0 %v11439
      %v11551 = vpop.f32.mrf.mxu0
      %v11552 = vadd.f32 0.0, %v11551
      %11553 = vmatmul.f32.gmra.mxu0 %v11442
      %v11554 = vpop.f32.mrf.mxu0
      %v11555 = vadd.f32 0.0, %v11554
      %11556 = vmatmul.f32.gmra.mxu0 %v11445
      %v11557 = vpop.f32.mrf.mxu0
      %v11558 = vadd.f32 0.0, %v11557
      %11559 = vmatmul.f32.gmra.mxu0 %v11448
      %v11560 = vpop.f32.mrf.mxu0
      %v11561 = vadd.f32 0.0, %v11560
      %11562 = vmatmul.f32.gmra.mxu0 %v11451
      %v11563 = vpop.f32.mrf.mxu0
      %v11564 = vadd.f32 0.0, %v11563
      %11565 = vdwg.mxu0
      %v11566 = vadd.f32 %v11288, %v11471
      %v11567 = vadd.f32 %v11289, %v11474
      %v11568 = vadd.f32 %v11290, %v11477
      %v11569 = vadd.f32 %v11291, %v11480
      %v11570 = vadd.f32 %v11292, %v11483
      %v11571 = vadd.f32 %v11293, %v11486
      %v11572 = vadd.f32 %v11294, %v11489
      %v11573 = vadd.f32 %v11295, %v11492
      %v11574 = vadd.f32 %v11296, %v11495
      %v11575 = vadd.f32 %v11297, %v11498
      %v11576 = vadd.f32 %v11298, %v11501
      %v11577 = vadd.f32 %v11299, %v11504
      %v11578 = vadd.f32 %v11300, %v11507
      %v11579 = vadd.f32 %v11301, %v11510
      %v11580 = vadd.f32 %v11302, %v11513
      %v11581 = vadd.f32 %v11303, %v11516
      %v11582 = vadd.f32 %v11304, %v11519
      %v11583 = vadd.f32 %v11305, %v11522
      %v11584 = vadd.f32 %v11306, %v11525
      %v11585 = vadd.f32 %v11307, %v11528
      %v11586 = vadd.f32 %v11308, %v11531
      %v11587 = vadd.f32 %v11309, %v11534
      %v11588 = vadd.f32 %v11310, %v11537
      %v11589 = vadd.f32 %v11311, %v11540
      %v11590 = vadd.f32 %v11312, %v11543
      %v11591 = vadd.f32 %v11313, %v11546
      %v11592 = vadd.f32 %v11314, %v11549
      %v11593 = vadd.f32 %v11315, %v11552
      %v11594 = vadd.f32 %v11316, %v11555
      %v11595 = vadd.f32 %v11317, %v11558
      %v11596 = vadd.f32 %v11318, %v11561
      %v11597 = vadd.f32 %v11319, %v11564
      %v11598 = vld [vmem:[%s2130 + $0x1] sm:$0xff]
      %v11599 = vld [vmem:[%s2130 + $0x9] sm:$0xff]
      %v11600 = vld [vmem:[%s2130 + $0x19] sm:$0xff]
      %v11601 = vld [vmem:[%s2130 + $0x21] sm:$0xff]
      %v11602 = vld [vmem:[%s2130 + $0x31] sm:$0xff]
      %v11603 = vld [vmem:[%s2130 + $0x39] sm:$0xff]
      %v11604 = vld [vmem:[%s2130 + $0x49] sm:$0xff]
      %v11605 = vld [vmem:[%s2130 + $0x51] sm:$0xff]
      %v11606 = vld [vmem:[%s2130 + $0x61] sm:$0xff]
      %v11607 = vld [vmem:[%s2130 + $0x69] sm:$0xff]
      %v11608 = vld [vmem:[%s2130 + $0x79] sm:$0xff]
      %v11609 = vld [vmem:[%s2130 + $0x81] sm:$0xff]
      %v11610 = vld [vmem:[%s2130 + $0x91] sm:$0xff]
      %v11611 = vld [vmem:[%s2130 + $0x99] sm:$0xff]
      %v11612 = vld [vmem:[%s2130 + $0xa9] sm:$0xff]
      %v11613 = vld [vmem:[%s2130 + $0xb1] sm:$0xff]
      %v11614 = vld [vmem:[%s2130 + $0xc1] sm:$0xff]
      %v11615 = vld [vmem:[%s2130 + $0xc9] sm:$0xff]
      %v11616 = vld [vmem:[%s2130 + $0xd9] sm:$0xff]
      %v11617 = vld [vmem:[%s2130 + $0xe1] sm:$0xff]
      %v11618 = vld [vmem:[%s2130 + $0xf1] sm:$0xff]
      %v11619 = vld [vmem:[%s2130 + $0xf9] sm:$0xff]
      %v11620 = vld [vmem:[%s2130 + $0x109] sm:$0xff]
      %v11621 = vld [vmem:[%s2130 + $0x111] sm:$0xff]
      %v11622 = vld [vmem:[%s2130 + $0x121] sm:$0xff]
      %v11623 = vld [vmem:[%s2130 + $0x129] sm:$0xff]
      %v11624 = vld [vmem:[%s2130 + $0x139] sm:$0xff]
      %v11625 = vld [vmem:[%s2130 + $0x141] sm:$0xff]
      %v11626 = vld [vmem:[%s2130 + $0x151] sm:$0xff]
      %v11627 = vld [vmem:[%s2130 + $0x159] sm:$0xff]
      %v11628 = vld [vmem:[%s2130 + $0x169] sm:$0xff]
      %v11629 = vld [vmem:[%s2130 + $0x171] sm:$0xff]
      %s11630 = scalar_lea.vmem %s9, 224
      %v11631 = vld [vmem:[%s11630] sm:$0xff]
      %v11632 = vld [vmem:[%s11630 + $0x8] sm:$0xff]
      %v11633 = vld [vmem:[%s11630 + $0x10] sm:$0xff]
      %v11634 = vld [vmem:[%s11630 + $0x18] sm:$0xff]
      %v11636 = vsel %vm3036, %v11598, 0
      %v11639 = vsel %vm3036, %v11599, 0
      %v11642 = vsel %vm3036, %v11600, 0
      %v11645 = vsel %vm3036, %v11601, 0
      %v11648 = vsel %vm3036, %v11602, 0
      %v11651 = vsel %vm3036, %v11603, 0
      %v11654 = vsel %vm3036, %v11604, 0
      %v11657 = vsel %vm3036, %v11605, 0
      %v11660 = vsel %vm3036, %v11606, 0
      %v11663 = vsel %vm3036, %v11607, 0
      %v11666 = vsel %vm3036, %v11608, 0
      %v11669 = vsel %vm3036, %v11609, 0
      %v11672 = vsel %vm3036, %v11610, 0
      %v11675 = vsel %vm3036, %v11611, 0
      %v11678 = vsel %vm3036, %v11612, 0
      %v11681 = vsel %vm3036, %v11613, 0
      %v11684 = vsel %vm3036, %v11614, 0
      %v11687 = vsel %vm3036, %v11615, 0
      %v11690 = vsel %vm3036, %v11616, 0
      %v11693 = vsel %vm3036, %v11617, 0
      %v11696 = vsel %vm3036, %v11618, 0
      %v11699 = vsel %vm3036, %v11619, 0
      %v11702 = vsel %vm3036, %v11620, 0
      %v11705 = vsel %vm3036, %v11621, 0
      %v11708 = vsel %vm3036, %v11622, 0
      %v11711 = vsel %vm3036, %v11623, 0
      %v11714 = vsel %vm3036, %v11624, 0
      %v11717 = vsel %vm3036, %v11625, 0
      %v11720 = vsel %vm3036, %v11626, 0
      %v11723 = vsel %vm3036, %v11627, 0
      %v11726 = vsel %vm3036, %v11628, 0
      %v11729 = vsel %vm3036, %v11629, 0
      %11731 = vmatpush.msra.mxu0 0.0
      %11732 = vmatpush.msra.mxu0 0.0
      %11733 = vmatpush.msra.mxu0 0.0
      %11734 = vmatpush.msra.mxu0 0.0
      %11735 = vmatpush.msra.mxu0 0.0
      %11736 = vmatpush.msra.mxu0 0.0
      %11737 = vmatpush.msra.mxu0 0.0
      %11738 = vmatpush.msra.mxu0 0.0
      %11739 = vmatpush.msra.mxu0 0.0
      %11740 = vmatpush.msra.mxu0 0.0
      %11741 = vmatpush.msra.mxu0 0.0
      %11742 = vmatpush.msra.mxu0 0.0
      %11743 = vmatpush.msra.mxu0 %v11634
      %11744 = vmatpush.msra.mxu0 %v11633
      %11745 = vmatpush.msra.mxu0 %v11632
      %11746 = vmatpush.msra.mxu0 %v11631
      %11747 = vmatmul.f32.gmra.mxu0 %v11636
      %v11748 = vpop.f32.mrf.mxu0
      %v11749 = vadd.f32 0.0, %v11748
      %11750 = vmatmul.f32.gmra.mxu0 %v11639
      %v11751 = vpop.f32.mrf.mxu0
      %v11752 = vadd.f32 0.0, %v11751
      %11753 = vmatmul.f32.gmra.mxu0 %v11642
      %v11754 = vpop.f32.mrf.mxu0
      %v11755 = vadd.f32 0.0, %v11754
      %11756 = vmatmul.f32.gmra.mxu0 %v11645
      %v11757 = vpop.f32.mrf.mxu0
      %v11758 = vadd.f32 0.0, %v11757
      %11759 = vmatmul.f32.gmra.mxu0 %v11648
      %v11760 = vpop.f32.mrf.mxu0
      %v11761 = vadd.f32 0.0, %v11760
      %11762 = vmatmul.f32.gmra.mxu0 %v11651
      %v11763 = vpop.f32.mrf.mxu0
      %v11764 = vadd.f32 0.0, %v11763
      %11765 = vmatmul.f32.gmra.mxu0 %v11654
      %v11766 = vpop.f32.mrf.mxu0
      %v11767 = vadd.f32 0.0, %v11766
      %11768 = vmatmul.f32.gmra.mxu0 %v11657
      %v11769 = vpop.f32.mrf.mxu0
      %v11770 = vadd.f32 0.0, %v11769
      %11771 = vmatmul.f32.gmra.mxu0 %v11660
      %v11772 = vpop.f32.mrf.mxu0
      %v11773 = vadd.f32 0.0, %v11772
      %11774 = vmatmul.f32.gmra.mxu0 %v11663
      %v11775 = vpop.f32.mrf.mxu0
      %v11776 = vadd.f32 0.0, %v11775
      %11777 = vmatmul.f32.gmra.mxu0 %v11666
      %v11778 = vpop.f32.mrf.mxu0
      %v11779 = vadd.f32 0.0, %v11778
      %11780 = vmatmul.f32.gmra.mxu0 %v11669
      %v11781 = vpop.f32.mrf.mxu0
      %v11782 = vadd.f32 0.0, %v11781
      %11783 = vmatmul.f32.gmra.mxu0 %v11672
      %v11784 = vpop.f32.mrf.mxu0
      %v11785 = vadd.f32 0.0, %v11784
      %11786 = vmatmul.f32.gmra.mxu0 %v11675
      %v11787 = vpop.f32.mrf.mxu0
      %v11788 = vadd.f32 0.0, %v11787
      %11789 = vmatmul.f32.gmra.mxu0 %v11678
      %v11790 = vpop.f32.mrf.mxu0
      %v11791 = vadd.f32 0.0, %v11790
      %11792 = vmatmul.f32.gmra.mxu0 %v11681
      %v11793 = vpop.f32.mrf.mxu0
      %v11794 = vadd.f32 0.0, %v11793
      %11795 = vmatmul.f32.gmra.mxu0 %v11684
      %v11796 = vpop.f32.mrf.mxu0
      %v11797 = vadd.f32 0.0, %v11796
      %11798 = vmatmul.f32.gmra.mxu0 %v11687
      %v11799 = vpop.f32.mrf.mxu0
      %v11800 = vadd.f32 0.0, %v11799
      %11801 = vmatmul.f32.gmra.mxu0 %v11690
      %v11802 = vpop.f32.mrf.mxu0
      %v11803 = vadd.f32 0.0, %v11802
      %11804 = vmatmul.f32.gmra.mxu0 %v11693
      %v11805 = vpop.f32.mrf.mxu0
      %v11806 = vadd.f32 0.0, %v11805
      %11807 = vmatmul.f32.gmra.mxu0 %v11696
      %v11808 = vpop.f32.mrf.mxu0
      %v11809 = vadd.f32 0.0, %v11808
      %11810 = vmatmul.f32.gmra.mxu0 %v11699
      %v11811 = vpop.f32.mrf.mxu0
      %v11812 = vadd.f32 0.0, %v11811
      %11813 = vmatmul.f32.gmra.mxu0 %v11702
      %v11814 = vpop.f32.mrf.mxu0
      %v11815 = vadd.f32 0.0, %v11814
      %11816 = vmatmul.f32.gmra.mxu0 %v11705
      %v11817 = vpop.f32.mrf.mxu0
      %v11818 = vadd.f32 0.0, %v11817
      %11819 = vmatmul.f32.gmra.mxu0 %v11708
      %v11820 = vpop.f32.mrf.mxu0
      %v11821 = vadd.f32 0.0, %v11820
      %11822 = vmatmul.f32.gmra.mxu0 %v11711
      %v11823 = vpop.f32.mrf.mxu0
      %v11824 = vadd.f32 0.0, %v11823
      %11825 = vmatmul.f32.gmra.mxu0 %v11714
      %v11826 = vpop.f32.mrf.mxu0
      %v11827 = vadd.f32 0.0, %v11826
      %11828 = vmatmul.f32.gmra.mxu0 %v11717
      %v11829 = vpop.f32.mrf.mxu0
      %v11830 = vadd.f32 0.0, %v11829
      %11831 = vmatmul.f32.gmra.mxu0 %v11720
      %v11832 = vpop.f32.mrf.mxu0
      %v11833 = vadd.f32 0.0, %v11832
      %11834 = vmatmul.f32.gmra.mxu0 %v11723
      %v11835 = vpop.f32.mrf.mxu0
      %v11836 = vadd.f32 0.0, %v11835
      %11837 = vmatmul.f32.gmra.mxu0 %v11726
      %v11838 = vpop.f32.mrf.mxu0
      %v11839 = vadd.f32 0.0, %v11838
      %11840 = vmatmul.f32.gmra.mxu0 %v11729
      %v11841 = vpop.f32.mrf.mxu0
      %v11842 = vadd.f32 0.0, %v11841
      %11843 = vdwg.mxu0
      %v11844 = vadd.f32 %v11566, %v11749
      %v11845 = vadd.f32 %v11567, %v11752
      %v11846 = vadd.f32 %v11568, %v11755
      %v11847 = vadd.f32 %v11569, %v11758
      %v11848 = vadd.f32 %v11570, %v11761
      %v11849 = vadd.f32 %v11571, %v11764
      %v11850 = vadd.f32 %v11572, %v11767
      %v11851 = vadd.f32 %v11573, %v11770
      %v11852 = vadd.f32 %v11574, %v11773
      %v11853 = vadd.f32 %v11575, %v11776
      %v11854 = vadd.f32 %v11576, %v11779
      %v11855 = vadd.f32 %v11577, %v11782
      %v11856 = vadd.f32 %v11578, %v11785
      %v11857 = vadd.f32 %v11579, %v11788
      %v11858 = vadd.f32 %v11580, %v11791
      %v11859 = vadd.f32 %v11581, %v11794
      %v11860 = vadd.f32 %v11582, %v11797
      %v11861 = vadd.f32 %v11583, %v11800
      %v11862 = vadd.f32 %v11584, %v11803
      %v11863 = vadd.f32 %v11585, %v11806
      %v11864 = vadd.f32 %v11586, %v11809
      %v11865 = vadd.f32 %v11587, %v11812
      %v11866 = vadd.f32 %v11588, %v11815
      %v11867 = vadd.f32 %v11589, %v11818
      %v11868 = vadd.f32 %v11590, %v11821
      %v11869 = vadd.f32 %v11591, %v11824
      %v11870 = vadd.f32 %v11592, %v11827
      %v11871 = vadd.f32 %v11593, %v11830
      %v11872 = vadd.f32 %v11594, %v11833
      %v11873 = vadd.f32 %v11595, %v11836
      %v11874 = vadd.f32 %v11596, %v11839
      %v11875 = vadd.f32 %v11597, %v11842
      %v11876 = vld [vmem:[%s2130 + $0x2] sm:$0xff]
      %v11877 = vld [vmem:[%s2130 + $0xa] sm:$0xff]
      %v11878 = vld [vmem:[%s2130 + $0x1a] sm:$0xff]
      %v11879 = vld [vmem:[%s2130 + $0x22] sm:$0xff]
      %v11880 = vld [vmem:[%s2130 + $0x32] sm:$0xff]
      %v11881 = vld [vmem:[%s2130 + $0x3a] sm:$0xff]
      %v11882 = vld [vmem:[%s2130 + $0x4a] sm:$0xff]
      %v11883 = vld [vmem:[%s2130 + $0x52] sm:$0xff]
      %v11884 = vld [vmem:[%s2130 + $0x62] sm:$0xff]
      %v11885 = vld [vmem:[%s2130 + $0x6a] sm:$0xff]
      %v11886 = vld [vmem:[%s2130 + $0x7a] sm:$0xff]
      %v11887 = vld [vmem:[%s2130 + $0x82] sm:$0xff]
      %v11888 = vld [vmem:[%s2130 + $0x92] sm:$0xff]
      %v11889 = vld [vmem:[%s2130 + $0x9a] sm:$0xff]
      %v11890 = vld [vmem:[%s2130 + $0xaa] sm:$0xff]
      %v11891 = vld [vmem:[%s2130 + $0xb2] sm:$0xff]
      %v11892 = vld [vmem:[%s2130 + $0xc2] sm:$0xff]
      %v11893 = vld [vmem:[%s2130 + $0xca] sm:$0xff]
      %v11894 = vld [vmem:[%s2130 + $0xda] sm:$0xff]
      %v11895 = vld [vmem:[%s2130 + $0xe2] sm:$0xff]
      %v11896 = vld [vmem:[%s2130 + $0xf2] sm:$0xff]
      %v11897 = vld [vmem:[%s2130 + $0xfa] sm:$0xff]
      %v11898 = vld [vmem:[%s2130 + $0x10a] sm:$0xff]
      %v11899 = vld [vmem:[%s2130 + $0x112] sm:$0xff]
      %v11900 = vld [vmem:[%s2130 + $0x122] sm:$0xff]
      %v11901 = vld [vmem:[%s2130 + $0x12a] sm:$0xff]
      %v11902 = vld [vmem:[%s2130 + $0x13a] sm:$0xff]
      %v11903 = vld [vmem:[%s2130 + $0x142] sm:$0xff]
      %v11904 = vld [vmem:[%s2130 + $0x152] sm:$0xff]
      %v11905 = vld [vmem:[%s2130 + $0x15a] sm:$0xff]
      %v11906 = vld [vmem:[%s2130 + $0x16a] sm:$0xff]
      %v11907 = vld [vmem:[%s2130 + $0x172] sm:$0xff]
      %s11908 = scalar_lea.vmem %s9, 256
      %v11909 = vld [vmem:[%s11908] sm:$0xff]
      %v11910 = vld [vmem:[%s11908 + $0x8] sm:$0xff]
      %v11911 = vld [vmem:[%s11908 + $0x10] sm:$0xff]
      %v11912 = vld [vmem:[%s11908 + $0x18] sm:$0xff]
      %v11914 = vsel %vm3036, %v11876, 0
      %v11917 = vsel %vm3036, %v11877, 0
      %v11920 = vsel %vm3036, %v11878, 0
      %v11923 = vsel %vm3036, %v11879, 0
      %v11926 = vsel %vm3036, %v11880, 0
      %v11929 = vsel %vm3036, %v11881, 0
      %v11932 = vsel %vm3036, %v11882, 0
      %v11935 = vsel %vm3036, %v11883, 0
      %v11938 = vsel %vm3036, %v11884, 0
      %v11941 = vsel %vm3036, %v11885, 0
      %v11944 = vsel %vm3036, %v11886, 0
      %v11947 = vsel %vm3036, %v11887, 0
      %v11950 = vsel %vm3036, %v11888, 0
      %v11953 = vsel %vm3036, %v11889, 0
      %v11956 = vsel %vm3036, %v11890, 0
      %v11959 = vsel %vm3036, %v11891, 0
      %v11962 = vsel %vm3036, %v11892, 0
      %v11965 = vsel %vm3036, %v11893, 0
      %v11968 = vsel %vm3036, %v11894, 0
      %v11971 = vsel %vm3036, %v11895, 0
      %v11974 = vsel %vm3036, %v11896, 0
      %v11977 = vsel %vm3036, %v11897, 0
      %v11980 = vsel %vm3036, %v11898, 0
      %v11983 = vsel %vm3036, %v11899, 0
      %v11986 = vsel %vm3036, %v11900, 0
      %v11989 = vsel %vm3036, %v11901, 0
      %v11992 = vsel %vm3036, %v11902, 0
      %v11995 = vsel %vm3036, %v11903, 0
      %v11998 = vsel %vm3036, %v11904, 0
      %v12001 = vsel %vm3036, %v11905, 0
      %v12004 = vsel %vm3036, %v11906, 0
      %v12007 = vsel %vm3036, %v11907, 0
      %12009 = vmatpush.msra.mxu0 0.0
      %12010 = vmatpush.msra.mxu0 0.0
      %12011 = vmatpush.msra.mxu0 0.0
      %12012 = vmatpush.msra.mxu0 0.0
      %12013 = vmatpush.msra.mxu0 0.0
      %12014 = vmatpush.msra.mxu0 0.0
      %12015 = vmatpush.msra.mxu0 0.0
      %12016 = vmatpush.msra.mxu0 0.0
      %12017 = vmatpush.msra.mxu0 0.0
      %12018 = vmatpush.msra.mxu0 0.0
      %12019 = vmatpush.msra.mxu0 0.0
      %12020 = vmatpush.msra.mxu0 0.0
      %12021 = vmatpush.msra.mxu0 %v11912
      %12022 = vmatpush.msra.mxu0 %v11911
      %12023 = vmatpush.msra.mxu0 %v11910
      %12024 = vmatpush.msra.mxu0 %v11909
      %12025 = vmatmul.f32.gmra.mxu0 %v11914
      %v12026 = vpop.f32.mrf.mxu0
      %v12027 = vadd.f32 0.0, %v12026
      %12028 = vmatmul.f32.gmra.mxu0 %v11917
      %v12029 = vpop.f32.mrf.mxu0
      %v12030 = vadd.f32 0.0, %v12029
      %12031 = vmatmul.f32.gmra.mxu0 %v11920
      %v12032 = vpop.f32.mrf.mxu0
      %v12033 = vadd.f32 0.0, %v12032
      %12034 = vmatmul.f32.gmra.mxu0 %v11923
      %v12035 = vpop.f32.mrf.mxu0
      %v12036 = vadd.f32 0.0, %v12035
      %12037 = vmatmul.f32.gmra.mxu0 %v11926
      %v12038 = vpop.f32.mrf.mxu0
      %v12039 = vadd.f32 0.0, %v12038
      %12040 = vmatmul.f32.gmra.mxu0 %v11929
      %v12041 = vpop.f32.mrf.mxu0
      %v12042 = vadd.f32 0.0, %v12041
      %12043 = vmatmul.f32.gmra.mxu0 %v11932
      %v12044 = vpop.f32.mrf.mxu0
      %v12045 = vadd.f32 0.0, %v12044
      %12046 = vmatmul.f32.gmra.mxu0 %v11935
      %v12047 = vpop.f32.mrf.mxu0
      %v12048 = vadd.f32 0.0, %v12047
      %12049 = vmatmul.f32.gmra.mxu0 %v11938
      %v12050 = vpop.f32.mrf.mxu0
      %v12051 = vadd.f32 0.0, %v12050
      %12052 = vmatmul.f32.gmra.mxu0 %v11941
      %v12053 = vpop.f32.mrf.mxu0
      %v12054 = vadd.f32 0.0, %v12053
      %12055 = vmatmul.f32.gmra.mxu0 %v11944
      %v12056 = vpop.f32.mrf.mxu0
      %v12057 = vadd.f32 0.0, %v12056
      %12058 = vmatmul.f32.gmra.mxu0 %v11947
      %v12059 = vpop.f32.mrf.mxu0
      %v12060 = vadd.f32 0.0, %v12059
      %12061 = vmatmul.f32.gmra.mxu0 %v11950
      %v12062 = vpop.f32.mrf.mxu0
      %v12063 = vadd.f32 0.0, %v12062
      %12064 = vmatmul.f32.gmra.mxu0 %v11953
      %v12065 = vpop.f32.mrf.mxu0
      %v12066 = vadd.f32 0.0, %v12065
      %12067 = vmatmul.f32.gmra.mxu0 %v11956
      %v12068 = vpop.f32.mrf.mxu0
      %v12069 = vadd.f32 0.0, %v12068
      %12070 = vmatmul.f32.gmra.mxu0 %v11959
      %v12071 = vpop.f32.mrf.mxu0
      %v12072 = vadd.f32 0.0, %v12071
      %12073 = vmatmul.f32.gmra.mxu0 %v11962
      %v12074 = vpop.f32.mrf.mxu0
      %v12075 = vadd.f32 0.0, %v12074
      %12076 = vmatmul.f32.gmra.mxu0 %v11965
      %v12077 = vpop.f32.mrf.mxu0
      %v12078 = vadd.f32 0.0, %v12077
      %12079 = vmatmul.f32.gmra.mxu0 %v11968
      %v12080 = vpop.f32.mrf.mxu0
      %v12081 = vadd.f32 0.0, %v12080
      %12082 = vmatmul.f32.gmra.mxu0 %v11971
      %v12083 = vpop.f32.mrf.mxu0
      %v12084 = vadd.f32 0.0, %v12083
      %12085 = vmatmul.f32.gmra.mxu0 %v11974
      %v12086 = vpop.f32.mrf.mxu0
      %v12087 = vadd.f32 0.0, %v12086
      %12088 = vmatmul.f32.gmra.mxu0 %v11977
      %v12089 = vpop.f32.mrf.mxu0
      %v12090 = vadd.f32 0.0, %v12089
      %12091 = vmatmul.f32.gmra.mxu0 %v11980
      %v12092 = vpop.f32.mrf.mxu0
      %v12093 = vadd.f32 0.0, %v12092
      %12094 = vmatmul.f32.gmra.mxu0 %v11983
      %v12095 = vpop.f32.mrf.mxu0
      %v12096 = vadd.f32 0.0, %v12095
      %12097 = vmatmul.f32.gmra.mxu0 %v11986
      %v12098 = vpop.f32.mrf.mxu0
      %v12099 = vadd.f32 0.0, %v12098
      %12100 = vmatmul.f32.gmra.mxu0 %v11989
      %v12101 = vpop.f32.mrf.mxu0
      %v12102 = vadd.f32 0.0, %v12101
      %12103 = vmatmul.f32.gmra.mxu0 %v11992
      %v12104 = vpop.f32.mrf.mxu0
      %v12105 = vadd.f32 0.0, %v12104
      %12106 = vmatmul.f32.gmra.mxu0 %v11995
      %v12107 = vpop.f32.mrf.mxu0
      %v12108 = vadd.f32 0.0, %v12107
      %12109 = vmatmul.f32.gmra.mxu0 %v11998
      %v12110 = vpop.f32.mrf.mxu0
      %v12111 = vadd.f32 0.0, %v12110
      %12112 = vmatmul.f32.gmra.mxu0 %v12001
      %v12113 = vpop.f32.mrf.mxu0
      %v12114 = vadd.f32 0.0, %v12113
      %12115 = vmatmul.f32.gmra.mxu0 %v12004
      %v12116 = vpop.f32.mrf.mxu0
      %v12117 = vadd.f32 0.0, %v12116
      %12118 = vmatmul.f32.gmra.mxu0 %v12007
      %v12119 = vpop.f32.mrf.mxu0
      %v12120 = vadd.f32 0.0, %v12119
      %12121 = vdwg.mxu0
      %v12122 = vadd.f32 %v11844, %v12027
      %v12123 = vadd.f32 %v11845, %v12030
      %v12124 = vadd.f32 %v11846, %v12033
      %v12125 = vadd.f32 %v11847, %v12036
      %v12126 = vadd.f32 %v11848, %v12039
      %v12127 = vadd.f32 %v11849, %v12042
      %v12128 = vadd.f32 %v11850, %v12045
      %v12129 = vadd.f32 %v11851, %v12048
      %v12130 = vadd.f32 %v11852, %v12051
      %v12131 = vadd.f32 %v11853, %v12054
      %v12132 = vadd.f32 %v11854, %v12057
      %v12133 = vadd.f32 %v11855, %v12060
      %v12134 = vadd.f32 %v11856, %v12063
      %v12135 = vadd.f32 %v11857, %v12066
      %v12136 = vadd.f32 %v11858, %v12069
      %v12137 = vadd.f32 %v11859, %v12072
      %v12138 = vadd.f32 %v11860, %v12075
      %v12139 = vadd.f32 %v11861, %v12078
      %v12140 = vadd.f32 %v11862, %v12081
      %v12141 = vadd.f32 %v11863, %v12084
      %v12142 = vadd.f32 %v11864, %v12087
      %v12143 = vadd.f32 %v11865, %v12090
      %v12144 = vadd.f32 %v11866, %v12093
      %v12145 = vadd.f32 %v11867, %v12096
      %v12146 = vadd.f32 %v11868, %v12099
      %v12147 = vadd.f32 %v11869, %v12102
      %v12148 = vadd.f32 %v11870, %v12105
      %v12149 = vadd.f32 %v11871, %v12108
      %v12150 = vadd.f32 %v11872, %v12111
      %v12151 = vadd.f32 %v11873, %v12114
      %v12152 = vadd.f32 %v11874, %v12117
      %v12153 = vadd.f32 %v11875, %v12120
      %v12154 = vld [vmem:[#allocation3] sm:$0x1]
      %v12156 = vperm.slane %v12154, 0
      %v12158 = vadd.f32 %v12122, %v12156
      %v12159 = vadd.f32 %v12123, %v12156
      %v12160 = vadd.f32 %v12124, %v12156
      %v12161 = vadd.f32 %v12125, %v12156
      %v12162 = vadd.f32 %v12126, %v12156
      %v12163 = vadd.f32 %v12127, %v12156
      %v12164 = vadd.f32 %v12128, %v12156
      %v12165 = vadd.f32 %v12129, %v12156
      %v12166 = vadd.f32 %v12130, %v12156
      %v12167 = vadd.f32 %v12131, %v12156
      %v12168 = vadd.f32 %v12132, %v12156
      %v12169 = vadd.f32 %v12133, %v12156
      %v12170 = vadd.f32 %v12134, %v12156
      %v12171 = vadd.f32 %v12135, %v12156
      %v12172 = vadd.f32 %v12136, %v12156
      %v12173 = vadd.f32 %v12137, %v12156
      %v12174 = vadd.f32 %v12138, %v12156
      %v12175 = vadd.f32 %v12139, %v12156
      %v12176 = vadd.f32 %v12140, %v12156
      %v12177 = vadd.f32 %v12141, %v12156
      %v12178 = vadd.f32 %v12142, %v12156
      %v12179 = vadd.f32 %v12143, %v12156
      %v12180 = vadd.f32 %v12144, %v12156
      %v12181 = vadd.f32 %v12145, %v12156
      %v12182 = vadd.f32 %v12146, %v12156
      %v12183 = vadd.f32 %v12147, %v12156
      %v12184 = vadd.f32 %v12148, %v12156
      %v12185 = vadd.f32 %v12149, %v12156
      %v12186 = vadd.f32 %v12150, %v12156
      %v12187 = vadd.f32 %v12151, %v12156
      %v12188 = vadd.f32 %v12152, %v12156
      %v12189 = vadd.f32 %v12153, %v12156
      %12190 = vst.msk [vmem:[%s442] sm:$0xff] %vm532, %v12158
      %12191 = vst.msk [vmem:[%s442 + $0x8] sm:$0xff] %vm532, %v12159
      %12192 = vst.msk [vmem:[%s442 + $0x10] sm:$0xff] %vm532, %v12160
      %12193 = vst.msk [vmem:[%s442 + $0x18] sm:$0xff] %vm532, %v12161
      %12194 = vst.msk [vmem:[%s442 + $0x20] sm:$0xff] %vm532, %v12162
      %12195 = vst.msk [vmem:[%s442 + $0x28] sm:$0xff] %vm532, %v12163
      %12196 = vst.msk [vmem:[%s442 + $0x30] sm:$0xff] %vm532, %v12164
      %12197 = vst.msk [vmem:[%s442 + $0x38] sm:$0xff] %vm532, %v12165
      %12198 = vst.msk [vmem:[%s442 + $0x40] sm:$0xff] %vm532, %v12166
      %12199 = vst.msk [vmem:[%s442 + $0x48] sm:$0xff] %vm532, %v12167
      %12200 = vst.msk [vmem:[%s442 + $0x50] sm:$0xff] %vm532, %v12168
      %12201 = vst.msk [vmem:[%s442 + $0x58] sm:$0xff] %vm532, %v12169
      %12202 = vst.msk [vmem:[%s442 + $0x60] sm:$0xff] %vm532, %v12170
      %12203 = vst.msk [vmem:[%s442 + $0x68] sm:$0xff] %vm532, %v12171
      %12204 = vst.msk [vmem:[%s442 + $0x70] sm:$0xff] %vm532, %v12172
      %12205 = vst.msk [vmem:[%s442 + $0x78] sm:$0xff] %vm532, %v12173
      %12206 = vst.msk [vmem:[%s442 + $0x80] sm:$0xff] %vm532, %v12174
      %12207 = vst.msk [vmem:[%s442 + $0x88] sm:$0xff] %vm532, %v12175
      %12208 = vst.msk [vmem:[%s442 + $0x90] sm:$0xff] %vm532, %v12176
      %12209 = vst.msk [vmem:[%s442 + $0x98] sm:$0xff] %vm532, %v12177
      %12210 = vst.msk [vmem:[%s442 + $0xa0] sm:$0xff] %vm532, %v12178
      %12211 = vst.msk [vmem:[%s442 + $0xa8] sm:$0xff] %vm532, %v12179
      %12212 = vst.msk [vmem:[%s442 + $0xb0] sm:$0xff] %vm532, %v12180
      %12213 = vst.msk [vmem:[%s442 + $0xb8] sm:$0xff] %vm532, %v12181
      %12214 = vst.msk [vmem:[%s442 + $0xc0] sm:$0xff] %vm532, %v12182
      %12215 = vst.msk [vmem:[%s442 + $0xc8] sm:$0xff] %vm532, %v12183
      %12216 = vst.msk [vmem:[%s442 + $0xd0] sm:$0xff] %vm532, %v12184
      %12217 = vst.msk [vmem:[%s442 + $0xd8] sm:$0xff] %vm532, %v12185
      %12218 = vst.msk [vmem:[%s442 + $0xe0] sm:$0xff] %vm532, %v12186
      %12219 = vst.msk [vmem:[%s442 + $0xe8] sm:$0xff] %vm532, %v12187
      %12220 = vst.msk [vmem:[%s442 + $0xf0] sm:$0xff] %vm532, %v12188
      %12221 = vst.msk [vmem:[%s442 + $0xf8] sm:$0xff] %vm532, %v12189
      %p12222 = scmp.lt.s32.totalorder %s26, 1
      %s12223 = scalar_select %p12222, %s26, 1
      %s12224 = smul.addr %s12223, 32
      %s12225 = smul.addr %s12224, 8
      %s12226 = scalar_lea.vmem %s13, %s12225
      // Predicated region
      $region73: #{tpu_custom_call.1} parent=71 // pred_check
        %p12227 = pneg %p322
      $region74: #{tpu_custom_call.1} parent=71 // pred_check_branch
        %12229 = sbr.rel (%p12227) target = $region76
      $region75: #{tpu_custom_call.1} parent=71 // pred_region
        _
      $region76: #{tpu_custom_call.1} parent=71 // pred_fallthru
        _
    $region72: #{tpu_custom_call.1} parent=5 // pred_fallthru
      _
    %p12230 = scmp.le.s32.totalorder 2, %s21
    // Predicated region
    $region77: #{tpu_custom_call.1} parent=5 // pred_check
      %p12231 = pneg %p12230
    $region78: #{tpu_custom_call.1} parent=5 // pred_check_branch
      %12233 = sbr.rel (%p12231) target = $region80
    $region79: #{tpu_custom_call.1} parent=5 // pred_region
      %s12234 = ssub.s32 %s21, 2
      // Predicated region
      $region81: #{tpu_custom_call.1} parent=79 // pred_check
        %p12235 = pneg %p328
      $region82: #{tpu_custom_call.1} parent=79 // pred_check_branch
        %12237 = sbr.rel (%p12235) target = $region84
      $region83: #{tpu_custom_call.1} parent=79 // pred_region
        %p12238 = scmp.lt.s32.totalorder %s27, 1
        %s12239 = scalar_select %p12238, %s27, 1
        %s12240 = smul.addr %s12239, 32
        %s12241 = smul.addr %s12240, 8
        %s12242 = scalar_lea.vmem %s13, %s12241
      $region84: #{tpu_custom_call.1} parent=79 // pred_fallthru
        _
    $region80: #{tpu_custom_call.1} parent=5 // pred_fallthru
      _
  $region6: #{tpu_custom_call.1} parent=0 // loop_footer
    %s25 = sadd.s32 1, %s21
  $region7: #{tpu_custom_call.1} parent=0 // loop_footer_branch
    %20 = sbr.rel target = $region3
  $region8: #{tpu_custom_call.1} parent=0 // loop_exit
    _

</llo_original>
